<compile_context>
chip_gen: v7x
topology: tpu7x:2x2x1
jax: 0.10.0
libtpu: 0.0.40
codegen_flags: <defaults>
</compile_context>

<pallas_src>
import jax
import jax.numpy as jnp
from jax.experimental import pallas as pl
from jax.experimental.pallas import tpu as pltpu
import numpy as np


_SUB_B = 128   # sub-tile rows: keeps each layer's live intermediates near the vregs


def _make_mlp_kernel(tile_b, epilogue_dtype):
    """Kernel for one (tile_b, D) batch block, fully unrolled over 128-row sub-tiles."""
    n_sub = tile_b // _SUB_B

    def mlp_kernel(x_ref,
                   w1_ref, b1_ref,
                   w2_ref, b2_ref,
                   w3_ref, b3_ref,
                   w4_ref, b4_ref,
                   o_ref):
        # Block-constant weights/biases: load once per grid step (reused by all sub-tiles).
        w1 = w1_ref[...]                              # (D, 256)  bf16
        w2 = w2_ref[...]                              # (256,128) bf16
        w3 = w3_ref[...]                              # (128, 64) bf16
        w4 = w4_ref[...].astype(jnp.float32)          # (1, 64)   row vector
        b1 = b1_ref[...]                              # (1, 256)  f32
        b2 = b2_ref[...]                              # (1, 128)  f32
        b3 = b3_ref[...]                              # (1, 64)   f32
        b4 = b4_ref[...]                              # (1, 1)    f32

        # Unrolled sub-tiling (static starts -> aligned, unmasked accesses).  Each
        # sub-tile's f32 accumulators are only (_SUB_B, 256) so Mosaic keeps them in
        # vregs instead of spilling to VMEM at large tile_b.
        for s in range(n_sub):
            row = s * _SUB_B
            x = x_ref[pl.ds(row, _SUB_B), :]          # (128, D) bf16

            # Layer 1: D -> 256, ReLU.  (Dropout(0.3) = identity, eval mode.)
            a1 = jnp.dot(x, w1, preferred_element_type=jnp.float32)
            h1 = jnp.maximum((a1 + b1).astype(epilogue_dtype), 0.0)

            # Layer 2: 256 -> 128, ReLU.  (Dropout(0.2) = identity, eval mode.)
            a2 = jnp.dot(h1.astype(jnp.bfloat16), w2,
                         preferred_element_type=jnp.float32)
            h2 = jnp.maximum((a2 + b2).astype(epilogue_dtype), 0.0)

            # Layer 3: 128 -> 64, ReLU.
            a3 = jnp.dot(h2.astype(jnp.bfloat16), w3,
                         preferred_element_type=jnp.float32)
            h3 = jnp.maximum((a3 + b3).astype(epilogue_dtype), 0.0)

            # Layer 4: 64 -> 1 as a VPU broadcast-multiply + lane reduction (an N=1
            # MXU matmul would waste all but one MXU column).  h3 is quantized to
            # bf16 first so the math matches the bf16-operand reference exactly.
            h3q = h3.astype(jnp.bfloat16).astype(jnp.float32)
            out = jnp.sum(h3q * w4, axis=-1)          # (128,) f32
            # Lane-dense store at a static, 128-aligned lane offset.
            o_ref[:, pl.ds(row, _SUB_B)] = (out[None, :] + b4).astype(o_ref.dtype)

    return mlp_kernel


def _device_info():
    """(tensorcores per jax device, epilogue dtype) from the TPU generation."""
    try:
        kind = jax.devices()[0].device_kind.lower()
    except Exception:
        kind = ""
    # Megacore-style chips expose 2 TensorCores per jax device.
    num_cores = 2 if any(t in kind for t in ("v4", "v5p", "v7", "7x")) else 1
    # bf16 VALU exists on v6e/v7x; v5e has no bf16 VPU path -> keep f32 epilogue.
    bf16_vpu = any(t in kind for t in ("v6", "v7", "7x"))
    epilogue_dtype = jnp.bfloat16 if bf16_vpu else jnp.float32
    return num_cores, epilogue_dtype


def _pick_tiling(batch, input_dim, num_cores):
    """Pick (tile_b, n_tiles): tile_b multiple of 128, VMEM-budgeted, generation-aware.

    * One bf16 x buffer is kept <= 8 MiB so the double-buffered window + weights
      stays well inside v7x's 64 MiB (32 MiB default scoped) VMEM.
    * 1-TC chips (v5e/v6e): single grid step when the batch fits (per-step pipeline
      overhead ~0.35us is comparable to this MLP's compute).
    * 2-TC chips (v4/v5p/v7x): an even number of grid steps so the "parallel" grid
      axis splits evenly across both TensorCores.
    """
    x_row_bytes = 2 * max(int(input_dim), 1)                 # bf16 row
    cap = (8 * 1024 * 1024) // x_row_bytes                    # one x buffer <= 8 MiB
    cap = max(_SUB_B, min(4096, (cap // _SUB_B) * _SUB_B))

    b_units = pl.cdiv(batch, _SUB_B)                          # batch in 128-row units
    if num_cores >= 2 and b_units >= 2:
        steps = 2 * pl.cdiv(b_units * _SUB_B, 2 * cap)        # even step count
        tile_b = pl.cdiv(b_units, steps) * _SUB_B
    else:
        tile_b = min(cap, b_units * _SUB_B)
    n_tiles = pl.cdiv(batch, tile_b)
    return int(tile_b), int(n_tiles)


def _build_call(B_pad, D, tile_b, n_tiles, epilogue_dtype, weight_bytes,
                weights_single_buffered):
    kernel = _make_mlp_kernel(tile_b, epilogue_dtype)

    if weights_single_buffered:
        # Block-constant refs: double-buffering them is pure VMEM waste.
        def const_spec(shape):
            return pl.BlockSpec(shape, lambda i: (0, 0), pipeline_mode=pl.Buffered(1))
    else:
        def const_spec(shape):
            return pl.BlockSpec(shape, lambda i: (0, 0))

    flops = 2 * B_pad * (D * 256 + 256 * 128 + 128 * 64 + 64)
    bytes_accessed = int(2 * B_pad * D + weight_bytes + 4 * B_pad)

    vmem_est = (2 * tile_b * D * 2                      # double-buffered bf16 x window
                + 2 * tile_b * 4                        # double-buffered f32 out row
                + weight_bytes * (1 if weights_single_buffered else 2)
                + _SUB_B * (256 + 128 + 64) * 4 * 4)    # live intermediates slack
    vmem_limit = int(min(max(2 * vmem_est, 16 << 20), 48 << 20))

    return pl.pallas_call(
        kernel,
        out_shape=jax.ShapeDtypeStruct((1, B_pad), jnp.float32),
        grid_spec=pltpu.PrefetchScalarGridSpec(
            num_scalar_prefetch=0,
            grid=(n_tiles,),
            in_specs=[
                pl.BlockSpec((tile_b, D), lambda i: (i, 0)),   # x tile (only per-step DMA)
                const_spec((D, 256)), const_spec((1, 256)),
                const_spec((256, 128)), const_spec((1, 128)),
                const_spec((128, 64)), const_spec((1, 64)),
                const_spec((1, 64)), const_spec((1, 1)),
            ],
            # Lane-dense output slab: (1, tile_b) per step into the (1, B_pad) row.
            out_specs=pl.BlockSpec((1, tile_b), lambda i: (0, i)),
        ),
        compiler_params=pltpu.CompilerParams(
            dimension_semantics=("parallel",),
            vmem_limit_bytes=vmem_limit),
        cost_estimate=pl.CostEstimate(
            flops=flops, transcendentals=0, bytes_accessed=bytes_accessed),
    )


def torch_mlp_forward(x, params, *, tile_b=None):
    """x: (B, D) float32.  params: dict of (in, out) weights + (1, out) biases."""
    B, D = x.shape
    num_cores, epilogue_dtype = _device_info()
    if tile_b is None:
        tile_b, n_tiles = _pick_tiling(B, D, num_cores)
    else:
        tile_b = max(_SUB_B, (int(tile_b) // _SUB_B) * _SUB_B)
        n_tiles = pl.cdiv(B, tile_b)

    B_pad = n_tiles * tile_b
    if B_pad != B:
        x = jnp.pad(x, ((0, B_pad - B), (0, 0)))

    # bf16 operands (halves HBM traffic + MXU passes); biases stay f32.
    x_bf = x.astype(jnp.bfloat16)
    w1 = params["w1"].astype(jnp.bfloat16)
    w2 = params["w2"].astype(jnp.bfloat16)
    w3 = params["w3"].astype(jnp.bfloat16)
    w4 = jnp.reshape(params["w4"], (1, -1)).astype(jnp.bfloat16)   # (1, 64) row vector
    b1 = params["b1"].astype(jnp.float32)
    b2 = params["b2"].astype(jnp.float32)
    b3 = params["b3"].astype(jnp.float32)
    b4 = params["b4"].astype(jnp.float32)

    weight_bytes = sum(int(np.prod(a.shape)) * a.dtype.itemsize
                       for a in (w1, b1, w2, b2, w3, b3, w4, b4))
    operands = (x_bf, w1, b1, w2, b2, w3, b3, w4, b4)

    try:
        call = _build_call(B_pad, D, tile_b, n_tiles, epilogue_dtype,
                           weight_bytes, weights_single_buffered=True)
        out_flat = jax.block_until_ready(call(*operands))
    except Exception:
        # Fallback if this jax/Mosaic build rejects pl.Buffered(1) single-buffering
        # of the block-constant weight specs.
        call = _build_call(B_pad, D, tile_b, n_tiles, epilogue_dtype,
                           weight_bytes, weights_single_buffered=False)
        out_flat = jax.block_until_ready(call(*operands))

    return out_flat[0, :B][:, None]   # (B, 1)


def init_params(key, input_dim):
    """Deterministic PyTorch-style init: U(-1/sqrt(fan_in), 1/sqrt(fan_in)).
    Weights stored as (in, out) so the kernel computes x @ W."""
    dims = [(input_dim, 256), (256, 128), (128, 64), (64, 1)]
    params = {}
    for idx, (fan_in, fan_out) in enumerate(dims, start=1):
        key, kw, kb = jax.random.split(key, 3)
        bound = 1.0 / np.sqrt(fan_in)
        params[f"w{idx}"] = jax.random.uniform(
            kw, (fan_in, fan_out), jnp.float32, -bound, bound)
        params[f"b{idx}"] = jax.random.uniform(
            kb, (1, fan_out), jnp.float32, -bound, bound)
    return params


def reference_forward(x, p):
    """f32 reference mirroring the kernel's bf16-operand / f32-accumulate math."""
    q = lambda a: a.astype(jnp.bfloat16).astype(jnp.float32)
    h = jnp.maximum(q(x) @ q(p["w1"]) + p["b1"], 0.0)
    h = jnp.maximum(q(h) @ q(p["w2"]) + p["b2"], 0.0)
    h = jnp.maximum(q(h) @ q(p["w3"]) + p["b3"], 0.0)
    return q(h) @ q(p["w4"]) + p["b4"]


if __name__ == "__main__":
    key = jax.random.PRNGKey(0)
    input_dim = 32
    batch = 200        # ragged batch: padded to the 128-row tile grid, sliced back

    kx, kp = jax.random.split(key)
    x = jax.random.normal(kx, (batch, input_dim), jnp.float32)
    params = init_params(kp, input_dim)

    out = torch_mlp_forward(x, params)
    out = jax.block_until_ready(out)

    ref = reference_forward(x, params)
    np.testing.assert_allclose(np.asarray(out), np.asarray(ref),
                               rtol=2e-3, atol=2e-3)
    assert out.shape == (batch, 1)
    print("KERNEL_OK")
</pallas_src>

<mosaic_0001>
module attributes {stable_mosaic.version = 11 : i64} {
  func.func @mlp_kernel(%arg0: i32, %arg1: memref<256x32xbf16, #tpu.memory_space<vmem>>, %arg2: memref<32x256xbf16, #tpu.memory_space<vmem>>, %arg3: memref<1x256xf32, #tpu.memory_space<vmem>>, %arg4: memref<256x128xbf16, #tpu.memory_space<vmem>>, %arg5: memref<1x128xf32, #tpu.memory_space<vmem>>, %arg6: memref<128x64xbf16, #tpu.memory_space<vmem>>, %arg7: memref<1x64xf32, #tpu.memory_space<vmem>>, %arg8: memref<1x64xbf16, #tpu.memory_space<vmem>>, %arg9: memref<1x1xf32, #tpu.memory_space<vmem>>, %arg10: memref<1x256xf32, #tpu.memory_space<vmem>>) attributes {dimension_semantics = [#tpu.dimension_semantics<parallel>], iteration_bounds = array<i64: 1>, scalar_prefetch = 0 : i64, scratch_operands = 0 : i64, tpu.core_type = #tpu.core_type<tc>, window_params = [{transform_indices = @transform_0, window_bounds = array<i64: 256, 32>}, {pipeline_mode = #tpu.pipeline_mode<synchronous>, transform_indices = @transform_1, window_bounds = array<i64: 32, 256>}, {pipeline_mode = #tpu.pipeline_mode<synchronous>, transform_indices = @transform_2, window_bounds = array<i64: 1, 256>}, {pipeline_mode = #tpu.pipeline_mode<synchronous>, transform_indices = @transform_3, window_bounds = array<i64: 256, 128>}, {pipeline_mode = #tpu.pipeline_mode<synchronous>, transform_indices = @transform_4, window_bounds = array<i64: 1, 128>}, {pipeline_mode = #tpu.pipeline_mode<synchronous>, transform_indices = @transform_5, window_bounds = array<i64: 128, 64>}, {pipeline_mode = #tpu.pipeline_mode<synchronous>, transform_indices = @transform_6, window_bounds = array<i64: 1, 64>}, {pipeline_mode = #tpu.pipeline_mode<synchronous>, transform_indices = @transform_7, window_bounds = array<i64: 1, 64>}, {pipeline_mode = #tpu.pipeline_mode<synchronous>, transform_indices = @transform_8, window_bounds = array<i64: 1, 1>}, {transform_indices = @transform_9, window_bounds = array<i64: 1, 256>}]} {
    %c0 = arith.constant 0 : index
    %c0_0 = arith.constant 0 : index
    %0 = vector.load %arg2[%c0, %c0_0] : memref<32x256xbf16, #tpu.memory_space<vmem>>, vector<32x256xbf16>
    %c0_1 = arith.constant 0 : index
    %c0_2 = arith.constant 0 : index
    %1 = vector.load %arg4[%c0_1, %c0_2] : memref<256x128xbf16, #tpu.memory_space<vmem>>, vector<256x128xbf16>
    %c0_3 = arith.constant 0 : index
    %c0_4 = arith.constant 0 : index
    %2 = vector.load %arg6[%c0_3, %c0_4] : memref<128x64xbf16, #tpu.memory_space<vmem>>, vector<128x64xbf16>
    %c0_5 = arith.constant 0 : index
    %c0_6 = arith.constant 0 : index
    %3 = vector.load %arg8[%c0_5, %c0_6] : memref<1x64xbf16, #tpu.memory_space<vmem>>, vector<1x64xbf16>
    %4 = arith.extf %3 : vector<1x64xbf16> to vector<1x64xf32>
    %c0_7 = arith.constant 0 : index
    %c0_8 = arith.constant 0 : index
    %5 = vector.load %arg3[%c0_7, %c0_8] : memref<1x256xf32, #tpu.memory_space<vmem>>, vector<1x256xf32>
    %c0_9 = arith.constant 0 : index
    %c0_10 = arith.constant 0 : index
    %6 = vector.load %arg5[%c0_9, %c0_10] : memref<1x128xf32, #tpu.memory_space<vmem>>, vector<1x128xf32>
    %c0_11 = arith.constant 0 : index
    %c0_12 = arith.constant 0 : index
    %7 = vector.load %arg7[%c0_11, %c0_12] : memref<1x64xf32, #tpu.memory_space<vmem>>, vector<1x64xf32>
    %c0_13 = arith.constant 0 : index
    %c0_14 = arith.constant 0 : index
    %8 = vector.load %arg9[%c0_13, %c0_14] : memref<1x1xf32, #tpu.memory_space<vmem>>, vector<1x1xf32>
    %c0_15 = arith.constant 0 : index
    %c0_16 = arith.constant 0 : index
    %9 = vector.load %arg1[%c0_15, %c0_16] : memref<256x32xbf16, #tpu.memory_space<vmem>>, vector<128x32xbf16>
    %cst = arith.constant dense<0.000000e+00> : vector<128x256xf32>
    %10 = tpu.matmul %9, %0, %cst {dimension_numbers = #tpu.dot_dimension_numbers<[1], [0], [0], [1], [0, 0, 1, 1], [], []>} : vector<128x32xbf16>, vector<32x256xbf16>, vector<128x256xf32> -> vector<128x256xf32>
    %11 = vector.broadcast %5 : vector<1x256xf32> to vector<128x256xf32>
    %12 = arith.addf %10, %11 : vector<128x256xf32>
    %cst_17 = arith.constant 0.000000e+00 : f32
    %13 = vector.broadcast %cst_17 : f32 to vector<128x256xf32>
    %14 = arith.maximumf %12, %13 : vector<128x256xf32>
    %15 = arith.truncf %14 : vector<128x256xf32> to vector<128x256xbf16>
    %cst_18 = arith.constant dense<0.000000e+00> : vector<128x128xf32>
    %16 = tpu.matmul %15, %1, %cst_18 {dimension_numbers = #tpu.dot_dimension_numbers<[1], [0], [0], [1], [0, 0, 1, 1], [], []>} : vector<128x256xbf16>, vector<256x128xbf16>, vector<128x128xf32> -> vector<128x128xf32>
    %17 = vector.broadcast %6 : vector<1x128xf32> to vector<128x128xf32>
    %18 = arith.addf %16, %17 : vector<128x128xf32>
    %cst_19 = arith.constant 0.000000e+00 : f32
    %19 = vector.broadcast %cst_19 : f32 to vector<128x128xf32>
    %20 = arith.maximumf %18, %19 : vector<128x128xf32>
    %21 = arith.truncf %20 : vector<128x128xf32> to vector<128x128xbf16>
    %cst_20 = arith.constant dense<0.000000e+00> : vector<128x64xf32>
    %22 = tpu.matmul %21, %2, %cst_20 {dimension_numbers = #tpu.dot_dimension_numbers<[1], [0], [0], [1], [0, 0, 1, 1], [], []>} : vector<128x128xbf16>, vector<128x64xbf16>, vector<128x64xf32> -> vector<128x64xf32>
    %23 = vector.broadcast %7 : vector<1x64xf32> to vector<128x64xf32>
    %24 = arith.addf %22, %23 : vector<128x64xf32>
    %cst_21 = arith.constant 0.000000e+00 : f32
    %25 = vector.broadcast %cst_21 : f32 to vector<128x64xf32>
    %26 = arith.maximumf %24, %25 : vector<128x64xf32>
    %27 = arith.truncf %26 : vector<128x64xf32> to vector<128x64xbf16>
    %28 = arith.extf %27 : vector<128x64xbf16> to vector<128x64xf32>
    %29 = vector.broadcast %4 : vector<1x64xf32> to vector<128x64xf32>
    %30 = arith.mulf %28, %29 : vector<128x64xf32>
    %cst_22 = arith.constant dense<0.000000e+00> : vector<128xf32>
    %31 = vector.multi_reduction <add>, %30, %cst_22 [1] : vector<128x64xf32> to vector<128xf32>
    %32 = vector.shape_cast %31 : vector<128xf32> to vector<1x128xf32>
    %33 = vector.broadcast %8 : vector<1x1xf32> to vector<1x128xf32>
    %34 = arith.addf %32, %33 : vector<1x128xf32>
    %c0_23 = arith.constant 0 : index
    %c0_24 = arith.constant 0 : index
    %35 = vector.load %arg10[%c0_23, %c0_24] : memref<1x256xf32, #tpu.memory_space<vmem>>, vector<1x128xf32>
    tpu.vector_store %arg10[%c0_23, %c0_24], %34 {strides = array<i32>} : memref<1x256xf32, #tpu.memory_space<vmem>>, vector<1x128xf32>,
    %c128 = arith.constant 128 : index
    %c0_25 = arith.constant 0 : index
    %36 = vector.load %arg1[%c128, %c0_25] : memref<256x32xbf16, #tpu.memory_space<vmem>>, vector<128x32xbf16>
    %cst_26 = arith.constant dense<0.000000e+00> : vector<128x256xf32>
    %37 = tpu.matmul %36, %0, %cst_26 {dimension_numbers = #tpu.dot_dimension_numbers<[1], [0], [0], [1], [0, 0, 1, 1], [], []>} : vector<128x32xbf16>, vector<32x256xbf16>, vector<128x256xf32> -> vector<128x256xf32>
    %38 = vector.broadcast %5 : vector<1x256xf32> to vector<128x256xf32>
    %39 = arith.addf %37, %38 : vector<128x256xf32>
    %cst_27 = arith.constant 0.000000e+00 : f32
    %40 = vector.broadcast %cst_27 : f32 to vector<128x256xf32>
    %41 = arith.maximumf %39, %40 : vector<128x256xf32>
    %42 = arith.truncf %41 : vector<128x256xf32> to vector<128x256xbf16>
    %cst_28 = arith.constant dense<0.000000e+00> : vector<128x128xf32>
    %43 = tpu.matmul %42, %1, %cst_28 {dimension_numbers = #tpu.dot_dimension_numbers<[1], [0], [0], [1], [0, 0, 1, 1], [], []>} : vector<128x256xbf16>, vector<256x128xbf16>, vector<128x128xf32> -> vector<128x128xf32>
    %44 = vector.broadcast %6 : vector<1x128xf32> to vector<128x128xf32>
    %45 = arith.addf %43, %44 : vector<128x128xf32>
    %cst_29 = arith.constant 0.000000e+00 : f32
    %46 = vector.broadcast %cst_29 : f32 to vector<128x128xf32>
    %47 = arith.maximumf %45, %46 : vector<128x128xf32>
    %48 = arith.truncf %47 : vector<128x128xf32> to vector<128x128xbf16>
    %cst_30 = arith.constant dense<0.000000e+00> : vector<128x64xf32>
    %49 = tpu.matmul %48, %2, %cst_30 {dimension_numbers = #tpu.dot_dimension_numbers<[1], [0], [0], [1], [0, 0, 1, 1], [], []>} : vector<128x128xbf16>, vector<128x64xbf16>, vector<128x64xf32> -> vector<128x64xf32>
    %50 = vector.broadcast %7 : vector<1x64xf32> to vector<128x64xf32>
    %51 = arith.addf %49, %50 : vector<128x64xf32>
    %cst_31 = arith.constant 0.000000e+00 : f32
    %52 = vector.broadcast %cst_31 : f32 to vector<128x64xf32>
    %53 = arith.maximumf %51, %52 : vector<128x64xf32>
    %54 = arith.truncf %53 : vector<128x64xf32> to vector<128x64xbf16>
    %55 = arith.extf %54 : vector<128x64xbf16> to vector<128x64xf32>
    %56 = vector.broadcast %4 : vector<1x64xf32> to vector<128x64xf32>
    %57 = arith.mulf %55, %56 : vector<128x64xf32>
    %cst_32 = arith.constant dense<0.000000e+00> : vector<128xf32>
    %58 = vector.multi_reduction <add>, %57, %cst_32 [1] : vector<128x64xf32> to vector<128xf32>
    %59 = vector.shape_cast %58 : vector<128xf32> to vector<1x128xf32>
    %60 = vector.broadcast %8 : vector<1x1xf32> to vector<1x128xf32>
    %61 = arith.addf %59, %60 : vector<1x128xf32>
    %c0_33 = arith.constant 0 : index
    %c128_34 = arith.constant 128 : index
    %62 = vector.load %arg10[%c0_33, %c128_34] : memref<1x256xf32, #tpu.memory_space<vmem>>, vector<1x128xf32>
    tpu.vector_store %arg10[%c0_33, %c128_34], %61 {strides = array<i32>} : memref<1x256xf32, #tpu.memory_space<vmem>>, vector<1x128xf32>,
    return
  }
  func.func @transform_0(%arg0: i32) -> (i32, i32) {
    %c0_i32 = arith.constant 0 : i32
    %c0_i32_0 = arith.constant 0 : i32
    return %arg0, %c0_i32 : i32, i32
  }
  func.func @transform_1(%arg0: i32) -> (i32, i32) {
    %c0_i32 = arith.constant 0 : i32
    %c0_i32_0 = arith.constant 0 : i32
    %c0_i32_1 = arith.constant 0 : i32
    return %c0_i32, %c0_i32_0 : i32, i32
  }
  func.func @transform_2(%arg0: i32) -> (i32, i32) {
    %c0_i32 = arith.constant 0 : i32
    %c0_i32_0 = arith.constant 0 : i32
    %c0_i32_1 = arith.constant 0 : i32
    return %c0_i32, %c0_i32_0 : i32, i32
  }
  func.func @transform_3(%arg0: i32) -> (i32, i32) {
    %c0_i32 = arith.constant 0 : i32
    %c0_i32_0 = arith.constant 0 : i32
    %c0_i32_1 = arith.constant 0 : i32
    return %c0_i32, %c0_i32_0 : i32, i32
  }
  func.func @transform_4(%arg0: i32) -> (i32, i32) {
    %c0_i32 = arith.constant 0 : i32
    %c0_i32_0 = arith.constant 0 : i32
    %c0_i32_1 = arith.constant 0 : i32
    return %c0_i32, %c0_i32_0 : i32, i32
  }
  func.func @transform_5(%arg0: i32) -> (i32, i32) {
    %c0_i32 = arith.constant 0 : i32
    %c0_i32_0 = arith.constant 0 : i32
    %c0_i32_1 = arith.constant 0 : i32
    return %c0_i32, %c0_i32_0 : i32, i32
  }
  func.func @transform_6(%arg0: i32) -> (i32, i32) {
    %c0_i32 = arith.constant 0 : i32
    %c0_i32_0 = arith.constant 0 : i32
    %c0_i32_1 = arith.constant 0 : i32
    return %c0_i32, %c0_i32_0 : i32, i32
  }
  func.func @transform_7(%arg0: i32) -> (i32, i32) {
    %c0_i32 = arith.constant 0 : i32
    %c0_i32_0 = arith.constant 0 : i32
    %c0_i32_1 = arith.constant 0 : i32
    return %c0_i32, %c0_i32_0 : i32, i32
  }
  func.func @transform_8(%arg0: i32) -> (i32, i32) {
    %c0_i32 = arith.constant 0 : i32
    %c0_i32_0 = arith.constant 0 : i32
    %c0_i32_1 = arith.constant 0 : i32
    return %c0_i32, %c0_i32_0 : i32, i32
  }
  func.func @transform_9(%arg0: i32) -> (i32, i32) {
    %c0_i32 = arith.constant 0 : i32
    %c0_i32_0 = arith.constant 0 : i32
    return %c0_i32, %arg0 : i32, i32
  }
}

module attributes {stable_mosaic.version = 11 : i64} {
  func.func @mlp_kernel(%arg0: i32, %arg1: memref<256x32xbf16, #tpu.memory_space<vmem>>, %arg2: memref<32x256xbf16, #tpu.memory_space<vmem>>, %arg3: memref<1x256xf32, #tpu.memory_space<vmem>>, %arg4: memref<256x128xbf16, #tpu.memory_space<vmem>>, %arg5: memref<1x128xf32, #tpu.memory_space<vmem>>, %arg6: memref<128x64xbf16, #tpu.memory_space<vmem>>, %arg7: memref<1x64xf32, #tpu.memory_space<vmem>>, %arg8: memref<1x64xbf16, #tpu.memory_space<vmem>>, %arg9: memref<1x1xf32, #tpu.memory_space<vmem>>, %arg10: memref<1x256xf32, #tpu.memory_space<vmem>>) attributes {dimension_semantics = [#tpu.dimension_semantics<parallel>], iteration_bounds = array<i64: 1>, scalar_prefetch = 0 : i64, scratch_operands = 0 : i64, tpu.core_type = #tpu.core_type<tc>, window_params = [{transform_indices = @transform_0, window_bounds = array<i64: 256, 32>}, {pipeline_mode = #tpu.pipeline_mode<synchronous>, transform_indices = @transform_1, window_bounds = array<i64: 32, 256>}, {pipeline_mode = #tpu.pipeline_mode<synchronous>, transform_indices = @transform_2, window_bounds = array<i64: 1, 256>}, {pipeline_mode = #tpu.pipeline_mode<synchronous>, transform_indices = @transform_3, window_bounds = array<i64: 256, 128>}, {pipeline_mode = #tpu.pipeline_mode<synchronous>, transform_indices = @transform_4, window_bounds = array<i64: 1, 128>}, {pipeline_mode = #tpu.pipeline_mode<synchronous>, transform_indices = @transform_5, window_bounds = array<i64: 128, 64>}, {pipeline_mode = #tpu.pipeline_mode<synchronous>, transform_indices = @transform_6, window_bounds = array<i64: 1, 64>}, {pipeline_mode = #tpu.pipeline_mode<synchronous>, transform_indices = @transform_7, window_bounds = array<i64: 1, 64>}, {pipeline_mode = #tpu.pipeline_mode<synchronous>, transform_indices = @transform_8, window_bounds = array<i64: 1, 1>}, {transform_indices = @transform_9, window_bounds = array<i64: 1, 256>}]} {
    %c0 = arith.constant 0 : index
    %c0_0 = arith.constant 0 : index
    %0 = vector.load %arg2[%c0, %c0_0] : memref<32x256xbf16, #tpu.memory_space<vmem>>, vector<32x256xbf16>
    %c0_1 = arith.constant 0 : index
    %c0_2 = arith.constant 0 : index
    %1 = vector.load %arg4[%c0_1, %c0_2] : memref<256x128xbf16, #tpu.memory_space<vmem>>, vector<256x128xbf16>
    %c0_3 = arith.constant 0 : index
    %c0_4 = arith.constant 0 : index
    %2 = vector.load %arg6[%c0_3, %c0_4] : memref<128x64xbf16, #tpu.memory_space<vmem>>, vector<128x64xbf16>
    %c0_5 = arith.constant 0 : index
    %c0_6 = arith.constant 0 : index
    %3 = vector.load %arg8[%c0_5, %c0_6] : memref<1x64xbf16, #tpu.memory_space<vmem>>, vector<1x64xbf16>
    %4 = arith.extf %3 : vector<1x64xbf16> to vector<1x64xf32>
    %c0_7 = arith.constant 0 : index
    %c0_8 = arith.constant 0 : index
    %5 = vector.load %arg3[%c0_7, %c0_8] : memref<1x256xf32, #tpu.memory_space<vmem>>, vector<1x256xf32>
    %c0_9 = arith.constant 0 : index
    %c0_10 = arith.constant 0 : index
    %6 = vector.load %arg5[%c0_9, %c0_10] : memref<1x128xf32, #tpu.memory_space<vmem>>, vector<1x128xf32>
    %c0_11 = arith.constant 0 : index
    %c0_12 = arith.constant 0 : index
    %7 = vector.load %arg7[%c0_11, %c0_12] : memref<1x64xf32, #tpu.memory_space<vmem>>, vector<1x64xf32>
    %c0_13 = arith.constant 0 : index
    %c0_14 = arith.constant 0 : index
    %8 = vector.load %arg9[%c0_13, %c0_14] : memref<1x1xf32, #tpu.memory_space<vmem>>, vector<1x1xf32>
    %c0_15 = arith.constant 0 : index
    %c0_16 = arith.constant 0 : index
    %9 = vector.load %arg1[%c0_15, %c0_16] : memref<256x32xbf16, #tpu.memory_space<vmem>>, vector<128x32xbf16>
    %cst = arith.constant dense<0.000000e+00> : vector<128x256xf32>
    %10 = tpu.matmul %9, %0, %cst {dimension_numbers = #tpu.dot_dimension_numbers<[1], [0], [0], [1], [0, 0, 1, 1], [], []>} : vector<128x32xbf16>, vector<32x256xbf16>, vector<128x256xf32> -> vector<128x256xf32>
    %11 = vector.broadcast %5 : vector<1x256xf32> to vector<128x256xf32>
    %12 = arith.addf %10, %11 : vector<128x256xf32>
    %cst_17 = arith.constant 0.000000e+00 : f32
    %13 = vector.broadcast %cst_17 : f32 to vector<128x256xf32>
    %14 = arith.maximumf %12, %13 : vector<128x256xf32>
    %15 = arith.truncf %14 : vector<128x256xf32> to vector<128x256xbf16>
    %cst_18 = arith.constant dense<0.000000e+00> : vector<128x128xf32>
    %16 = tpu.matmul %15, %1, %cst_18 {dimension_numbers = #tpu.dot_dimension_numbers<[1], [0], [0], [1], [0, 0, 1, 1], [], []>} : vector<128x256xbf16>, vector<256x128xbf16>, vector<128x128xf32> -> vector<128x128xf32>
    %17 = vector.broadcast %6 : vector<1x128xf32> to vector<128x128xf32>
    %18 = arith.addf %16, %17 : vector<128x128xf32>
    %cst_19 = arith.constant 0.000000e+00 : f32
    %19 = vector.broadcast %cst_19 : f32 to vector<128x128xf32>
    %20 = arith.maximumf %18, %19 : vector<128x128xf32>
    %21 = arith.truncf %20 : vector<128x128xf32> to vector<128x128xbf16>
    %cst_20 = arith.constant dense<0.000000e+00> : vector<128x64xf32>
    %22 = tpu.matmul %21, %2, %cst_20 {dimension_numbers = #tpu.dot_dimension_numbers<[1], [0], [0], [1], [0, 0, 1, 1], [], []>} : vector<128x128xbf16>, vector<128x64xbf16>, vector<128x64xf32> -> vector<128x64xf32>
    %23 = vector.broadcast %7 : vector<1x64xf32> to vector<128x64xf32>
    %24 = arith.addf %22, %23 : vector<128x64xf32>
    %cst_21 = arith.constant 0.000000e+00 : f32
    %25 = vector.broadcast %cst_21 : f32 to vector<128x64xf32>
    %26 = arith.maximumf %24, %25 : vector<128x64xf32>
    %27 = arith.truncf %26 : vector<128x64xf32> to vector<128x64xbf16>
    %28 = arith.extf %27 : vector<128x64xbf16> to vector<128x64xf32>
    %29 = vector.broadcast %4 : vector<1x64xf32> to vector<128x64xf32>
    %30 = arith.mulf %28, %29 : vector<128x64xf32>
    %cst_22 = arith.constant dense<0.000000e+00> : vector<128xf32>
    %31 = vector.multi_reduction <add>, %30, %cst_22 [1] : vector<128x64xf32> to vector<128xf32>
    %32 = vector.shape_cast %31 : vector<128xf32> to vector<1x128xf32>
    %33 = vector.broadcast %8 : vector<1x1xf32> to vector<1x128xf32>
    %34 = arith.addf %32, %33 : vector<1x128xf32>
    %c0_23 = arith.constant 0 : index
    %c0_24 = arith.constant 0 : index
    %35 = vector.load %arg10[%c0_23, %c0_24] : memref<1x256xf32, #tpu.memory_space<vmem>>, vector<1x128xf32>
    tpu.vector_store %arg10[%c0_23, %c0_24], %34 {strides = array<i32>} : memref<1x256xf32, #tpu.memory_space<vmem>>, vector<1x128xf32>,
    %c128 = arith.constant 128 : index
    %c0_25 = arith.constant 0 : index
    %36 = vector.load %arg1[%c128, %c0_25] : memref<256x32xbf16, #tpu.memory_space<vmem>>, vector<128x32xbf16>
    %cst_26 = arith.constant dense<0.000000e+00> : vector<128x256xf32>
    %37 = tpu.matmul %36, %0, %cst_26 {dimension_numbers = #tpu.dot_dimension_numbers<[1], [0], [0], [1], [0, 0, 1, 1], [], []>} : vector<128x32xbf16>, vector<32x256xbf16>, vector<128x256xf32> -> vector<128x256xf32>
    %38 = vector.broadcast %5 : vector<1x256xf32> to vector<128x256xf32>
    %39 = arith.addf %37, %38 : vector<128x256xf32>
    %cst_27 = arith.constant 0.000000e+00 : f32
    %40 = vector.broadcast %cst_27 : f32 to vector<128x256xf32>
    %41 = arith.maximumf %39, %40 : vector<128x256xf32>
    %42 = arith.truncf %41 : vector<128x256xf32> to vector<128x256xbf16>
    %cst_28 = arith.constant dense<0.000000e+00> : vector<128x128xf32>
    %43 = tpu.matmul %42, %1, %cst_28 {dimension_numbers = #tpu.dot_dimension_numbers<[1], [0], [0], [1], [0, 0, 1, 1], [], []>} : vector<128x256xbf16>, vector<256x128xbf16>, vector<128x128xf32> -> vector<128x128xf32>
    %44 = vector.broadcast %6 : vector<1x128xf32> to vector<128x128xf32>
    %45 = arith.addf %43, %44 : vector<128x128xf32>
    %cst_29 = arith.constant 0.000000e+00 : f32
    %46 = vector.broadcast %cst_29 : f32 to vector<128x128xf32>
    %47 = arith.maximumf %45, %46 : vector<128x128xf32>
    %48 = arith.truncf %47 : vector<128x128xf32> to vector<128x128xbf16>
    %cst_30 = arith.constant dense<0.000000e+00> : vector<128x64xf32>
    %49 = tpu.matmul %48, %2, %cst_30 {dimension_numbers = #tpu.dot_dimension_numbers<[1], [0], [0], [1], [0, 0, 1, 1], [], []>} : vector<128x128xbf16>, vector<128x64xbf16>, vector<128x64xf32> -> vector<128x64xf32>
    %50 = vector.broadcast %7 : vector<1x64xf32> to vector<128x64xf32>
    %51 = arith.addf %49, %50 : vector<128x64xf32>
    %cst_31 = arith.constant 0.000000e+00 : f32
    %52 = vector.broadcast %cst_31 : f32 to vector<128x64xf32>
    %53 = arith.maximumf %51, %52 : vector<128x64xf32>
    %54 = arith.truncf %53 : vector<128x64xf32> to vector<128x64xbf16>
    %55 = arith.extf %54 : vector<128x64xbf16> to vector<128x64xf32>
    %56 = vector.broadcast %4 : vector<1x64xf32> to vector<128x64xf32>
    %57 = arith.mulf %55, %56 : vector<128x64xf32>
    %cst_32 = arith.constant dense<0.000000e+00> : vector<128xf32>
    %58 = vector.multi_reduction <add>, %57, %cst_32 [1] : vector<128x64xf32> to vector<128xf32>
    %59 = vector.shape_cast %58 : vector<128xf32> to vector<1x128xf32>
    %60 = vector.broadcast %8 : vector<1x1xf32> to vector<1x128xf32>
    %61 = arith.addf %59, %60 : vector<1x128xf32>
    %c0_33 = arith.constant 0 : index
    %c128_34 = arith.constant 128 : index
    %62 = vector.load %arg10[%c0_33, %c128_34] : memref<1x256xf32, #tpu.memory_space<vmem>>, vector<1x128xf32>
    tpu.vector_store %arg10[%c0_33, %c128_34], %61 {strides = array<i32>} : memref<1x256xf32, #tpu.memory_space<vmem>>, vector<1x128xf32>,
    return
  }
  func.func @transform_0(%arg0: i32) -> (i32, i32) {
    %c0_i32 = arith.constant 0 : i32
    %c0_i32_0 = arith.constant 0 : i32
    return %arg0, %c0_i32 : i32, i32
  }
  func.func @transform_1(%arg0: i32) -> (i32, i32) {
    %c0_i32 = arith.constant 0 : i32
    %c0_i32_0 = arith.constant 0 : i32
    %c0_i32_1 = arith.constant 0 : i32
    return %c0_i32, %c0_i32_0 : i32, i32
  }
  func.func @transform_2(%arg0: i32) -> (i32, i32) {
    %c0_i32 = arith.constant 0 : i32
    %c0_i32_0 = arith.constant 0 : i32
    %c0_i32_1 = arith.constant 0 : i32
    return %c0_i32, %c0_i32_0 : i32, i32
  }
  func.func @transform_3(%arg0: i32) -> (i32, i32) {
    %c0_i32 = arith.constant 0 : i32
    %c0_i32_0 = arith.constant 0 : i32
    %c0_i32_1 = arith.constant 0 : i32
    return %c0_i32, %c0_i32_0 : i32, i32
  }
  func.func @transform_4(%arg0: i32) -> (i32, i32) {
    %c0_i32 = arith.constant 0 : i32
    %c0_i32_0 = arith.constant 0 : i32
    %c0_i32_1 = arith.constant 0 : i32
    return %c0_i32, %c0_i32_0 : i32, i32
  }
  func.func @transform_5(%arg0: i32) -> (i32, i32) {
    %c0_i32 = arith.constant 0 : i32
    %c0_i32_0 = arith.constant 0 : i32
    %c0_i32_1 = arith.constant 0 : i32
    return %c0_i32, %c0_i32_0 : i32, i32
  }
  func.func @transform_6(%arg0: i32) -> (i32, i32) {
    %c0_i32 = arith.constant 0 : i32
    %c0_i32_0 = arith.constant 0 : i32
    %c0_i32_1 = arith.constant 0 : i32
    return %c0_i32, %c0_i32_0 : i32, i32
  }
  func.func @transform_7(%arg0: i32) -> (i32, i32) {
    %c0_i32 = arith.constant 0 : i32
    %c0_i32_0 = arith.constant 0 : i32
    %c0_i32_1 = arith.constant 0 : i32
    return %c0_i32, %c0_i32_0 : i32, i32
  }
  func.func @transform_8(%arg0: i32) -> (i32, i32) {
    %c0_i32 = arith.constant 0 : i32
    %c0_i32_0 = arith.constant 0 : i32
    %c0_i32_1 = arith.constant 0 : i32
    return %c0_i32, %c0_i32_0 : i32, i32
  }
  func.func @transform_9(%arg0: i32) -> (i32, i32) {
    %c0_i32 = arith.constant 0 : i32
    %c0_i32_0 = arith.constant 0 : i32
    return %c0_i32, %arg0 : i32, i32
  }
}

</mosaic_0001>

<llo_original>
// kernel: tpu_custom_call.1
$region0: #{tpu_custom_call.1}
  #allocation0 [shape = 'u32[]', space=smem, size = 0x4, offset = 0x4, fixed_abs, tag = 'smem constant byte address 0x4 - core index']
  #allocation1 [shape = 'u32[144,128]{1,0:T(1,128)}', space=vmem, size = 0x12000, scoped, tag = 'internal scratch']
  #allocation2 [shape = 'f32[1,1]{1,0:T(1,128)S(1)}', space=vmem, size = 0x200, scoped, tag = 'scoped memory for tpu_custom_call.1']
  %s0 = inlined_call_operand.vmem [shape: bf16[256,32], index: 0, kind: input, shape index: {}]
  %s1 = inlined_call_operand.vmem [shape: bf16[32,256], index: 1, kind: input, shape index: {}]
  %s2 = inlined_call_operand.vmem [shape: f32[1,256], index: 2, kind: input, shape index: {}]
  %s3 = inlined_call_operand.vmem [shape: bf16[256,128], index: 3, kind: input, shape index: {}]
  %s4 = inlined_call_operand.vmem [shape: f32[1,128], index: 4, kind: input, shape index: {}]
  %s5 = inlined_call_operand.vmem [shape: bf16[128,64], index: 5, kind: input, shape index: {}]
  %s6 = inlined_call_operand.vmem [shape: f32[1,64], index: 6, kind: input, shape index: {}]
  %s7 = inlined_call_operand.vmem [shape: bf16[1,64], index: 7, kind: input, shape index: {}]
  %s8 = inlined_call_operand.<no memory space> [shape: f32[1,1], index: 8, kind: input, shape index: {}]
  %s9 = inlined_call_operand.hbm [shape: f32[1,256], index: 9, kind: output, shape index: {}]
  %s10 = sld [smem:[#allocation0]]
  $region46: #{tpu_custom_call.1} parent=0
    _
  %s12 = ssub.s32 1, %s10
  %s13 = scalar_select 0, %s12, %s10
  %v14 = vstv %s8
  %15 = vst [vmem:[#allocation2] sm:$0x1] %v14
  $region1: #{tpu_custom_call.1} parent=0
    #allocation3 [shape = 'u8[1024]{0}', space=vmem, size = 0x400, scoped, tag = 'output window, operand 0, single buffered']
    #allocation4 [shape = 's32[1]{0}', space=sflag, size = 0x4, scoped, tag = 'scoped memory for tpu_custom_call.1']
    %16 = vsyncpa [#allocation4], 0
    // Predicated region
    $region2: #{tpu_custom_call.1} parent=1 // pred_check
      _
    $region3: #{tpu_custom_call.1} parent=1 // pred_check_branch
      %18 = sbr.rel (0) target = $region5
    $region4: #{tpu_custom_call.1} parent=1 // pred_region
      _
    $region5: #{tpu_custom_call.1} parent=1 // pred_fallthru
      _
    // Predicated region
    $region6: #{tpu_custom_call.1} parent=1 // pred_check
      _
    $region7: #{tpu_custom_call.1} parent=1 // pred_check_branch
      %20 = sbr.rel (0) target = $region9
    $region8: #{tpu_custom_call.1} parent=1 // pred_region
      _
    $region9: #{tpu_custom_call.1} parent=1 // pred_fallthru
      _
    // Predicated region
    $region10: #{tpu_custom_call.1} parent=1 // pred_check
      _
    $region11: #{tpu_custom_call.1} parent=1 // pred_check_branch
      %22 = sbr.rel (0) target = $region13
    $region12: #{tpu_custom_call.1} parent=1 // pred_region
      _
    $region13: #{tpu_custom_call.1} parent=1 // pred_fallthru
      _
    // Predicated region
    $region14: #{tpu_custom_call.1} parent=1 // pred_check
      _
    $region15: #{tpu_custom_call.1} parent=1 // pred_check_branch
      %24 = sbr.rel (0) target = $region17
    $region16: #{tpu_custom_call.1} parent=1 // pred_region
      _
    $region17: #{tpu_custom_call.1} parent=1 // pred_fallthru
      _
    // Predicated region
    $region18: #{tpu_custom_call.1} parent=1 // pred_check
      _
    $region19: #{tpu_custom_call.1} parent=1 // pred_check_branch
      %26 = sbr.rel (0) target = $region21
    $region20: #{tpu_custom_call.1} parent=1 // pred_region
      _
    $region21: #{tpu_custom_call.1} parent=1 // pred_fallthru
      _
    // Predicated region
    $region22: #{tpu_custom_call.1} parent=1 // pred_check
      _
    $region23: #{tpu_custom_call.1} parent=1 // pred_check_branch
      %28 = sbr.rel (0) target = $region25
    $region24: #{tpu_custom_call.1} parent=1 // pred_region
      _
    $region25: #{tpu_custom_call.1} parent=1 // pred_fallthru
      _
    // Predicated region
    $region26: #{tpu_custom_call.1} parent=1 // pred_check
      _
    $region27: #{tpu_custom_call.1} parent=1 // pred_check_branch
      %30 = sbr.rel (0) target = $region29
    $region28: #{tpu_custom_call.1} parent=1 // pred_region
      _
    $region29: #{tpu_custom_call.1} parent=1 // pred_fallthru
      _
    // Predicated region
    $region30: #{tpu_custom_call.1} parent=1 // pred_check
      _
    $region31: #{tpu_custom_call.1} parent=1 // pred_check_branch
      %32 = sbr.rel (0) target = $region33
    $region32: #{tpu_custom_call.1} parent=1 // pred_region
      _
    $region33: #{tpu_custom_call.1} parent=1 // pred_fallthru
      _
    // Predicated region
    $region34: #{tpu_custom_call.1} parent=1 // pred_check
      _
    $region35: #{tpu_custom_call.1} parent=1 // pred_check_branch
      %34 = sbr.rel (0) target = $region37
    $region36: #{tpu_custom_call.1} parent=1 // pred_region
      _
    $region37: #{tpu_custom_call.1} parent=1 // pred_fallthru
      _
    %v36 = vld [vmem:[%s1] sm:$0xff]
    %v37 = vld [vmem:[%s1 + $0x8] sm:$0xff]
    %v38 = vld [vmem:[%s1 + $0x10] sm:$0xff]
    %v39 = vld [vmem:[%s1 + $0x18] sm:$0xff]
    %v40 = vld [vmem:[%s3] sm:$0xf]
    %v41 = vld [vmem:[%s3 + $0x4] sm:$0xf]
    %v42 = vld [vmem:[%s3 + $0x8] sm:$0xf]
    %v43 = vld [vmem:[%s3 + $0xc] sm:$0xf]
    %v44 = vld [vmem:[%s3 + $0x10] sm:$0xf]
    %v45 = vld [vmem:[%s3 + $0x14] sm:$0xf]
    %v46 = vld [vmem:[%s3 + $0x18] sm:$0xf]
    %v47 = vld [vmem:[%s3 + $0x1c] sm:$0xf]
    %v48 = vld [vmem:[%s3 + $0x20] sm:$0xf]
    %v49 = vld [vmem:[%s3 + $0x24] sm:$0xf]
    %v50 = vld [vmem:[%s3 + $0x28] sm:$0xf]
    %v51 = vld [vmem:[%s3 + $0x2c] sm:$0xf]
    %v52 = vld [vmem:[%s3 + $0x30] sm:$0xf]
    %v53 = vld [vmem:[%s3 + $0x34] sm:$0xf]
    %v54 = vld [vmem:[%s3 + $0x38] sm:$0xf]
    %v55 = vld [vmem:[%s3 + $0x3c] sm:$0xf]
    %v56 = vld [vmem:[%s3 + $0x40] sm:$0xf]
    %v57 = vld [vmem:[%s3 + $0x44] sm:$0xf]
    %v58 = vld [vmem:[%s3 + $0x48] sm:$0xf]
    %v59 = vld [vmem:[%s3 + $0x4c] sm:$0xf]
    %v60 = vld [vmem:[%s3 + $0x50] sm:$0xf]
    %v61 = vld [vmem:[%s3 + $0x54] sm:$0xf]
    %v62 = vld [vmem:[%s3 + $0x58] sm:$0xf]
    %v63 = vld [vmem:[%s3 + $0x5c] sm:$0xf]
    %v64 = vld [vmem:[%s3 + $0x60] sm:$0xf]
    %v65 = vld [vmem:[%s3 + $0x64] sm:$0xf]
    %v66 = vld [vmem:[%s3 + $0x68] sm:$0xf]
    %v67 = vld [vmem:[%s3 + $0x6c] sm:$0xf]
    %v68 = vld [vmem:[%s3 + $0x70] sm:$0xf]
    %v69 = vld [vmem:[%s3 + $0x74] sm:$0xf]
    %v70 = vld [vmem:[%s3 + $0x78] sm:$0xf]
    %v71 = vld [vmem:[%s3 + $0x7c] sm:$0xf]
    %v72 = vld [vmem:[%s5] sm:$0xf]
    %v73 = vld [vmem:[%s5 + $0x4] sm:$0xf]
    %v74 = vld [vmem:[%s5 + $0x8] sm:$0xf]
    %v75 = vld [vmem:[%s5 + $0xc] sm:$0xf]
    %v76 = vld [vmem:[%s5 + $0x10] sm:$0xf]
    %v77 = vld [vmem:[%s5 + $0x14] sm:$0xf]
    %v78 = vld [vmem:[%s5 + $0x18] sm:$0xf]
    %v79 = vld [vmem:[%s5 + $0x1c] sm:$0xf]
    %v80 = vld [vmem:[%s5 + $0x20] sm:$0xf]
    %v81 = vld [vmem:[%s5 + $0x24] sm:$0xf]
    %v82 = vld [vmem:[%s5 + $0x28] sm:$0xf]
    %v83 = vld [vmem:[%s5 + $0x2c] sm:$0xf]
    %v84 = vld [vmem:[%s5 + $0x30] sm:$0xf]
    %v85 = vld [vmem:[%s5 + $0x34] sm:$0xf]
    %v86 = vld [vmem:[%s5 + $0x38] sm:$0xf]
    %v87 = vld [vmem:[%s5 + $0x3c] sm:$0xf]
    %v88 = vld [vmem:[%s7] sm:$0x1]
    %v89 = vunpack.c.l.bf16 %v88
    %v90 = vld [vmem:[%s2] sm:$0x3]
    %v91 = vld [vmem:[%s4] sm:$0x1]
    %v92 = vld [vmem:[%s6] sm:$0x1]
    %v93 = vld [vmem:[#allocation2] sm:$0x1]
    %v94 = vld [vmem:[%s0] sm:$0xf]
    %v95 = vld [vmem:[%s0 + $0x4] sm:$0xf]
    %v96 = vld [vmem:[%s0 + $0x8] sm:$0xf]
    %v97 = vld [vmem:[%s0 + $0xc] sm:$0xf]
    %v98 = vld [vmem:[%s0 + $0x10] sm:$0xf]
    %v99 = vld [vmem:[%s0 + $0x14] sm:$0xf]
    %v100 = vld [vmem:[%s0 + $0x18] sm:$0xf]
    %v101 = vld [vmem:[%s0 + $0x1c] sm:$0xf]
    %v102 = vld [vmem:[%s0 + $0x20] sm:$0xf]
    %v103 = vld [vmem:[%s0 + $0x24] sm:$0xf]
    %v104 = vld [vmem:[%s0 + $0x28] sm:$0xf]
    %v105 = vld [vmem:[%s0 + $0x2c] sm:$0xf]
    %v106 = vld [vmem:[%s0 + $0x30] sm:$0xf]
    %v107 = vld [vmem:[%s0 + $0x34] sm:$0xf]
    %v108 = vld [vmem:[%s0 + $0x38] sm:$0xf]
    %v109 = vld [vmem:[%s0 + $0x3c] sm:$0xf]
    %v111 = vlaneseq
    %v112 = vshrl.u32 %v111, 7
    %v113 = vsub.s32 0, %v112
    %v114 = vrot.slane %v90, %v113
    %v115 = vlaneseq
    %v116 = vshrl.u32 %v115, 7
    %v117 = vsub.s32 1, %v116
    %v118 = vrot.slane %v90, %v117
    %v137 = vunpack.c.l.b16 %v94
    %v138 = vunpack.c.l.b16 %v95
    %v139 = vunpack.c.l.b16 %v96
    %v140 = vunpack.c.l.b16 %v97
    %v141 = vunpack.c.l.b16 %v98
    %v142 = vunpack.c.l.b16 %v99
    %v143 = vunpack.c.l.b16 %v100
    %v144 = vunpack.c.l.b16 %v101
    %v145 = vunpack.c.l.b16 %v102
    %v146 = vunpack.c.l.b16 %v103
    %v147 = vunpack.c.l.b16 %v104
    %v148 = vunpack.c.l.b16 %v105
    %v149 = vunpack.c.l.b16 %v106
    %v150 = vunpack.c.l.b16 %v107
    %v151 = vunpack.c.l.b16 %v108
    %v152 = vunpack.c.l.b16 %v109
    %v153 = vpack.c.b16 %v138, %v137
    %v154 = vpack.c.b16 %v140, %v139
    %v155 = vpack.c.b16 %v142, %v141
    %v156 = vpack.c.b16 %v144, %v143
    %v157 = vpack.c.b16 %v146, %v145
    %v158 = vpack.c.b16 %v148, %v147
    %v159 = vpack.c.b16 %v150, %v149
    %v160 = vpack.c.b16 %v152, %v151
    %v165 = vunpack.c.l.b16 %v36
    %v166 = vunpack.c.h.b16 %v36
    %v167 = vunpack.c.l.b16 %v37
    %v168 = vunpack.c.h.b16 %v37
    %v169 = vunpack.c.l.b16 %v38
    %v170 = vunpack.c.h.b16 %v38
    %v171 = vunpack.c.l.b16 %v39
    %v172 = vunpack.c.h.b16 %v39
    %v173 = vpack.c.b16 %v167, %v165
    %v174 = vpack.c.b16 %v168, %v166
    %v175 = vpack.c.b16 %v171, %v169
    %v176 = vpack.c.b16 %v172, %v170
    %vm181 = vcmask 261120
    %v183 = vsel %vm181, %v153, 0
    %v186 = vsel %vm181, %v154, 0
    %v189 = vsel %vm181, %v155, 0
    %v192 = vsel %vm181, %v156, 0
    %v195 = vsel %vm181, %v157, 0
    %v198 = vsel %vm181, %v158, 0
    %v201 = vsel %vm181, %v159, 0
    %v204 = vsel %vm181, %v160, 0
    %206 = vmatprep.subr.bf16.mxu0 %v174
    %207 = vmatpush1.bf16.msra.mxu0 %v173
    %208 = vmatprep.subr.bf16.mxu0 %v176
    %209 = vmatpush1.bf16.msra.mxu0 %v175
    %210 = vmatprep.subr.bf16.mxu0 0
    %211 = vmatpush1.bf16.msra.mxu0 0
    %212 = vmatprep.subr.bf16.mxu0 0
    %213 = vmatpush1.bf16.msra.mxu0 0
    %214 = vmatprep.subr.bf16.mxu0 0
    %215 = vmatpush1.bf16.msra.mxu0 0
    %216 = vmatprep.subr.bf16.mxu0 0
    %217 = vmatpush1.bf16.msra.mxu0 0
    %218 = vmatprep.subr.bf16.mxu0 0
    %219 = vmatpush1.bf16.msra.mxu0 0
    %220 = vmatprep.subr.bf16.mxu0 0
    %221 = vmatpush1.bf16.msra.mxu0 0
    %222 = vmatprep.subr.bf16.mxu0 0
    %223 = vmatpush1.bf16.msra.mxu0 0
    %224 = vmatprep.subr.bf16.mxu0 0
    %225 = vmatpush1.bf16.msra.mxu0 0
    %226 = vmatprep.subr.bf16.mxu0 0
    %227 = vmatpush1.bf16.msra.mxu0 0
    %228 = vmatprep.subr.bf16.mxu0 0
    %229 = vmatpush1.bf16.msra.mxu0 0
    %230 = vmatprep.subr.bf16.mxu0 0
    %231 = vmatpush1.bf16.msra.mxu0 0
    %232 = vmatprep.subr.bf16.mxu0 0
    %233 = vmatpush1.bf16.msra.mxu0 0
    %234 = vmatprep.subr.bf16.mxu0 0
    %235 = vmatpush1.bf16.msra.mxu0 0
    %236 = vmatprep.subr.bf16.mxu0 0
    %237 = vmatpush1.bf16.msra.mxu0 0
    %238 = vmatprep.mubr.bf16.mxu0 0
    %239 = vmatmul.mubr.bf16.gmra.mrb[0].mxu0 %v183
    %v240 = vpop.f32.mrb[0].mxu0
    %v241 = vadd.f32 %v114, %v240
    %v242 = vpop.f32.mrb[0].mxu0
    %v243 = vadd.f32 %v118, %v242
    %v244 = vpop.f32.mrb[0].mxu0
    %v245 = vadd.f32 %v114, %v244
    %v246 = vpop.f32.mrb[0].mxu0
    %v247 = vadd.f32 %v118, %v246
    %248 = vmatprep.mubr.bf16.mxu0 0
    %249 = vmatmul.mubr.bf16.gmra.mrb[0].mxu0 %v186
    %v250 = vpop.f32.mrb[0].mxu0
    %v251 = vadd.f32 %v114, %v250
    %v252 = vpop.f32.mrb[0].mxu0
    %v253 = vadd.f32 %v118, %v252
    %v254 = vpop.f32.mrb[0].mxu0
    %v255 = vadd.f32 %v114, %v254
    %v256 = vpop.f32.mrb[0].mxu0
    %v257 = vadd.f32 %v118, %v256
    %258 = vmatprep.mubr.bf16.mxu0 0
    %259 = vmatmul.mubr.bf16.gmra.mrb[0].mxu0 %v189
    %v260 = vpop.f32.mrb[0].mxu0
    %v261 = vadd.f32 %v114, %v260
    %v262 = vpop.f32.mrb[0].mxu0
    %v263 = vadd.f32 %v118, %v262
    %v264 = vpop.f32.mrb[0].mxu0
    %v265 = vadd.f32 %v114, %v264
    %v266 = vpop.f32.mrb[0].mxu0
    %v267 = vadd.f32 %v118, %v266
    %268 = vmatprep.mubr.bf16.mxu0 0
    %269 = vmatmul.mubr.bf16.gmra.mrb[0].mxu0 %v192
    %v270 = vpop.f32.mrb[0].mxu0
    %v271 = vadd.f32 %v114, %v270
    %v272 = vpop.f32.mrb[0].mxu0
    %v273 = vadd.f32 %v118, %v272
    %v274 = vpop.f32.mrb[0].mxu0
    %v275 = vadd.f32 %v114, %v274
    %v276 = vpop.f32.mrb[0].mxu0
    %v277 = vadd.f32 %v118, %v276
    %278 = vmatprep.mubr.bf16.mxu0 0
    %279 = vmatmul.mubr.bf16.gmra.mrb[0].mxu0 %v195
    %v280 = vpop.f32.mrb[0].mxu0
    %v281 = vadd.f32 %v114, %v280
    %v282 = vpop.f32.mrb[0].mxu0
    %v283 = vadd.f32 %v118, %v282
    %v284 = vpop.f32.mrb[0].mxu0
    %v285 = vadd.f32 %v114, %v284
    %v286 = vpop.f32.mrb[0].mxu0
    %v287 = vadd.f32 %v118, %v286
    %288 = vmatprep.mubr.bf16.mxu0 0
    %289 = vmatmul.mubr.bf16.gmra.mrb[0].mxu0 %v198
    %v290 = vpop.f32.mrb[0].mxu0
    %v291 = vadd.f32 %v114, %v290
    %v292 = vpop.f32.mrb[0].mxu0
    %v293 = vadd.f32 %v118, %v292
    %v294 = vpop.f32.mrb[0].mxu0
    %v295 = vadd.f32 %v114, %v294
    %v296 = vpop.f32.mrb[0].mxu0
    %v297 = vadd.f32 %v118, %v296
    %298 = vmatprep.mubr.bf16.mxu0 0
    %299 = vmatmul.mubr.bf16.gmra.mrb[0].mxu0 %v201
    %v300 = vpop.f32.mrb[0].mxu0
    %v301 = vadd.f32 %v114, %v300
    %v302 = vpop.f32.mrb[0].mxu0
    %v303 = vadd.f32 %v118, %v302
    %v304 = vpop.f32.mrb[0].mxu0
    %v305 = vadd.f32 %v114, %v304
    %v306 = vpop.f32.mrb[0].mxu0
    %v307 = vadd.f32 %v118, %v306
    %308 = vmatprep.mubr.bf16.mxu0 0
    %309 = vmatmul.mubr.bf16.gmra.mrb[0].mxu0 %v204
    %v310 = vpop.f32.mrb[0].mxu0
    %v311 = vadd.f32 %v114, %v310
    %v312 = vpop.f32.mrb[0].mxu0
    %v313 = vadd.f32 %v118, %v312
    %v314 = vpop.f32.mrb[0].mxu0
    %v315 = vadd.f32 %v114, %v314
    %v316 = vpop.f32.mrb[0].mxu0
    %v317 = vadd.f32 %v118, %v316
    %318 = vdwg.mxu0
    %v319 = vmax.f32 %v241, 0.0
    %v320 = vmax.f32 %v243, 0.0
    %v321 = vmax.f32 %v245, 0.0
    %v322 = vmax.f32 %v247, 0.0
    %v323 = vmax.f32 %v251, 0.0
    %v324 = vmax.f32 %v253, 0.0
    %v325 = vmax.f32 %v255, 0.0
    %v326 = vmax.f32 %v257, 0.0
    %v327 = vmax.f32 %v261, 0.0
    %v328 = vmax.f32 %v263, 0.0
    %v329 = vmax.f32 %v265, 0.0
    %v330 = vmax.f32 %v267, 0.0
    %v331 = vmax.f32 %v271, 0.0
    %v332 = vmax.f32 %v273, 0.0
    %v333 = vmax.f32 %v275, 0.0
    %v334 = vmax.f32 %v277, 0.0
    %v335 = vmax.f32 %v281, 0.0
    %v336 = vmax.f32 %v283, 0.0
    %v337 = vmax.f32 %v285, 0.0
    %v338 = vmax.f32 %v287, 0.0
    %v339 = vmax.f32 %v291, 0.0
    %v340 = vmax.f32 %v293, 0.0
    %v341 = vmax.f32 %v295, 0.0
    %v342 = vmax.f32 %v297, 0.0
    %v343 = vmax.f32 %v301, 0.0
    %v344 = vmax.f32 %v303, 0.0
    %v345 = vmax.f32 %v305, 0.0
    %v346 = vmax.f32 %v307, 0.0
    %v347 = vmax.f32 %v311, 0.0
    %v348 = vmax.f32 %v313, 0.0
    %v349 = vmax.f32 %v315, 0.0
    %v350 = vmax.f32 %v317, 0.0
    %v351 = vpack.c.bf16 %v321, %v319
    %v352 = vpack.c.bf16 %v322, %v320
    %v353 = vpack.c.bf16 %v325, %v323
    %v354 = vpack.c.bf16 %v326, %v324
    %v355 = vpack.c.bf16 %v329, %v327
    %v356 = vpack.c.bf16 %v330, %v328
    %v357 = vpack.c.bf16 %v333, %v331
    %v358 = vpack.c.bf16 %v334, %v332
    %v359 = vpack.c.bf16 %v337, %v335
    %v360 = vpack.c.bf16 %v338, %v336
    %v361 = vpack.c.bf16 %v341, %v339
    %v362 = vpack.c.bf16 %v342, %v340
    %v363 = vpack.c.bf16 %v345, %v343
    %v364 = vpack.c.bf16 %v346, %v344
    %v365 = vpack.c.bf16 %v349, %v347
    %v366 = vpack.c.bf16 %v350, %v348
    %v368 = vlaneseq
    %v369 = vshrl.u32 %v368, 7
    %v370 = vsub.s32 0, %v369
    %v371 = vrot.slane %v91, %v370
    %v405 = vunpack.c.l.b16 %v40
    %v406 = vunpack.c.l.b16 %v41
    %v407 = vunpack.c.l.b16 %v42
    %v408 = vunpack.c.l.b16 %v43
    %v409 = vunpack.c.l.b16 %v44
    %v410 = vunpack.c.l.b16 %v45
    %v411 = vunpack.c.l.b16 %v46
    %v412 = vunpack.c.l.b16 %v47
    %v413 = vunpack.c.l.b16 %v48
    %v414 = vunpack.c.l.b16 %v49
    %v415 = vunpack.c.l.b16 %v50
    %v416 = vunpack.c.l.b16 %v51
    %v417 = vunpack.c.l.b16 %v52
    %v418 = vunpack.c.l.b16 %v53
    %v419 = vunpack.c.l.b16 %v54
    %v420 = vunpack.c.l.b16 %v55
    %v421 = vunpack.c.l.b16 %v56
    %v422 = vunpack.c.l.b16 %v57
    %v423 = vunpack.c.l.b16 %v58
    %v424 = vunpack.c.l.b16 %v59
    %v425 = vunpack.c.l.b16 %v60
    %v426 = vunpack.c.l.b16 %v61
    %v427 = vunpack.c.l.b16 %v62
    %v428 = vunpack.c.l.b16 %v63
    %v429 = vunpack.c.l.b16 %v64
    %v430 = vunpack.c.l.b16 %v65
    %v431 = vunpack.c.l.b16 %v66
    %v432 = vunpack.c.l.b16 %v67
    %v433 = vunpack.c.l.b16 %v68
    %v434 = vunpack.c.l.b16 %v69
    %v435 = vunpack.c.l.b16 %v70
    %v436 = vunpack.c.l.b16 %v71
    %v437 = vpack.c.b16 %v406, %v405
    %v438 = vpack.c.b16 %v408, %v407
    %v439 = vpack.c.b16 %v410, %v409
    %v440 = vpack.c.b16 %v412, %v411
    %v441 = vpack.c.b16 %v414, %v413
    %v442 = vpack.c.b16 %v416, %v415
    %v443 = vpack.c.b16 %v418, %v417
    %v444 = vpack.c.b16 %v420, %v419
    %v445 = vpack.c.b16 %v422, %v421
    %v446 = vpack.c.b16 %v424, %v423
    %v447 = vpack.c.b16 %v426, %v425
    %v448 = vpack.c.b16 %v428, %v427
    %v449 = vpack.c.b16 %v430, %v429
    %v450 = vpack.c.b16 %v432, %v431
    %v451 = vpack.c.b16 %v434, %v433
    %v452 = vpack.c.b16 %v436, %v435
    %469 = vmatprep.subr.bf16.mxu0 0
    %470 = vmatpush1.bf16.msra.mxu0 %v437
    %471 = vmatprep.subr.bf16.mxu0 0
    %472 = vmatpush1.bf16.msra.mxu0 %v438
    %473 = vmatprep.subr.bf16.mxu0 0
    %474 = vmatpush1.bf16.msra.mxu0 %v439
    %475 = vmatprep.subr.bf16.mxu0 0
    %476 = vmatpush1.bf16.msra.mxu0 %v440
    %477 = vmatprep.subr.bf16.mxu0 0
    %478 = vmatpush1.bf16.msra.mxu0 %v441
    %479 = vmatprep.subr.bf16.mxu0 0
    %480 = vmatpush1.bf16.msra.mxu0 %v442
    %481 = vmatprep.subr.bf16.mxu0 0
    %482 = vmatpush1.bf16.msra.mxu0 %v443
    %483 = vmatprep.subr.bf16.mxu0 0
    %484 = vmatpush1.bf16.msra.mxu0 %v444
    %485 = vmatprep.subr.bf16.mxu0 0
    %486 = vmatpush1.bf16.msra.mxu0 %v445
    %487 = vmatprep.subr.bf16.mxu0 0
    %488 = vmatpush1.bf16.msra.mxu0 %v446
    %489 = vmatprep.subr.bf16.mxu0 0
    %490 = vmatpush1.bf16.msra.mxu0 %v447
    %491 = vmatprep.subr.bf16.mxu0 0
    %492 = vmatpush1.bf16.msra.mxu0 %v448
    %493 = vmatprep.subr.bf16.mxu0 0
    %494 = vmatpush1.bf16.msra.mxu0 %v449
    %495 = vmatprep.subr.bf16.mxu0 0
    %496 = vmatpush1.bf16.msra.mxu0 %v450
    %497 = vmatprep.subr.bf16.mxu0 0
    %498 = vmatpush1.bf16.msra.mxu0 %v451
    %499 = vmatprep.subr.bf16.mxu0 0
    %500 = vmatpush1.bf16.msra.mxu0 %v452
    %501 = vmatprep.mubr.bf16.mxu0 %v352
    %502 = vmatmul.mubr.bf16.gmra.mrb[0].mxu0 %v351
    %v503 = vpop.f32.mrb[0].mxu0
    %v504 = vadd.f32 %v371, %v503
    %v505 = vpop.f32.mrb[0].mxu0
    %v506 = vpop.f32.mrb[0].mxu0
    %v507 = vadd.f32 %v371, %v506
    %v508 = vpop.f32.mrb[0].mxu0
    %509 = vmatprep.mubr.bf16.mxu0 %v354
    %510 = vmatmul.mubr.bf16.gmra.mrb[0].mxu0 %v353
    %v511 = vpop.f32.mrb[0].mxu0
    %v512 = vadd.f32 %v371, %v511
    %v513 = vpop.f32.mrb[0].mxu0
    %v514 = vpop.f32.mrb[0].mxu0
    %v515 = vadd.f32 %v371, %v514
    %v516 = vpop.f32.mrb[0].mxu0
    %517 = vmatprep.mubr.bf16.mxu0 %v356
    %518 = vmatmul.mubr.bf16.gmra.mrb[0].mxu0 %v355
    %v519 = vpop.f32.mrb[0].mxu0
    %v520 = vadd.f32 %v371, %v519
    %v521 = vpop.f32.mrb[0].mxu0
    %v522 = vpop.f32.mrb[0].mxu0
    %v523 = vadd.f32 %v371, %v522
    %v524 = vpop.f32.mrb[0].mxu0
    %525 = vmatprep.mubr.bf16.mxu0 %v358
    %526 = vmatmul.mubr.bf16.gmra.mrb[0].mxu0 %v357
    %v527 = vpop.f32.mrb[0].mxu0
    %v528 = vadd.f32 %v371, %v527
    %v529 = vpop.f32.mrb[0].mxu0
    %v530 = vpop.f32.mrb[0].mxu0
    %v531 = vadd.f32 %v371, %v530
    %v532 = vpop.f32.mrb[0].mxu0
    %533 = vmatprep.mubr.bf16.mxu0 %v360
    %534 = vmatmul.mubr.bf16.gmra.mrb[0].mxu0 %v359
    %v535 = vpop.f32.mrb[0].mxu0
    %v536 = vadd.f32 %v371, %v535
    %v537 = vpop.f32.mrb[0].mxu0
    %v538 = vpop.f32.mrb[0].mxu0
    %v539 = vadd.f32 %v371, %v538
    %v540 = vpop.f32.mrb[0].mxu0
    %541 = vmatprep.mubr.bf16.mxu0 %v362
    %542 = vmatmul.mubr.bf16.gmra.mrb[0].mxu0 %v361
    %v543 = vpop.f32.mrb[0].mxu0
    %v544 = vadd.f32 %v371, %v543
    %v545 = vpop.f32.mrb[0].mxu0
    %v546 = vpop.f32.mrb[0].mxu0
    %v547 = vadd.f32 %v371, %v546
    %v548 = vpop.f32.mrb[0].mxu0
    %549 = vmatprep.mubr.bf16.mxu0 %v364
    %550 = vmatmul.mubr.bf16.gmra.mrb[0].mxu0 %v363
    %v551 = vpop.f32.mrb[0].mxu0
    %v552 = vadd.f32 %v371, %v551
    %v553 = vpop.f32.mrb[0].mxu0
    %v554 = vpop.f32.mrb[0].mxu0
    %v555 = vadd.f32 %v371, %v554
    %v556 = vpop.f32.mrb[0].mxu0
    %557 = vmatprep.mubr.bf16.mxu0 %v366
    %558 = vmatmul.mubr.bf16.gmra.mrb[0].mxu0 %v365
    %v559 = vpop.f32.mrb[0].mxu0
    %v560 = vadd.f32 %v371, %v559
    %v561 = vpop.f32.mrb[0].mxu0
    %v562 = vpop.f32.mrb[0].mxu0
    %v563 = vadd.f32 %v371, %v562
    %v564 = vpop.f32.mrb[0].mxu0
    %565 = vdwg.mxu0
    %v566 = vmax.f32 %v504, 0.0
    %v567 = vmax.f32 %v507, 0.0
    %v568 = vmax.f32 %v512, 0.0
    %v569 = vmax.f32 %v515, 0.0
    %v570 = vmax.f32 %v520, 0.0
    %v571 = vmax.f32 %v523, 0.0
    %v572 = vmax.f32 %v528, 0.0
    %v573 = vmax.f32 %v531, 0.0
    %v574 = vmax.f32 %v536, 0.0
    %v575 = vmax.f32 %v539, 0.0
    %v576 = vmax.f32 %v544, 0.0
    %v577 = vmax.f32 %v547, 0.0
    %v578 = vmax.f32 %v552, 0.0
    %v579 = vmax.f32 %v555, 0.0
    %v580 = vmax.f32 %v560, 0.0
    %v581 = vmax.f32 %v563, 0.0
    %v582 = vpack.c.bf16 %v567, %v566
    %v583 = vpack.c.bf16 %v569, %v568
    %v584 = vpack.c.bf16 %v571, %v570
    %v585 = vpack.c.bf16 %v573, %v572
    %v586 = vpack.c.bf16 %v575, %v574
    %v587 = vpack.c.bf16 %v577, %v576
    %v588 = vpack.c.bf16 %v579, %v578
    %v589 = vpack.c.bf16 %v581, %v580
    %v591 = vlaneseq
    %v592 = vshrl.u32 %v591, 7
    %v593 = vsub.s32 0, %v592
    %v594 = vrot.slane %v92, %v593
    %v612 = vunpack.c.l.b16 %v72
    %v613 = vunpack.c.l.b16 %v73
    %v614 = vunpack.c.l.b16 %v74
    %v615 = vunpack.c.l.b16 %v75
    %v616 = vunpack.c.l.b16 %v76
    %v617 = vunpack.c.l.b16 %v77
    %v618 = vunpack.c.l.b16 %v78
    %v619 = vunpack.c.l.b16 %v79
    %v620 = vunpack.c.l.b16 %v80
    %v621 = vunpack.c.l.b16 %v81
    %v622 = vunpack.c.l.b16 %v82
    %v623 = vunpack.c.l.b16 %v83
    %v624 = vunpack.c.l.b16 %v84
    %v625 = vunpack.c.l.b16 %v85
    %v626 = vunpack.c.l.b16 %v86
    %v627 = vunpack.c.l.b16 %v87
    %v628 = vpack.c.b16 %v613, %v612
    %v629 = vpack.c.b16 %v615, %v614
    %v630 = vpack.c.b16 %v617, %v616
    %v631 = vpack.c.b16 %v619, %v618
    %v632 = vpack.c.b16 %v621, %v620
    %v633 = vpack.c.b16 %v623, %v622
    %v634 = vpack.c.b16 %v625, %v624
    %v635 = vpack.c.b16 %v627, %v626
    %644 = vmatprep.subr.bf16.mxu0 0
    %645 = vmatpush1.bf16.msra.mxu0 %v628
    %646 = vmatprep.subr.bf16.mxu0 0
    %647 = vmatpush1.bf16.msra.mxu0 %v629
    %648 = vmatprep.subr.bf16.mxu0 0
    %649 = vmatpush1.bf16.msra.mxu0 %v630
    %650 = vmatprep.subr.bf16.mxu0 0
    %651 = vmatpush1.bf16.msra.mxu0 %v631
    %652 = vmatprep.subr.bf16.mxu0 0
    %653 = vmatpush1.bf16.msra.mxu0 %v632
    %654 = vmatprep.subr.bf16.mxu0 0
    %655 = vmatpush1.bf16.msra.mxu0 %v633
    %656 = vmatprep.subr.bf16.mxu0 0
    %657 = vmatpush1.bf16.msra.mxu0 %v634
    %658 = vmatprep.subr.bf16.mxu0 0
    %659 = vmatpush1.bf16.msra.mxu0 %v635
    %660 = vmatprep.subr.bf16.mxu0 0
    %661 = vmatpush1.bf16.msra.mxu0 0
    %662 = vmatprep.subr.bf16.mxu0 0
    %663 = vmatpush1.bf16.msra.mxu0 0
    %664 = vmatprep.subr.bf16.mxu0 0
    %665 = vmatpush1.bf16.msra.mxu0 0
    %666 = vmatprep.subr.bf16.mxu0 0
    %667 = vmatpush1.bf16.msra.mxu0 0
    %668 = vmatprep.subr.bf16.mxu0 0
    %669 = vmatpush1.bf16.msra.mxu0 0
    %670 = vmatprep.subr.bf16.mxu0 0
    %671 = vmatpush1.bf16.msra.mxu0 0
    %672 = vmatprep.subr.bf16.mxu0 0
    %673 = vmatpush1.bf16.msra.mxu0 0
    %674 = vmatprep.subr.bf16.mxu0 0
    %675 = vmatpush1.bf16.msra.mxu0 0
    %676 = vmatprep.mubr.bf16.mxu0 0
    %677 = vmatmul.mubr.bf16.gmra.mrb[0].mxu0 %v582
    %v678 = vpop.f32.mrb[0].mxu0
    %v679 = vadd.f32 %v594, %v678
    %v680 = vpop.f32.mrb[0].mxu0
    %v681 = vpop.f32.mrb[0].mxu0
    %v682 = vadd.f32 %v594, %v681
    %v683 = vpop.f32.mrb[0].mxu0
    %684 = vmatprep.mubr.bf16.mxu0 0
    %685 = vmatmul.mubr.bf16.gmra.mrb[0].mxu0 %v583
    %v686 = vpop.f32.mrb[0].mxu0
    %v687 = vadd.f32 %v594, %v686
    %v688 = vpop.f32.mrb[0].mxu0
    %v689 = vpop.f32.mrb[0].mxu0
    %v690 = vadd.f32 %v594, %v689
    %v691 = vpop.f32.mrb[0].mxu0
    %692 = vmatprep.mubr.bf16.mxu0 0
    %693 = vmatmul.mubr.bf16.gmra.mrb[0].mxu0 %v584
    %v694 = vpop.f32.mrb[0].mxu0
    %v695 = vadd.f32 %v594, %v694
    %v696 = vpop.f32.mrb[0].mxu0
    %v697 = vpop.f32.mrb[0].mxu0
    %v698 = vadd.f32 %v594, %v697
    %v699 = vpop.f32.mrb[0].mxu0
    %700 = vmatprep.mubr.bf16.mxu0 0
    %701 = vmatmul.mubr.bf16.gmra.mrb[0].mxu0 %v585
    %v702 = vpop.f32.mrb[0].mxu0
    %v703 = vadd.f32 %v594, %v702
    %v704 = vpop.f32.mrb[0].mxu0
    %v705 = vpop.f32.mrb[0].mxu0
    %v706 = vadd.f32 %v594, %v705
    %v707 = vpop.f32.mrb[0].mxu0
    %708 = vmatprep.mubr.bf16.mxu0 0
    %709 = vmatmul.mubr.bf16.gmra.mrb[0].mxu0 %v586
    %v710 = vpop.f32.mrb[0].mxu0
    %v711 = vadd.f32 %v594, %v710
    %v712 = vpop.f32.mrb[0].mxu0
    %v713 = vpop.f32.mrb[0].mxu0
    %v714 = vadd.f32 %v594, %v713
    %v715 = vpop.f32.mrb[0].mxu0
    %716 = vmatprep.mubr.bf16.mxu0 0
    %717 = vmatmul.mubr.bf16.gmra.mrb[0].mxu0 %v587
    %v718 = vpop.f32.mrb[0].mxu0
    %v719 = vadd.f32 %v594, %v718
    %v720 = vpop.f32.mrb[0].mxu0
    %v721 = vpop.f32.mrb[0].mxu0
    %v722 = vadd.f32 %v594, %v721
    %v723 = vpop.f32.mrb[0].mxu0
    %724 = vmatprep.mubr.bf16.mxu0 0
    %725 = vmatmul.mubr.bf16.gmra.mrb[0].mxu0 %v588
    %v726 = vpop.f32.mrb[0].mxu0
    %v727 = vadd.f32 %v594, %v726
    %v728 = vpop.f32.mrb[0].mxu0
    %v729 = vpop.f32.mrb[0].mxu0
    %v730 = vadd.f32 %v594, %v729
    %v731 = vpop.f32.mrb[0].mxu0
    %732 = vmatprep.mubr.bf16.mxu0 0
    %733 = vmatmul.mubr.bf16.gmra.mrb[0].mxu0 %v589
    %v734 = vpop.f32.mrb[0].mxu0
    %v735 = vadd.f32 %v594, %v734
    %v736 = vpop.f32.mrb[0].mxu0
    %v737 = vpop.f32.mrb[0].mxu0
    %v738 = vadd.f32 %v594, %v737
    %v739 = vpop.f32.mrb[0].mxu0
    %740 = vdwg.mxu0
    %v741 = vmax.f32 %v679, 0.0
    %v742 = vmax.f32 %v682, 0.0
    %v743 = vmax.f32 %v687, 0.0
    %v744 = vmax.f32 %v690, 0.0
    %v745 = vmax.f32 %v695, 0.0
    %v746 = vmax.f32 %v698, 0.0
    %v747 = vmax.f32 %v703, 0.0
    %v748 = vmax.f32 %v706, 0.0
    %v749 = vmax.f32 %v711, 0.0
    %v750 = vmax.f32 %v714, 0.0
    %v751 = vmax.f32 %v719, 0.0
    %v752 = vmax.f32 %v722, 0.0
    %v753 = vmax.f32 %v727, 0.0
    %v754 = vmax.f32 %v730, 0.0
    %v755 = vmax.f32 %v735, 0.0
    %v756 = vmax.f32 %v738, 0.0
    %v757 = vpack.c.bf16 %v742, %v741
    %v758 = vpack.c.bf16 %v744, %v743
    %v759 = vpack.c.bf16 %v746, %v745
    %v760 = vpack.c.bf16 %v748, %v747
    %v761 = vpack.c.bf16 %v750, %v749
    %v762 = vpack.c.bf16 %v752, %v751
    %v763 = vpack.c.bf16 %v754, %v753
    %v764 = vpack.c.bf16 %v756, %v755
    %v765 = vunpack.c.l.bf16 %v757
    %v766 = vunpack.c.h.bf16 %v757
    %v767 = vunpack.c.l.bf16 %v758
    %v768 = vunpack.c.h.bf16 %v758
    %v769 = vunpack.c.l.bf16 %v759
    %v770 = vunpack.c.h.bf16 %v759
    %v771 = vunpack.c.l.bf16 %v760
    %v772 = vunpack.c.h.bf16 %v760
    %v773 = vunpack.c.l.bf16 %v761
    %v774 = vunpack.c.h.bf16 %v761
    %v775 = vunpack.c.l.bf16 %v762
    %v776 = vunpack.c.h.bf16 %v762
    %v777 = vunpack.c.l.bf16 %v763
    %v778 = vunpack.c.h.bf16 %v763
    %v779 = vunpack.c.l.bf16 %v764
    %v780 = vunpack.c.h.bf16 %v764
    %v781 = vlaneseq
    %v782 = vshrl.u32 %v781, 7
    %v783 = vsub.s32 0, %v782
    %v784 = vrot.slane %v89, %v783
    %v785 = vmul.f32 %v765, %v784
    %v786 = vmul.f32 %v766, %v784
    %v787 = vmul.f32 %v767, %v784
    %v788 = vmul.f32 %v768, %v784
    %v789 = vmul.f32 %v769, %v784
    %v790 = vmul.f32 %v770, %v784
    %v791 = vmul.f32 %v771, %v784
    %v792 = vmul.f32 %v772, %v784
    %v793 = vmul.f32 %v773, %v784
    %v794 = vmul.f32 %v774, %v784
    %v795 = vmul.f32 %v775, %v784
    %v796 = vmul.f32 %v776, %v784
    %v797 = vmul.f32 %v777, %v784
    %v798 = vmul.f32 %v778, %v784
    %v799 = vmul.f32 %v779, %v784
    %v800 = vmul.f32 %v780, %v784
    %vm801 = vcmask 523264
    %v802 = vsel %vm801, %v785, 0.0
    %803 = vadd.xlane.f32.xlu0 %v802
    %v804 = vpop.xlane.xlu0 %803
    %v805 = vsel %vm801, %v786, 0.0
    %806 = vadd.xlane.f32.xlu0 %v805
    %v807 = vpop.xlane.xlu0 %806
    %v808 = vsel %vm801, %v787, 0.0
    %809 = vadd.xlane.f32.xlu0 %v808
    %v810 = vpop.xlane.xlu0 %809
    %v811 = vsel %vm801, %v788, 0.0
    %812 = vadd.xlane.f32.xlu0 %v811
    %v813 = vpop.xlane.xlu0 %812
    %v814 = vsel %vm801, %v789, 0.0
    %815 = vadd.xlane.f32.xlu0 %v814
    %v816 = vpop.xlane.xlu0 %815
    %v817 = vsel %vm801, %v790, 0.0
    %818 = vadd.xlane.f32.xlu0 %v817
    %v819 = vpop.xlane.xlu0 %818
    %v820 = vsel %vm801, %v791, 0.0
    %821 = vadd.xlane.f32.xlu0 %v820
    %v822 = vpop.xlane.xlu0 %821
    %v823 = vsel %vm801, %v792, 0.0
    %824 = vadd.xlane.f32.xlu0 %v823
    %v825 = vpop.xlane.xlu0 %824
    %v826 = vsel %vm801, %v793, 0.0
    %827 = vadd.xlane.f32.xlu0 %v826
    %v828 = vpop.xlane.xlu0 %827
    %v829 = vsel %vm801, %v794, 0.0
    %830 = vadd.xlane.f32.xlu0 %v829
    %v831 = vpop.xlane.xlu0 %830
    %v832 = vsel %vm801, %v795, 0.0
    %833 = vadd.xlane.f32.xlu0 %v832
    %v834 = vpop.xlane.xlu0 %833
    %v835 = vsel %vm801, %v796, 0.0
    %836 = vadd.xlane.f32.xlu0 %v835
    %v837 = vpop.xlane.xlu0 %836
    %v838 = vsel %vm801, %v797, 0.0
    %839 = vadd.xlane.f32.xlu0 %v838
    %v840 = vpop.xlane.xlu0 %839
    %v841 = vsel %vm801, %v798, 0.0
    %842 = vadd.xlane.f32.xlu0 %v841
    %v843 = vpop.xlane.xlu0 %842
    %v844 = vsel %vm801, %v799, 0.0
    %845 = vadd.xlane.f32.xlu0 %v844
    %v846 = vpop.xlane.xlu0 %845
    %v847 = vsel %vm801, %v800, 0.0
    %848 = vadd.xlane.f32.xlu0 %v847
    %v849 = vpop.xlane.xlu0 %848
    %851 = vset.pattern.permute.xlu0 0
    %852 = vperm.xlu0 %851, %v93
    %v853 = vpop.permute.xlu0 %852
    %v855 = vlaneseq
    %v856 = vshrl.u32 %v855, 7
    %v857 = vsub.s32 0, %v856
    %v858 = vrot.slane %v853, %v857
    %v859 = vadd.f32 %v804, %v858
    %v860 = vadd.f32 %v807, %v858
    %v861 = vadd.f32 %v810, %v858
    %v862 = vadd.f32 %v813, %v858
    %v863 = vadd.f32 %v816, %v858
    %v864 = vadd.f32 %v819, %v858
    %v865 = vadd.f32 %v822, %v858
    %v866 = vadd.f32 %v825, %v858
    %v867 = vadd.f32 %v828, %v858
    %v868 = vadd.f32 %v831, %v858
    %v869 = vadd.f32 %v834, %v858
    %v870 = vadd.f32 %v837, %v858
    %v871 = vadd.f32 %v840, %v858
    %v872 = vadd.f32 %v843, %v858
    %v873 = vadd.f32 %v846, %v858
    %v874 = vadd.f32 %v849, %v858
    %v891 = vlaneseq
    %v892 = vshrl.u32 %v891, 7
    %v893 = vsub.s32 0, %v892
    %v894 = vrot.slane %v859, %v893
    %v895 = vlaneseq
    %v896 = vshrl.u32 %v895, 7
    %v897 = vsub.s32 1, %v896
    %v898 = vrot.slane %v859, %v897
    %v899 = vlaneseq
    %v900 = vshrl.u32 %v899, 7
    %v901 = vsub.s32 2, %v900
    %v902 = vrot.slane %v859, %v901
    %v903 = vlaneseq
    %v904 = vshrl.u32 %v903, 7
    %v905 = vsub.s32 3, %v904
    %v906 = vrot.slane %v859, %v905
    %v907 = vlaneseq
    %v908 = vshrl.u32 %v907, 7
    %v909 = vsub.s32 4, %v908
    %v910 = vrot.slane %v859, %v909
    %v911 = vlaneseq
    %v912 = vshrl.u32 %v911, 7
    %v913 = vsub.s32 5, %v912
    %v914 = vrot.slane %v859, %v913
    %v915 = vlaneseq
    %v916 = vshrl.u32 %v915, 7
    %v917 = vsub.s32 6, %v916
    %v918 = vrot.slane %v859, %v917
    %v919 = vlaneseq
    %v920 = vshrl.u32 %v919, 7
    %v921 = vsub.s32 7, %v920
    %v922 = vrot.slane %v859, %v921
    %v923 = vlaneseq
    %v924 = vshrl.u32 %v923, 7
    %v925 = vsub.s32 0, %v924
    %v926 = vrot.slane %v860, %v925
    %v927 = vlaneseq
    %v928 = vshrl.u32 %v927, 7
    %v929 = vsub.s32 1, %v928
    %v930 = vrot.slane %v860, %v929
    %v931 = vlaneseq
    %v932 = vshrl.u32 %v931, 7
    %v933 = vsub.s32 2, %v932
    %v934 = vrot.slane %v860, %v933
    %v935 = vlaneseq
    %v936 = vshrl.u32 %v935, 7
    %v937 = vsub.s32 3, %v936
    %v938 = vrot.slane %v860, %v937
    %v939 = vlaneseq
    %v940 = vshrl.u32 %v939, 7
    %v941 = vsub.s32 4, %v940
    %v942 = vrot.slane %v860, %v941
    %v943 = vlaneseq
    %v944 = vshrl.u32 %v943, 7
    %v945 = vsub.s32 5, %v944
    %v946 = vrot.slane %v860, %v945
    %v947 = vlaneseq
    %v948 = vshrl.u32 %v947, 7
    %v949 = vsub.s32 6, %v948
    %v950 = vrot.slane %v860, %v949
    %v951 = vlaneseq
    %v952 = vshrl.u32 %v951, 7
    %v953 = vsub.s32 7, %v952
    %v954 = vrot.slane %v860, %v953
    %v955 = vlaneseq
    %v956 = vshrl.u32 %v955, 7
    %v957 = vsub.s32 0, %v956
    %v958 = vrot.slane %v861, %v957
    %v959 = vlaneseq
    %v960 = vshrl.u32 %v959, 7
    %v961 = vsub.s32 1, %v960
    %v962 = vrot.slane %v861, %v961
    %v963 = vlaneseq
    %v964 = vshrl.u32 %v963, 7
    %v965 = vsub.s32 2, %v964
    %v966 = vrot.slane %v861, %v965
    %v967 = vlaneseq
    %v968 = vshrl.u32 %v967, 7
    %v969 = vsub.s32 3, %v968
    %v970 = vrot.slane %v861, %v969
    %v971 = vlaneseq
    %v972 = vshrl.u32 %v971, 7
    %v973 = vsub.s32 4, %v972
    %v974 = vrot.slane %v861, %v973
    %v975 = vlaneseq
    %v976 = vshrl.u32 %v975, 7
    %v977 = vsub.s32 5, %v976
    %v978 = vrot.slane %v861, %v977
    %v979 = vlaneseq
    %v980 = vshrl.u32 %v979, 7
    %v981 = vsub.s32 6, %v980
    %v982 = vrot.slane %v861, %v981
    %v983 = vlaneseq
    %v984 = vshrl.u32 %v983, 7
    %v985 = vsub.s32 7, %v984
    %v986 = vrot.slane %v861, %v985
    %v987 = vlaneseq
    %v988 = vshrl.u32 %v987, 7
    %v989 = vsub.s32 0, %v988
    %v990 = vrot.slane %v862, %v989
    %v991 = vlaneseq
    %v992 = vshrl.u32 %v991, 7
    %v993 = vsub.s32 1, %v992
    %v994 = vrot.slane %v862, %v993
    %v995 = vlaneseq
    %v996 = vshrl.u32 %v995, 7
    %v997 = vsub.s32 2, %v996
    %v998 = vrot.slane %v862, %v997
    %v999 = vlaneseq
    %v1000 = vshrl.u32 %v999, 7
    %v1001 = vsub.s32 3, %v1000
    %v1002 = vrot.slane %v862, %v1001
    %v1003 = vlaneseq
    %v1004 = vshrl.u32 %v1003, 7
    %v1005 = vsub.s32 4, %v1004
    %v1006 = vrot.slane %v862, %v1005
    %v1007 = vlaneseq
    %v1008 = vshrl.u32 %v1007, 7
    %v1009 = vsub.s32 5, %v1008
    %v1010 = vrot.slane %v862, %v1009
    %v1011 = vlaneseq
    %v1012 = vshrl.u32 %v1011, 7
    %v1013 = vsub.s32 6, %v1012
    %v1014 = vrot.slane %v862, %v1013
    %v1015 = vlaneseq
    %v1016 = vshrl.u32 %v1015, 7
    %v1017 = vsub.s32 7, %v1016
    %v1018 = vrot.slane %v862, %v1017
    %v1019 = vlaneseq
    %v1020 = vshrl.u32 %v1019, 7
    %v1021 = vsub.s32 0, %v1020
    %v1022 = vrot.slane %v863, %v1021
    %v1023 = vlaneseq
    %v1024 = vshrl.u32 %v1023, 7
    %v1025 = vsub.s32 1, %v1024
    %v1026 = vrot.slane %v863, %v1025
    %v1027 = vlaneseq
    %v1028 = vshrl.u32 %v1027, 7
    %v1029 = vsub.s32 2, %v1028
    %v1030 = vrot.slane %v863, %v1029
    %v1031 = vlaneseq
    %v1032 = vshrl.u32 %v1031, 7
    %v1033 = vsub.s32 3, %v1032
    %v1034 = vrot.slane %v863, %v1033
    %v1035 = vlaneseq
    %v1036 = vshrl.u32 %v1035, 7
    %v1037 = vsub.s32 4, %v1036
    %v1038 = vrot.slane %v863, %v1037
    %v1039 = vlaneseq
    %v1040 = vshrl.u32 %v1039, 7
    %v1041 = vsub.s32 5, %v1040
    %v1042 = vrot.slane %v863, %v1041
    %v1043 = vlaneseq
    %v1044 = vshrl.u32 %v1043, 7
    %v1045 = vsub.s32 6, %v1044
    %v1046 = vrot.slane %v863, %v1045
    %v1047 = vlaneseq
    %v1048 = vshrl.u32 %v1047, 7
    %v1049 = vsub.s32 7, %v1048
    %v1050 = vrot.slane %v863, %v1049
    %v1051 = vlaneseq
    %v1052 = vshrl.u32 %v1051, 7
    %v1053 = vsub.s32 0, %v1052
    %v1054 = vrot.slane %v864, %v1053
    %v1055 = vlaneseq
    %v1056 = vshrl.u32 %v1055, 7
    %v1057 = vsub.s32 1, %v1056
    %v1058 = vrot.slane %v864, %v1057
    %v1059 = vlaneseq
    %v1060 = vshrl.u32 %v1059, 7
    %v1061 = vsub.s32 2, %v1060
    %v1062 = vrot.slane %v864, %v1061
    %v1063 = vlaneseq
    %v1064 = vshrl.u32 %v1063, 7
    %v1065 = vsub.s32 3, %v1064
    %v1066 = vrot.slane %v864, %v1065
    %v1067 = vlaneseq
    %v1068 = vshrl.u32 %v1067, 7
    %v1069 = vsub.s32 4, %v1068
    %v1070 = vrot.slane %v864, %v1069
    %v1071 = vlaneseq
    %v1072 = vshrl.u32 %v1071, 7
    %v1073 = vsub.s32 5, %v1072
    %v1074 = vrot.slane %v864, %v1073
    %v1075 = vlaneseq
    %v1076 = vshrl.u32 %v1075, 7
    %v1077 = vsub.s32 6, %v1076
    %v1078 = vrot.slane %v864, %v1077
    %v1079 = vlaneseq
    %v1080 = vshrl.u32 %v1079, 7
    %v1081 = vsub.s32 7, %v1080
    %v1082 = vrot.slane %v864, %v1081
    %v1083 = vlaneseq
    %v1084 = vshrl.u32 %v1083, 7
    %v1085 = vsub.s32 0, %v1084
    %v1086 = vrot.slane %v865, %v1085
    %v1087 = vlaneseq
    %v1088 = vshrl.u32 %v1087, 7
    %v1089 = vsub.s32 1, %v1088
    %v1090 = vrot.slane %v865, %v1089
    %v1091 = vlaneseq
    %v1092 = vshrl.u32 %v1091, 7
    %v1093 = vsub.s32 2, %v1092
    %v1094 = vrot.slane %v865, %v1093
    %v1095 = vlaneseq
    %v1096 = vshrl.u32 %v1095, 7
    %v1097 = vsub.s32 3, %v1096
    %v1098 = vrot.slane %v865, %v1097
    %v1099 = vlaneseq
    %v1100 = vshrl.u32 %v1099, 7
    %v1101 = vsub.s32 4, %v1100
    %v1102 = vrot.slane %v865, %v1101
    %v1103 = vlaneseq
    %v1104 = vshrl.u32 %v1103, 7
    %v1105 = vsub.s32 5, %v1104
    %v1106 = vrot.slane %v865, %v1105
    %v1107 = vlaneseq
    %v1108 = vshrl.u32 %v1107, 7
    %v1109 = vsub.s32 6, %v1108
    %v1110 = vrot.slane %v865, %v1109
    %v1111 = vlaneseq
    %v1112 = vshrl.u32 %v1111, 7
    %v1113 = vsub.s32 7, %v1112
    %v1114 = vrot.slane %v865, %v1113
    %v1115 = vlaneseq
    %v1116 = vshrl.u32 %v1115, 7
    %v1117 = vsub.s32 0, %v1116
    %v1118 = vrot.slane %v866, %v1117
    %v1119 = vlaneseq
    %v1120 = vshrl.u32 %v1119, 7
    %v1121 = vsub.s32 1, %v1120
    %v1122 = vrot.slane %v866, %v1121
    %v1123 = vlaneseq
    %v1124 = vshrl.u32 %v1123, 7
    %v1125 = vsub.s32 2, %v1124
    %v1126 = vrot.slane %v866, %v1125
    %v1127 = vlaneseq
    %v1128 = vshrl.u32 %v1127, 7
    %v1129 = vsub.s32 3, %v1128
    %v1130 = vrot.slane %v866, %v1129
    %v1131 = vlaneseq
    %v1132 = vshrl.u32 %v1131, 7
    %v1133 = vsub.s32 4, %v1132
    %v1134 = vrot.slane %v866, %v1133
    %v1135 = vlaneseq
    %v1136 = vshrl.u32 %v1135, 7
    %v1137 = vsub.s32 5, %v1136
    %v1138 = vrot.slane %v866, %v1137
    %v1139 = vlaneseq
    %v1140 = vshrl.u32 %v1139, 7
    %v1141 = vsub.s32 6, %v1140
    %v1142 = vrot.slane %v866, %v1141
    %v1143 = vlaneseq
    %v1144 = vshrl.u32 %v1143, 7
    %v1145 = vsub.s32 7, %v1144
    %v1146 = vrot.slane %v866, %v1145
    %v1147 = vlaneseq
    %v1148 = vshrl.u32 %v1147, 7
    %v1149 = vsub.s32 0, %v1148
    %v1150 = vrot.slane %v867, %v1149
    %v1151 = vlaneseq
    %v1152 = vshrl.u32 %v1151, 7
    %v1153 = vsub.s32 1, %v1152
    %v1154 = vrot.slane %v867, %v1153
    %v1155 = vlaneseq
    %v1156 = vshrl.u32 %v1155, 7
    %v1157 = vsub.s32 2, %v1156
    %v1158 = vrot.slane %v867, %v1157
    %v1159 = vlaneseq
    %v1160 = vshrl.u32 %v1159, 7
    %v1161 = vsub.s32 3, %v1160
    %v1162 = vrot.slane %v867, %v1161
    %v1163 = vlaneseq
    %v1164 = vshrl.u32 %v1163, 7
    %v1165 = vsub.s32 4, %v1164
    %v1166 = vrot.slane %v867, %v1165
    %v1167 = vlaneseq
    %v1168 = vshrl.u32 %v1167, 7
    %v1169 = vsub.s32 5, %v1168
    %v1170 = vrot.slane %v867, %v1169
    %v1171 = vlaneseq
    %v1172 = vshrl.u32 %v1171, 7
    %v1173 = vsub.s32 6, %v1172
    %v1174 = vrot.slane %v867, %v1173
    %v1175 = vlaneseq
    %v1176 = vshrl.u32 %v1175, 7
    %v1177 = vsub.s32 7, %v1176
    %v1178 = vrot.slane %v867, %v1177
    %v1179 = vlaneseq
    %v1180 = vshrl.u32 %v1179, 7
    %v1181 = vsub.s32 0, %v1180
    %v1182 = vrot.slane %v868, %v1181
    %v1183 = vlaneseq
    %v1184 = vshrl.u32 %v1183, 7
    %v1185 = vsub.s32 1, %v1184
    %v1186 = vrot.slane %v868, %v1185
    %v1187 = vlaneseq
    %v1188 = vshrl.u32 %v1187, 7
    %v1189 = vsub.s32 2, %v1188
    %v1190 = vrot.slane %v868, %v1189
    %v1191 = vlaneseq
    %v1192 = vshrl.u32 %v1191, 7
    %v1193 = vsub.s32 3, %v1192
    %v1194 = vrot.slane %v868, %v1193
    %v1195 = vlaneseq
    %v1196 = vshrl.u32 %v1195, 7
    %v1197 = vsub.s32 4, %v1196
    %v1198 = vrot.slane %v868, %v1197
    %v1199 = vlaneseq
    %v1200 = vshrl.u32 %v1199, 7
    %v1201 = vsub.s32 5, %v1200
    %v1202 = vrot.slane %v868, %v1201
    %v1203 = vlaneseq
    %v1204 = vshrl.u32 %v1203, 7
    %v1205 = vsub.s32 6, %v1204
    %v1206 = vrot.slane %v868, %v1205
    %v1207 = vlaneseq
    %v1208 = vshrl.u32 %v1207, 7
    %v1209 = vsub.s32 7, %v1208
    %v1210 = vrot.slane %v868, %v1209
    %v1211 = vlaneseq
    %v1212 = vshrl.u32 %v1211, 7
    %v1213 = vsub.s32 0, %v1212
    %v1214 = vrot.slane %v869, %v1213
    %v1215 = vlaneseq
    %v1216 = vshrl.u32 %v1215, 7
    %v1217 = vsub.s32 1, %v1216
    %v1218 = vrot.slane %v869, %v1217
    %v1219 = vlaneseq
    %v1220 = vshrl.u32 %v1219, 7
    %v1221 = vsub.s32 2, %v1220
    %v1222 = vrot.slane %v869, %v1221
    %v1223 = vlaneseq
    %v1224 = vshrl.u32 %v1223, 7
    %v1225 = vsub.s32 3, %v1224
    %v1226 = vrot.slane %v869, %v1225
    %v1227 = vlaneseq
    %v1228 = vshrl.u32 %v1227, 7
    %v1229 = vsub.s32 4, %v1228
    %v1230 = vrot.slane %v869, %v1229
    %v1231 = vlaneseq
    %v1232 = vshrl.u32 %v1231, 7
    %v1233 = vsub.s32 5, %v1232
    %v1234 = vrot.slane %v869, %v1233
    %v1235 = vlaneseq
    %v1236 = vshrl.u32 %v1235, 7
    %v1237 = vsub.s32 6, %v1236
    %v1238 = vrot.slane %v869, %v1237
    %v1239 = vlaneseq
    %v1240 = vshrl.u32 %v1239, 7
    %v1241 = vsub.s32 7, %v1240
    %v1242 = vrot.slane %v869, %v1241
    %v1243 = vlaneseq
    %v1244 = vshrl.u32 %v1243, 7
    %v1245 = vsub.s32 0, %v1244
    %v1246 = vrot.slane %v870, %v1245
    %v1247 = vlaneseq
    %v1248 = vshrl.u32 %v1247, 7
    %v1249 = vsub.s32 1, %v1248
    %v1250 = vrot.slane %v870, %v1249
    %v1251 = vlaneseq
    %v1252 = vshrl.u32 %v1251, 7
    %v1253 = vsub.s32 2, %v1252
    %v1254 = vrot.slane %v870, %v1253
    %v1255 = vlaneseq
    %v1256 = vshrl.u32 %v1255, 7
    %v1257 = vsub.s32 3, %v1256
    %v1258 = vrot.slane %v870, %v1257
    %v1259 = vlaneseq
    %v1260 = vshrl.u32 %v1259, 7
    %v1261 = vsub.s32 4, %v1260
    %v1262 = vrot.slane %v870, %v1261
    %v1263 = vlaneseq
    %v1264 = vshrl.u32 %v1263, 7
    %v1265 = vsub.s32 5, %v1264
    %v1266 = vrot.slane %v870, %v1265
    %v1267 = vlaneseq
    %v1268 = vshrl.u32 %v1267, 7
    %v1269 = vsub.s32 6, %v1268
    %v1270 = vrot.slane %v870, %v1269
    %v1271 = vlaneseq
    %v1272 = vshrl.u32 %v1271, 7
    %v1273 = vsub.s32 7, %v1272
    %v1274 = vrot.slane %v870, %v1273
    %v1275 = vlaneseq
    %v1276 = vshrl.u32 %v1275, 7
    %v1277 = vsub.s32 0, %v1276
    %v1278 = vrot.slane %v871, %v1277
    %v1279 = vlaneseq
    %v1280 = vshrl.u32 %v1279, 7
    %v1281 = vsub.s32 1, %v1280
    %v1282 = vrot.slane %v871, %v1281
    %v1283 = vlaneseq
    %v1284 = vshrl.u32 %v1283, 7
    %v1285 = vsub.s32 2, %v1284
    %v1286 = vrot.slane %v871, %v1285
    %v1287 = vlaneseq
    %v1288 = vshrl.u32 %v1287, 7
    %v1289 = vsub.s32 3, %v1288
    %v1290 = vrot.slane %v871, %v1289
    %v1291 = vlaneseq
    %v1292 = vshrl.u32 %v1291, 7
    %v1293 = vsub.s32 4, %v1292
    %v1294 = vrot.slane %v871, %v1293
    %v1295 = vlaneseq
    %v1296 = vshrl.u32 %v1295, 7
    %v1297 = vsub.s32 5, %v1296
    %v1298 = vrot.slane %v871, %v1297
    %v1299 = vlaneseq
    %v1300 = vshrl.u32 %v1299, 7
    %v1301 = vsub.s32 6, %v1300
    %v1302 = vrot.slane %v871, %v1301
    %v1303 = vlaneseq
    %v1304 = vshrl.u32 %v1303, 7
    %v1305 = vsub.s32 7, %v1304
    %v1306 = vrot.slane %v871, %v1305
    %v1307 = vlaneseq
    %v1308 = vshrl.u32 %v1307, 7
    %v1309 = vsub.s32 0, %v1308
    %v1310 = vrot.slane %v872, %v1309
    %v1311 = vlaneseq
    %v1312 = vshrl.u32 %v1311, 7
    %v1313 = vsub.s32 1, %v1312
    %v1314 = vrot.slane %v872, %v1313
    %v1315 = vlaneseq
    %v1316 = vshrl.u32 %v1315, 7
    %v1317 = vsub.s32 2, %v1316
    %v1318 = vrot.slane %v872, %v1317
    %v1319 = vlaneseq
    %v1320 = vshrl.u32 %v1319, 7
    %v1321 = vsub.s32 3, %v1320
    %v1322 = vrot.slane %v872, %v1321
    %v1323 = vlaneseq
    %v1324 = vshrl.u32 %v1323, 7
    %v1325 = vsub.s32 4, %v1324
    %v1326 = vrot.slane %v872, %v1325
    %v1327 = vlaneseq
    %v1328 = vshrl.u32 %v1327, 7
    %v1329 = vsub.s32 5, %v1328
    %v1330 = vrot.slane %v872, %v1329
    %v1331 = vlaneseq
    %v1332 = vshrl.u32 %v1331, 7
    %v1333 = vsub.s32 6, %v1332
    %v1334 = vrot.slane %v872, %v1333
    %v1335 = vlaneseq
    %v1336 = vshrl.u32 %v1335, 7
    %v1337 = vsub.s32 7, %v1336
    %v1338 = vrot.slane %v872, %v1337
    %v1339 = vlaneseq
    %v1340 = vshrl.u32 %v1339, 7
    %v1341 = vsub.s32 0, %v1340
    %v1342 = vrot.slane %v873, %v1341
    %v1343 = vlaneseq
    %v1344 = vshrl.u32 %v1343, 7
    %v1345 = vsub.s32 1, %v1344
    %v1346 = vrot.slane %v873, %v1345
    %v1347 = vlaneseq
    %v1348 = vshrl.u32 %v1347, 7
    %v1349 = vsub.s32 2, %v1348
    %v1350 = vrot.slane %v873, %v1349
    %v1351 = vlaneseq
    %v1352 = vshrl.u32 %v1351, 7
    %v1353 = vsub.s32 3, %v1352
    %v1354 = vrot.slane %v873, %v1353
    %v1355 = vlaneseq
    %v1356 = vshrl.u32 %v1355, 7
    %v1357 = vsub.s32 4, %v1356
    %v1358 = vrot.slane %v873, %v1357
    %v1359 = vlaneseq
    %v1360 = vshrl.u32 %v1359, 7
    %v1361 = vsub.s32 5, %v1360
    %v1362 = vrot.slane %v873, %v1361
    %v1363 = vlaneseq
    %v1364 = vshrl.u32 %v1363, 7
    %v1365 = vsub.s32 6, %v1364
    %v1366 = vrot.slane %v873, %v1365
    %v1367 = vlaneseq
    %v1368 = vshrl.u32 %v1367, 7
    %v1369 = vsub.s32 7, %v1368
    %v1370 = vrot.slane %v873, %v1369
    %v1371 = vlaneseq
    %v1372 = vshrl.u32 %v1371, 7
    %v1373 = vsub.s32 0, %v1372
    %v1374 = vrot.slane %v874, %v1373
    %v1375 = vlaneseq
    %v1376 = vshrl.u32 %v1375, 7
    %v1377 = vsub.s32 1, %v1376
    %v1378 = vrot.slane %v874, %v1377
    %v1379 = vlaneseq
    %v1380 = vshrl.u32 %v1379, 7
    %v1381 = vsub.s32 2, %v1380
    %v1382 = vrot.slane %v874, %v1381
    %v1383 = vlaneseq
    %v1384 = vshrl.u32 %v1383, 7
    %v1385 = vsub.s32 3, %v1384
    %v1386 = vrot.slane %v874, %v1385
    %v1387 = vlaneseq
    %v1388 = vshrl.u32 %v1387, 7
    %v1389 = vsub.s32 4, %v1388
    %v1390 = vrot.slane %v874, %v1389
    %v1391 = vlaneseq
    %v1392 = vshrl.u32 %v1391, 7
    %v1393 = vsub.s32 5, %v1392
    %v1394 = vrot.slane %v874, %v1393
    %v1395 = vlaneseq
    %v1396 = vshrl.u32 %v1395, 7
    %v1397 = vsub.s32 6, %v1396
    %v1398 = vrot.slane %v874, %v1397
    %v1399 = vlaneseq
    %v1400 = vshrl.u32 %v1399, 7
    %v1401 = vsub.s32 7, %v1400
    %v1402 = vrot.slane %v874, %v1401
    %v1403 = vcombine.low %v894, %v898
    %v1404 = vcombine.low %v902, %v906
    %v1405 = vcombine.low %v910, %v914
    %v1406 = vcombine.low %v918, %v922
    %v1408 = vunpack.c.l.s4 1966171168
    %v1409 = vunpack.c.0.s8 %v1408
    %v1410 = vlaneseq
    %v1411 = vshrl.u32 %v1410, 7
    %v1412 = vsub.s32 %v1409, %v1411
    %v1413 = vrot.slane %v1403, %v1412
    %v1415 = vunpack.c.l.s4 1966171168
    %v1416 = vunpack.c.0.s8 %v1415
    %v1417 = vlaneseq
    %v1418 = vshrl.u32 %v1417, 7
    %v1419 = vsub.s32 %v1416, %v1418
    %v1420 = vrot.slane %v1404, %v1419
    %v1422 = vunpack.c.l.s4 1966171168
    %v1423 = vunpack.c.0.s8 %v1422
    %v1424 = vlaneseq
    %v1425 = vshrl.u32 %v1424, 7
    %v1426 = vsub.s32 %v1423, %v1425
    %v1427 = vrot.slane %v1405, %v1426
    %v1429 = vunpack.c.l.s4 1966171168
    %v1430 = vunpack.c.0.s8 %v1429
    %v1431 = vlaneseq
    %v1432 = vshrl.u32 %v1431, 7
    %v1433 = vsub.s32 %v1430, %v1432
    %v1434 = vrot.slane %v1406, %v1433
    %v1435 = vcombine.low %v1413, %v1420
    %v1436 = vcombine.low %v1427, %v1434
    %v1438 = vunpack.c.l.s4 1966171168
    %v1439 = vunpack.c.0.s8 %v1438
    %v1440 = vlaneseq
    %v1441 = vshrl.u32 %v1440, 7
    %v1442 = vsub.s32 %v1439, %v1441
    %v1443 = vrot.slane %v1435, %v1442
    %v1445 = vunpack.c.l.s4 1966171168
    %v1446 = vunpack.c.0.s8 %v1445
    %v1447 = vlaneseq
    %v1448 = vshrl.u32 %v1447, 7
    %v1449 = vsub.s32 %v1446, %v1448
    %v1450 = vrot.slane %v1436, %v1449
    %v1451 = vcombine.low %v1443, %v1450
    %v1452 = vcombine.low %v926, %v930
    %v1453 = vcombine.low %v934, %v938
    %v1454 = vcombine.low %v942, %v946
    %v1455 = vcombine.low %v950, %v954
    %v1457 = vunpack.c.l.s4 1966171168
    %v1458 = vunpack.c.0.s8 %v1457
    %v1459 = vlaneseq
    %v1460 = vshrl.u32 %v1459, 7
    %v1461 = vsub.s32 %v1458, %v1460
    %v1462 = vrot.slane %v1452, %v1461
    %v1464 = vunpack.c.l.s4 1966171168
    %v1465 = vunpack.c.0.s8 %v1464
    %v1466 = vlaneseq
    %v1467 = vshrl.u32 %v1466, 7
    %v1468 = vsub.s32 %v1465, %v1467
    %v1469 = vrot.slane %v1453, %v1468
    %v1471 = vunpack.c.l.s4 1966171168
    %v1472 = vunpack.c.0.s8 %v1471
    %v1473 = vlaneseq
    %v1474 = vshrl.u32 %v1473, 7
    %v1475 = vsub.s32 %v1472, %v1474
    %v1476 = vrot.slane %v1454, %v1475
    %v1478 = vunpack.c.l.s4 1966171168
    %v1479 = vunpack.c.0.s8 %v1478
    %v1480 = vlaneseq
    %v1481 = vshrl.u32 %v1480, 7
    %v1482 = vsub.s32 %v1479, %v1481
    %v1483 = vrot.slane %v1455, %v1482
    %v1484 = vcombine.low %v1462, %v1469
    %v1485 = vcombine.low %v1476, %v1483
    %v1487 = vunpack.c.l.s4 1966171168
    %v1488 = vunpack.c.0.s8 %v1487
    %v1489 = vlaneseq
    %v1490 = vshrl.u32 %v1489, 7
    %v1491 = vsub.s32 %v1488, %v1490
    %v1492 = vrot.slane %v1484, %v1491
    %v1494 = vunpack.c.l.s4 1966171168
    %v1495 = vunpack.c.0.s8 %v1494
    %v1496 = vlaneseq
    %v1497 = vshrl.u32 %v1496, 7
    %v1498 = vsub.s32 %v1495, %v1497
    %v1499 = vrot.slane %v1485, %v1498
    %v1500 = vcombine.low %v1492, %v1499
    %v1501 = vcombine.low %v958, %v962
    %v1502 = vcombine.low %v966, %v970
    %v1503 = vcombine.low %v974, %v978
    %v1504 = vcombine.low %v982, %v986
    %v1506 = vunpack.c.l.s4 1966171168
    %v1507 = vunpack.c.0.s8 %v1506
    %v1508 = vlaneseq
    %v1509 = vshrl.u32 %v1508, 7
    %v1510 = vsub.s32 %v1507, %v1509
    %v1511 = vrot.slane %v1501, %v1510
    %v1513 = vunpack.c.l.s4 1966171168
    %v1514 = vunpack.c.0.s8 %v1513
    %v1515 = vlaneseq
    %v1516 = vshrl.u32 %v1515, 7
    %v1517 = vsub.s32 %v1514, %v1516
    %v1518 = vrot.slane %v1502, %v1517
    %v1520 = vunpack.c.l.s4 1966171168
    %v1521 = vunpack.c.0.s8 %v1520
    %v1522 = vlaneseq
    %v1523 = vshrl.u32 %v1522, 7
    %v1524 = vsub.s32 %v1521, %v1523
    %v1525 = vrot.slane %v1503, %v1524
    %v1527 = vunpack.c.l.s4 1966171168
    %v1528 = vunpack.c.0.s8 %v1527
    %v1529 = vlaneseq
    %v1530 = vshrl.u32 %v1529, 7
    %v1531 = vsub.s32 %v1528, %v1530
    %v1532 = vrot.slane %v1504, %v1531
    %v1533 = vcombine.low %v1511, %v1518
    %v1534 = vcombine.low %v1525, %v1532
    %v1536 = vunpack.c.l.s4 1966171168
    %v1537 = vunpack.c.0.s8 %v1536
    %v1538 = vlaneseq
    %v1539 = vshrl.u32 %v1538, 7
    %v1540 = vsub.s32 %v1537, %v1539
    %v1541 = vrot.slane %v1533, %v1540
    %v1543 = vunpack.c.l.s4 1966171168
    %v1544 = vunpack.c.0.s8 %v1543
    %v1545 = vlaneseq
    %v1546 = vshrl.u32 %v1545, 7
    %v1547 = vsub.s32 %v1544, %v1546
    %v1548 = vrot.slane %v1534, %v1547
    %v1549 = vcombine.low %v1541, %v1548
    %v1550 = vcombine.low %v990, %v994
    %v1551 = vcombine.low %v998, %v1002
    %v1552 = vcombine.low %v1006, %v1010
    %v1553 = vcombine.low %v1014, %v1018
    %v1555 = vunpack.c.l.s4 1966171168
    %v1556 = vunpack.c.0.s8 %v1555
    %v1557 = vlaneseq
    %v1558 = vshrl.u32 %v1557, 7
    %v1559 = vsub.s32 %v1556, %v1558
    %v1560 = vrot.slane %v1550, %v1559
    %v1562 = vunpack.c.l.s4 1966171168
    %v1563 = vunpack.c.0.s8 %v1562
    %v1564 = vlaneseq
    %v1565 = vshrl.u32 %v1564, 7
    %v1566 = vsub.s32 %v1563, %v1565
    %v1567 = vrot.slane %v1551, %v1566
    %v1569 = vunpack.c.l.s4 1966171168
    %v1570 = vunpack.c.0.s8 %v1569
    %v1571 = vlaneseq
    %v1572 = vshrl.u32 %v1571, 7
    %v1573 = vsub.s32 %v1570, %v1572
    %v1574 = vrot.slane %v1552, %v1573
    %v1576 = vunpack.c.l.s4 1966171168
    %v1577 = vunpack.c.0.s8 %v1576
    %v1578 = vlaneseq
    %v1579 = vshrl.u32 %v1578, 7
    %v1580 = vsub.s32 %v1577, %v1579
    %v1581 = vrot.slane %v1553, %v1580
    %v1582 = vcombine.low %v1560, %v1567
    %v1583 = vcombine.low %v1574, %v1581
    %v1585 = vunpack.c.l.s4 1966171168
    %v1586 = vunpack.c.0.s8 %v1585
    %v1587 = vlaneseq
    %v1588 = vshrl.u32 %v1587, 7
    %v1589 = vsub.s32 %v1586, %v1588
    %v1590 = vrot.slane %v1582, %v1589
    %v1592 = vunpack.c.l.s4 1966171168
    %v1593 = vunpack.c.0.s8 %v1592
    %v1594 = vlaneseq
    %v1595 = vshrl.u32 %v1594, 7
    %v1596 = vsub.s32 %v1593, %v1595
    %v1597 = vrot.slane %v1583, %v1596
    %v1598 = vcombine.low %v1590, %v1597
    %v1599 = vcombine.low %v1022, %v1026
    %v1600 = vcombine.low %v1030, %v1034
    %v1601 = vcombine.low %v1038, %v1042
    %v1602 = vcombine.low %v1046, %v1050
    %v1604 = vunpack.c.l.s4 1966171168
    %v1605 = vunpack.c.0.s8 %v1604
    %v1606 = vlaneseq
    %v1607 = vshrl.u32 %v1606, 7
    %v1608 = vsub.s32 %v1605, %v1607
    %v1609 = vrot.slane %v1599, %v1608
    %v1611 = vunpack.c.l.s4 1966171168
    %v1612 = vunpack.c.0.s8 %v1611
    %v1613 = vlaneseq
    %v1614 = vshrl.u32 %v1613, 7
    %v1615 = vsub.s32 %v1612, %v1614
    %v1616 = vrot.slane %v1600, %v1615
    %v1618 = vunpack.c.l.s4 1966171168
    %v1619 = vunpack.c.0.s8 %v1618
    %v1620 = vlaneseq
    %v1621 = vshrl.u32 %v1620, 7
    %v1622 = vsub.s32 %v1619, %v1621
    %v1623 = vrot.slane %v1601, %v1622
    %v1625 = vunpack.c.l.s4 1966171168
    %v1626 = vunpack.c.0.s8 %v1625
    %v1627 = vlaneseq
    %v1628 = vshrl.u32 %v1627, 7
    %v1629 = vsub.s32 %v1626, %v1628
    %v1630 = vrot.slane %v1602, %v1629
    %v1631 = vcombine.low %v1609, %v1616
    %v1632 = vcombine.low %v1623, %v1630
    %v1634 = vunpack.c.l.s4 1966171168
    %v1635 = vunpack.c.0.s8 %v1634
    %v1636 = vlaneseq
    %v1637 = vshrl.u32 %v1636, 7
    %v1638 = vsub.s32 %v1635, %v1637
    %v1639 = vrot.slane %v1631, %v1638
    %v1641 = vunpack.c.l.s4 1966171168
    %v1642 = vunpack.c.0.s8 %v1641
    %v1643 = vlaneseq
    %v1644 = vshrl.u32 %v1643, 7
    %v1645 = vsub.s32 %v1642, %v1644
    %v1646 = vrot.slane %v1632, %v1645
    %v1647 = vcombine.low %v1639, %v1646
    %v1648 = vcombine.low %v1054, %v1058
    %v1649 = vcombine.low %v1062, %v1066
    %v1650 = vcombine.low %v1070, %v1074
    %v1651 = vcombine.low %v1078, %v1082
    %v1653 = vunpack.c.l.s4 1966171168
    %v1654 = vunpack.c.0.s8 %v1653
    %v1655 = vlaneseq
    %v1656 = vshrl.u32 %v1655, 7
    %v1657 = vsub.s32 %v1654, %v1656
    %v1658 = vrot.slane %v1648, %v1657
    %v1660 = vunpack.c.l.s4 1966171168
    %v1661 = vunpack.c.0.s8 %v1660
    %v1662 = vlaneseq
    %v1663 = vshrl.u32 %v1662, 7
    %v1664 = vsub.s32 %v1661, %v1663
    %v1665 = vrot.slane %v1649, %v1664
    %v1667 = vunpack.c.l.s4 1966171168
    %v1668 = vunpack.c.0.s8 %v1667
    %v1669 = vlaneseq
    %v1670 = vshrl.u32 %v1669, 7
    %v1671 = vsub.s32 %v1668, %v1670
    %v1672 = vrot.slane %v1650, %v1671
    %v1674 = vunpack.c.l.s4 1966171168
    %v1675 = vunpack.c.0.s8 %v1674
    %v1676 = vlaneseq
    %v1677 = vshrl.u32 %v1676, 7
    %v1678 = vsub.s32 %v1675, %v1677
    %v1679 = vrot.slane %v1651, %v1678
    %v1680 = vcombine.low %v1658, %v1665
    %v1681 = vcombine.low %v1672, %v1679
    %v1683 = vunpack.c.l.s4 1966171168
    %v1684 = vunpack.c.0.s8 %v1683
    %v1685 = vlaneseq
    %v1686 = vshrl.u32 %v1685, 7
    %v1687 = vsub.s32 %v1684, %v1686
    %v1688 = vrot.slane %v1680, %v1687
    %v1690 = vunpack.c.l.s4 1966171168
    %v1691 = vunpack.c.0.s8 %v1690
    %v1692 = vlaneseq
    %v1693 = vshrl.u32 %v1692, 7
    %v1694 = vsub.s32 %v1691, %v1693
    %v1695 = vrot.slane %v1681, %v1694
    %v1696 = vcombine.low %v1688, %v1695
    %v1697 = vcombine.low %v1086, %v1090
    %v1698 = vcombine.low %v1094, %v1098
    %v1699 = vcombine.low %v1102, %v1106
    %v1700 = vcombine.low %v1110, %v1114
    %v1702 = vunpack.c.l.s4 1966171168
    %v1703 = vunpack.c.0.s8 %v1702
    %v1704 = vlaneseq
    %v1705 = vshrl.u32 %v1704, 7
    %v1706 = vsub.s32 %v1703, %v1705
    %v1707 = vrot.slane %v1697, %v1706
    %v1709 = vunpack.c.l.s4 1966171168
    %v1710 = vunpack.c.0.s8 %v1709
    %v1711 = vlaneseq
    %v1712 = vshrl.u32 %v1711, 7
    %v1713 = vsub.s32 %v1710, %v1712
    %v1714 = vrot.slane %v1698, %v1713
    %v1716 = vunpack.c.l.s4 1966171168
    %v1717 = vunpack.c.0.s8 %v1716
    %v1718 = vlaneseq
    %v1719 = vshrl.u32 %v1718, 7
    %v1720 = vsub.s32 %v1717, %v1719
    %v1721 = vrot.slane %v1699, %v1720
    %v1723 = vunpack.c.l.s4 1966171168
    %v1724 = vunpack.c.0.s8 %v1723
    %v1725 = vlaneseq
    %v1726 = vshrl.u32 %v1725, 7
    %v1727 = vsub.s32 %v1724, %v1726
    %v1728 = vrot.slane %v1700, %v1727
    %v1729 = vcombine.low %v1707, %v1714
    %v1730 = vcombine.low %v1721, %v1728
    %v1732 = vunpack.c.l.s4 1966171168
    %v1733 = vunpack.c.0.s8 %v1732
    %v1734 = vlaneseq
    %v1735 = vshrl.u32 %v1734, 7
    %v1736 = vsub.s32 %v1733, %v1735
    %v1737 = vrot.slane %v1729, %v1736
    %v1739 = vunpack.c.l.s4 1966171168
    %v1740 = vunpack.c.0.s8 %v1739
    %v1741 = vlaneseq
    %v1742 = vshrl.u32 %v1741, 7
    %v1743 = vsub.s32 %v1740, %v1742
    %v1744 = vrot.slane %v1730, %v1743
    %v1745 = vcombine.low %v1737, %v1744
    %v1746 = vcombine.low %v1118, %v1122
    %v1747 = vcombine.low %v1126, %v1130
    %v1748 = vcombine.low %v1134, %v1138
    %v1749 = vcombine.low %v1142, %v1146
    %v1751 = vunpack.c.l.s4 1966171168
    %v1752 = vunpack.c.0.s8 %v1751
    %v1753 = vlaneseq
    %v1754 = vshrl.u32 %v1753, 7
    %v1755 = vsub.s32 %v1752, %v1754
    %v1756 = vrot.slane %v1746, %v1755
    %v1758 = vunpack.c.l.s4 1966171168
    %v1759 = vunpack.c.0.s8 %v1758
    %v1760 = vlaneseq
    %v1761 = vshrl.u32 %v1760, 7
    %v1762 = vsub.s32 %v1759, %v1761
    %v1763 = vrot.slane %v1747, %v1762
    %v1765 = vunpack.c.l.s4 1966171168
    %v1766 = vunpack.c.0.s8 %v1765
    %v1767 = vlaneseq
    %v1768 = vshrl.u32 %v1767, 7
    %v1769 = vsub.s32 %v1766, %v1768
    %v1770 = vrot.slane %v1748, %v1769
    %v1772 = vunpack.c.l.s4 1966171168
    %v1773 = vunpack.c.0.s8 %v1772
    %v1774 = vlaneseq
    %v1775 = vshrl.u32 %v1774, 7
    %v1776 = vsub.s32 %v1773, %v1775
    %v1777 = vrot.slane %v1749, %v1776
    %v1778 = vcombine.low %v1756, %v1763
    %v1779 = vcombine.low %v1770, %v1777
    %v1781 = vunpack.c.l.s4 1966171168
    %v1782 = vunpack.c.0.s8 %v1781
    %v1783 = vlaneseq
    %v1784 = vshrl.u32 %v1783, 7
    %v1785 = vsub.s32 %v1782, %v1784
    %v1786 = vrot.slane %v1778, %v1785
    %v1788 = vunpack.c.l.s4 1966171168
    %v1789 = vunpack.c.0.s8 %v1788
    %v1790 = vlaneseq
    %v1791 = vshrl.u32 %v1790, 7
    %v1792 = vsub.s32 %v1789, %v1791
    %v1793 = vrot.slane %v1779, %v1792
    %v1794 = vcombine.low %v1786, %v1793
    %v1795 = vcombine.low %v1150, %v1154
    %v1796 = vcombine.low %v1158, %v1162
    %v1797 = vcombine.low %v1166, %v1170
    %v1798 = vcombine.low %v1174, %v1178
    %v1800 = vunpack.c.l.s4 1966171168
    %v1801 = vunpack.c.0.s8 %v1800
    %v1802 = vlaneseq
    %v1803 = vshrl.u32 %v1802, 7
    %v1804 = vsub.s32 %v1801, %v1803
    %v1805 = vrot.slane %v1795, %v1804
    %v1807 = vunpack.c.l.s4 1966171168
    %v1808 = vunpack.c.0.s8 %v1807
    %v1809 = vlaneseq
    %v1810 = vshrl.u32 %v1809, 7
    %v1811 = vsub.s32 %v1808, %v1810
    %v1812 = vrot.slane %v1796, %v1811
    %v1814 = vunpack.c.l.s4 1966171168
    %v1815 = vunpack.c.0.s8 %v1814
    %v1816 = vlaneseq
    %v1817 = vshrl.u32 %v1816, 7
    %v1818 = vsub.s32 %v1815, %v1817
    %v1819 = vrot.slane %v1797, %v1818
    %v1821 = vunpack.c.l.s4 1966171168
    %v1822 = vunpack.c.0.s8 %v1821
    %v1823 = vlaneseq
    %v1824 = vshrl.u32 %v1823, 7
    %v1825 = vsub.s32 %v1822, %v1824
    %v1826 = vrot.slane %v1798, %v1825
    %v1827 = vcombine.low %v1805, %v1812
    %v1828 = vcombine.low %v1819, %v1826
    %v1830 = vunpack.c.l.s4 1966171168
    %v1831 = vunpack.c.0.s8 %v1830
    %v1832 = vlaneseq
    %v1833 = vshrl.u32 %v1832, 7
    %v1834 = vsub.s32 %v1831, %v1833
    %v1835 = vrot.slane %v1827, %v1834
    %v1837 = vunpack.c.l.s4 1966171168
    %v1838 = vunpack.c.0.s8 %v1837
    %v1839 = vlaneseq
    %v1840 = vshrl.u32 %v1839, 7
    %v1841 = vsub.s32 %v1838, %v1840
    %v1842 = vrot.slane %v1828, %v1841
    %v1843 = vcombine.low %v1835, %v1842
    %v1844 = vcombine.low %v1182, %v1186
    %v1845 = vcombine.low %v1190, %v1194
    %v1846 = vcombine.low %v1198, %v1202
    %v1847 = vcombine.low %v1206, %v1210
    %v1849 = vunpack.c.l.s4 1966171168
    %v1850 = vunpack.c.0.s8 %v1849
    %v1851 = vlaneseq
    %v1852 = vshrl.u32 %v1851, 7
    %v1853 = vsub.s32 %v1850, %v1852
    %v1854 = vrot.slane %v1844, %v1853
    %v1856 = vunpack.c.l.s4 1966171168
    %v1857 = vunpack.c.0.s8 %v1856
    %v1858 = vlaneseq
    %v1859 = vshrl.u32 %v1858, 7
    %v1860 = vsub.s32 %v1857, %v1859
    %v1861 = vrot.slane %v1845, %v1860
    %v1863 = vunpack.c.l.s4 1966171168
    %v1864 = vunpack.c.0.s8 %v1863
    %v1865 = vlaneseq
    %v1866 = vshrl.u32 %v1865, 7
    %v1867 = vsub.s32 %v1864, %v1866
    %v1868 = vrot.slane %v1846, %v1867
    %v1870 = vunpack.c.l.s4 1966171168
    %v1871 = vunpack.c.0.s8 %v1870
    %v1872 = vlaneseq
    %v1873 = vshrl.u32 %v1872, 7
    %v1874 = vsub.s32 %v1871, %v1873
    %v1875 = vrot.slane %v1847, %v1874
    %v1876 = vcombine.low %v1854, %v1861
    %v1877 = vcombine.low %v1868, %v1875
    %v1879 = vunpack.c.l.s4 1966171168
    %v1880 = vunpack.c.0.s8 %v1879
    %v1881 = vlaneseq
    %v1882 = vshrl.u32 %v1881, 7
    %v1883 = vsub.s32 %v1880, %v1882
    %v1884 = vrot.slane %v1876, %v1883
    %v1886 = vunpack.c.l.s4 1966171168
    %v1887 = vunpack.c.0.s8 %v1886
    %v1888 = vlaneseq
    %v1889 = vshrl.u32 %v1888, 7
    %v1890 = vsub.s32 %v1887, %v1889
    %v1891 = vrot.slane %v1877, %v1890
    %v1892 = vcombine.low %v1884, %v1891
    %v1893 = vcombine.low %v1214, %v1218
    %v1894 = vcombine.low %v1222, %v1226
    %v1895 = vcombine.low %v1230, %v1234
    %v1896 = vcombine.low %v1238, %v1242
    %v1898 = vunpack.c.l.s4 1966171168
    %v1899 = vunpack.c.0.s8 %v1898
    %v1900 = vlaneseq
    %v1901 = vshrl.u32 %v1900, 7
    %v1902 = vsub.s32 %v1899, %v1901
    %v1903 = vrot.slane %v1893, %v1902
    %v1905 = vunpack.c.l.s4 1966171168
    %v1906 = vunpack.c.0.s8 %v1905
    %v1907 = vlaneseq
    %v1908 = vshrl.u32 %v1907, 7
    %v1909 = vsub.s32 %v1906, %v1908
    %v1910 = vrot.slane %v1894, %v1909
    %v1912 = vunpack.c.l.s4 1966171168
    %v1913 = vunpack.c.0.s8 %v1912
    %v1914 = vlaneseq
    %v1915 = vshrl.u32 %v1914, 7
    %v1916 = vsub.s32 %v1913, %v1915
    %v1917 = vrot.slane %v1895, %v1916
    %v1919 = vunpack.c.l.s4 1966171168
    %v1920 = vunpack.c.0.s8 %v1919
    %v1921 = vlaneseq
    %v1922 = vshrl.u32 %v1921, 7
    %v1923 = vsub.s32 %v1920, %v1922
    %v1924 = vrot.slane %v1896, %v1923
    %v1925 = vcombine.low %v1903, %v1910
    %v1926 = vcombine.low %v1917, %v1924
    %v1928 = vunpack.c.l.s4 1966171168
    %v1929 = vunpack.c.0.s8 %v1928
    %v1930 = vlaneseq
    %v1931 = vshrl.u32 %v1930, 7
    %v1932 = vsub.s32 %v1929, %v1931
    %v1933 = vrot.slane %v1925, %v1932
    %v1935 = vunpack.c.l.s4 1966171168
    %v1936 = vunpack.c.0.s8 %v1935
    %v1937 = vlaneseq
    %v1938 = vshrl.u32 %v1937, 7
    %v1939 = vsub.s32 %v1936, %v1938
    %v1940 = vrot.slane %v1926, %v1939
    %v1941 = vcombine.low %v1933, %v1940
    %v1942 = vcombine.low %v1246, %v1250
    %v1943 = vcombine.low %v1254, %v1258
    %v1944 = vcombine.low %v1262, %v1266
    %v1945 = vcombine.low %v1270, %v1274
    %v1947 = vunpack.c.l.s4 1966171168
    %v1948 = vunpack.c.0.s8 %v1947
    %v1949 = vlaneseq
    %v1950 = vshrl.u32 %v1949, 7
    %v1951 = vsub.s32 %v1948, %v1950
    %v1952 = vrot.slane %v1942, %v1951
    %v1954 = vunpack.c.l.s4 1966171168
    %v1955 = vunpack.c.0.s8 %v1954
    %v1956 = vlaneseq
    %v1957 = vshrl.u32 %v1956, 7
    %v1958 = vsub.s32 %v1955, %v1957
    %v1959 = vrot.slane %v1943, %v1958
    %v1961 = vunpack.c.l.s4 1966171168
    %v1962 = vunpack.c.0.s8 %v1961
    %v1963 = vlaneseq
    %v1964 = vshrl.u32 %v1963, 7
    %v1965 = vsub.s32 %v1962, %v1964
    %v1966 = vrot.slane %v1944, %v1965
    %v1968 = vunpack.c.l.s4 1966171168
    %v1969 = vunpack.c.0.s8 %v1968
    %v1970 = vlaneseq
    %v1971 = vshrl.u32 %v1970, 7
    %v1972 = vsub.s32 %v1969, %v1971
    %v1973 = vrot.slane %v1945, %v1972
    %v1974 = vcombine.low %v1952, %v1959
    %v1975 = vcombine.low %v1966, %v1973
    %v1977 = vunpack.c.l.s4 1966171168
    %v1978 = vunpack.c.0.s8 %v1977
    %v1979 = vlaneseq
    %v1980 = vshrl.u32 %v1979, 7
    %v1981 = vsub.s32 %v1978, %v1980
    %v1982 = vrot.slane %v1974, %v1981
    %v1984 = vunpack.c.l.s4 1966171168
    %v1985 = vunpack.c.0.s8 %v1984
    %v1986 = vlaneseq
    %v1987 = vshrl.u32 %v1986, 7
    %v1988 = vsub.s32 %v1985, %v1987
    %v1989 = vrot.slane %v1975, %v1988
    %v1990 = vcombine.low %v1982, %v1989
    %v1991 = vcombine.low %v1278, %v1282
    %v1992 = vcombine.low %v1286, %v1290
    %v1993 = vcombine.low %v1294, %v1298
    %v1994 = vcombine.low %v1302, %v1306
    %v1996 = vunpack.c.l.s4 1966171168
    %v1997 = vunpack.c.0.s8 %v1996
    %v1998 = vlaneseq
    %v1999 = vshrl.u32 %v1998, 7
    %v2000 = vsub.s32 %v1997, %v1999
    %v2001 = vrot.slane %v1991, %v2000
    %v2003 = vunpack.c.l.s4 1966171168
    %v2004 = vunpack.c.0.s8 %v2003
    %v2005 = vlaneseq
    %v2006 = vshrl.u32 %v2005, 7
    %v2007 = vsub.s32 %v2004, %v2006
    %v2008 = vrot.slane %v1992, %v2007
    %v2010 = vunpack.c.l.s4 1966171168
    %v2011 = vunpack.c.0.s8 %v2010
    %v2012 = vlaneseq
    %v2013 = vshrl.u32 %v2012, 7
    %v2014 = vsub.s32 %v2011, %v2013
    %v2015 = vrot.slane %v1993, %v2014
    %v2017 = vunpack.c.l.s4 1966171168
    %v2018 = vunpack.c.0.s8 %v2017
    %v2019 = vlaneseq
    %v2020 = vshrl.u32 %v2019, 7
    %v2021 = vsub.s32 %v2018, %v2020
    %v2022 = vrot.slane %v1994, %v2021
    %v2023 = vcombine.low %v2001, %v2008
    %v2024 = vcombine.low %v2015, %v2022
    %v2026 = vunpack.c.l.s4 1966171168
    %v2027 = vunpack.c.0.s8 %v2026
    %v2028 = vlaneseq
    %v2029 = vshrl.u32 %v2028, 7
    %v2030 = vsub.s32 %v2027, %v2029
    %v2031 = vrot.slane %v2023, %v2030
    %v2033 = vunpack.c.l.s4 1966171168
    %v2034 = vunpack.c.0.s8 %v2033
    %v2035 = vlaneseq
    %v2036 = vshrl.u32 %v2035, 7
    %v2037 = vsub.s32 %v2034, %v2036
    %v2038 = vrot.slane %v2024, %v2037
    %v2039 = vcombine.low %v2031, %v2038
    %v2040 = vcombine.low %v1310, %v1314
    %v2041 = vcombine.low %v1318, %v1322
    %v2042 = vcombine.low %v1326, %v1330
    %v2043 = vcombine.low %v1334, %v1338
    %v2045 = vunpack.c.l.s4 1966171168
    %v2046 = vunpack.c.0.s8 %v2045
    %v2047 = vlaneseq
    %v2048 = vshrl.u32 %v2047, 7
    %v2049 = vsub.s32 %v2046, %v2048
    %v2050 = vrot.slane %v2040, %v2049
    %v2052 = vunpack.c.l.s4 1966171168
    %v2053 = vunpack.c.0.s8 %v2052
    %v2054 = vlaneseq
    %v2055 = vshrl.u32 %v2054, 7
    %v2056 = vsub.s32 %v2053, %v2055
    %v2057 = vrot.slane %v2041, %v2056
    %v2059 = vunpack.c.l.s4 1966171168
    %v2060 = vunpack.c.0.s8 %v2059
    %v2061 = vlaneseq
    %v2062 = vshrl.u32 %v2061, 7
    %v2063 = vsub.s32 %v2060, %v2062
    %v2064 = vrot.slane %v2042, %v2063
    %v2066 = vunpack.c.l.s4 1966171168
    %v2067 = vunpack.c.0.s8 %v2066
    %v2068 = vlaneseq
    %v2069 = vshrl.u32 %v2068, 7
    %v2070 = vsub.s32 %v2067, %v2069
    %v2071 = vrot.slane %v2043, %v2070
    %v2072 = vcombine.low %v2050, %v2057
    %v2073 = vcombine.low %v2064, %v2071
    %v2075 = vunpack.c.l.s4 1966171168
    %v2076 = vunpack.c.0.s8 %v2075
    %v2077 = vlaneseq
    %v2078 = vshrl.u32 %v2077, 7
    %v2079 = vsub.s32 %v2076, %v2078
    %v2080 = vrot.slane %v2072, %v2079
    %v2082 = vunpack.c.l.s4 1966171168
    %v2083 = vunpack.c.0.s8 %v2082
    %v2084 = vlaneseq
    %v2085 = vshrl.u32 %v2084, 7
    %v2086 = vsub.s32 %v2083, %v2085
    %v2087 = vrot.slane %v2073, %v2086
    %v2088 = vcombine.low %v2080, %v2087
    %v2089 = vcombine.low %v1342, %v1346
    %v2090 = vcombine.low %v1350, %v1354
    %v2091 = vcombine.low %v1358, %v1362
    %v2092 = vcombine.low %v1366, %v1370
    %v2094 = vunpack.c.l.s4 1966171168
    %v2095 = vunpack.c.0.s8 %v2094
    %v2096 = vlaneseq
    %v2097 = vshrl.u32 %v2096, 7
    %v2098 = vsub.s32 %v2095, %v2097
    %v2099 = vrot.slane %v2089, %v2098
    %v2101 = vunpack.c.l.s4 1966171168
    %v2102 = vunpack.c.0.s8 %v2101
    %v2103 = vlaneseq
    %v2104 = vshrl.u32 %v2103, 7
    %v2105 = vsub.s32 %v2102, %v2104
    %v2106 = vrot.slane %v2090, %v2105
    %v2108 = vunpack.c.l.s4 1966171168
    %v2109 = vunpack.c.0.s8 %v2108
    %v2110 = vlaneseq
    %v2111 = vshrl.u32 %v2110, 7
    %v2112 = vsub.s32 %v2109, %v2111
    %v2113 = vrot.slane %v2091, %v2112
    %v2115 = vunpack.c.l.s4 1966171168
    %v2116 = vunpack.c.0.s8 %v2115
    %v2117 = vlaneseq
    %v2118 = vshrl.u32 %v2117, 7
    %v2119 = vsub.s32 %v2116, %v2118
    %v2120 = vrot.slane %v2092, %v2119
    %v2121 = vcombine.low %v2099, %v2106
    %v2122 = vcombine.low %v2113, %v2120
    %v2124 = vunpack.c.l.s4 1966171168
    %v2125 = vunpack.c.0.s8 %v2124
    %v2126 = vlaneseq
    %v2127 = vshrl.u32 %v2126, 7
    %v2128 = vsub.s32 %v2125, %v2127
    %v2129 = vrot.slane %v2121, %v2128
    %v2131 = vunpack.c.l.s4 1966171168
    %v2132 = vunpack.c.0.s8 %v2131
    %v2133 = vlaneseq
    %v2134 = vshrl.u32 %v2133, 7
    %v2135 = vsub.s32 %v2132, %v2134
    %v2136 = vrot.slane %v2122, %v2135
    %v2137 = vcombine.low %v2129, %v2136
    %v2138 = vcombine.low %v1374, %v1378
    %v2139 = vcombine.low %v1382, %v1386
    %v2140 = vcombine.low %v1390, %v1394
    %v2141 = vcombine.low %v1398, %v1402
    %v2143 = vunpack.c.l.s4 1966171168
    %v2144 = vunpack.c.0.s8 %v2143
    %v2145 = vlaneseq
    %v2146 = vshrl.u32 %v2145, 7
    %v2147 = vsub.s32 %v2144, %v2146
    %v2148 = vrot.slane %v2138, %v2147
    %v2150 = vunpack.c.l.s4 1966171168
    %v2151 = vunpack.c.0.s8 %v2150
    %v2152 = vlaneseq
    %v2153 = vshrl.u32 %v2152, 7
    %v2154 = vsub.s32 %v2151, %v2153
    %v2155 = vrot.slane %v2139, %v2154
    %v2157 = vunpack.c.l.s4 1966171168
    %v2158 = vunpack.c.0.s8 %v2157
    %v2159 = vlaneseq
    %v2160 = vshrl.u32 %v2159, 7
    %v2161 = vsub.s32 %v2158, %v2160
    %v2162 = vrot.slane %v2140, %v2161
    %v2164 = vunpack.c.l.s4 1966171168
    %v2165 = vunpack.c.0.s8 %v2164
    %v2166 = vlaneseq
    %v2167 = vshrl.u32 %v2166, 7
    %v2168 = vsub.s32 %v2165, %v2167
    %v2169 = vrot.slane %v2141, %v2168
    %v2170 = vcombine.low %v2148, %v2155
    %v2171 = vcombine.low %v2162, %v2169
    %v2173 = vunpack.c.l.s4 1966171168
    %v2174 = vunpack.c.0.s8 %v2173
    %v2175 = vlaneseq
    %v2176 = vshrl.u32 %v2175, 7
    %v2177 = vsub.s32 %v2174, %v2176
    %v2178 = vrot.slane %v2170, %v2177
    %v2180 = vunpack.c.l.s4 1966171168
    %v2181 = vunpack.c.0.s8 %v2180
    %v2182 = vlaneseq
    %v2183 = vshrl.u32 %v2182, 7
    %v2184 = vsub.s32 %v2181, %v2183
    %v2185 = vrot.slane %v2171, %v2184
    %v2186 = vcombine.low %v2178, %v2185
    %2187 = vset.pattern.permute.xlu0 0
    %2188 = vperm.xlu0 %2187, %v1451
    %v2189 = vpop.permute.xlu0 %2188
    %2190 = vset.pattern.permute.xlu0 0
    %2191 = vperm.xlu0 %2190, %v1500
    %v2192 = vpop.permute.xlu0 %2191
    %2193 = vset.pattern.permute.xlu0 0
    %2194 = vperm.xlu0 %2193, %v1549
    %v2195 = vpop.permute.xlu0 %2194
    %2196 = vset.pattern.permute.xlu0 0
    %2197 = vperm.xlu0 %2196, %v1598
    %v2198 = vpop.permute.xlu0 %2197
    %2199 = vset.pattern.permute.xlu0 0
    %2200 = vperm.xlu0 %2199, %v1647
    %v2201 = vpop.permute.xlu0 %2200
    %2202 = vset.pattern.permute.xlu0 0
    %2203 = vperm.xlu0 %2202, %v1696
    %v2204 = vpop.permute.xlu0 %2203
    %2205 = vset.pattern.permute.xlu0 0
    %2206 = vperm.xlu0 %2205, %v1745
    %v2207 = vpop.permute.xlu0 %2206
    %2208 = vset.pattern.permute.xlu0 0
    %2209 = vperm.xlu0 %2208, %v1794
    %v2210 = vpop.permute.xlu0 %2209
    %2211 = vset.pattern.permute.xlu0 0
    %2212 = vperm.xlu0 %2211, %v1843
    %v2213 = vpop.permute.xlu0 %2212
    %2214 = vset.pattern.permute.xlu0 0
    %2215 = vperm.xlu0 %2214, %v1892
    %v2216 = vpop.permute.xlu0 %2215
    %2217 = vset.pattern.permute.xlu0 0
    %2218 = vperm.xlu0 %2217, %v1941
    %v2219 = vpop.permute.xlu0 %2218
    %2220 = vset.pattern.permute.xlu0 0
    %2221 = vperm.xlu0 %2220, %v1990
    %v2222 = vpop.permute.xlu0 %2221
    %2223 = vset.pattern.permute.xlu0 0
    %2224 = vperm.xlu0 %2223, %v2039
    %v2225 = vpop.permute.xlu0 %2224
    %2226 = vset.pattern.permute.xlu0 0
    %2227 = vperm.xlu0 %2226, %v2088
    %v2228 = vpop.permute.xlu0 %2227
    %2229 = vset.pattern.permute.xlu0 0
    %2230 = vperm.xlu0 %2229, %v2137
    %v2231 = vpop.permute.xlu0 %2230
    %2232 = vset.pattern.permute.xlu0 0
    %2233 = vperm.xlu0 %2232, %v2186
    %v2234 = vpop.permute.xlu0 %2233
    %v2235 = vlaneseq
    %v2236 = vand.u32 %v2235, 127
    %v2237 = vlaneseq
    %v2238 = vshrl.u32 %v2237, 7
    %v2239 = vsub.s32 %v2236, %v2238
    %v2240 = vrot.slane %v2189, %v2239
    %v2241 = vadd.s32 %v2236, 4294967288
    %v2242 = vlaneseq
    %v2243 = vshrl.u32 %v2242, 7
    %v2244 = vsub.s32 %v2241, %v2243
    %v2245 = vrot.slane %v2192, %v2244
    %vm2246 = vcmask 130112
    %v2247 = vsel %vm2246, %v2245, %v2240
    %v2248 = vadd.s32 %v2236, 4294967280
    %v2249 = vlaneseq
    %v2250 = vshrl.u32 %v2249, 7
    %v2251 = vsub.s32 %v2248, %v2250
    %v2252 = vrot.slane %v2195, %v2251
    %vm2253 = vcmask 195712
    %v2254 = vsel %vm2253, %v2252, %v2247
    %v2255 = vadd.s32 %v2236, 4294967272
    %v2256 = vlaneseq
    %v2257 = vshrl.u32 %v2256, 7
    %v2258 = vsub.s32 %v2255, %v2257
    %v2259 = vrot.slane %v2198, %v2258
    %vm2260 = vcmask 261312
    %v2261 = vsel %vm2260, %v2259, %v2254
    %v2262 = vadd.s32 %v2236, 4294967264
    %v2263 = vlaneseq
    %v2264 = vshrl.u32 %v2263, 7
    %v2265 = vsub.s32 %v2262, %v2264
    %v2266 = vrot.slane %v2201, %v2265
    %vm2267 = vcmask 326912
    %v2268 = vsel %vm2267, %v2266, %v2261
    %v2269 = vadd.s32 %v2236, 4294967256
    %v2270 = vlaneseq
    %v2271 = vshrl.u32 %v2270, 7
    %v2272 = vsub.s32 %v2269, %v2271
    %v2273 = vrot.slane %v2204, %v2272
    %vm2274 = vcmask 392512
    %v2275 = vsel %vm2274, %v2273, %v2268
    %v2276 = vadd.s32 %v2236, 4294967248
    %v2277 = vlaneseq
    %v2278 = vshrl.u32 %v2277, 7
    %v2279 = vsub.s32 %v2276, %v2278
    %v2280 = vrot.slane %v2207, %v2279
    %vm2281 = vcmask 458112
    %v2282 = vsel %vm2281, %v2280, %v2275
    %v2283 = vadd.s32 %v2236, 4294967240
    %v2284 = vlaneseq
    %v2285 = vshrl.u32 %v2284, 7
    %v2286 = vsub.s32 %v2283, %v2285
    %v2287 = vrot.slane %v2210, %v2286
    %vm2288 = vcmask 523712
    %v2289 = vsel %vm2288, %v2287, %v2282
    %v2290 = vadd.s32 %v2236, 4294967232
    %v2291 = vlaneseq
    %v2292 = vshrl.u32 %v2291, 7
    %v2293 = vsub.s32 %v2290, %v2292
    %v2294 = vrot.slane %v2213, %v2293
    %vm2295 = vcmask 589312
    %v2296 = vsel %vm2295, %v2294, %v2289
    %v2297 = vadd.s32 %v2236, 4294967224
    %v2298 = vlaneseq
    %v2299 = vshrl.u32 %v2298, 7
    %v2300 = vsub.s32 %v2297, %v2299
    %v2301 = vrot.slane %v2216, %v2300
    %vm2302 = vcmask 654912
    %v2303 = vsel %vm2302, %v2301, %v2296
    %v2304 = vadd.s32 %v2236, 4294967216
    %v2305 = vlaneseq
    %v2306 = vshrl.u32 %v2305, 7
    %v2307 = vsub.s32 %v2304, %v2306
    %v2308 = vrot.slane %v2219, %v2307
    %vm2309 = vcmask 720512
    %v2310 = vsel %vm2309, %v2308, %v2303
    %v2311 = vadd.s32 %v2236, 4294967208
    %v2312 = vlaneseq
    %v2313 = vshrl.u32 %v2312, 7
    %v2314 = vsub.s32 %v2311, %v2313
    %v2315 = vrot.slane %v2222, %v2314
    %vm2316 = vcmask 786112
    %v2317 = vsel %vm2316, %v2315, %v2310
    %v2318 = vadd.s32 %v2236, 4294967200
    %v2319 = vlaneseq
    %v2320 = vshrl.u32 %v2319, 7
    %v2321 = vsub.s32 %v2318, %v2320
    %v2322 = vrot.slane %v2225, %v2321
    %vm2323 = vcmask 851712
    %v2324 = vsel %vm2323, %v2322, %v2317
    %v2325 = vadd.s32 %v2236, 4294967192
    %v2326 = vlaneseq
    %v2327 = vshrl.u32 %v2326, 7
    %v2328 = vsub.s32 %v2325, %v2327
    %v2329 = vrot.slane %v2228, %v2328
    %vm2330 = vcmask 917312
    %v2331 = vsel %vm2330, %v2329, %v2324
    %v2332 = vadd.s32 %v2236, 4294967184
    %v2333 = vlaneseq
    %v2334 = vshrl.u32 %v2333, 7
    %v2335 = vsub.s32 %v2332, %v2334
    %v2336 = vrot.slane %v2231, %v2335
    %vm2337 = vcmask 982912
    %v2338 = vsel %vm2337, %v2336, %v2331
    %v2339 = vadd.s32 %v2236, 4294967176
    %v2340 = vlaneseq
    %v2341 = vshrl.u32 %v2340, 7
    %v2342 = vsub.s32 %v2339, %v2341
    %v2343 = vrot.slane %v2234, %v2342
    %vm2344 = vcmask 1048512
    %v2345 = vsel %vm2344, %v2343, %v2338
    %v2347 = vunpack.c.l.s4 1966171168
    %v2348 = vunpack.c.0.s8 %v2347
    %v2349 = vlaneseq
    %v2350 = vshrl.u32 %v2349, 7
    %v2351 = vsub.s32 %v2348, %v2350
    %v2352 = vrot.slane %v2345, %v2351
    %v2354 = vunpack.c.l.s4 1966171168
    %v2355 = vunpack.c.0.s8 %v2354
    %v2356 = vlaneseq
    %v2357 = vshrl.u32 %v2356, 7
    %v2358 = vsub.s32 %v2355, %v2357
    %v2359 = vrot.slane %v2352, %v2358
    %v2361 = vlaneseq
    %vm2362 = vcmp.ge.s32.totalorder %v2361, 0
    %vm2363 = vcmp.lt.s32.totalorder %v2361, 128
    %vm2364 = vmand %vm2362, %vm2363
    %2365 = vst.msk [vmem:[#allocation3] sm:$0x1] %vm2364, %v2359
    %v2366 = vld [vmem:[%s0 + $0x40] sm:$0xf]
    %v2367 = vld [vmem:[%s0 + $0x44] sm:$0xf]
    %v2368 = vld [vmem:[%s0 + $0x48] sm:$0xf]
    %v2369 = vld [vmem:[%s0 + $0x4c] sm:$0xf]
    %v2370 = vld [vmem:[%s0 + $0x50] sm:$0xf]
    %v2371 = vld [vmem:[%s0 + $0x54] sm:$0xf]
    %v2372 = vld [vmem:[%s0 + $0x58] sm:$0xf]
    %v2373 = vld [vmem:[%s0 + $0x5c] sm:$0xf]
    %v2374 = vld [vmem:[%s0 + $0x60] sm:$0xf]
    %v2375 = vld [vmem:[%s0 + $0x64] sm:$0xf]
    %v2376 = vld [vmem:[%s0 + $0x68] sm:$0xf]
    %v2377 = vld [vmem:[%s0 + $0x6c] sm:$0xf]
    %v2378 = vld [vmem:[%s0 + $0x70] sm:$0xf]
    %v2379 = vld [vmem:[%s0 + $0x74] sm:$0xf]
    %v2380 = vld [vmem:[%s0 + $0x78] sm:$0xf]
    %v2381 = vld [vmem:[%s0 + $0x7c] sm:$0xf]
    %v2398 = vunpack.c.l.b16 %v2366
    %v2399 = vunpack.c.l.b16 %v2367
    %v2400 = vunpack.c.l.b16 %v2368
    %v2401 = vunpack.c.l.b16 %v2369
    %v2402 = vunpack.c.l.b16 %v2370
    %v2403 = vunpack.c.l.b16 %v2371
    %v2404 = vunpack.c.l.b16 %v2372
    %v2405 = vunpack.c.l.b16 %v2373
    %v2406 = vunpack.c.l.b16 %v2374
    %v2407 = vunpack.c.l.b16 %v2375
    %v2408 = vunpack.c.l.b16 %v2376
    %v2409 = vunpack.c.l.b16 %v2377
    %v2410 = vunpack.c.l.b16 %v2378
    %v2411 = vunpack.c.l.b16 %v2379
    %v2412 = vunpack.c.l.b16 %v2380
    %v2413 = vunpack.c.l.b16 %v2381
    %v2414 = vpack.c.b16 %v2399, %v2398
    %v2415 = vpack.c.b16 %v2401, %v2400
    %v2416 = vpack.c.b16 %v2403, %v2402
    %v2417 = vpack.c.b16 %v2405, %v2404
    %v2418 = vpack.c.b16 %v2407, %v2406
    %v2419 = vpack.c.b16 %v2409, %v2408
    %v2420 = vpack.c.b16 %v2411, %v2410
    %v2421 = vpack.c.b16 %v2413, %v2412
    %v2423 = vsel %vm181, %v2414, 0
    %v2426 = vsel %vm181, %v2415, 0
    %v2429 = vsel %vm181, %v2416, 0
    %v2432 = vsel %vm181, %v2417, 0
    %v2435 = vsel %vm181, %v2418, 0
    %v2438 = vsel %vm181, %v2419, 0
    %v2441 = vsel %vm181, %v2420, 0
    %v2444 = vsel %vm181, %v2421, 0
    %2446 = vmatprep.subr.bf16.mxu0 %v174
    %2447 = vmatpush1.bf16.msra.mxu0 %v173
    %2448 = vmatprep.subr.bf16.mxu0 %v176
    %2449 = vmatpush1.bf16.msra.mxu0 %v175
    %2450 = vmatprep.subr.bf16.mxu0 0
    %2451 = vmatpush1.bf16.msra.mxu0 0
    %2452 = vmatprep.subr.bf16.mxu0 0
    %2453 = vmatpush1.bf16.msra.mxu0 0
    %2454 = vmatprep.subr.bf16.mxu0 0
    %2455 = vmatpush1.bf16.msra.mxu0 0
    %2456 = vmatprep.subr.bf16.mxu0 0
    %2457 = vmatpush1.bf16.msra.mxu0 0
    %2458 = vmatprep.subr.bf16.mxu0 0
    %2459 = vmatpush1.bf16.msra.mxu0 0
    %2460 = vmatprep.subr.bf16.mxu0 0
    %2461 = vmatpush1.bf16.msra.mxu0 0
    %2462 = vmatprep.subr.bf16.mxu0 0
    %2463 = vmatpush1.bf16.msra.mxu0 0
    %2464 = vmatprep.subr.bf16.mxu0 0
    %2465 = vmatpush1.bf16.msra.mxu0 0
    %2466 = vmatprep.subr.bf16.mxu0 0
    %2467 = vmatpush1.bf16.msra.mxu0 0
    %2468 = vmatprep.subr.bf16.mxu0 0
    %2469 = vmatpush1.bf16.msra.mxu0 0
    %2470 = vmatprep.subr.bf16.mxu0 0
    %2471 = vmatpush1.bf16.msra.mxu0 0
    %2472 = vmatprep.subr.bf16.mxu0 0
    %2473 = vmatpush1.bf16.msra.mxu0 0
    %2474 = vmatprep.subr.bf16.mxu0 0
    %2475 = vmatpush1.bf16.msra.mxu0 0
    %2476 = vmatprep.subr.bf16.mxu0 0
    %2477 = vmatpush1.bf16.msra.mxu0 0
    %2478 = vmatprep.mubr.bf16.mxu0 0
    %2479 = vmatmul.mubr.bf16.gmra.mrb[0].mxu0 %v2423
    %v2480 = vpop.f32.mrb[0].mxu0
    %v2481 = vadd.f32 %v114, %v2480
    %v2482 = vpop.f32.mrb[0].mxu0
    %v2483 = vadd.f32 %v118, %v2482
    %v2484 = vpop.f32.mrb[0].mxu0
    %v2485 = vadd.f32 %v114, %v2484
    %v2486 = vpop.f32.mrb[0].mxu0
    %v2487 = vadd.f32 %v118, %v2486
    %2488 = vmatprep.mubr.bf16.mxu0 0
    %2489 = vmatmul.mubr.bf16.gmra.mrb[0].mxu0 %v2426
    %v2490 = vpop.f32.mrb[0].mxu0
    %v2491 = vadd.f32 %v114, %v2490
    %v2492 = vpop.f32.mrb[0].mxu0
    %v2493 = vadd.f32 %v118, %v2492
    %v2494 = vpop.f32.mrb[0].mxu0
    %v2495 = vadd.f32 %v114, %v2494
    %v2496 = vpop.f32.mrb[0].mxu0
    %v2497 = vadd.f32 %v118, %v2496
    %2498 = vmatprep.mubr.bf16.mxu0 0
    %2499 = vmatmul.mubr.bf16.gmra.mrb[0].mxu0 %v2429
    %v2500 = vpop.f32.mrb[0].mxu0
    %v2501 = vadd.f32 %v114, %v2500
    %v2502 = vpop.f32.mrb[0].mxu0
    %v2503 = vadd.f32 %v118, %v2502
    %v2504 = vpop.f32.mrb[0].mxu0
    %v2505 = vadd.f32 %v114, %v2504
    %v2506 = vpop.f32.mrb[0].mxu0
    %v2507 = vadd.f32 %v118, %v2506
    %2508 = vmatprep.mubr.bf16.mxu0 0
    %2509 = vmatmul.mubr.bf16.gmra.mrb[0].mxu0 %v2432
    %v2510 = vpop.f32.mrb[0].mxu0
    %v2511 = vadd.f32 %v114, %v2510
    %v2512 = vpop.f32.mrb[0].mxu0
    %v2513 = vadd.f32 %v118, %v2512
    %v2514 = vpop.f32.mrb[0].mxu0
    %v2515 = vadd.f32 %v114, %v2514
    %v2516 = vpop.f32.mrb[0].mxu0
    %v2517 = vadd.f32 %v118, %v2516
    %2518 = vmatprep.mubr.bf16.mxu0 0
    %2519 = vmatmul.mubr.bf16.gmra.mrb[0].mxu0 %v2435
    %v2520 = vpop.f32.mrb[0].mxu0
    %v2521 = vadd.f32 %v114, %v2520
    %v2522 = vpop.f32.mrb[0].mxu0
    %v2523 = vadd.f32 %v118, %v2522
    %v2524 = vpop.f32.mrb[0].mxu0
    %v2525 = vadd.f32 %v114, %v2524
    %v2526 = vpop.f32.mrb[0].mxu0
    %v2527 = vadd.f32 %v118, %v2526
    %2528 = vmatprep.mubr.bf16.mxu0 0
    %2529 = vmatmul.mubr.bf16.gmra.mrb[0].mxu0 %v2438
    %v2530 = vpop.f32.mrb[0].mxu0
    %v2531 = vadd.f32 %v114, %v2530
    %v2532 = vpop.f32.mrb[0].mxu0
    %v2533 = vadd.f32 %v118, %v2532
    %v2534 = vpop.f32.mrb[0].mxu0
    %v2535 = vadd.f32 %v114, %v2534
    %v2536 = vpop.f32.mrb[0].mxu0
    %v2537 = vadd.f32 %v118, %v2536
    %2538 = vmatprep.mubr.bf16.mxu0 0
    %2539 = vmatmul.mubr.bf16.gmra.mrb[0].mxu0 %v2441
    %v2540 = vpop.f32.mrb[0].mxu0
    %v2541 = vadd.f32 %v114, %v2540
    %v2542 = vpop.f32.mrb[0].mxu0
    %v2543 = vadd.f32 %v118, %v2542
    %v2544 = vpop.f32.mrb[0].mxu0
    %v2545 = vadd.f32 %v114, %v2544
    %v2546 = vpop.f32.mrb[0].mxu0
    %v2547 = vadd.f32 %v118, %v2546
    %2548 = vmatprep.mubr.bf16.mxu0 0
    %2549 = vmatmul.mubr.bf16.gmra.mrb[0].mxu0 %v2444
    %v2550 = vpop.f32.mrb[0].mxu0
    %v2551 = vadd.f32 %v114, %v2550
    %v2552 = vpop.f32.mrb[0].mxu0
    %v2553 = vadd.f32 %v118, %v2552
    %v2554 = vpop.f32.mrb[0].mxu0
    %v2555 = vadd.f32 %v114, %v2554
    %v2556 = vpop.f32.mrb[0].mxu0
    %v2557 = vadd.f32 %v118, %v2556
    %2558 = vdwg.mxu0
    %v2559 = vmax.f32 %v2481, 0.0
    %v2560 = vmax.f32 %v2483, 0.0
    %v2561 = vmax.f32 %v2485, 0.0
    %v2562 = vmax.f32 %v2487, 0.0
    %v2563 = vmax.f32 %v2491, 0.0
    %v2564 = vmax.f32 %v2493, 0.0
    %v2565 = vmax.f32 %v2495, 0.0
    %v2566 = vmax.f32 %v2497, 0.0
    %v2567 = vmax.f32 %v2501, 0.0
    %v2568 = vmax.f32 %v2503, 0.0
    %v2569 = vmax.f32 %v2505, 0.0
    %v2570 = vmax.f32 %v2507, 0.0
    %v2571 = vmax.f32 %v2511, 0.0
    %v2572 = vmax.f32 %v2513, 0.0
    %v2573 = vmax.f32 %v2515, 0.0
    %v2574 = vmax.f32 %v2517, 0.0
    %v2575 = vmax.f32 %v2521, 0.0
    %v2576 = vmax.f32 %v2523, 0.0
    %v2577 = vmax.f32 %v2525, 0.0
    %v2578 = vmax.f32 %v2527, 0.0
    %v2579 = vmax.f32 %v2531, 0.0
    %v2580 = vmax.f32 %v2533, 0.0
    %v2581 = vmax.f32 %v2535, 0.0
    %v2582 = vmax.f32 %v2537, 0.0
    %v2583 = vmax.f32 %v2541, 0.0
    %v2584 = vmax.f32 %v2543, 0.0
    %v2585 = vmax.f32 %v2545, 0.0
    %v2586 = vmax.f32 %v2547, 0.0
    %v2587 = vmax.f32 %v2551, 0.0
    %v2588 = vmax.f32 %v2553, 0.0
    %v2589 = vmax.f32 %v2555, 0.0
    %v2590 = vmax.f32 %v2557, 0.0
    %v2591 = vpack.c.bf16 %v2561, %v2559
    %v2592 = vpack.c.bf16 %v2562, %v2560
    %v2593 = vpack.c.bf16 %v2565, %v2563
    %v2594 = vpack.c.bf16 %v2566, %v2564
    %v2595 = vpack.c.bf16 %v2569, %v2567
    %v2596 = vpack.c.bf16 %v2570, %v2568
    %v2597 = vpack.c.bf16 %v2573, %v2571
    %v2598 = vpack.c.bf16 %v2574, %v2572
    %v2599 = vpack.c.bf16 %v2577, %v2575
    %v2600 = vpack.c.bf16 %v2578, %v2576
    %v2601 = vpack.c.bf16 %v2581, %v2579
    %v2602 = vpack.c.bf16 %v2582, %v2580
    %v2603 = vpack.c.bf16 %v2585, %v2583
    %v2604 = vpack.c.bf16 %v2586, %v2584
    %v2605 = vpack.c.bf16 %v2589, %v2587
    %v2606 = vpack.c.bf16 %v2590, %v2588
    %2607 = vmatprep.subr.bf16.mxu0 0
    %2608 = vmatpush1.bf16.msra.mxu0 %v437
    %2609 = vmatprep.subr.bf16.mxu0 0
    %2610 = vmatpush1.bf16.msra.mxu0 %v438
    %2611 = vmatprep.subr.bf16.mxu0 0
    %2612 = vmatpush1.bf16.msra.mxu0 %v439
    %2613 = vmatprep.subr.bf16.mxu0 0
    %2614 = vmatpush1.bf16.msra.mxu0 %v440
    %2615 = vmatprep.subr.bf16.mxu0 0
    %2616 = vmatpush1.bf16.msra.mxu0 %v441
    %2617 = vmatprep.subr.bf16.mxu0 0
    %2618 = vmatpush1.bf16.msra.mxu0 %v442
    %2619 = vmatprep.subr.bf16.mxu0 0
    %2620 = vmatpush1.bf16.msra.mxu0 %v443
    %2621 = vmatprep.subr.bf16.mxu0 0
    %2622 = vmatpush1.bf16.msra.mxu0 %v444
    %2623 = vmatprep.subr.bf16.mxu0 0
    %2624 = vmatpush1.bf16.msra.mxu0 %v445
    %2625 = vmatprep.subr.bf16.mxu0 0
    %2626 = vmatpush1.bf16.msra.mxu0 %v446
    %2627 = vmatprep.subr.bf16.mxu0 0
    %2628 = vmatpush1.bf16.msra.mxu0 %v447
    %2629 = vmatprep.subr.bf16.mxu0 0
    %2630 = vmatpush1.bf16.msra.mxu0 %v448
    %2631 = vmatprep.subr.bf16.mxu0 0
    %2632 = vmatpush1.bf16.msra.mxu0 %v449
    %2633 = vmatprep.subr.bf16.mxu0 0
    %2634 = vmatpush1.bf16.msra.mxu0 %v450
    %2635 = vmatprep.subr.bf16.mxu0 0
    %2636 = vmatpush1.bf16.msra.mxu0 %v451
    %2637 = vmatprep.subr.bf16.mxu0 0
    %2638 = vmatpush1.bf16.msra.mxu0 %v452
    %2639 = vmatprep.mubr.bf16.mxu0 %v2592
    %2640 = vmatmul.mubr.bf16.gmra.mrb[0].mxu0 %v2591
    %v2641 = vpop.f32.mrb[0].mxu0
    %v2642 = vadd.f32 %v371, %v2641
    %v2643 = vpop.f32.mrb[0].mxu0
    %v2644 = vpop.f32.mrb[0].mxu0
    %v2645 = vadd.f32 %v371, %v2644
    %v2646 = vpop.f32.mrb[0].mxu0
    %2647 = vmatprep.mubr.bf16.mxu0 %v2594
    %2648 = vmatmul.mubr.bf16.gmra.mrb[0].mxu0 %v2593
    %v2649 = vpop.f32.mrb[0].mxu0
    %v2650 = vadd.f32 %v371, %v2649
    %v2651 = vpop.f32.mrb[0].mxu0
    %v2652 = vpop.f32.mrb[0].mxu0
    %v2653 = vadd.f32 %v371, %v2652
    %v2654 = vpop.f32.mrb[0].mxu0
    %2655 = vmatprep.mubr.bf16.mxu0 %v2596
    %2656 = vmatmul.mubr.bf16.gmra.mrb[0].mxu0 %v2595
    %v2657 = vpop.f32.mrb[0].mxu0
    %v2658 = vadd.f32 %v371, %v2657
    %v2659 = vpop.f32.mrb[0].mxu0
    %v2660 = vpop.f32.mrb[0].mxu0
    %v2661 = vadd.f32 %v371, %v2660
    %v2662 = vpop.f32.mrb[0].mxu0
    %2663 = vmatprep.mubr.bf16.mxu0 %v2598
    %2664 = vmatmul.mubr.bf16.gmra.mrb[0].mxu0 %v2597
    %v2665 = vpop.f32.mrb[0].mxu0
    %v2666 = vadd.f32 %v371, %v2665
    %v2667 = vpop.f32.mrb[0].mxu0
    %v2668 = vpop.f32.mrb[0].mxu0
    %v2669 = vadd.f32 %v371, %v2668
    %v2670 = vpop.f32.mrb[0].mxu0
    %2671 = vmatprep.mubr.bf16.mxu0 %v2600
    %2672 = vmatmul.mubr.bf16.gmra.mrb[0].mxu0 %v2599
    %v2673 = vpop.f32.mrb[0].mxu0
    %v2674 = vadd.f32 %v371, %v2673
    %v2675 = vpop.f32.mrb[0].mxu0
    %v2676 = vpop.f32.mrb[0].mxu0
    %v2677 = vadd.f32 %v371, %v2676
    %v2678 = vpop.f32.mrb[0].mxu0
    %2679 = vmatprep.mubr.bf16.mxu0 %v2602
    %2680 = vmatmul.mubr.bf16.gmra.mrb[0].mxu0 %v2601
    %v2681 = vpop.f32.mrb[0].mxu0
    %v2682 = vadd.f32 %v371, %v2681
    %v2683 = vpop.f32.mrb[0].mxu0
    %v2684 = vpop.f32.mrb[0].mxu0
    %v2685 = vadd.f32 %v371, %v2684
    %v2686 = vpop.f32.mrb[0].mxu0
    %2687 = vmatprep.mubr.bf16.mxu0 %v2604
    %2688 = vmatmul.mubr.bf16.gmra.mrb[0].mxu0 %v2603
    %v2689 = vpop.f32.mrb[0].mxu0
    %v2690 = vadd.f32 %v371, %v2689
    %v2691 = vpop.f32.mrb[0].mxu0
    %v2692 = vpop.f32.mrb[0].mxu0
    %v2693 = vadd.f32 %v371, %v2692
    %v2694 = vpop.f32.mrb[0].mxu0
    %2695 = vmatprep.mubr.bf16.mxu0 %v2606
    %2696 = vmatmul.mubr.bf16.gmra.mrb[0].mxu0 %v2605
    %v2697 = vpop.f32.mrb[0].mxu0
    %v2698 = vadd.f32 %v371, %v2697
    %v2699 = vpop.f32.mrb[0].mxu0
    %v2700 = vpop.f32.mrb[0].mxu0
    %v2701 = vadd.f32 %v371, %v2700
    %v2702 = vpop.f32.mrb[0].mxu0
    %2703 = vdwg.mxu0
    %v2704 = vmax.f32 %v2642, 0.0
    %v2705 = vmax.f32 %v2645, 0.0
    %v2706 = vmax.f32 %v2650, 0.0
    %v2707 = vmax.f32 %v2653, 0.0
    %v2708 = vmax.f32 %v2658, 0.0
    %v2709 = vmax.f32 %v2661, 0.0
    %v2710 = vmax.f32 %v2666, 0.0
    %v2711 = vmax.f32 %v2669, 0.0
    %v2712 = vmax.f32 %v2674, 0.0
    %v2713 = vmax.f32 %v2677, 0.0
    %v2714 = vmax.f32 %v2682, 0.0
    %v2715 = vmax.f32 %v2685, 0.0
    %v2716 = vmax.f32 %v2690, 0.0
    %v2717 = vmax.f32 %v2693, 0.0
    %v2718 = vmax.f32 %v2698, 0.0
    %v2719 = vmax.f32 %v2701, 0.0
    %v2720 = vpack.c.bf16 %v2705, %v2704
    %v2721 = vpack.c.bf16 %v2707, %v2706
    %v2722 = vpack.c.bf16 %v2709, %v2708
    %v2723 = vpack.c.bf16 %v2711, %v2710
    %v2724 = vpack.c.bf16 %v2713, %v2712
    %v2725 = vpack.c.bf16 %v2715, %v2714
    %v2726 = vpack.c.bf16 %v2717, %v2716
    %v2727 = vpack.c.bf16 %v2719, %v2718
    %2728 = vmatprep.subr.bf16.mxu0 0
    %2729 = vmatpush1.bf16.msra.mxu0 %v628
    %2730 = vmatprep.subr.bf16.mxu0 0
    %2731 = vmatpush1.bf16.msra.mxu0 %v629
    %2732 = vmatprep.subr.bf16.mxu0 0
    %2733 = vmatpush1.bf16.msra.mxu0 %v630
    %2734 = vmatprep.subr.bf16.mxu0 0
    %2735 = vmatpush1.bf16.msra.mxu0 %v631
    %2736 = vmatprep.subr.bf16.mxu0 0
    %2737 = vmatpush1.bf16.msra.mxu0 %v632
    %2738 = vmatprep.subr.bf16.mxu0 0
    %2739 = vmatpush1.bf16.msra.mxu0 %v633
    %2740 = vmatprep.subr.bf16.mxu0 0
    %2741 = vmatpush1.bf16.msra.mxu0 %v634
    %2742 = vmatprep.subr.bf16.mxu0 0
    %2743 = vmatpush1.bf16.msra.mxu0 %v635
    %2744 = vmatprep.subr.bf16.mxu0 0
    %2745 = vmatpush1.bf16.msra.mxu0 0
    %2746 = vmatprep.subr.bf16.mxu0 0
    %2747 = vmatpush1.bf16.msra.mxu0 0
    %2748 = vmatprep.subr.bf16.mxu0 0
    %2749 = vmatpush1.bf16.msra.mxu0 0
    %2750 = vmatprep.subr.bf16.mxu0 0
    %2751 = vmatpush1.bf16.msra.mxu0 0
    %2752 = vmatprep.subr.bf16.mxu0 0
    %2753 = vmatpush1.bf16.msra.mxu0 0
    %2754 = vmatprep.subr.bf16.mxu0 0
    %2755 = vmatpush1.bf16.msra.mxu0 0
    %2756 = vmatprep.subr.bf16.mxu0 0
    %2757 = vmatpush1.bf16.msra.mxu0 0
    %2758 = vmatprep.subr.bf16.mxu0 0
    %2759 = vmatpush1.bf16.msra.mxu0 0
    %2760 = vmatprep.mubr.bf16.mxu0 0
    %2761 = vmatmul.mubr.bf16.gmra.mrb[0].mxu0 %v2720
    %v2762 = vpop.f32.mrb[0].mxu0
    %v2763 = vadd.f32 %v594, %v2762
    %v2764 = vpop.f32.mrb[0].mxu0
    %v2765 = vpop.f32.mrb[0].mxu0
    %v2766 = vadd.f32 %v594, %v2765
    %v2767 = vpop.f32.mrb[0].mxu0
    %2768 = vmatprep.mubr.bf16.mxu0 0
    %2769 = vmatmul.mubr.bf16.gmra.mrb[0].mxu0 %v2721
    %v2770 = vpop.f32.mrb[0].mxu0
    %v2771 = vadd.f32 %v594, %v2770
    %v2772 = vpop.f32.mrb[0].mxu0
    %v2773 = vpop.f32.mrb[0].mxu0
    %v2774 = vadd.f32 %v594, %v2773
    %v2775 = vpop.f32.mrb[0].mxu0
    %2776 = vmatprep.mubr.bf16.mxu0 0
    %2777 = vmatmul.mubr.bf16.gmra.mrb[0].mxu0 %v2722
    %v2778 = vpop.f32.mrb[0].mxu0
    %v2779 = vadd.f32 %v594, %v2778
    %v2780 = vpop.f32.mrb[0].mxu0
    %v2781 = vpop.f32.mrb[0].mxu0
    %v2782 = vadd.f32 %v594, %v2781
    %v2783 = vpop.f32.mrb[0].mxu0
    %2784 = vmatprep.mubr.bf16.mxu0 0
    %2785 = vmatmul.mubr.bf16.gmra.mrb[0].mxu0 %v2723
    %v2786 = vpop.f32.mrb[0].mxu0
    %v2787 = vadd.f32 %v594, %v2786
    %v2788 = vpop.f32.mrb[0].mxu0
    %v2789 = vpop.f32.mrb[0].mxu0
    %v2790 = vadd.f32 %v594, %v2789
    %v2791 = vpop.f32.mrb[0].mxu0
    %2792 = vmatprep.mubr.bf16.mxu0 0
    %2793 = vmatmul.mubr.bf16.gmra.mrb[0].mxu0 %v2724
    %v2794 = vpop.f32.mrb[0].mxu0
    %v2795 = vadd.f32 %v594, %v2794
    %v2796 = vpop.f32.mrb[0].mxu0
    %v2797 = vpop.f32.mrb[0].mxu0
    %v2798 = vadd.f32 %v594, %v2797
    %v2799 = vpop.f32.mrb[0].mxu0
    %2800 = vmatprep.mubr.bf16.mxu0 0
    %2801 = vmatmul.mubr.bf16.gmra.mrb[0].mxu0 %v2725
    %v2802 = vpop.f32.mrb[0].mxu0
    %v2803 = vadd.f32 %v594, %v2802
    %v2804 = vpop.f32.mrb[0].mxu0
    %v2805 = vpop.f32.mrb[0].mxu0
    %v2806 = vadd.f32 %v594, %v2805
    %v2807 = vpop.f32.mrb[0].mxu0
    %2808 = vmatprep.mubr.bf16.mxu0 0
    %2809 = vmatmul.mubr.bf16.gmra.mrb[0].mxu0 %v2726
    %v2810 = vpop.f32.mrb[0].mxu0
    %v2811 = vadd.f32 %v594, %v2810
    %v2812 = vpop.f32.mrb[0].mxu0
    %v2813 = vpop.f32.mrb[0].mxu0
    %v2814 = vadd.f32 %v594, %v2813
    %v2815 = vpop.f32.mrb[0].mxu0
    %2816 = vmatprep.mubr.bf16.mxu0 0
    %2817 = vmatmul.mubr.bf16.gmra.mrb[0].mxu0 %v2727
    %v2818 = vpop.f32.mrb[0].mxu0
    %v2819 = vadd.f32 %v594, %v2818
    %v2820 = vpop.f32.mrb[0].mxu0
    %v2821 = vpop.f32.mrb[0].mxu0
    %v2822 = vadd.f32 %v594, %v2821
    %v2823 = vpop.f32.mrb[0].mxu0
    %2824 = vdwg.mxu0
    %v2825 = vmax.f32 %v2763, 0.0
    %v2826 = vmax.f32 %v2766, 0.0
    %v2827 = vmax.f32 %v2771, 0.0
    %v2828 = vmax.f32 %v2774, 0.0
    %v2829 = vmax.f32 %v2779, 0.0
    %v2830 = vmax.f32 %v2782, 0.0
    %v2831 = vmax.f32 %v2787, 0.0
    %v2832 = vmax.f32 %v2790, 0.0
    %v2833 = vmax.f32 %v2795, 0.0
    %v2834 = vmax.f32 %v2798, 0.0
    %v2835 = vmax.f32 %v2803, 0.0
    %v2836 = vmax.f32 %v2806, 0.0
    %v2837 = vmax.f32 %v2811, 0.0
    %v2838 = vmax.f32 %v2814, 0.0
    %v2839 = vmax.f32 %v2819, 0.0
    %v2840 = vmax.f32 %v2822, 0.0
    %v2841 = vpack.c.bf16 %v2826, %v2825
    %v2842 = vpack.c.bf16 %v2828, %v2827
    %v2843 = vpack.c.bf16 %v2830, %v2829
    %v2844 = vpack.c.bf16 %v2832, %v2831
    %v2845 = vpack.c.bf16 %v2834, %v2833
    %v2846 = vpack.c.bf16 %v2836, %v2835
    %v2847 = vpack.c.bf16 %v2838, %v2837
    %v2848 = vpack.c.bf16 %v2840, %v2839
    %v2849 = vunpack.c.l.bf16 %v2841
    %v2850 = vunpack.c.h.bf16 %v2841
    %v2851 = vunpack.c.l.bf16 %v2842
    %v2852 = vunpack.c.h.bf16 %v2842
    %v2853 = vunpack.c.l.bf16 %v2843
    %v2854 = vunpack.c.h.bf16 %v2843
    %v2855 = vunpack.c.l.bf16 %v2844
    %v2856 = vunpack.c.h.bf16 %v2844
    %v2857 = vunpack.c.l.bf16 %v2845
    %v2858 = vunpack.c.h.bf16 %v2845
    %v2859 = vunpack.c.l.bf16 %v2846
    %v2860 = vunpack.c.h.bf16 %v2846
    %v2861 = vunpack.c.l.bf16 %v2847
    %v2862 = vunpack.c.h.bf16 %v2847
    %v2863 = vunpack.c.l.bf16 %v2848
    %v2864 = vunpack.c.h.bf16 %v2848
    %v2865 = vmul.f32 %v2849, %v784
    %v2866 = vmul.f32 %v2850, %v784
    %v2867 = vmul.f32 %v2851, %v784
    %v2868 = vmul.f32 %v2852, %v784
    %v2869 = vmul.f32 %v2853, %v784
    %v2870 = vmul.f32 %v2854, %v784
    %v2871 = vmul.f32 %v2855, %v784
    %v2872 = vmul.f32 %v2856, %v784
    %v2873 = vmul.f32 %v2857, %v784
    %v2874 = vmul.f32 %v2858, %v784
    %v2875 = vmul.f32 %v2859, %v784
    %v2876 = vmul.f32 %v2860, %v784
    %v2877 = vmul.f32 %v2861, %v784
    %v2878 = vmul.f32 %v2862, %v784
    %v2879 = vmul.f32 %v2863, %v784
    %v2880 = vmul.f32 %v2864, %v784
    %v2881 = vsel %vm801, %v2865, 0.0
    %2882 = vadd.xlane.f32.xlu0 %v2881
    %v2883 = vpop.xlane.xlu0 %2882
    %v2884 = vsel %vm801, %v2866, 0.0
    %2885 = vadd.xlane.f32.xlu0 %v2884
    %v2886 = vpop.xlane.xlu0 %2885
    %v2887 = vsel %vm801, %v2867, 0.0
    %2888 = vadd.xlane.f32.xlu0 %v2887
    %v2889 = vpop.xlane.xlu0 %2888
    %v2890 = vsel %vm801, %v2868, 0.0
    %2891 = vadd.xlane.f32.xlu0 %v2890
    %v2892 = vpop.xlane.xlu0 %2891
    %v2893 = vsel %vm801, %v2869, 0.0
    %2894 = vadd.xlane.f32.xlu0 %v2893
    %v2895 = vpop.xlane.xlu0 %2894
    %v2896 = vsel %vm801, %v2870, 0.0
    %2897 = vadd.xlane.f32.xlu0 %v2896
    %v2898 = vpop.xlane.xlu0 %2897
    %v2899 = vsel %vm801, %v2871, 0.0
    %2900 = vadd.xlane.f32.xlu0 %v2899
    %v2901 = vpop.xlane.xlu0 %2900
    %v2902 = vsel %vm801, %v2872, 0.0
    %2903 = vadd.xlane.f32.xlu0 %v2902
    %v2904 = vpop.xlane.xlu0 %2903
    %v2905 = vsel %vm801, %v2873, 0.0
    %2906 = vadd.xlane.f32.xlu0 %v2905
    %v2907 = vpop.xlane.xlu0 %2906
    %v2908 = vsel %vm801, %v2874, 0.0
    %2909 = vadd.xlane.f32.xlu0 %v2908
    %v2910 = vpop.xlane.xlu0 %2909
    %v2911 = vsel %vm801, %v2875, 0.0
    %2912 = vadd.xlane.f32.xlu0 %v2911
    %v2913 = vpop.xlane.xlu0 %2912
    %v2914 = vsel %vm801, %v2876, 0.0
    %2915 = vadd.xlane.f32.xlu0 %v2914
    %v2916 = vpop.xlane.xlu0 %2915
    %v2917 = vsel %vm801, %v2877, 0.0
    %2918 = vadd.xlane.f32.xlu0 %v2917
    %v2919 = vpop.xlane.xlu0 %2918
    %v2920 = vsel %vm801, %v2878, 0.0
    %2921 = vadd.xlane.f32.xlu0 %v2920
    %v2922 = vpop.xlane.xlu0 %2921
    %v2923 = vsel %vm801, %v2879, 0.0
    %2924 = vadd.xlane.f32.xlu0 %v2923
    %v2925 = vpop.xlane.xlu0 %2924
    %v2926 = vsel %vm801, %v2880, 0.0
    %2927 = vadd.xlane.f32.xlu0 %v2926
    %v2928 = vpop.xlane.xlu0 %2927
    %v2929 = vadd.f32 %v2883, %v858
    %v2930 = vadd.f32 %v2886, %v858
    %v2931 = vadd.f32 %v2889, %v858
    %v2932 = vadd.f32 %v2892, %v858
    %v2933 = vadd.f32 %v2895, %v858
    %v2934 = vadd.f32 %v2898, %v858
    %v2935 = vadd.f32 %v2901, %v858
    %v2936 = vadd.f32 %v2904, %v858
    %v2937 = vadd.f32 %v2907, %v858
    %v2938 = vadd.f32 %v2910, %v858
    %v2939 = vadd.f32 %v2913, %v858
    %v2940 = vadd.f32 %v2916, %v858
    %v2941 = vadd.f32 %v2919, %v858
    %v2942 = vadd.f32 %v2922, %v858
    %v2943 = vadd.f32 %v2925, %v858
    %v2944 = vadd.f32 %v2928, %v858
    %v2961 = vlaneseq
    %v2962 = vshrl.u32 %v2961, 7
    %v2963 = vsub.s32 0, %v2962
    %v2964 = vrot.slane %v2929, %v2963
    %v2965 = vlaneseq
    %v2966 = vshrl.u32 %v2965, 7
    %v2967 = vsub.s32 1, %v2966
    %v2968 = vrot.slane %v2929, %v2967
    %v2969 = vlaneseq
    %v2970 = vshrl.u32 %v2969, 7
    %v2971 = vsub.s32 2, %v2970
    %v2972 = vrot.slane %v2929, %v2971
    %v2973 = vlaneseq
    %v2974 = vshrl.u32 %v2973, 7
    %v2975 = vsub.s32 3, %v2974
    %v2976 = vrot.slane %v2929, %v2975
    %v2977 = vlaneseq
    %v2978 = vshrl.u32 %v2977, 7
    %v2979 = vsub.s32 4, %v2978
    %v2980 = vrot.slane %v2929, %v2979
    %v2981 = vlaneseq
    %v2982 = vshrl.u32 %v2981, 7
    %v2983 = vsub.s32 5, %v2982
    %v2984 = vrot.slane %v2929, %v2983
    %v2985 = vlaneseq
    %v2986 = vshrl.u32 %v2985, 7
    %v2987 = vsub.s32 6, %v2986
    %v2988 = vrot.slane %v2929, %v2987
    %v2989 = vlaneseq
    %v2990 = vshrl.u32 %v2989, 7
    %v2991 = vsub.s32 7, %v2990
    %v2992 = vrot.slane %v2929, %v2991
    %v2993 = vlaneseq
    %v2994 = vshrl.u32 %v2993, 7
    %v2995 = vsub.s32 0, %v2994
    %v2996 = vrot.slane %v2930, %v2995
    %v2997 = vlaneseq
    %v2998 = vshrl.u32 %v2997, 7
    %v2999 = vsub.s32 1, %v2998
    %v3000 = vrot.slane %v2930, %v2999
    %v3001 = vlaneseq
    %v3002 = vshrl.u32 %v3001, 7
    %v3003 = vsub.s32 2, %v3002
    %v3004 = vrot.slane %v2930, %v3003
    %v3005 = vlaneseq
    %v3006 = vshrl.u32 %v3005, 7
    %v3007 = vsub.s32 3, %v3006
    %v3008 = vrot.slane %v2930, %v3007
    %v3009 = vlaneseq
    %v3010 = vshrl.u32 %v3009, 7
    %v3011 = vsub.s32 4, %v3010
    %v3012 = vrot.slane %v2930, %v3011
    %v3013 = vlaneseq
    %v3014 = vshrl.u32 %v3013, 7
    %v3015 = vsub.s32 5, %v3014
    %v3016 = vrot.slane %v2930, %v3015
    %v3017 = vlaneseq
    %v3018 = vshrl.u32 %v3017, 7
    %v3019 = vsub.s32 6, %v3018
    %v3020 = vrot.slane %v2930, %v3019
    %v3021 = vlaneseq
    %v3022 = vshrl.u32 %v3021, 7
    %v3023 = vsub.s32 7, %v3022
    %v3024 = vrot.slane %v2930, %v3023
    %v3025 = vlaneseq
    %v3026 = vshrl.u32 %v3025, 7
    %v3027 = vsub.s32 0, %v3026
    %v3028 = vrot.slane %v2931, %v3027
    %v3029 = vlaneseq
    %v3030 = vshrl.u32 %v3029, 7
    %v3031 = vsub.s32 1, %v3030
    %v3032 = vrot.slane %v2931, %v3031
    %v3033 = vlaneseq
    %v3034 = vshrl.u32 %v3033, 7
    %v3035 = vsub.s32 2, %v3034
    %v3036 = vrot.slane %v2931, %v3035
    %v3037 = vlaneseq
    %v3038 = vshrl.u32 %v3037, 7
    %v3039 = vsub.s32 3, %v3038
    %v3040 = vrot.slane %v2931, %v3039
    %v3041 = vlaneseq
    %v3042 = vshrl.u32 %v3041, 7
    %v3043 = vsub.s32 4, %v3042
    %v3044 = vrot.slane %v2931, %v3043
    %v3045 = vlaneseq
    %v3046 = vshrl.u32 %v3045, 7
    %v3047 = vsub.s32 5, %v3046
    %v3048 = vrot.slane %v2931, %v3047
    %v3049 = vlaneseq
    %v3050 = vshrl.u32 %v3049, 7
    %v3051 = vsub.s32 6, %v3050
    %v3052 = vrot.slane %v2931, %v3051
    %v3053 = vlaneseq
    %v3054 = vshrl.u32 %v3053, 7
    %v3055 = vsub.s32 7, %v3054
    %v3056 = vrot.slane %v2931, %v3055
    %v3057 = vlaneseq
    %v3058 = vshrl.u32 %v3057, 7
    %v3059 = vsub.s32 0, %v3058
    %v3060 = vrot.slane %v2932, %v3059
    %v3061 = vlaneseq
    %v3062 = vshrl.u32 %v3061, 7
    %v3063 = vsub.s32 1, %v3062
    %v3064 = vrot.slane %v2932, %v3063
    %v3065 = vlaneseq
    %v3066 = vshrl.u32 %v3065, 7
    %v3067 = vsub.s32 2, %v3066
    %v3068 = vrot.slane %v2932, %v3067
    %v3069 = vlaneseq
    %v3070 = vshrl.u32 %v3069, 7
    %v3071 = vsub.s32 3, %v3070
    %v3072 = vrot.slane %v2932, %v3071
    %v3073 = vlaneseq
    %v3074 = vshrl.u32 %v3073, 7
    %v3075 = vsub.s32 4, %v3074
    %v3076 = vrot.slane %v2932, %v3075
    %v3077 = vlaneseq
    %v3078 = vshrl.u32 %v3077, 7
    %v3079 = vsub.s32 5, %v3078
    %v3080 = vrot.slane %v2932, %v3079
    %v3081 = vlaneseq
    %v3082 = vshrl.u32 %v3081, 7
    %v3083 = vsub.s32 6, %v3082
    %v3084 = vrot.slane %v2932, %v3083
    %v3085 = vlaneseq
    %v3086 = vshrl.u32 %v3085, 7
    %v3087 = vsub.s32 7, %v3086
    %v3088 = vrot.slane %v2932, %v3087
    %v3089 = vlaneseq
    %v3090 = vshrl.u32 %v3089, 7
    %v3091 = vsub.s32 0, %v3090
    %v3092 = vrot.slane %v2933, %v3091
    %v3093 = vlaneseq
    %v3094 = vshrl.u32 %v3093, 7
    %v3095 = vsub.s32 1, %v3094
    %v3096 = vrot.slane %v2933, %v3095
    %v3097 = vlaneseq
    %v3098 = vshrl.u32 %v3097, 7
    %v3099 = vsub.s32 2, %v3098
    %v3100 = vrot.slane %v2933, %v3099
    %v3101 = vlaneseq
    %v3102 = vshrl.u32 %v3101, 7
    %v3103 = vsub.s32 3, %v3102
    %v3104 = vrot.slane %v2933, %v3103
    %v3105 = vlaneseq
    %v3106 = vshrl.u32 %v3105, 7
    %v3107 = vsub.s32 4, %v3106
    %v3108 = vrot.slane %v2933, %v3107
    %v3109 = vlaneseq
    %v3110 = vshrl.u32 %v3109, 7
    %v3111 = vsub.s32 5, %v3110
    %v3112 = vrot.slane %v2933, %v3111
    %v3113 = vlaneseq
    %v3114 = vshrl.u32 %v3113, 7
    %v3115 = vsub.s32 6, %v3114
    %v3116 = vrot.slane %v2933, %v3115
    %v3117 = vlaneseq
    %v3118 = vshrl.u32 %v3117, 7
    %v3119 = vsub.s32 7, %v3118
    %v3120 = vrot.slane %v2933, %v3119
    %v3121 = vlaneseq
    %v3122 = vshrl.u32 %v3121, 7
    %v3123 = vsub.s32 0, %v3122
    %v3124 = vrot.slane %v2934, %v3123
    %v3125 = vlaneseq
    %v3126 = vshrl.u32 %v3125, 7
    %v3127 = vsub.s32 1, %v3126
    %v3128 = vrot.slane %v2934, %v3127
    %v3129 = vlaneseq
    %v3130 = vshrl.u32 %v3129, 7
    %v3131 = vsub.s32 2, %v3130
    %v3132 = vrot.slane %v2934, %v3131
    %v3133 = vlaneseq
    %v3134 = vshrl.u32 %v3133, 7
    %v3135 = vsub.s32 3, %v3134
    %v3136 = vrot.slane %v2934, %v3135
    %v3137 = vlaneseq
    %v3138 = vshrl.u32 %v3137, 7
    %v3139 = vsub.s32 4, %v3138
    %v3140 = vrot.slane %v2934, %v3139
    %v3141 = vlaneseq
    %v3142 = vshrl.u32 %v3141, 7
    %v3143 = vsub.s32 5, %v3142
    %v3144 = vrot.slane %v2934, %v3143
    %v3145 = vlaneseq
    %v3146 = vshrl.u32 %v3145, 7
    %v3147 = vsub.s32 6, %v3146
    %v3148 = vrot.slane %v2934, %v3147
    %v3149 = vlaneseq
    %v3150 = vshrl.u32 %v3149, 7
    %v3151 = vsub.s32 7, %v3150
    %v3152 = vrot.slane %v2934, %v3151
    %v3153 = vlaneseq
    %v3154 = vshrl.u32 %v3153, 7
    %v3155 = vsub.s32 0, %v3154
    %v3156 = vrot.slane %v2935, %v3155
    %v3157 = vlaneseq
    %v3158 = vshrl.u32 %v3157, 7
    %v3159 = vsub.s32 1, %v3158
    %v3160 = vrot.slane %v2935, %v3159
    %v3161 = vlaneseq
    %v3162 = vshrl.u32 %v3161, 7
    %v3163 = vsub.s32 2, %v3162
    %v3164 = vrot.slane %v2935, %v3163
    %v3165 = vlaneseq
    %v3166 = vshrl.u32 %v3165, 7
    %v3167 = vsub.s32 3, %v3166
    %v3168 = vrot.slane %v2935, %v3167
    %v3169 = vlaneseq
    %v3170 = vshrl.u32 %v3169, 7
    %v3171 = vsub.s32 4, %v3170
    %v3172 = vrot.slane %v2935, %v3171
    %v3173 = vlaneseq
    %v3174 = vshrl.u32 %v3173, 7
    %v3175 = vsub.s32 5, %v3174
    %v3176 = vrot.slane %v2935, %v3175
    %v3177 = vlaneseq
    %v3178 = vshrl.u32 %v3177, 7
    %v3179 = vsub.s32 6, %v3178
    %v3180 = vrot.slane %v2935, %v3179
    %v3181 = vlaneseq
    %v3182 = vshrl.u32 %v3181, 7
    %v3183 = vsub.s32 7, %v3182
    %v3184 = vrot.slane %v2935, %v3183
    %v3185 = vlaneseq
    %v3186 = vshrl.u32 %v3185, 7
    %v3187 = vsub.s32 0, %v3186
    %v3188 = vrot.slane %v2936, %v3187
    %v3189 = vlaneseq
    %v3190 = vshrl.u32 %v3189, 7
    %v3191 = vsub.s32 1, %v3190
    %v3192 = vrot.slane %v2936, %v3191
    %v3193 = vlaneseq
    %v3194 = vshrl.u32 %v3193, 7
    %v3195 = vsub.s32 2, %v3194
    %v3196 = vrot.slane %v2936, %v3195
    %v3197 = vlaneseq
    %v3198 = vshrl.u32 %v3197, 7
    %v3199 = vsub.s32 3, %v3198
    %v3200 = vrot.slane %v2936, %v3199
    %v3201 = vlaneseq
    %v3202 = vshrl.u32 %v3201, 7
    %v3203 = vsub.s32 4, %v3202
    %v3204 = vrot.slane %v2936, %v3203
    %v3205 = vlaneseq
    %v3206 = vshrl.u32 %v3205, 7
    %v3207 = vsub.s32 5, %v3206
    %v3208 = vrot.slane %v2936, %v3207
    %v3209 = vlaneseq
    %v3210 = vshrl.u32 %v3209, 7
    %v3211 = vsub.s32 6, %v3210
    %v3212 = vrot.slane %v2936, %v3211
    %v3213 = vlaneseq
    %v3214 = vshrl.u32 %v3213, 7
    %v3215 = vsub.s32 7, %v3214
    %v3216 = vrot.slane %v2936, %v3215
    %v3217 = vlaneseq
    %v3218 = vshrl.u32 %v3217, 7
    %v3219 = vsub.s32 0, %v3218
    %v3220 = vrot.slane %v2937, %v3219
    %v3221 = vlaneseq
    %v3222 = vshrl.u32 %v3221, 7
    %v3223 = vsub.s32 1, %v3222
    %v3224 = vrot.slane %v2937, %v3223
    %v3225 = vlaneseq
    %v3226 = vshrl.u32 %v3225, 7
    %v3227 = vsub.s32 2, %v3226
    %v3228 = vrot.slane %v2937, %v3227
    %v3229 = vlaneseq
    %v3230 = vshrl.u32 %v3229, 7
    %v3231 = vsub.s32 3, %v3230
    %v3232 = vrot.slane %v2937, %v3231
    %v3233 = vlaneseq
    %v3234 = vshrl.u32 %v3233, 7
    %v3235 = vsub.s32 4, %v3234
    %v3236 = vrot.slane %v2937, %v3235
    %v3237 = vlaneseq
    %v3238 = vshrl.u32 %v3237, 7
    %v3239 = vsub.s32 5, %v3238
    %v3240 = vrot.slane %v2937, %v3239
    %v3241 = vlaneseq
    %v3242 = vshrl.u32 %v3241, 7
    %v3243 = vsub.s32 6, %v3242
    %v3244 = vrot.slane %v2937, %v3243
    %v3245 = vlaneseq
    %v3246 = vshrl.u32 %v3245, 7
    %v3247 = vsub.s32 7, %v3246
    %v3248 = vrot.slane %v2937, %v3247
    %v3249 = vlaneseq
    %v3250 = vshrl.u32 %v3249, 7
    %v3251 = vsub.s32 0, %v3250
    %v3252 = vrot.slane %v2938, %v3251
    %v3253 = vlaneseq
    %v3254 = vshrl.u32 %v3253, 7
    %v3255 = vsub.s32 1, %v3254
    %v3256 = vrot.slane %v2938, %v3255
    %v3257 = vlaneseq
    %v3258 = vshrl.u32 %v3257, 7
    %v3259 = vsub.s32 2, %v3258
    %v3260 = vrot.slane %v2938, %v3259
    %v3261 = vlaneseq
    %v3262 = vshrl.u32 %v3261, 7
    %v3263 = vsub.s32 3, %v3262
    %v3264 = vrot.slane %v2938, %v3263
    %v3265 = vlaneseq
    %v3266 = vshrl.u32 %v3265, 7
    %v3267 = vsub.s32 4, %v3266
    %v3268 = vrot.slane %v2938, %v3267
    %v3269 = vlaneseq
    %v3270 = vshrl.u32 %v3269, 7
    %v3271 = vsub.s32 5, %v3270
    %v3272 = vrot.slane %v2938, %v3271
    %v3273 = vlaneseq
    %v3274 = vshrl.u32 %v3273, 7
    %v3275 = vsub.s32 6, %v3274
    %v3276 = vrot.slane %v2938, %v3275
    %v3277 = vlaneseq
    %v3278 = vshrl.u32 %v3277, 7
    %v3279 = vsub.s32 7, %v3278
    %v3280 = vrot.slane %v2938, %v3279
    %v3281 = vlaneseq
    %v3282 = vshrl.u32 %v3281, 7
    %v3283 = vsub.s32 0, %v3282
    %v3284 = vrot.slane %v2939, %v3283
    %v3285 = vlaneseq
    %v3286 = vshrl.u32 %v3285, 7
    %v3287 = vsub.s32 1, %v3286
    %v3288 = vrot.slane %v2939, %v3287
    %v3289 = vlaneseq
    %v3290 = vshrl.u32 %v3289, 7
    %v3291 = vsub.s32 2, %v3290
    %v3292 = vrot.slane %v2939, %v3291
    %v3293 = vlaneseq
    %v3294 = vshrl.u32 %v3293, 7
    %v3295 = vsub.s32 3, %v3294
    %v3296 = vrot.slane %v2939, %v3295
    %v3297 = vlaneseq
    %v3298 = vshrl.u32 %v3297, 7
    %v3299 = vsub.s32 4, %v3298
    %v3300 = vrot.slane %v2939, %v3299
    %v3301 = vlaneseq
    %v3302 = vshrl.u32 %v3301, 7
    %v3303 = vsub.s32 5, %v3302
    %v3304 = vrot.slane %v2939, %v3303
    %v3305 = vlaneseq
    %v3306 = vshrl.u32 %v3305, 7
    %v3307 = vsub.s32 6, %v3306
    %v3308 = vrot.slane %v2939, %v3307
    %v3309 = vlaneseq
    %v3310 = vshrl.u32 %v3309, 7
    %v3311 = vsub.s32 7, %v3310
    %v3312 = vrot.slane %v2939, %v3311
    %v3313 = vlaneseq
    %v3314 = vshrl.u32 %v3313, 7
    %v3315 = vsub.s32 0, %v3314
    %v3316 = vrot.slane %v2940, %v3315
    %v3317 = vlaneseq
    %v3318 = vshrl.u32 %v3317, 7
    %v3319 = vsub.s32 1, %v3318
    %v3320 = vrot.slane %v2940, %v3319
    %v3321 = vlaneseq
    %v3322 = vshrl.u32 %v3321, 7
    %v3323 = vsub.s32 2, %v3322
    %v3324 = vrot.slane %v2940, %v3323
    %v3325 = vlaneseq
    %v3326 = vshrl.u32 %v3325, 7
    %v3327 = vsub.s32 3, %v3326
    %v3328 = vrot.slane %v2940, %v3327
    %v3329 = vlaneseq
    %v3330 = vshrl.u32 %v3329, 7
    %v3331 = vsub.s32 4, %v3330
    %v3332 = vrot.slane %v2940, %v3331
    %v3333 = vlaneseq
    %v3334 = vshrl.u32 %v3333, 7
    %v3335 = vsub.s32 5, %v3334
    %v3336 = vrot.slane %v2940, %v3335
    %v3337 = vlaneseq
    %v3338 = vshrl.u32 %v3337, 7
    %v3339 = vsub.s32 6, %v3338
    %v3340 = vrot.slane %v2940, %v3339
    %v3341 = vlaneseq
    %v3342 = vshrl.u32 %v3341, 7
    %v3343 = vsub.s32 7, %v3342
    %v3344 = vrot.slane %v2940, %v3343
    %v3345 = vlaneseq
    %v3346 = vshrl.u32 %v3345, 7
    %v3347 = vsub.s32 0, %v3346
    %v3348 = vrot.slane %v2941, %v3347
    %v3349 = vlaneseq
    %v3350 = vshrl.u32 %v3349, 7
    %v3351 = vsub.s32 1, %v3350
    %v3352 = vrot.slane %v2941, %v3351
    %v3353 = vlaneseq
    %v3354 = vshrl.u32 %v3353, 7
    %v3355 = vsub.s32 2, %v3354
    %v3356 = vrot.slane %v2941, %v3355
    %v3357 = vlaneseq
    %v3358 = vshrl.u32 %v3357, 7
    %v3359 = vsub.s32 3, %v3358
    %v3360 = vrot.slane %v2941, %v3359
    %v3361 = vlaneseq
    %v3362 = vshrl.u32 %v3361, 7
    %v3363 = vsub.s32 4, %v3362
    %v3364 = vrot.slane %v2941, %v3363
    %v3365 = vlaneseq
    %v3366 = vshrl.u32 %v3365, 7
    %v3367 = vsub.s32 5, %v3366
    %v3368 = vrot.slane %v2941, %v3367
    %v3369 = vlaneseq
    %v3370 = vshrl.u32 %v3369, 7
    %v3371 = vsub.s32 6, %v3370
    %v3372 = vrot.slane %v2941, %v3371
    %v3373 = vlaneseq
    %v3374 = vshrl.u32 %v3373, 7
    %v3375 = vsub.s32 7, %v3374
    %v3376 = vrot.slane %v2941, %v3375
    %v3377 = vlaneseq
    %v3378 = vshrl.u32 %v3377, 7
    %v3379 = vsub.s32 0, %v3378
    %v3380 = vrot.slane %v2942, %v3379
    %v3381 = vlaneseq
    %v3382 = vshrl.u32 %v3381, 7
    %v3383 = vsub.s32 1, %v3382
    %v3384 = vrot.slane %v2942, %v3383
    %v3385 = vlaneseq
    %v3386 = vshrl.u32 %v3385, 7
    %v3387 = vsub.s32 2, %v3386
    %v3388 = vrot.slane %v2942, %v3387
    %v3389 = vlaneseq
    %v3390 = vshrl.u32 %v3389, 7
    %v3391 = vsub.s32 3, %v3390
    %v3392 = vrot.slane %v2942, %v3391
    %v3393 = vlaneseq
    %v3394 = vshrl.u32 %v3393, 7
    %v3395 = vsub.s32 4, %v3394
    %v3396 = vrot.slane %v2942, %v3395
    %v3397 = vlaneseq
    %v3398 = vshrl.u32 %v3397, 7
    %v3399 = vsub.s32 5, %v3398
    %v3400 = vrot.slane %v2942, %v3399
    %v3401 = vlaneseq
    %v3402 = vshrl.u32 %v3401, 7
    %v3403 = vsub.s32 6, %v3402
    %v3404 = vrot.slane %v2942, %v3403
    %v3405 = vlaneseq
    %v3406 = vshrl.u32 %v3405, 7
    %v3407 = vsub.s32 7, %v3406
    %v3408 = vrot.slane %v2942, %v3407
    %v3409 = vlaneseq
    %v3410 = vshrl.u32 %v3409, 7
    %v3411 = vsub.s32 0, %v3410
    %v3412 = vrot.slane %v2943, %v3411
    %v3413 = vlaneseq
    %v3414 = vshrl.u32 %v3413, 7
    %v3415 = vsub.s32 1, %v3414
    %v3416 = vrot.slane %v2943, %v3415
    %v3417 = vlaneseq
    %v3418 = vshrl.u32 %v3417, 7
    %v3419 = vsub.s32 2, %v3418
    %v3420 = vrot.slane %v2943, %v3419
    %v3421 = vlaneseq
    %v3422 = vshrl.u32 %v3421, 7
    %v3423 = vsub.s32 3, %v3422
    %v3424 = vrot.slane %v2943, %v3423
    %v3425 = vlaneseq
    %v3426 = vshrl.u32 %v3425, 7
    %v3427 = vsub.s32 4, %v3426
    %v3428 = vrot.slane %v2943, %v3427
    %v3429 = vlaneseq
    %v3430 = vshrl.u32 %v3429, 7
    %v3431 = vsub.s32 5, %v3430
    %v3432 = vrot.slane %v2943, %v3431
    %v3433 = vlaneseq
    %v3434 = vshrl.u32 %v3433, 7
    %v3435 = vsub.s32 6, %v3434
    %v3436 = vrot.slane %v2943, %v3435
    %v3437 = vlaneseq
    %v3438 = vshrl.u32 %v3437, 7
    %v3439 = vsub.s32 7, %v3438
    %v3440 = vrot.slane %v2943, %v3439
    %v3441 = vlaneseq
    %v3442 = vshrl.u32 %v3441, 7
    %v3443 = vsub.s32 0, %v3442
    %v3444 = vrot.slane %v2944, %v3443
    %v3445 = vlaneseq
    %v3446 = vshrl.u32 %v3445, 7
    %v3447 = vsub.s32 1, %v3446
    %v3448 = vrot.slane %v2944, %v3447
    %v3449 = vlaneseq
    %v3450 = vshrl.u32 %v3449, 7
    %v3451 = vsub.s32 2, %v3450
    %v3452 = vrot.slane %v2944, %v3451
    %v3453 = vlaneseq
    %v3454 = vshrl.u32 %v3453, 7
    %v3455 = vsub.s32 3, %v3454
    %v3456 = vrot.slane %v2944, %v3455
    %v3457 = vlaneseq
    %v3458 = vshrl.u32 %v3457, 7
    %v3459 = vsub.s32 4, %v3458
    %v3460 = vrot.slane %v2944, %v3459
    %v3461 = vlaneseq
    %v3462 = vshrl.u32 %v3461, 7
    %v3463 = vsub.s32 5, %v3462
    %v3464 = vrot.slane %v2944, %v3463
    %v3465 = vlaneseq
    %v3466 = vshrl.u32 %v3465, 7
    %v3467 = vsub.s32 6, %v3466
    %v3468 = vrot.slane %v2944, %v3467
    %v3469 = vlaneseq
    %v3470 = vshrl.u32 %v3469, 7
    %v3471 = vsub.s32 7, %v3470
    %v3472 = vrot.slane %v2944, %v3471
    %v3473 = vcombine.low %v2964, %v2968
    %v3474 = vcombine.low %v2972, %v2976
    %v3475 = vcombine.low %v2980, %v2984
    %v3476 = vcombine.low %v2988, %v2992
    %v3478 = vunpack.c.l.s4 1966171168
    %v3479 = vunpack.c.0.s8 %v3478
    %v3480 = vlaneseq
    %v3481 = vshrl.u32 %v3480, 7
    %v3482 = vsub.s32 %v3479, %v3481
    %v3483 = vrot.slane %v3473, %v3482
    %v3485 = vunpack.c.l.s4 1966171168
    %v3486 = vunpack.c.0.s8 %v3485
    %v3487 = vlaneseq
    %v3488 = vshrl.u32 %v3487, 7
    %v3489 = vsub.s32 %v3486, %v3488
    %v3490 = vrot.slane %v3474, %v3489
    %v3492 = vunpack.c.l.s4 1966171168
    %v3493 = vunpack.c.0.s8 %v3492
    %v3494 = vlaneseq
    %v3495 = vshrl.u32 %v3494, 7
    %v3496 = vsub.s32 %v3493, %v3495
    %v3497 = vrot.slane %v3475, %v3496
    %v3499 = vunpack.c.l.s4 1966171168
    %v3500 = vunpack.c.0.s8 %v3499
    %v3501 = vlaneseq
    %v3502 = vshrl.u32 %v3501, 7
    %v3503 = vsub.s32 %v3500, %v3502
    %v3504 = vrot.slane %v3476, %v3503
    %v3505 = vcombine.low %v3483, %v3490
    %v3506 = vcombine.low %v3497, %v3504
    %v3508 = vunpack.c.l.s4 1966171168
    %v3509 = vunpack.c.0.s8 %v3508
    %v3510 = vlaneseq
    %v3511 = vshrl.u32 %v3510, 7
    %v3512 = vsub.s32 %v3509, %v3511
    %v3513 = vrot.slane %v3505, %v3512
    %v3515 = vunpack.c.l.s4 1966171168
    %v3516 = vunpack.c.0.s8 %v3515
    %v3517 = vlaneseq
    %v3518 = vshrl.u32 %v3517, 7
    %v3519 = vsub.s32 %v3516, %v3518
    %v3520 = vrot.slane %v3506, %v3519
    %v3521 = vcombine.low %v3513, %v3520
    %v3522 = vcombine.low %v2996, %v3000
    %v3523 = vcombine.low %v3004, %v3008
    %v3524 = vcombine.low %v3012, %v3016
    %v3525 = vcombine.low %v3020, %v3024
    %v3527 = vunpack.c.l.s4 1966171168
    %v3528 = vunpack.c.0.s8 %v3527
    %v3529 = vlaneseq
    %v3530 = vshrl.u32 %v3529, 7
    %v3531 = vsub.s32 %v3528, %v3530
    %v3532 = vrot.slane %v3522, %v3531
    %v3534 = vunpack.c.l.s4 1966171168
    %v3535 = vunpack.c.0.s8 %v3534
    %v3536 = vlaneseq
    %v3537 = vshrl.u32 %v3536, 7
    %v3538 = vsub.s32 %v3535, %v3537
    %v3539 = vrot.slane %v3523, %v3538
    %v3541 = vunpack.c.l.s4 1966171168
    %v3542 = vunpack.c.0.s8 %v3541
    %v3543 = vlaneseq
    %v3544 = vshrl.u32 %v3543, 7
    %v3545 = vsub.s32 %v3542, %v3544
    %v3546 = vrot.slane %v3524, %v3545
    %v3548 = vunpack.c.l.s4 1966171168
    %v3549 = vunpack.c.0.s8 %v3548
    %v3550 = vlaneseq
    %v3551 = vshrl.u32 %v3550, 7
    %v3552 = vsub.s32 %v3549, %v3551
    %v3553 = vrot.slane %v3525, %v3552
    %v3554 = vcombine.low %v3532, %v3539
    %v3555 = vcombine.low %v3546, %v3553
    %v3557 = vunpack.c.l.s4 1966171168
    %v3558 = vunpack.c.0.s8 %v3557
    %v3559 = vlaneseq
    %v3560 = vshrl.u32 %v3559, 7
    %v3561 = vsub.s32 %v3558, %v3560
    %v3562 = vrot.slane %v3554, %v3561
    %v3564 = vunpack.c.l.s4 1966171168
    %v3565 = vunpack.c.0.s8 %v3564
    %v3566 = vlaneseq
    %v3567 = vshrl.u32 %v3566, 7
    %v3568 = vsub.s32 %v3565, %v3567
    %v3569 = vrot.slane %v3555, %v3568
    %v3570 = vcombine.low %v3562, %v3569
    %v3571 = vcombine.low %v3028, %v3032
    %v3572 = vcombine.low %v3036, %v3040
    %v3573 = vcombine.low %v3044, %v3048
    %v3574 = vcombine.low %v3052, %v3056
    %v3576 = vunpack.c.l.s4 1966171168
    %v3577 = vunpack.c.0.s8 %v3576
    %v3578 = vlaneseq
    %v3579 = vshrl.u32 %v3578, 7
    %v3580 = vsub.s32 %v3577, %v3579
    %v3581 = vrot.slane %v3571, %v3580
    %v3583 = vunpack.c.l.s4 1966171168
    %v3584 = vunpack.c.0.s8 %v3583
    %v3585 = vlaneseq
    %v3586 = vshrl.u32 %v3585, 7
    %v3587 = vsub.s32 %v3584, %v3586
    %v3588 = vrot.slane %v3572, %v3587
    %v3590 = vunpack.c.l.s4 1966171168
    %v3591 = vunpack.c.0.s8 %v3590
    %v3592 = vlaneseq
    %v3593 = vshrl.u32 %v3592, 7
    %v3594 = vsub.s32 %v3591, %v3593
    %v3595 = vrot.slane %v3573, %v3594
    %v3597 = vunpack.c.l.s4 1966171168
    %v3598 = vunpack.c.0.s8 %v3597
    %v3599 = vlaneseq
    %v3600 = vshrl.u32 %v3599, 7
    %v3601 = vsub.s32 %v3598, %v3600
    %v3602 = vrot.slane %v3574, %v3601
    %v3603 = vcombine.low %v3581, %v3588
    %v3604 = vcombine.low %v3595, %v3602
    %v3606 = vunpack.c.l.s4 1966171168
    %v3607 = vunpack.c.0.s8 %v3606
    %v3608 = vlaneseq
    %v3609 = vshrl.u32 %v3608, 7
    %v3610 = vsub.s32 %v3607, %v3609
    %v3611 = vrot.slane %v3603, %v3610
    %v3613 = vunpack.c.l.s4 1966171168
    %v3614 = vunpack.c.0.s8 %v3613
    %v3615 = vlaneseq
    %v3616 = vshrl.u32 %v3615, 7
    %v3617 = vsub.s32 %v3614, %v3616
    %v3618 = vrot.slane %v3604, %v3617
    %v3619 = vcombine.low %v3611, %v3618
    %v3620 = vcombine.low %v3060, %v3064
    %v3621 = vcombine.low %v3068, %v3072
    %v3622 = vcombine.low %v3076, %v3080
    %v3623 = vcombine.low %v3084, %v3088
    %v3625 = vunpack.c.l.s4 1966171168
    %v3626 = vunpack.c.0.s8 %v3625
    %v3627 = vlaneseq
    %v3628 = vshrl.u32 %v3627, 7
    %v3629 = vsub.s32 %v3626, %v3628
    %v3630 = vrot.slane %v3620, %v3629
    %v3632 = vunpack.c.l.s4 1966171168
    %v3633 = vunpack.c.0.s8 %v3632
    %v3634 = vlaneseq
    %v3635 = vshrl.u32 %v3634, 7
    %v3636 = vsub.s32 %v3633, %v3635
    %v3637 = vrot.slane %v3621, %v3636
    %v3639 = vunpack.c.l.s4 1966171168
    %v3640 = vunpack.c.0.s8 %v3639
    %v3641 = vlaneseq
    %v3642 = vshrl.u32 %v3641, 7
    %v3643 = vsub.s32 %v3640, %v3642
    %v3644 = vrot.slane %v3622, %v3643
    %v3646 = vunpack.c.l.s4 1966171168
    %v3647 = vunpack.c.0.s8 %v3646
    %v3648 = vlaneseq
    %v3649 = vshrl.u32 %v3648, 7
    %v3650 = vsub.s32 %v3647, %v3649
    %v3651 = vrot.slane %v3623, %v3650
    %v3652 = vcombine.low %v3630, %v3637
    %v3653 = vcombine.low %v3644, %v3651
    %v3655 = vunpack.c.l.s4 1966171168
    %v3656 = vunpack.c.0.s8 %v3655
    %v3657 = vlaneseq
    %v3658 = vshrl.u32 %v3657, 7
    %v3659 = vsub.s32 %v3656, %v3658
    %v3660 = vrot.slane %v3652, %v3659
    %v3662 = vunpack.c.l.s4 1966171168
    %v3663 = vunpack.c.0.s8 %v3662
    %v3664 = vlaneseq
    %v3665 = vshrl.u32 %v3664, 7
    %v3666 = vsub.s32 %v3663, %v3665
    %v3667 = vrot.slane %v3653, %v3666
    %v3668 = vcombine.low %v3660, %v3667
    %v3669 = vcombine.low %v3092, %v3096
    %v3670 = vcombine.low %v3100, %v3104
    %v3671 = vcombine.low %v3108, %v3112
    %v3672 = vcombine.low %v3116, %v3120
    %v3674 = vunpack.c.l.s4 1966171168
    %v3675 = vunpack.c.0.s8 %v3674
    %v3676 = vlaneseq
    %v3677 = vshrl.u32 %v3676, 7
    %v3678 = vsub.s32 %v3675, %v3677
    %v3679 = vrot.slane %v3669, %v3678
    %v3681 = vunpack.c.l.s4 1966171168
    %v3682 = vunpack.c.0.s8 %v3681
    %v3683 = vlaneseq
    %v3684 = vshrl.u32 %v3683, 7
    %v3685 = vsub.s32 %v3682, %v3684
    %v3686 = vrot.slane %v3670, %v3685
    %v3688 = vunpack.c.l.s4 1966171168
    %v3689 = vunpack.c.0.s8 %v3688
    %v3690 = vlaneseq
    %v3691 = vshrl.u32 %v3690, 7
    %v3692 = vsub.s32 %v3689, %v3691
    %v3693 = vrot.slane %v3671, %v3692
    %v3695 = vunpack.c.l.s4 1966171168
    %v3696 = vunpack.c.0.s8 %v3695
    %v3697 = vlaneseq
    %v3698 = vshrl.u32 %v3697, 7
    %v3699 = vsub.s32 %v3696, %v3698
    %v3700 = vrot.slane %v3672, %v3699
    %v3701 = vcombine.low %v3679, %v3686
    %v3702 = vcombine.low %v3693, %v3700
    %v3704 = vunpack.c.l.s4 1966171168
    %v3705 = vunpack.c.0.s8 %v3704
    %v3706 = vlaneseq
    %v3707 = vshrl.u32 %v3706, 7
    %v3708 = vsub.s32 %v3705, %v3707
    %v3709 = vrot.slane %v3701, %v3708
    %v3711 = vunpack.c.l.s4 1966171168
    %v3712 = vunpack.c.0.s8 %v3711
    %v3713 = vlaneseq
    %v3714 = vshrl.u32 %v3713, 7
    %v3715 = vsub.s32 %v3712, %v3714
    %v3716 = vrot.slane %v3702, %v3715
    %v3717 = vcombine.low %v3709, %v3716
    %v3718 = vcombine.low %v3124, %v3128
    %v3719 = vcombine.low %v3132, %v3136
    %v3720 = vcombine.low %v3140, %v3144
    %v3721 = vcombine.low %v3148, %v3152
    %v3723 = vunpack.c.l.s4 1966171168
    %v3724 = vunpack.c.0.s8 %v3723
    %v3725 = vlaneseq
    %v3726 = vshrl.u32 %v3725, 7
    %v3727 = vsub.s32 %v3724, %v3726
    %v3728 = vrot.slane %v3718, %v3727
    %v3730 = vunpack.c.l.s4 1966171168
    %v3731 = vunpack.c.0.s8 %v3730
    %v3732 = vlaneseq
    %v3733 = vshrl.u32 %v3732, 7
    %v3734 = vsub.s32 %v3731, %v3733
    %v3735 = vrot.slane %v3719, %v3734
    %v3737 = vunpack.c.l.s4 1966171168
    %v3738 = vunpack.c.0.s8 %v3737
    %v3739 = vlaneseq
    %v3740 = vshrl.u32 %v3739, 7
    %v3741 = vsub.s32 %v3738, %v3740
    %v3742 = vrot.slane %v3720, %v3741
    %v3744 = vunpack.c.l.s4 1966171168
    %v3745 = vunpack.c.0.s8 %v3744
    %v3746 = vlaneseq
    %v3747 = vshrl.u32 %v3746, 7
    %v3748 = vsub.s32 %v3745, %v3747
    %v3749 = vrot.slane %v3721, %v3748
    %v3750 = vcombine.low %v3728, %v3735
    %v3751 = vcombine.low %v3742, %v3749
    %v3753 = vunpack.c.l.s4 1966171168
    %v3754 = vunpack.c.0.s8 %v3753
    %v3755 = vlaneseq
    %v3756 = vshrl.u32 %v3755, 7
    %v3757 = vsub.s32 %v3754, %v3756
    %v3758 = vrot.slane %v3750, %v3757
    %v3760 = vunpack.c.l.s4 1966171168
    %v3761 = vunpack.c.0.s8 %v3760
    %v3762 = vlaneseq
    %v3763 = vshrl.u32 %v3762, 7
    %v3764 = vsub.s32 %v3761, %v3763
    %v3765 = vrot.slane %v3751, %v3764
    %v3766 = vcombine.low %v3758, %v3765
    %v3767 = vcombine.low %v3156, %v3160
    %v3768 = vcombine.low %v3164, %v3168
    %v3769 = vcombine.low %v3172, %v3176
    %v3770 = vcombine.low %v3180, %v3184
    %v3772 = vunpack.c.l.s4 1966171168
    %v3773 = vunpack.c.0.s8 %v3772
    %v3774 = vlaneseq
    %v3775 = vshrl.u32 %v3774, 7
    %v3776 = vsub.s32 %v3773, %v3775
    %v3777 = vrot.slane %v3767, %v3776
    %v3779 = vunpack.c.l.s4 1966171168
    %v3780 = vunpack.c.0.s8 %v3779
    %v3781 = vlaneseq
    %v3782 = vshrl.u32 %v3781, 7
    %v3783 = vsub.s32 %v3780, %v3782
    %v3784 = vrot.slane %v3768, %v3783
    %v3786 = vunpack.c.l.s4 1966171168
    %v3787 = vunpack.c.0.s8 %v3786
    %v3788 = vlaneseq
    %v3789 = vshrl.u32 %v3788, 7
    %v3790 = vsub.s32 %v3787, %v3789
    %v3791 = vrot.slane %v3769, %v3790
    %v3793 = vunpack.c.l.s4 1966171168
    %v3794 = vunpack.c.0.s8 %v3793
    %v3795 = vlaneseq
    %v3796 = vshrl.u32 %v3795, 7
    %v3797 = vsub.s32 %v3794, %v3796
    %v3798 = vrot.slane %v3770, %v3797
    %v3799 = vcombine.low %v3777, %v3784
    %v3800 = vcombine.low %v3791, %v3798
    %v3802 = vunpack.c.l.s4 1966171168
    %v3803 = vunpack.c.0.s8 %v3802
    %v3804 = vlaneseq
    %v3805 = vshrl.u32 %v3804, 7
    %v3806 = vsub.s32 %v3803, %v3805
    %v3807 = vrot.slane %v3799, %v3806
    %v3809 = vunpack.c.l.s4 1966171168
    %v3810 = vunpack.c.0.s8 %v3809
    %v3811 = vlaneseq
    %v3812 = vshrl.u32 %v3811, 7
    %v3813 = vsub.s32 %v3810, %v3812
    %v3814 = vrot.slane %v3800, %v3813
    %v3815 = vcombine.low %v3807, %v3814
    %v3816 = vcombine.low %v3188, %v3192
    %v3817 = vcombine.low %v3196, %v3200
    %v3818 = vcombine.low %v3204, %v3208
    %v3819 = vcombine.low %v3212, %v3216
    %v3821 = vunpack.c.l.s4 1966171168
    %v3822 = vunpack.c.0.s8 %v3821
    %v3823 = vlaneseq
    %v3824 = vshrl.u32 %v3823, 7
    %v3825 = vsub.s32 %v3822, %v3824
    %v3826 = vrot.slane %v3816, %v3825
    %v3828 = vunpack.c.l.s4 1966171168
    %v3829 = vunpack.c.0.s8 %v3828
    %v3830 = vlaneseq
    %v3831 = vshrl.u32 %v3830, 7
    %v3832 = vsub.s32 %v3829, %v3831
    %v3833 = vrot.slane %v3817, %v3832
    %v3835 = vunpack.c.l.s4 1966171168
    %v3836 = vunpack.c.0.s8 %v3835
    %v3837 = vlaneseq
    %v3838 = vshrl.u32 %v3837, 7
    %v3839 = vsub.s32 %v3836, %v3838
    %v3840 = vrot.slane %v3818, %v3839
    %v3842 = vunpack.c.l.s4 1966171168
    %v3843 = vunpack.c.0.s8 %v3842
    %v3844 = vlaneseq
    %v3845 = vshrl.u32 %v3844, 7
    %v3846 = vsub.s32 %v3843, %v3845
    %v3847 = vrot.slane %v3819, %v3846
    %v3848 = vcombine.low %v3826, %v3833
    %v3849 = vcombine.low %v3840, %v3847
    %v3851 = vunpack.c.l.s4 1966171168
    %v3852 = vunpack.c.0.s8 %v3851
    %v3853 = vlaneseq
    %v3854 = vshrl.u32 %v3853, 7
    %v3855 = vsub.s32 %v3852, %v3854
    %v3856 = vrot.slane %v3848, %v3855
    %v3858 = vunpack.c.l.s4 1966171168
    %v3859 = vunpack.c.0.s8 %v3858
    %v3860 = vlaneseq
    %v3861 = vshrl.u32 %v3860, 7
    %v3862 = vsub.s32 %v3859, %v3861
    %v3863 = vrot.slane %v3849, %v3862
    %v3864 = vcombine.low %v3856, %v3863
    %v3865 = vcombine.low %v3220, %v3224
    %v3866 = vcombine.low %v3228, %v3232
    %v3867 = vcombine.low %v3236, %v3240
    %v3868 = vcombine.low %v3244, %v3248
    %v3870 = vunpack.c.l.s4 1966171168
    %v3871 = vunpack.c.0.s8 %v3870
    %v3872 = vlaneseq
    %v3873 = vshrl.u32 %v3872, 7
    %v3874 = vsub.s32 %v3871, %v3873
    %v3875 = vrot.slane %v3865, %v3874
    %v3877 = vunpack.c.l.s4 1966171168
    %v3878 = vunpack.c.0.s8 %v3877
    %v3879 = vlaneseq
    %v3880 = vshrl.u32 %v3879, 7
    %v3881 = vsub.s32 %v3878, %v3880
    %v3882 = vrot.slane %v3866, %v3881
    %v3884 = vunpack.c.l.s4 1966171168
    %v3885 = vunpack.c.0.s8 %v3884
    %v3886 = vlaneseq
    %v3887 = vshrl.u32 %v3886, 7
    %v3888 = vsub.s32 %v3885, %v3887
    %v3889 = vrot.slane %v3867, %v3888
    %v3891 = vunpack.c.l.s4 1966171168
    %v3892 = vunpack.c.0.s8 %v3891
    %v3893 = vlaneseq
    %v3894 = vshrl.u32 %v3893, 7
    %v3895 = vsub.s32 %v3892, %v3894
    %v3896 = vrot.slane %v3868, %v3895
    %v3897 = vcombine.low %v3875, %v3882
    %v3898 = vcombine.low %v3889, %v3896
    %v3900 = vunpack.c.l.s4 1966171168
    %v3901 = vunpack.c.0.s8 %v3900
    %v3902 = vlaneseq
    %v3903 = vshrl.u32 %v3902, 7
    %v3904 = vsub.s32 %v3901, %v3903
    %v3905 = vrot.slane %v3897, %v3904
    %v3907 = vunpack.c.l.s4 1966171168
    %v3908 = vunpack.c.0.s8 %v3907
    %v3909 = vlaneseq
    %v3910 = vshrl.u32 %v3909, 7
    %v3911 = vsub.s32 %v3908, %v3910
    %v3912 = vrot.slane %v3898, %v3911
    %v3913 = vcombine.low %v3905, %v3912
    %v3914 = vcombine.low %v3252, %v3256
    %v3915 = vcombine.low %v3260, %v3264
    %v3916 = vcombine.low %v3268, %v3272
    %v3917 = vcombine.low %v3276, %v3280
    %v3919 = vunpack.c.l.s4 1966171168
    %v3920 = vunpack.c.0.s8 %v3919
    %v3921 = vlaneseq
    %v3922 = vshrl.u32 %v3921, 7
    %v3923 = vsub.s32 %v3920, %v3922
    %v3924 = vrot.slane %v3914, %v3923
    %v3926 = vunpack.c.l.s4 1966171168
    %v3927 = vunpack.c.0.s8 %v3926
    %v3928 = vlaneseq
    %v3929 = vshrl.u32 %v3928, 7
    %v3930 = vsub.s32 %v3927, %v3929
    %v3931 = vrot.slane %v3915, %v3930
    %v3933 = vunpack.c.l.s4 1966171168
    %v3934 = vunpack.c.0.s8 %v3933
    %v3935 = vlaneseq
    %v3936 = vshrl.u32 %v3935, 7
    %v3937 = vsub.s32 %v3934, %v3936
    %v3938 = vrot.slane %v3916, %v3937
    %v3940 = vunpack.c.l.s4 1966171168
    %v3941 = vunpack.c.0.s8 %v3940
    %v3942 = vlaneseq
    %v3943 = vshrl.u32 %v3942, 7
    %v3944 = vsub.s32 %v3941, %v3943
    %v3945 = vrot.slane %v3917, %v3944
    %v3946 = vcombine.low %v3924, %v3931
    %v3947 = vcombine.low %v3938, %v3945
    %v3949 = vunpack.c.l.s4 1966171168
    %v3950 = vunpack.c.0.s8 %v3949
    %v3951 = vlaneseq
    %v3952 = vshrl.u32 %v3951, 7
    %v3953 = vsub.s32 %v3950, %v3952
    %v3954 = vrot.slane %v3946, %v3953
    %v3956 = vunpack.c.l.s4 1966171168
    %v3957 = vunpack.c.0.s8 %v3956
    %v3958 = vlaneseq
    %v3959 = vshrl.u32 %v3958, 7
    %v3960 = vsub.s32 %v3957, %v3959
    %v3961 = vrot.slane %v3947, %v3960
    %v3962 = vcombine.low %v3954, %v3961
    %v3963 = vcombine.low %v3284, %v3288
    %v3964 = vcombine.low %v3292, %v3296
    %v3965 = vcombine.low %v3300, %v3304
    %v3966 = vcombine.low %v3308, %v3312
    %v3968 = vunpack.c.l.s4 1966171168
    %v3969 = vunpack.c.0.s8 %v3968
    %v3970 = vlaneseq
    %v3971 = vshrl.u32 %v3970, 7
    %v3972 = vsub.s32 %v3969, %v3971
    %v3973 = vrot.slane %v3963, %v3972
    %v3975 = vunpack.c.l.s4 1966171168
    %v3976 = vunpack.c.0.s8 %v3975
    %v3977 = vlaneseq
    %v3978 = vshrl.u32 %v3977, 7
    %v3979 = vsub.s32 %v3976, %v3978
    %v3980 = vrot.slane %v3964, %v3979
    %v3982 = vunpack.c.l.s4 1966171168
    %v3983 = vunpack.c.0.s8 %v3982
    %v3984 = vlaneseq
    %v3985 = vshrl.u32 %v3984, 7
    %v3986 = vsub.s32 %v3983, %v3985
    %v3987 = vrot.slane %v3965, %v3986
    %v3989 = vunpack.c.l.s4 1966171168
    %v3990 = vunpack.c.0.s8 %v3989
    %v3991 = vlaneseq
    %v3992 = vshrl.u32 %v3991, 7
    %v3993 = vsub.s32 %v3990, %v3992
    %v3994 = vrot.slane %v3966, %v3993
    %v3995 = vcombine.low %v3973, %v3980
    %v3996 = vcombine.low %v3987, %v3994
    %v3998 = vunpack.c.l.s4 1966171168
    %v3999 = vunpack.c.0.s8 %v3998
    %v4000 = vlaneseq
    %v4001 = vshrl.u32 %v4000, 7
    %v4002 = vsub.s32 %v3999, %v4001
    %v4003 = vrot.slane %v3995, %v4002
    %v4005 = vunpack.c.l.s4 1966171168
    %v4006 = vunpack.c.0.s8 %v4005
    %v4007 = vlaneseq
    %v4008 = vshrl.u32 %v4007, 7
    %v4009 = vsub.s32 %v4006, %v4008
    %v4010 = vrot.slane %v3996, %v4009
    %v4011 = vcombine.low %v4003, %v4010
    %v4012 = vcombine.low %v3316, %v3320
    %v4013 = vcombine.low %v3324, %v3328
    %v4014 = vcombine.low %v3332, %v3336
    %v4015 = vcombine.low %v3340, %v3344
    %v4017 = vunpack.c.l.s4 1966171168
    %v4018 = vunpack.c.0.s8 %v4017
    %v4019 = vlaneseq
    %v4020 = vshrl.u32 %v4019, 7
    %v4021 = vsub.s32 %v4018, %v4020
    %v4022 = vrot.slane %v4012, %v4021
    %v4024 = vunpack.c.l.s4 1966171168
    %v4025 = vunpack.c.0.s8 %v4024
    %v4026 = vlaneseq
    %v4027 = vshrl.u32 %v4026, 7
    %v4028 = vsub.s32 %v4025, %v4027
    %v4029 = vrot.slane %v4013, %v4028
    %v4031 = vunpack.c.l.s4 1966171168
    %v4032 = vunpack.c.0.s8 %v4031
    %v4033 = vlaneseq
    %v4034 = vshrl.u32 %v4033, 7
    %v4035 = vsub.s32 %v4032, %v4034
    %v4036 = vrot.slane %v4014, %v4035
    %v4038 = vunpack.c.l.s4 1966171168
    %v4039 = vunpack.c.0.s8 %v4038
    %v4040 = vlaneseq
    %v4041 = vshrl.u32 %v4040, 7
    %v4042 = vsub.s32 %v4039, %v4041
    %v4043 = vrot.slane %v4015, %v4042
    %v4044 = vcombine.low %v4022, %v4029
    %v4045 = vcombine.low %v4036, %v4043
    %v4047 = vunpack.c.l.s4 1966171168
    %v4048 = vunpack.c.0.s8 %v4047
    %v4049 = vlaneseq
    %v4050 = vshrl.u32 %v4049, 7
    %v4051 = vsub.s32 %v4048, %v4050
    %v4052 = vrot.slane %v4044, %v4051
    %v4054 = vunpack.c.l.s4 1966171168
    %v4055 = vunpack.c.0.s8 %v4054
    %v4056 = vlaneseq
    %v4057 = vshrl.u32 %v4056, 7
    %v4058 = vsub.s32 %v4055, %v4057
    %v4059 = vrot.slane %v4045, %v4058
    %v4060 = vcombine.low %v4052, %v4059
    %v4061 = vcombine.low %v3348, %v3352
    %v4062 = vcombine.low %v3356, %v3360
    %v4063 = vcombine.low %v3364, %v3368
    %v4064 = vcombine.low %v3372, %v3376
    %v4066 = vunpack.c.l.s4 1966171168
    %v4067 = vunpack.c.0.s8 %v4066
    %v4068 = vlaneseq
    %v4069 = vshrl.u32 %v4068, 7
    %v4070 = vsub.s32 %v4067, %v4069
    %v4071 = vrot.slane %v4061, %v4070
    %v4073 = vunpack.c.l.s4 1966171168
    %v4074 = vunpack.c.0.s8 %v4073
    %v4075 = vlaneseq
    %v4076 = vshrl.u32 %v4075, 7
    %v4077 = vsub.s32 %v4074, %v4076
    %v4078 = vrot.slane %v4062, %v4077
    %v4080 = vunpack.c.l.s4 1966171168
    %v4081 = vunpack.c.0.s8 %v4080
    %v4082 = vlaneseq
    %v4083 = vshrl.u32 %v4082, 7
    %v4084 = vsub.s32 %v4081, %v4083
    %v4085 = vrot.slane %v4063, %v4084
    %v4087 = vunpack.c.l.s4 1966171168
    %v4088 = vunpack.c.0.s8 %v4087
    %v4089 = vlaneseq
    %v4090 = vshrl.u32 %v4089, 7
    %v4091 = vsub.s32 %v4088, %v4090
    %v4092 = vrot.slane %v4064, %v4091
    %v4093 = vcombine.low %v4071, %v4078
    %v4094 = vcombine.low %v4085, %v4092
    %v4096 = vunpack.c.l.s4 1966171168
    %v4097 = vunpack.c.0.s8 %v4096
    %v4098 = vlaneseq
    %v4099 = vshrl.u32 %v4098, 7
    %v4100 = vsub.s32 %v4097, %v4099
    %v4101 = vrot.slane %v4093, %v4100
    %v4103 = vunpack.c.l.s4 1966171168
    %v4104 = vunpack.c.0.s8 %v4103
    %v4105 = vlaneseq
    %v4106 = vshrl.u32 %v4105, 7
    %v4107 = vsub.s32 %v4104, %v4106
    %v4108 = vrot.slane %v4094, %v4107
    %v4109 = vcombine.low %v4101, %v4108
    %v4110 = vcombine.low %v3380, %v3384
    %v4111 = vcombine.low %v3388, %v3392
    %v4112 = vcombine.low %v3396, %v3400
    %v4113 = vcombine.low %v3404, %v3408
    %v4115 = vunpack.c.l.s4 1966171168
    %v4116 = vunpack.c.0.s8 %v4115
    %v4117 = vlaneseq
    %v4118 = vshrl.u32 %v4117, 7
    %v4119 = vsub.s32 %v4116, %v4118
    %v4120 = vrot.slane %v4110, %v4119
    %v4122 = vunpack.c.l.s4 1966171168
    %v4123 = vunpack.c.0.s8 %v4122
    %v4124 = vlaneseq
    %v4125 = vshrl.u32 %v4124, 7
    %v4126 = vsub.s32 %v4123, %v4125
    %v4127 = vrot.slane %v4111, %v4126
    %v4129 = vunpack.c.l.s4 1966171168
    %v4130 = vunpack.c.0.s8 %v4129
    %v4131 = vlaneseq
    %v4132 = vshrl.u32 %v4131, 7
    %v4133 = vsub.s32 %v4130, %v4132
    %v4134 = vrot.slane %v4112, %v4133
    %v4136 = vunpack.c.l.s4 1966171168
    %v4137 = vunpack.c.0.s8 %v4136
    %v4138 = vlaneseq
    %v4139 = vshrl.u32 %v4138, 7
    %v4140 = vsub.s32 %v4137, %v4139
    %v4141 = vrot.slane %v4113, %v4140
    %v4142 = vcombine.low %v4120, %v4127
    %v4143 = vcombine.low %v4134, %v4141
    %v4145 = vunpack.c.l.s4 1966171168
    %v4146 = vunpack.c.0.s8 %v4145
    %v4147 = vlaneseq
    %v4148 = vshrl.u32 %v4147, 7
    %v4149 = vsub.s32 %v4146, %v4148
    %v4150 = vrot.slane %v4142, %v4149
    %v4152 = vunpack.c.l.s4 1966171168
    %v4153 = vunpack.c.0.s8 %v4152
    %v4154 = vlaneseq
    %v4155 = vshrl.u32 %v4154, 7
    %v4156 = vsub.s32 %v4153, %v4155
    %v4157 = vrot.slane %v4143, %v4156
    %v4158 = vcombine.low %v4150, %v4157
    %v4159 = vcombine.low %v3412, %v3416
    %v4160 = vcombine.low %v3420, %v3424
    %v4161 = vcombine.low %v3428, %v3432
    %v4162 = vcombine.low %v3436, %v3440
    %v4164 = vunpack.c.l.s4 1966171168
    %v4165 = vunpack.c.0.s8 %v4164
    %v4166 = vlaneseq
    %v4167 = vshrl.u32 %v4166, 7
    %v4168 = vsub.s32 %v4165, %v4167
    %v4169 = vrot.slane %v4159, %v4168
    %v4171 = vunpack.c.l.s4 1966171168
    %v4172 = vunpack.c.0.s8 %v4171
    %v4173 = vlaneseq
    %v4174 = vshrl.u32 %v4173, 7
    %v4175 = vsub.s32 %v4172, %v4174
    %v4176 = vrot.slane %v4160, %v4175
    %v4178 = vunpack.c.l.s4 1966171168
    %v4179 = vunpack.c.0.s8 %v4178
    %v4180 = vlaneseq
    %v4181 = vshrl.u32 %v4180, 7
    %v4182 = vsub.s32 %v4179, %v4181
    %v4183 = vrot.slane %v4161, %v4182
    %v4185 = vunpack.c.l.s4 1966171168
    %v4186 = vunpack.c.0.s8 %v4185
    %v4187 = vlaneseq
    %v4188 = vshrl.u32 %v4187, 7
    %v4189 = vsub.s32 %v4186, %v4188
    %v4190 = vrot.slane %v4162, %v4189
    %v4191 = vcombine.low %v4169, %v4176
    %v4192 = vcombine.low %v4183, %v4190
    %v4194 = vunpack.c.l.s4 1966171168
    %v4195 = vunpack.c.0.s8 %v4194
    %v4196 = vlaneseq
    %v4197 = vshrl.u32 %v4196, 7
    %v4198 = vsub.s32 %v4195, %v4197
    %v4199 = vrot.slane %v4191, %v4198
    %v4201 = vunpack.c.l.s4 1966171168
    %v4202 = vunpack.c.0.s8 %v4201
    %v4203 = vlaneseq
    %v4204 = vshrl.u32 %v4203, 7
    %v4205 = vsub.s32 %v4202, %v4204
    %v4206 = vrot.slane %v4192, %v4205
    %v4207 = vcombine.low %v4199, %v4206
    %v4208 = vcombine.low %v3444, %v3448
    %v4209 = vcombine.low %v3452, %v3456
    %v4210 = vcombine.low %v3460, %v3464
    %v4211 = vcombine.low %v3468, %v3472
    %v4213 = vunpack.c.l.s4 1966171168
    %v4214 = vunpack.c.0.s8 %v4213
    %v4215 = vlaneseq
    %v4216 = vshrl.u32 %v4215, 7
    %v4217 = vsub.s32 %v4214, %v4216
    %v4218 = vrot.slane %v4208, %v4217
    %v4220 = vunpack.c.l.s4 1966171168
    %v4221 = vunpack.c.0.s8 %v4220
    %v4222 = vlaneseq
    %v4223 = vshrl.u32 %v4222, 7
    %v4224 = vsub.s32 %v4221, %v4223
    %v4225 = vrot.slane %v4209, %v4224
    %v4227 = vunpack.c.l.s4 1966171168
    %v4228 = vunpack.c.0.s8 %v4227
    %v4229 = vlaneseq
    %v4230 = vshrl.u32 %v4229, 7
    %v4231 = vsub.s32 %v4228, %v4230
    %v4232 = vrot.slane %v4210, %v4231
    %v4234 = vunpack.c.l.s4 1966171168
    %v4235 = vunpack.c.0.s8 %v4234
    %v4236 = vlaneseq
    %v4237 = vshrl.u32 %v4236, 7
    %v4238 = vsub.s32 %v4235, %v4237
    %v4239 = vrot.slane %v4211, %v4238
    %v4240 = vcombine.low %v4218, %v4225
    %v4241 = vcombine.low %v4232, %v4239
    %v4243 = vunpack.c.l.s4 1966171168
    %v4244 = vunpack.c.0.s8 %v4243
    %v4245 = vlaneseq
    %v4246 = vshrl.u32 %v4245, 7
    %v4247 = vsub.s32 %v4244, %v4246
    %v4248 = vrot.slane %v4240, %v4247
    %v4250 = vunpack.c.l.s4 1966171168
    %v4251 = vunpack.c.0.s8 %v4250
    %v4252 = vlaneseq
    %v4253 = vshrl.u32 %v4252, 7
    %v4254 = vsub.s32 %v4251, %v4253
    %v4255 = vrot.slane %v4241, %v4254
    %v4256 = vcombine.low %v4248, %v4255
    %4257 = vset.pattern.permute.xlu0 0
    %4258 = vperm.xlu0 %4257, %v3521
    %v4259 = vpop.permute.xlu0 %4258
    %4260 = vset.pattern.permute.xlu0 0
    %4261 = vperm.xlu0 %4260, %v3570
    %v4262 = vpop.permute.xlu0 %4261
    %4263 = vset.pattern.permute.xlu0 0
    %4264 = vperm.xlu0 %4263, %v3619
    %v4265 = vpop.permute.xlu0 %4264
    %4266 = vset.pattern.permute.xlu0 0
    %4267 = vperm.xlu0 %4266, %v3668
    %v4268 = vpop.permute.xlu0 %4267
    %4269 = vset.pattern.permute.xlu0 0
    %4270 = vperm.xlu0 %4269, %v3717
    %v4271 = vpop.permute.xlu0 %4270
    %4272 = vset.pattern.permute.xlu0 0
    %4273 = vperm.xlu0 %4272, %v3766
    %v4274 = vpop.permute.xlu0 %4273
    %4275 = vset.pattern.permute.xlu0 0
    %4276 = vperm.xlu0 %4275, %v3815
    %v4277 = vpop.permute.xlu0 %4276
    %4278 = vset.pattern.permute.xlu0 0
    %4279 = vperm.xlu0 %4278, %v3864
    %v4280 = vpop.permute.xlu0 %4279
    %4281 = vset.pattern.permute.xlu0 0
    %4282 = vperm.xlu0 %4281, %v3913
    %v4283 = vpop.permute.xlu0 %4282
    %4284 = vset.pattern.permute.xlu0 0
    %4285 = vperm.xlu0 %4284, %v3962
    %v4286 = vpop.permute.xlu0 %4285
    %4287 = vset.pattern.permute.xlu0 0
    %4288 = vperm.xlu0 %4287, %v4011
    %v4289 = vpop.permute.xlu0 %4288
    %4290 = vset.pattern.permute.xlu0 0
    %4291 = vperm.xlu0 %4290, %v4060
    %v4292 = vpop.permute.xlu0 %4291
    %4293 = vset.pattern.permute.xlu0 0
    %4294 = vperm.xlu0 %4293, %v4109
    %v4295 = vpop.permute.xlu0 %4294
    %4296 = vset.pattern.permute.xlu0 0
    %4297 = vperm.xlu0 %4296, %v4158
    %v4298 = vpop.permute.xlu0 %4297
    %4299 = vset.pattern.permute.xlu0 0
    %4300 = vperm.xlu0 %4299, %v4207
    %v4301 = vpop.permute.xlu0 %4300
    %4302 = vset.pattern.permute.xlu0 0
    %4303 = vperm.xlu0 %4302, %v4256
    %v4304 = vpop.permute.xlu0 %4303
    %v4305 = vlaneseq
    %v4306 = vshrl.u32 %v4305, 7
    %v4307 = vsub.s32 %v2236, %v4306
    %v4308 = vrot.slane %v4259, %v4307
    %v4309 = vlaneseq
    %v4310 = vshrl.u32 %v4309, 7
    %v4311 = vsub.s32 %v2241, %v4310
    %v4312 = vrot.slane %v4262, %v4311
    %v4313 = vsel %vm2246, %v4312, %v4308
    %v4314 = vlaneseq
    %v4315 = vshrl.u32 %v4314, 7
    %v4316 = vsub.s32 %v2248, %v4315
    %v4317 = vrot.slane %v4265, %v4316
    %v4318 = vsel %vm2253, %v4317, %v4313
    %v4319 = vlaneseq
    %v4320 = vshrl.u32 %v4319, 7
    %v4321 = vsub.s32 %v2255, %v4320
    %v4322 = vrot.slane %v4268, %v4321
    %v4323 = vsel %vm2260, %v4322, %v4318
    %v4324 = vlaneseq
    %v4325 = vshrl.u32 %v4324, 7
    %v4326 = vsub.s32 %v2262, %v4325
    %v4327 = vrot.slane %v4271, %v4326
    %v4328 = vsel %vm2267, %v4327, %v4323
    %v4329 = vlaneseq
    %v4330 = vshrl.u32 %v4329, 7
    %v4331 = vsub.s32 %v2269, %v4330
    %v4332 = vrot.slane %v4274, %v4331
    %v4333 = vsel %vm2274, %v4332, %v4328
    %v4334 = vlaneseq
    %v4335 = vshrl.u32 %v4334, 7
    %v4336 = vsub.s32 %v2276, %v4335
    %v4337 = vrot.slane %v4277, %v4336
    %v4338 = vsel %vm2281, %v4337, %v4333
    %v4339 = vlaneseq
    %v4340 = vshrl.u32 %v4339, 7
    %v4341 = vsub.s32 %v2283, %v4340
    %v4342 = vrot.slane %v4280, %v4341
    %v4343 = vsel %vm2288, %v4342, %v4338
    %v4344 = vlaneseq
    %v4345 = vshrl.u32 %v4344, 7
    %v4346 = vsub.s32 %v2290, %v4345
    %v4347 = vrot.slane %v4283, %v4346
    %v4348 = vsel %vm2295, %v4347, %v4343
    %v4349 = vlaneseq
    %v4350 = vshrl.u32 %v4349, 7
    %v4351 = vsub.s32 %v2297, %v4350
    %v4352 = vrot.slane %v4286, %v4351
    %v4353 = vsel %vm2302, %v4352, %v4348
    %v4354 = vlaneseq
    %v4355 = vshrl.u32 %v4354, 7
    %v4356 = vsub.s32 %v2304, %v4355
    %v4357 = vrot.slane %v4289, %v4356
    %v4358 = vsel %vm2309, %v4357, %v4353
    %v4359 = vlaneseq
    %v4360 = vshrl.u32 %v4359, 7
    %v4361 = vsub.s32 %v2311, %v4360
    %v4362 = vrot.slane %v4292, %v4361
    %v4363 = vsel %vm2316, %v4362, %v4358
    %v4364 = vlaneseq
    %v4365 = vshrl.u32 %v4364, 7
    %v4366 = vsub.s32 %v2318, %v4365
    %v4367 = vrot.slane %v4295, %v4366
    %v4368 = vsel %vm2323, %v4367, %v4363
    %v4369 = vlaneseq
    %v4370 = vshrl.u32 %v4369, 7
    %v4371 = vsub.s32 %v2325, %v4370
    %v4372 = vrot.slane %v4298, %v4371
    %v4373 = vsel %vm2330, %v4372, %v4368
    %v4374 = vlaneseq
    %v4375 = vshrl.u32 %v4374, 7
    %v4376 = vsub.s32 %v2332, %v4375
    %v4377 = vrot.slane %v4301, %v4376
    %v4378 = vsel %vm2337, %v4377, %v4373
    %v4379 = vlaneseq
    %v4380 = vshrl.u32 %v4379, 7
    %v4381 = vsub.s32 %v2339, %v4380
    %v4382 = vrot.slane %v4304, %v4381
    %v4383 = vsel %vm2344, %v4382, %v4378
    %v4385 = vunpack.c.l.s4 1966171168
    %v4386 = vunpack.c.0.s8 %v4385
    %v4387 = vlaneseq
    %v4388 = vshrl.u32 %v4387, 7
    %v4389 = vsub.s32 %v4386, %v4388
    %v4390 = vrot.slane %v4383, %v4389
    %v4392 = vunpack.c.l.s4 1966171168
    %v4393 = vunpack.c.0.s8 %v4392
    %v4394 = vlaneseq
    %v4395 = vshrl.u32 %v4394, 7
    %v4396 = vsub.s32 %v4393, %v4395
    %v4397 = vrot.slane %v4390, %v4396
    %4399 = vst.msk [vmem:[#allocation3 + $0x1] sm:$0x1] %vm2364, %v4397
    // Predicated region
    $region38: #{tpu_custom_call.1} parent=1 // pred_check
      _
    $region39: #{tpu_custom_call.1} parent=1 // pred_check_branch
      %4401 = sbr.rel (0) target = $region41
    $region40: #{tpu_custom_call.1} parent=1 // pred_region
      %s4403 = ssub.s32 32, 32
      %4404 = vsyncadd [#allocation4], %s4403
      %s4406 = sshll.u32 [#allocation3], 4
      %s4407 = int_to_ptr.vmem [resolvable:$true] %s4406
      %4409 = dma.vmem_to_hbm [thread:$0]  %s4407, 32, %s9, [#allocation4]
    $region41: #{tpu_custom_call.1} parent=1 // pred_fallthru
      _
    // Predicated region
    $region42: #{tpu_custom_call.1} parent=1 // pred_check
      _
    $region43: #{tpu_custom_call.1} parent=1 // pred_check_branch
      %4411 = sbr.rel (0) target = $region45
    $region44: #{tpu_custom_call.1} parent=1 // pred_region
      %4412 = dma.done [#allocation4], 32
    $region45: #{tpu_custom_call.1} parent=1 // pred_fallthru
      _
    %4413 = vsyncpa [#allocation4], 1

// kernel: tpu_custom_call.1
$region0: #{tpu_custom_call.1}
  #allocation0 [shape = 'u32[]', space=smem, size = 0x4, offset = 0x4, fixed_abs, tag = 'smem constant byte address 0x4 - core index']
  #allocation1 [shape = 'u32[144,128]{1,0:T(1,128)}', space=vmem, size = 0x12000, scoped, tag = 'internal scratch']
  #allocation2 [shape = 'f32[1,1]{1,0:T(1,128)S(1)}', space=vmem, size = 0x200, scoped, tag = 'scoped memory for tpu_custom_call.1']
  %s0 = inlined_call_operand.vmem [shape: bf16[256,32], index: 0, kind: input, shape index: {}]
  %s1 = inlined_call_operand.vmem [shape: bf16[32,256], index: 1, kind: input, shape index: {}]
  %s2 = inlined_call_operand.vmem [shape: f32[1,256], index: 2, kind: input, shape index: {}]
  %s3 = inlined_call_operand.vmem [shape: bf16[256,128], index: 3, kind: input, shape index: {}]
  %s4 = inlined_call_operand.vmem [shape: f32[1,128], index: 4, kind: input, shape index: {}]
  %s5 = inlined_call_operand.vmem [shape: bf16[128,64], index: 5, kind: input, shape index: {}]
  %s6 = inlined_call_operand.vmem [shape: f32[1,64], index: 6, kind: input, shape index: {}]
  %s7 = inlined_call_operand.vmem [shape: bf16[1,64], index: 7, kind: input, shape index: {}]
  %s8 = inlined_call_operand.<no memory space> [shape: f32[1,1], index: 8, kind: input, shape index: {}]
  %s9 = inlined_call_operand.hbm [shape: f32[1,256], index: 9, kind: output, shape index: {}]
  %s10 = sld [smem:[#allocation0]]
  $region46: #{tpu_custom_call.1} parent=0
    _
  %s12 = ssub.s32 1, %s10
  %s13 = scalar_select 0, %s12, %s10
  %v14 = vstv %s8
  %15 = vst [vmem:[#allocation2] sm:$0x1] %v14
  $region1: #{tpu_custom_call.1} parent=0
    #allocation3 [shape = 'u8[1024]{0}', space=vmem, size = 0x400, scoped, tag = 'output window, operand 0, single buffered']
    #allocation4 [shape = 's32[1]{0}', space=sflag, size = 0x4, scoped, tag = 'scoped memory for tpu_custom_call.1']
    %16 = vsyncpa [#allocation4], 0
    // Predicated region
    $region2: #{tpu_custom_call.1} parent=1 // pred_check
      _
    $region3: #{tpu_custom_call.1} parent=1 // pred_check_branch
      %18 = sbr.rel (0) target = $region5
    $region4: #{tpu_custom_call.1} parent=1 // pred_region
      _
    $region5: #{tpu_custom_call.1} parent=1 // pred_fallthru
      _
    // Predicated region
    $region6: #{tpu_custom_call.1} parent=1 // pred_check
      _
    $region7: #{tpu_custom_call.1} parent=1 // pred_check_branch
      %20 = sbr.rel (0) target = $region9
    $region8: #{tpu_custom_call.1} parent=1 // pred_region
      _
    $region9: #{tpu_custom_call.1} parent=1 // pred_fallthru
      _
    // Predicated region
    $region10: #{tpu_custom_call.1} parent=1 // pred_check
      _
    $region11: #{tpu_custom_call.1} parent=1 // pred_check_branch
      %22 = sbr.rel (0) target = $region13
    $region12: #{tpu_custom_call.1} parent=1 // pred_region
      _
    $region13: #{tpu_custom_call.1} parent=1 // pred_fallthru
      _
    // Predicated region
    $region14: #{tpu_custom_call.1} parent=1 // pred_check
      _
    $region15: #{tpu_custom_call.1} parent=1 // pred_check_branch
      %24 = sbr.rel (0) target = $region17
    $region16: #{tpu_custom_call.1} parent=1 // pred_region
      _
    $region17: #{tpu_custom_call.1} parent=1 // pred_fallthru
      _
    // Predicated region
    $region18: #{tpu_custom_call.1} parent=1 // pred_check
      _
    $region19: #{tpu_custom_call.1} parent=1 // pred_check_branch
      %26 = sbr.rel (0) target = $region21
    $region20: #{tpu_custom_call.1} parent=1 // pred_region
      _
    $region21: #{tpu_custom_call.1} parent=1 // pred_fallthru
      _
    // Predicated region
    $region22: #{tpu_custom_call.1} parent=1 // pred_check
      _
    $region23: #{tpu_custom_call.1} parent=1 // pred_check_branch
      %28 = sbr.rel (0) target = $region25
    $region24: #{tpu_custom_call.1} parent=1 // pred_region
      _
    $region25: #{tpu_custom_call.1} parent=1 // pred_fallthru
      _
    // Predicated region
    $region26: #{tpu_custom_call.1} parent=1 // pred_check
      _
    $region27: #{tpu_custom_call.1} parent=1 // pred_check_branch
      %30 = sbr.rel (0) target = $region29
    $region28: #{tpu_custom_call.1} parent=1 // pred_region
      _
    $region29: #{tpu_custom_call.1} parent=1 // pred_fallthru
      _
    // Predicated region
    $region30: #{tpu_custom_call.1} parent=1 // pred_check
      _
    $region31: #{tpu_custom_call.1} parent=1 // pred_check_branch
      %32 = sbr.rel (0) target = $region33
    $region32: #{tpu_custom_call.1} parent=1 // pred_region
      _
    $region33: #{tpu_custom_call.1} parent=1 // pred_fallthru
      _
    // Predicated region
    $region34: #{tpu_custom_call.1} parent=1 // pred_check
      _
    $region35: #{tpu_custom_call.1} parent=1 // pred_check_branch
      %34 = sbr.rel (0) target = $region37
    $region36: #{tpu_custom_call.1} parent=1 // pred_region
      _
    $region37: #{tpu_custom_call.1} parent=1 // pred_fallthru
      _
    %v36 = vld [vmem:[%s1] sm:$0xff]
    %v37 = vld [vmem:[%s1 + $0x8] sm:$0xff]
    %v38 = vld [vmem:[%s1 + $0x10] sm:$0xff]
    %v39 = vld [vmem:[%s1 + $0x18] sm:$0xff]
    %v40 = vld [vmem:[%s3] sm:$0xf]
    %v41 = vld [vmem:[%s3 + $0x4] sm:$0xf]
    %v42 = vld [vmem:[%s3 + $0x8] sm:$0xf]
    %v43 = vld [vmem:[%s3 + $0xc] sm:$0xf]
    %v44 = vld [vmem:[%s3 + $0x10] sm:$0xf]
    %v45 = vld [vmem:[%s3 + $0x14] sm:$0xf]
    %v46 = vld [vmem:[%s3 + $0x18] sm:$0xf]
    %v47 = vld [vmem:[%s3 + $0x1c] sm:$0xf]
    %v48 = vld [vmem:[%s3 + $0x20] sm:$0xf]
    %v49 = vld [vmem:[%s3 + $0x24] sm:$0xf]
    %v50 = vld [vmem:[%s3 + $0x28] sm:$0xf]
    %v51 = vld [vmem:[%s3 + $0x2c] sm:$0xf]
    %v52 = vld [vmem:[%s3 + $0x30] sm:$0xf]
    %v53 = vld [vmem:[%s3 + $0x34] sm:$0xf]
    %v54 = vld [vmem:[%s3 + $0x38] sm:$0xf]
    %v55 = vld [vmem:[%s3 + $0x3c] sm:$0xf]
    %v56 = vld [vmem:[%s3 + $0x40] sm:$0xf]
    %v57 = vld [vmem:[%s3 + $0x44] sm:$0xf]
    %v58 = vld [vmem:[%s3 + $0x48] sm:$0xf]
    %v59 = vld [vmem:[%s3 + $0x4c] sm:$0xf]
    %v60 = vld [vmem:[%s3 + $0x50] sm:$0xf]
    %v61 = vld [vmem:[%s3 + $0x54] sm:$0xf]
    %v62 = vld [vmem:[%s3 + $0x58] sm:$0xf]
    %v63 = vld [vmem:[%s3 + $0x5c] sm:$0xf]
    %v64 = vld [vmem:[%s3 + $0x60] sm:$0xf]
    %v65 = vld [vmem:[%s3 + $0x64] sm:$0xf]
    %v66 = vld [vmem:[%s3 + $0x68] sm:$0xf]
    %v67 = vld [vmem:[%s3 + $0x6c] sm:$0xf]
    %v68 = vld [vmem:[%s3 + $0x70] sm:$0xf]
    %v69 = vld [vmem:[%s3 + $0x74] sm:$0xf]
    %v70 = vld [vmem:[%s3 + $0x78] sm:$0xf]
    %v71 = vld [vmem:[%s3 + $0x7c] sm:$0xf]
    %v72 = vld [vmem:[%s5] sm:$0xf]
    %v73 = vld [vmem:[%s5 + $0x4] sm:$0xf]
    %v74 = vld [vmem:[%s5 + $0x8] sm:$0xf]
    %v75 = vld [vmem:[%s5 + $0xc] sm:$0xf]
    %v76 = vld [vmem:[%s5 + $0x10] sm:$0xf]
    %v77 = vld [vmem:[%s5 + $0x14] sm:$0xf]
    %v78 = vld [vmem:[%s5 + $0x18] sm:$0xf]
    %v79 = vld [vmem:[%s5 + $0x1c] sm:$0xf]
    %v80 = vld [vmem:[%s5 + $0x20] sm:$0xf]
    %v81 = vld [vmem:[%s5 + $0x24] sm:$0xf]
    %v82 = vld [vmem:[%s5 + $0x28] sm:$0xf]
    %v83 = vld [vmem:[%s5 + $0x2c] sm:$0xf]
    %v84 = vld [vmem:[%s5 + $0x30] sm:$0xf]
    %v85 = vld [vmem:[%s5 + $0x34] sm:$0xf]
    %v86 = vld [vmem:[%s5 + $0x38] sm:$0xf]
    %v87 = vld [vmem:[%s5 + $0x3c] sm:$0xf]
    %v88 = vld [vmem:[%s7] sm:$0x1]
    %v89 = vunpack.c.l.bf16 %v88
    %v90 = vld [vmem:[%s2] sm:$0x3]
    %v91 = vld [vmem:[%s4] sm:$0x1]
    %v92 = vld [vmem:[%s6] sm:$0x1]
    %v93 = vld [vmem:[#allocation2] sm:$0x1]
    %v94 = vld [vmem:[%s0] sm:$0xf]
    %v95 = vld [vmem:[%s0 + $0x4] sm:$0xf]
    %v96 = vld [vmem:[%s0 + $0x8] sm:$0xf]
    %v97 = vld [vmem:[%s0 + $0xc] sm:$0xf]
    %v98 = vld [vmem:[%s0 + $0x10] sm:$0xf]
    %v99 = vld [vmem:[%s0 + $0x14] sm:$0xf]
    %v100 = vld [vmem:[%s0 + $0x18] sm:$0xf]
    %v101 = vld [vmem:[%s0 + $0x1c] sm:$0xf]
    %v102 = vld [vmem:[%s0 + $0x20] sm:$0xf]
    %v103 = vld [vmem:[%s0 + $0x24] sm:$0xf]
    %v104 = vld [vmem:[%s0 + $0x28] sm:$0xf]
    %v105 = vld [vmem:[%s0 + $0x2c] sm:$0xf]
    %v106 = vld [vmem:[%s0 + $0x30] sm:$0xf]
    %v107 = vld [vmem:[%s0 + $0x34] sm:$0xf]
    %v108 = vld [vmem:[%s0 + $0x38] sm:$0xf]
    %v109 = vld [vmem:[%s0 + $0x3c] sm:$0xf]
    %v111 = vlaneseq
    %v112 = vshrl.u32 %v111, 7
    %v113 = vsub.s32 0, %v112
    %v114 = vrot.slane %v90, %v113
    %v115 = vlaneseq
    %v116 = vshrl.u32 %v115, 7
    %v117 = vsub.s32 1, %v116
    %v118 = vrot.slane %v90, %v117
    %v137 = vunpack.c.l.b16 %v94
    %v138 = vunpack.c.l.b16 %v95
    %v139 = vunpack.c.l.b16 %v96
    %v140 = vunpack.c.l.b16 %v97
    %v141 = vunpack.c.l.b16 %v98
    %v142 = vunpack.c.l.b16 %v99
    %v143 = vunpack.c.l.b16 %v100
    %v144 = vunpack.c.l.b16 %v101
    %v145 = vunpack.c.l.b16 %v102
    %v146 = vunpack.c.l.b16 %v103
    %v147 = vunpack.c.l.b16 %v104
    %v148 = vunpack.c.l.b16 %v105
    %v149 = vunpack.c.l.b16 %v106
    %v150 = vunpack.c.l.b16 %v107
    %v151 = vunpack.c.l.b16 %v108
    %v152 = vunpack.c.l.b16 %v109
    %v153 = vpack.c.b16 %v138, %v137
    %v154 = vpack.c.b16 %v140, %v139
    %v155 = vpack.c.b16 %v142, %v141
    %v156 = vpack.c.b16 %v144, %v143
    %v157 = vpack.c.b16 %v146, %v145
    %v158 = vpack.c.b16 %v148, %v147
    %v159 = vpack.c.b16 %v150, %v149
    %v160 = vpack.c.b16 %v152, %v151
    %v165 = vunpack.c.l.b16 %v36
    %v166 = vunpack.c.h.b16 %v36
    %v167 = vunpack.c.l.b16 %v37
    %v168 = vunpack.c.h.b16 %v37
    %v169 = vunpack.c.l.b16 %v38
    %v170 = vunpack.c.h.b16 %v38
    %v171 = vunpack.c.l.b16 %v39
    %v172 = vunpack.c.h.b16 %v39
    %v173 = vpack.c.b16 %v167, %v165
    %v174 = vpack.c.b16 %v168, %v166
    %v175 = vpack.c.b16 %v171, %v169
    %v176 = vpack.c.b16 %v172, %v170
    %vm181 = vcmask 261120
    %v183 = vsel %vm181, %v153, 0
    %v186 = vsel %vm181, %v154, 0
    %v189 = vsel %vm181, %v155, 0
    %v192 = vsel %vm181, %v156, 0
    %v195 = vsel %vm181, %v157, 0
    %v198 = vsel %vm181, %v158, 0
    %v201 = vsel %vm181, %v159, 0
    %v204 = vsel %vm181, %v160, 0
    %206 = vmatprep.subr.bf16.mxu0 %v174
    %207 = vmatpush1.bf16.msra.mxu0 %v173
    %208 = vmatprep.subr.bf16.mxu0 %v176
    %209 = vmatpush1.bf16.msra.mxu0 %v175
    %210 = vmatprep.subr.bf16.mxu0 0
    %211 = vmatpush1.bf16.msra.mxu0 0
    %212 = vmatprep.subr.bf16.mxu0 0
    %213 = vmatpush1.bf16.msra.mxu0 0
    %214 = vmatprep.subr.bf16.mxu0 0
    %215 = vmatpush1.bf16.msra.mxu0 0
    %216 = vmatprep.subr.bf16.mxu0 0
    %217 = vmatpush1.bf16.msra.mxu0 0
    %218 = vmatprep.subr.bf16.mxu0 0
    %219 = vmatpush1.bf16.msra.mxu0 0
    %220 = vmatprep.subr.bf16.mxu0 0
    %221 = vmatpush1.bf16.msra.mxu0 0
    %222 = vmatprep.subr.bf16.mxu0 0
    %223 = vmatpush1.bf16.msra.mxu0 0
    %224 = vmatprep.subr.bf16.mxu0 0
    %225 = vmatpush1.bf16.msra.mxu0 0
    %226 = vmatprep.subr.bf16.mxu0 0
    %227 = vmatpush1.bf16.msra.mxu0 0
    %228 = vmatprep.subr.bf16.mxu0 0
    %229 = vmatpush1.bf16.msra.mxu0 0
    %230 = vmatprep.subr.bf16.mxu0 0
    %231 = vmatpush1.bf16.msra.mxu0 0
    %232 = vmatprep.subr.bf16.mxu0 0
    %233 = vmatpush1.bf16.msra.mxu0 0
    %234 = vmatprep.subr.bf16.mxu0 0
    %235 = vmatpush1.bf16.msra.mxu0 0
    %236 = vmatprep.subr.bf16.mxu0 0
    %237 = vmatpush1.bf16.msra.mxu0 0
    %238 = vmatprep.mubr.bf16.mxu0 0
    %239 = vmatmul.mubr.bf16.gmra.mrb[0].mxu0 %v183
    %v240 = vpop.f32.mrb[0].mxu0
    %v241 = vadd.f32 %v114, %v240
    %v242 = vpop.f32.mrb[0].mxu0
    %v243 = vadd.f32 %v118, %v242
    %v244 = vpop.f32.mrb[0].mxu0
    %v245 = vadd.f32 %v114, %v244
    %v246 = vpop.f32.mrb[0].mxu0
    %v247 = vadd.f32 %v118, %v246
    %248 = vmatprep.mubr.bf16.mxu0 0
    %249 = vmatmul.mubr.bf16.gmra.mrb[0].mxu0 %v186
    %v250 = vpop.f32.mrb[0].mxu0
    %v251 = vadd.f32 %v114, %v250
    %v252 = vpop.f32.mrb[0].mxu0
    %v253 = vadd.f32 %v118, %v252
    %v254 = vpop.f32.mrb[0].mxu0
    %v255 = vadd.f32 %v114, %v254
    %v256 = vpop.f32.mrb[0].mxu0
    %v257 = vadd.f32 %v118, %v256
    %258 = vmatprep.mubr.bf16.mxu0 0
    %259 = vmatmul.mubr.bf16.gmra.mrb[0].mxu0 %v189
    %v260 = vpop.f32.mrb[0].mxu0
    %v261 = vadd.f32 %v114, %v260
    %v262 = vpop.f32.mrb[0].mxu0
    %v263 = vadd.f32 %v118, %v262
    %v264 = vpop.f32.mrb[0].mxu0
    %v265 = vadd.f32 %v114, %v264
    %v266 = vpop.f32.mrb[0].mxu0
    %v267 = vadd.f32 %v118, %v266
    %268 = vmatprep.mubr.bf16.mxu0 0
    %269 = vmatmul.mubr.bf16.gmra.mrb[0].mxu0 %v192
    %v270 = vpop.f32.mrb[0].mxu0
    %v271 = vadd.f32 %v114, %v270
    %v272 = vpop.f32.mrb[0].mxu0
    %v273 = vadd.f32 %v118, %v272
    %v274 = vpop.f32.mrb[0].mxu0
    %v275 = vadd.f32 %v114, %v274
    %v276 = vpop.f32.mrb[0].mxu0
    %v277 = vadd.f32 %v118, %v276
    %278 = vmatprep.mubr.bf16.mxu0 0
    %279 = vmatmul.mubr.bf16.gmra.mrb[0].mxu0 %v195
    %v280 = vpop.f32.mrb[0].mxu0
    %v281 = vadd.f32 %v114, %v280
    %v282 = vpop.f32.mrb[0].mxu0
    %v283 = vadd.f32 %v118, %v282
    %v284 = vpop.f32.mrb[0].mxu0
    %v285 = vadd.f32 %v114, %v284
    %v286 = vpop.f32.mrb[0].mxu0
    %v287 = vadd.f32 %v118, %v286
    %288 = vmatprep.mubr.bf16.mxu0 0
    %289 = vmatmul.mubr.bf16.gmra.mrb[0].mxu0 %v198
    %v290 = vpop.f32.mrb[0].mxu0
    %v291 = vadd.f32 %v114, %v290
    %v292 = vpop.f32.mrb[0].mxu0
    %v293 = vadd.f32 %v118, %v292
    %v294 = vpop.f32.mrb[0].mxu0
    %v295 = vadd.f32 %v114, %v294
    %v296 = vpop.f32.mrb[0].mxu0
    %v297 = vadd.f32 %v118, %v296
    %298 = vmatprep.mubr.bf16.mxu0 0
    %299 = vmatmul.mubr.bf16.gmra.mrb[0].mxu0 %v201
    %v300 = vpop.f32.mrb[0].mxu0
    %v301 = vadd.f32 %v114, %v300
    %v302 = vpop.f32.mrb[0].mxu0
    %v303 = vadd.f32 %v118, %v302
    %v304 = vpop.f32.mrb[0].mxu0
    %v305 = vadd.f32 %v114, %v304
    %v306 = vpop.f32.mrb[0].mxu0
    %v307 = vadd.f32 %v118, %v306
    %308 = vmatprep.mubr.bf16.mxu0 0
    %309 = vmatmul.mubr.bf16.gmra.mrb[0].mxu0 %v204
    %v310 = vpop.f32.mrb[0].mxu0
    %v311 = vadd.f32 %v114, %v310
    %v312 = vpop.f32.mrb[0].mxu0
    %v313 = vadd.f32 %v118, %v312
    %v314 = vpop.f32.mrb[0].mxu0
    %v315 = vadd.f32 %v114, %v314
    %v316 = vpop.f32.mrb[0].mxu0
    %v317 = vadd.f32 %v118, %v316
    %318 = vdwg.mxu0
    %v319 = vmax.f32 %v241, 0.0
    %v320 = vmax.f32 %v243, 0.0
    %v321 = vmax.f32 %v245, 0.0
    %v322 = vmax.f32 %v247, 0.0
    %v323 = vmax.f32 %v251, 0.0
    %v324 = vmax.f32 %v253, 0.0
    %v325 = vmax.f32 %v255, 0.0
    %v326 = vmax.f32 %v257, 0.0
    %v327 = vmax.f32 %v261, 0.0
    %v328 = vmax.f32 %v263, 0.0
    %v329 = vmax.f32 %v265, 0.0
    %v330 = vmax.f32 %v267, 0.0
    %v331 = vmax.f32 %v271, 0.0
    %v332 = vmax.f32 %v273, 0.0
    %v333 = vmax.f32 %v275, 0.0
    %v334 = vmax.f32 %v277, 0.0
    %v335 = vmax.f32 %v281, 0.0
    %v336 = vmax.f32 %v283, 0.0
    %v337 = vmax.f32 %v285, 0.0
    %v338 = vmax.f32 %v287, 0.0
    %v339 = vmax.f32 %v291, 0.0
    %v340 = vmax.f32 %v293, 0.0
    %v341 = vmax.f32 %v295, 0.0
    %v342 = vmax.f32 %v297, 0.0
    %v343 = vmax.f32 %v301, 0.0
    %v344 = vmax.f32 %v303, 0.0
    %v345 = vmax.f32 %v305, 0.0
    %v346 = vmax.f32 %v307, 0.0
    %v347 = vmax.f32 %v311, 0.0
    %v348 = vmax.f32 %v313, 0.0
    %v349 = vmax.f32 %v315, 0.0
    %v350 = vmax.f32 %v317, 0.0
    %v351 = vpack.c.bf16 %v321, %v319
    %v352 = vpack.c.bf16 %v322, %v320
    %v353 = vpack.c.bf16 %v325, %v323
    %v354 = vpack.c.bf16 %v326, %v324
    %v355 = vpack.c.bf16 %v329, %v327
    %v356 = vpack.c.bf16 %v330, %v328
    %v357 = vpack.c.bf16 %v333, %v331
    %v358 = vpack.c.bf16 %v334, %v332
    %v359 = vpack.c.bf16 %v337, %v335
    %v360 = vpack.c.bf16 %v338, %v336
    %v361 = vpack.c.bf16 %v341, %v339
    %v362 = vpack.c.bf16 %v342, %v340
    %v363 = vpack.c.bf16 %v345, %v343
    %v364 = vpack.c.bf16 %v346, %v344
    %v365 = vpack.c.bf16 %v349, %v347
    %v366 = vpack.c.bf16 %v350, %v348
    %v368 = vlaneseq
    %v369 = vshrl.u32 %v368, 7
    %v370 = vsub.s32 0, %v369
    %v371 = vrot.slane %v91, %v370
    %v405 = vunpack.c.l.b16 %v40
    %v406 = vunpack.c.l.b16 %v41
    %v407 = vunpack.c.l.b16 %v42
    %v408 = vunpack.c.l.b16 %v43
    %v409 = vunpack.c.l.b16 %v44
    %v410 = vunpack.c.l.b16 %v45
    %v411 = vunpack.c.l.b16 %v46
    %v412 = vunpack.c.l.b16 %v47
    %v413 = vunpack.c.l.b16 %v48
    %v414 = vunpack.c.l.b16 %v49
    %v415 = vunpack.c.l.b16 %v50
    %v416 = vunpack.c.l.b16 %v51
    %v417 = vunpack.c.l.b16 %v52
    %v418 = vunpack.c.l.b16 %v53
    %v419 = vunpack.c.l.b16 %v54
    %v420 = vunpack.c.l.b16 %v55
    %v421 = vunpack.c.l.b16 %v56
    %v422 = vunpack.c.l.b16 %v57
    %v423 = vunpack.c.l.b16 %v58
    %v424 = vunpack.c.l.b16 %v59
    %v425 = vunpack.c.l.b16 %v60
    %v426 = vunpack.c.l.b16 %v61
    %v427 = vunpack.c.l.b16 %v62
    %v428 = vunpack.c.l.b16 %v63
    %v429 = vunpack.c.l.b16 %v64
    %v430 = vunpack.c.l.b16 %v65
    %v431 = vunpack.c.l.b16 %v66
    %v432 = vunpack.c.l.b16 %v67
    %v433 = vunpack.c.l.b16 %v68
    %v434 = vunpack.c.l.b16 %v69
    %v435 = vunpack.c.l.b16 %v70
    %v436 = vunpack.c.l.b16 %v71
    %v437 = vpack.c.b16 %v406, %v405
    %v438 = vpack.c.b16 %v408, %v407
    %v439 = vpack.c.b16 %v410, %v409
    %v440 = vpack.c.b16 %v412, %v411
    %v441 = vpack.c.b16 %v414, %v413
    %v442 = vpack.c.b16 %v416, %v415
    %v443 = vpack.c.b16 %v418, %v417
    %v444 = vpack.c.b16 %v420, %v419
    %v445 = vpack.c.b16 %v422, %v421
    %v446 = vpack.c.b16 %v424, %v423
    %v447 = vpack.c.b16 %v426, %v425
    %v448 = vpack.c.b16 %v428, %v427
    %v449 = vpack.c.b16 %v430, %v429
    %v450 = vpack.c.b16 %v432, %v431
    %v451 = vpack.c.b16 %v434, %v433
    %v452 = vpack.c.b16 %v436, %v435
    %469 = vmatprep.subr.bf16.mxu0 0
    %470 = vmatpush1.bf16.msra.mxu0 %v437
    %471 = vmatprep.subr.bf16.mxu0 0
    %472 = vmatpush1.bf16.msra.mxu0 %v438
    %473 = vmatprep.subr.bf16.mxu0 0
    %474 = vmatpush1.bf16.msra.mxu0 %v439
    %475 = vmatprep.subr.bf16.mxu0 0
    %476 = vmatpush1.bf16.msra.mxu0 %v440
    %477 = vmatprep.subr.bf16.mxu0 0
    %478 = vmatpush1.bf16.msra.mxu0 %v441
    %479 = vmatprep.subr.bf16.mxu0 0
    %480 = vmatpush1.bf16.msra.mxu0 %v442
    %481 = vmatprep.subr.bf16.mxu0 0
    %482 = vmatpush1.bf16.msra.mxu0 %v443
    %483 = vmatprep.subr.bf16.mxu0 0
    %484 = vmatpush1.bf16.msra.mxu0 %v444
    %485 = vmatprep.subr.bf16.mxu0 0
    %486 = vmatpush1.bf16.msra.mxu0 %v445
    %487 = vmatprep.subr.bf16.mxu0 0
    %488 = vmatpush1.bf16.msra.mxu0 %v446
    %489 = vmatprep.subr.bf16.mxu0 0
    %490 = vmatpush1.bf16.msra.mxu0 %v447
    %491 = vmatprep.subr.bf16.mxu0 0
    %492 = vmatpush1.bf16.msra.mxu0 %v448
    %493 = vmatprep.subr.bf16.mxu0 0
    %494 = vmatpush1.bf16.msra.mxu0 %v449
    %495 = vmatprep.subr.bf16.mxu0 0
    %496 = vmatpush1.bf16.msra.mxu0 %v450
    %497 = vmatprep.subr.bf16.mxu0 0
    %498 = vmatpush1.bf16.msra.mxu0 %v451
    %499 = vmatprep.subr.bf16.mxu0 0
    %500 = vmatpush1.bf16.msra.mxu0 %v452
    %501 = vmatprep.mubr.bf16.mxu0 %v352
    %502 = vmatmul.mubr.bf16.gmra.mrb[0].mxu0 %v351
    %v503 = vpop.f32.mrb[0].mxu0
    %v504 = vadd.f32 %v371, %v503
    %v505 = vpop.f32.mrb[0].mxu0
    %v506 = vpop.f32.mrb[0].mxu0
    %v507 = vadd.f32 %v371, %v506
    %v508 = vpop.f32.mrb[0].mxu0
    %509 = vmatprep.mubr.bf16.mxu0 %v354
    %510 = vmatmul.mubr.bf16.gmra.mrb[0].mxu0 %v353
    %v511 = vpop.f32.mrb[0].mxu0
    %v512 = vadd.f32 %v371, %v511
    %v513 = vpop.f32.mrb[0].mxu0
    %v514 = vpop.f32.mrb[0].mxu0
    %v515 = vadd.f32 %v371, %v514
    %v516 = vpop.f32.mrb[0].mxu0
    %517 = vmatprep.mubr.bf16.mxu0 %v356
    %518 = vmatmul.mubr.bf16.gmra.mrb[0].mxu0 %v355
    %v519 = vpop.f32.mrb[0].mxu0
    %v520 = vadd.f32 %v371, %v519
    %v521 = vpop.f32.mrb[0].mxu0
    %v522 = vpop.f32.mrb[0].mxu0
    %v523 = vadd.f32 %v371, %v522
    %v524 = vpop.f32.mrb[0].mxu0
    %525 = vmatprep.mubr.bf16.mxu0 %v358
    %526 = vmatmul.mubr.bf16.gmra.mrb[0].mxu0 %v357
    %v527 = vpop.f32.mrb[0].mxu0
    %v528 = vadd.f32 %v371, %v527
    %v529 = vpop.f32.mrb[0].mxu0
    %v530 = vpop.f32.mrb[0].mxu0
    %v531 = vadd.f32 %v371, %v530
    %v532 = vpop.f32.mrb[0].mxu0
    %533 = vmatprep.mubr.bf16.mxu0 %v360
    %534 = vmatmul.mubr.bf16.gmra.mrb[0].mxu0 %v359
    %v535 = vpop.f32.mrb[0].mxu0
    %v536 = vadd.f32 %v371, %v535
    %v537 = vpop.f32.mrb[0].mxu0
    %v538 = vpop.f32.mrb[0].mxu0
    %v539 = vadd.f32 %v371, %v538
    %v540 = vpop.f32.mrb[0].mxu0
    %541 = vmatprep.mubr.bf16.mxu0 %v362
    %542 = vmatmul.mubr.bf16.gmra.mrb[0].mxu0 %v361
    %v543 = vpop.f32.mrb[0].mxu0
    %v544 = vadd.f32 %v371, %v543
    %v545 = vpop.f32.mrb[0].mxu0
    %v546 = vpop.f32.mrb[0].mxu0
    %v547 = vadd.f32 %v371, %v546
    %v548 = vpop.f32.mrb[0].mxu0
    %549 = vmatprep.mubr.bf16.mxu0 %v364
    %550 = vmatmul.mubr.bf16.gmra.mrb[0].mxu0 %v363
    %v551 = vpop.f32.mrb[0].mxu0
    %v552 = vadd.f32 %v371, %v551
    %v553 = vpop.f32.mrb[0].mxu0
    %v554 = vpop.f32.mrb[0].mxu0
    %v555 = vadd.f32 %v371, %v554
    %v556 = vpop.f32.mrb[0].mxu0
    %557 = vmatprep.mubr.bf16.mxu0 %v366
    %558 = vmatmul.mubr.bf16.gmra.mrb[0].mxu0 %v365
    %v559 = vpop.f32.mrb[0].mxu0
    %v560 = vadd.f32 %v371, %v559
    %v561 = vpop.f32.mrb[0].mxu0
    %v562 = vpop.f32.mrb[0].mxu0
    %v563 = vadd.f32 %v371, %v562
    %v564 = vpop.f32.mrb[0].mxu0
    %565 = vdwg.mxu0
    %v566 = vmax.f32 %v504, 0.0
    %v567 = vmax.f32 %v507, 0.0
    %v568 = vmax.f32 %v512, 0.0
    %v569 = vmax.f32 %v515, 0.0
    %v570 = vmax.f32 %v520, 0.0
    %v571 = vmax.f32 %v523, 0.0
    %v572 = vmax.f32 %v528, 0.0
    %v573 = vmax.f32 %v531, 0.0
    %v574 = vmax.f32 %v536, 0.0
    %v575 = vmax.f32 %v539, 0.0
    %v576 = vmax.f32 %v544, 0.0
    %v577 = vmax.f32 %v547, 0.0
    %v578 = vmax.f32 %v552, 0.0
    %v579 = vmax.f32 %v555, 0.0
    %v580 = vmax.f32 %v560, 0.0
    %v581 = vmax.f32 %v563, 0.0
    %v582 = vpack.c.bf16 %v567, %v566
    %v583 = vpack.c.bf16 %v569, %v568
    %v584 = vpack.c.bf16 %v571, %v570
    %v585 = vpack.c.bf16 %v573, %v572
    %v586 = vpack.c.bf16 %v575, %v574
    %v587 = vpack.c.bf16 %v577, %v576
    %v588 = vpack.c.bf16 %v579, %v578
    %v589 = vpack.c.bf16 %v581, %v580
    %v591 = vlaneseq
    %v592 = vshrl.u32 %v591, 7
    %v593 = vsub.s32 0, %v592
    %v594 = vrot.slane %v92, %v593
    %v612 = vunpack.c.l.b16 %v72
    %v613 = vunpack.c.l.b16 %v73
    %v614 = vunpack.c.l.b16 %v74
    %v615 = vunpack.c.l.b16 %v75
    %v616 = vunpack.c.l.b16 %v76
    %v617 = vunpack.c.l.b16 %v77
    %v618 = vunpack.c.l.b16 %v78
    %v619 = vunpack.c.l.b16 %v79
    %v620 = vunpack.c.l.b16 %v80
    %v621 = vunpack.c.l.b16 %v81
    %v622 = vunpack.c.l.b16 %v82
    %v623 = vunpack.c.l.b16 %v83
    %v624 = vunpack.c.l.b16 %v84
    %v625 = vunpack.c.l.b16 %v85
    %v626 = vunpack.c.l.b16 %v86
    %v627 = vunpack.c.l.b16 %v87
    %v628 = vpack.c.b16 %v613, %v612
    %v629 = vpack.c.b16 %v615, %v614
    %v630 = vpack.c.b16 %v617, %v616
    %v631 = vpack.c.b16 %v619, %v618
    %v632 = vpack.c.b16 %v621, %v620
    %v633 = vpack.c.b16 %v623, %v622
    %v634 = vpack.c.b16 %v625, %v624
    %v635 = vpack.c.b16 %v627, %v626
    %644 = vmatprep.subr.bf16.mxu0 0
    %645 = vmatpush1.bf16.msra.mxu0 %v628
    %646 = vmatprep.subr.bf16.mxu0 0
    %647 = vmatpush1.bf16.msra.mxu0 %v629
    %648 = vmatprep.subr.bf16.mxu0 0
    %649 = vmatpush1.bf16.msra.mxu0 %v630
    %650 = vmatprep.subr.bf16.mxu0 0
    %651 = vmatpush1.bf16.msra.mxu0 %v631
    %652 = vmatprep.subr.bf16.mxu0 0
    %653 = vmatpush1.bf16.msra.mxu0 %v632
    %654 = vmatprep.subr.bf16.mxu0 0
    %655 = vmatpush1.bf16.msra.mxu0 %v633
    %656 = vmatprep.subr.bf16.mxu0 0
    %657 = vmatpush1.bf16.msra.mxu0 %v634
    %658 = vmatprep.subr.bf16.mxu0 0
    %659 = vmatpush1.bf16.msra.mxu0 %v635
    %660 = vmatprep.subr.bf16.mxu0 0
    %661 = vmatpush1.bf16.msra.mxu0 0
    %662 = vmatprep.subr.bf16.mxu0 0
    %663 = vmatpush1.bf16.msra.mxu0 0
    %664 = vmatprep.subr.bf16.mxu0 0
    %665 = vmatpush1.bf16.msra.mxu0 0
    %666 = vmatprep.subr.bf16.mxu0 0
    %667 = vmatpush1.bf16.msra.mxu0 0
    %668 = vmatprep.subr.bf16.mxu0 0
    %669 = vmatpush1.bf16.msra.mxu0 0
    %670 = vmatprep.subr.bf16.mxu0 0
    %671 = vmatpush1.bf16.msra.mxu0 0
    %672 = vmatprep.subr.bf16.mxu0 0
    %673 = vmatpush1.bf16.msra.mxu0 0
    %674 = vmatprep.subr.bf16.mxu0 0
    %675 = vmatpush1.bf16.msra.mxu0 0
    %676 = vmatprep.mubr.bf16.mxu0 0
    %677 = vmatmul.mubr.bf16.gmra.mrb[0].mxu0 %v582
    %v678 = vpop.f32.mrb[0].mxu0
    %v679 = vadd.f32 %v594, %v678
    %v680 = vpop.f32.mrb[0].mxu0
    %v681 = vpop.f32.mrb[0].mxu0
    %v682 = vadd.f32 %v594, %v681
    %v683 = vpop.f32.mrb[0].mxu0
    %684 = vmatprep.mubr.bf16.mxu0 0
    %685 = vmatmul.mubr.bf16.gmra.mrb[0].mxu0 %v583
    %v686 = vpop.f32.mrb[0].mxu0
    %v687 = vadd.f32 %v594, %v686
    %v688 = vpop.f32.mrb[0].mxu0
    %v689 = vpop.f32.mrb[0].mxu0
    %v690 = vadd.f32 %v594, %v689
    %v691 = vpop.f32.mrb[0].mxu0
    %692 = vmatprep.mubr.bf16.mxu0 0
    %693 = vmatmul.mubr.bf16.gmra.mrb[0].mxu0 %v584
    %v694 = vpop.f32.mrb[0].mxu0
    %v695 = vadd.f32 %v594, %v694
    %v696 = vpop.f32.mrb[0].mxu0
    %v697 = vpop.f32.mrb[0].mxu0
    %v698 = vadd.f32 %v594, %v697
    %v699 = vpop.f32.mrb[0].mxu0
    %700 = vmatprep.mubr.bf16.mxu0 0
    %701 = vmatmul.mubr.bf16.gmra.mrb[0].mxu0 %v585
    %v702 = vpop.f32.mrb[0].mxu0
    %v703 = vadd.f32 %v594, %v702
    %v704 = vpop.f32.mrb[0].mxu0
    %v705 = vpop.f32.mrb[0].mxu0
    %v706 = vadd.f32 %v594, %v705
    %v707 = vpop.f32.mrb[0].mxu0
    %708 = vmatprep.mubr.bf16.mxu0 0
    %709 = vmatmul.mubr.bf16.gmra.mrb[0].mxu0 %v586
    %v710 = vpop.f32.mrb[0].mxu0
    %v711 = vadd.f32 %v594, %v710
    %v712 = vpop.f32.mrb[0].mxu0
    %v713 = vpop.f32.mrb[0].mxu0
    %v714 = vadd.f32 %v594, %v713
    %v715 = vpop.f32.mrb[0].mxu0
    %716 = vmatprep.mubr.bf16.mxu0 0
    %717 = vmatmul.mubr.bf16.gmra.mrb[0].mxu0 %v587
    %v718 = vpop.f32.mrb[0].mxu0
    %v719 = vadd.f32 %v594, %v718
    %v720 = vpop.f32.mrb[0].mxu0
    %v721 = vpop.f32.mrb[0].mxu0
    %v722 = vadd.f32 %v594, %v721
    %v723 = vpop.f32.mrb[0].mxu0
    %724 = vmatprep.mubr.bf16.mxu0 0
    %725 = vmatmul.mubr.bf16.gmra.mrb[0].mxu0 %v588
    %v726 = vpop.f32.mrb[0].mxu0
    %v727 = vadd.f32 %v594, %v726
    %v728 = vpop.f32.mrb[0].mxu0
    %v729 = vpop.f32.mrb[0].mxu0
    %v730 = vadd.f32 %v594, %v729
    %v731 = vpop.f32.mrb[0].mxu0
    %732 = vmatprep.mubr.bf16.mxu0 0
    %733 = vmatmul.mubr.bf16.gmra.mrb[0].mxu0 %v589
    %v734 = vpop.f32.mrb[0].mxu0
    %v735 = vadd.f32 %v594, %v734
    %v736 = vpop.f32.mrb[0].mxu0
    %v737 = vpop.f32.mrb[0].mxu0
    %v738 = vadd.f32 %v594, %v737
    %v739 = vpop.f32.mrb[0].mxu0
    %740 = vdwg.mxu0
    %v741 = vmax.f32 %v679, 0.0
    %v742 = vmax.f32 %v682, 0.0
    %v743 = vmax.f32 %v687, 0.0
    %v744 = vmax.f32 %v690, 0.0
    %v745 = vmax.f32 %v695, 0.0
    %v746 = vmax.f32 %v698, 0.0
    %v747 = vmax.f32 %v703, 0.0
    %v748 = vmax.f32 %v706, 0.0
    %v749 = vmax.f32 %v711, 0.0
    %v750 = vmax.f32 %v714, 0.0
    %v751 = vmax.f32 %v719, 0.0
    %v752 = vmax.f32 %v722, 0.0
    %v753 = vmax.f32 %v727, 0.0
    %v754 = vmax.f32 %v730, 0.0
    %v755 = vmax.f32 %v735, 0.0
    %v756 = vmax.f32 %v738, 0.0
    %v757 = vpack.c.bf16 %v742, %v741
    %v758 = vpack.c.bf16 %v744, %v743
    %v759 = vpack.c.bf16 %v746, %v745
    %v760 = vpack.c.bf16 %v748, %v747
    %v761 = vpack.c.bf16 %v750, %v749
    %v762 = vpack.c.bf16 %v752, %v751
    %v763 = vpack.c.bf16 %v754, %v753
    %v764 = vpack.c.bf16 %v756, %v755
    %v765 = vunpack.c.l.bf16 %v757
    %v766 = vunpack.c.h.bf16 %v757
    %v767 = vunpack.c.l.bf16 %v758
    %v768 = vunpack.c.h.bf16 %v758
    %v769 = vunpack.c.l.bf16 %v759
    %v770 = vunpack.c.h.bf16 %v759
    %v771 = vunpack.c.l.bf16 %v760
    %v772 = vunpack.c.h.bf16 %v760
    %v773 = vunpack.c.l.bf16 %v761
    %v774 = vunpack.c.h.bf16 %v761
    %v775 = vunpack.c.l.bf16 %v762
    %v776 = vunpack.c.h.bf16 %v762
    %v777 = vunpack.c.l.bf16 %v763
    %v778 = vunpack.c.h.bf16 %v763
    %v779 = vunpack.c.l.bf16 %v764
    %v780 = vunpack.c.h.bf16 %v764
    %v781 = vlaneseq
    %v782 = vshrl.u32 %v781, 7
    %v783 = vsub.s32 0, %v782
    %v784 = vrot.slane %v89, %v783
    %v785 = vmul.f32 %v765, %v784
    %v786 = vmul.f32 %v766, %v784
    %v787 = vmul.f32 %v767, %v784
    %v788 = vmul.f32 %v768, %v784
    %v789 = vmul.f32 %v769, %v784
    %v790 = vmul.f32 %v770, %v784
    %v791 = vmul.f32 %v771, %v784
    %v792 = vmul.f32 %v772, %v784
    %v793 = vmul.f32 %v773, %v784
    %v794 = vmul.f32 %v774, %v784
    %v795 = vmul.f32 %v775, %v784
    %v796 = vmul.f32 %v776, %v784
    %v797 = vmul.f32 %v777, %v784
    %v798 = vmul.f32 %v778, %v784
    %v799 = vmul.f32 %v779, %v784
    %v800 = vmul.f32 %v780, %v784
    %vm801 = vcmask 523264
    %v802 = vsel %vm801, %v785, 0.0
    %803 = vadd.xlane.f32.xlu0 %v802
    %v804 = vpop.xlane.xlu0 %803
    %v805 = vsel %vm801, %v786, 0.0
    %806 = vadd.xlane.f32.xlu0 %v805
    %v807 = vpop.xlane.xlu0 %806
    %v808 = vsel %vm801, %v787, 0.0
    %809 = vadd.xlane.f32.xlu0 %v808
    %v810 = vpop.xlane.xlu0 %809
    %v811 = vsel %vm801, %v788, 0.0
    %812 = vadd.xlane.f32.xlu0 %v811
    %v813 = vpop.xlane.xlu0 %812
    %v814 = vsel %vm801, %v789, 0.0
    %815 = vadd.xlane.f32.xlu0 %v814
    %v816 = vpop.xlane.xlu0 %815
    %v817 = vsel %vm801, %v790, 0.0
    %818 = vadd.xlane.f32.xlu0 %v817
    %v819 = vpop.xlane.xlu0 %818
    %v820 = vsel %vm801, %v791, 0.0
    %821 = vadd.xlane.f32.xlu0 %v820
    %v822 = vpop.xlane.xlu0 %821
    %v823 = vsel %vm801, %v792, 0.0
    %824 = vadd.xlane.f32.xlu0 %v823
    %v825 = vpop.xlane.xlu0 %824
    %v826 = vsel %vm801, %v793, 0.0
    %827 = vadd.xlane.f32.xlu0 %v826
    %v828 = vpop.xlane.xlu0 %827
    %v829 = vsel %vm801, %v794, 0.0
    %830 = vadd.xlane.f32.xlu0 %v829
    %v831 = vpop.xlane.xlu0 %830
    %v832 = vsel %vm801, %v795, 0.0
    %833 = vadd.xlane.f32.xlu0 %v832
    %v834 = vpop.xlane.xlu0 %833
    %v835 = vsel %vm801, %v796, 0.0
    %836 = vadd.xlane.f32.xlu0 %v835
    %v837 = vpop.xlane.xlu0 %836
    %v838 = vsel %vm801, %v797, 0.0
    %839 = vadd.xlane.f32.xlu0 %v838
    %v840 = vpop.xlane.xlu0 %839
    %v841 = vsel %vm801, %v798, 0.0
    %842 = vadd.xlane.f32.xlu0 %v841
    %v843 = vpop.xlane.xlu0 %842
    %v844 = vsel %vm801, %v799, 0.0
    %845 = vadd.xlane.f32.xlu0 %v844
    %v846 = vpop.xlane.xlu0 %845
    %v847 = vsel %vm801, %v800, 0.0
    %848 = vadd.xlane.f32.xlu0 %v847
    %v849 = vpop.xlane.xlu0 %848
    %851 = vset.pattern.permute.xlu0 0
    %852 = vperm.xlu0 %851, %v93
    %v853 = vpop.permute.xlu0 %852
    %v855 = vlaneseq
    %v856 = vshrl.u32 %v855, 7
    %v857 = vsub.s32 0, %v856
    %v858 = vrot.slane %v853, %v857
    %v859 = vadd.f32 %v804, %v858
    %v860 = vadd.f32 %v807, %v858
    %v861 = vadd.f32 %v810, %v858
    %v862 = vadd.f32 %v813, %v858
    %v863 = vadd.f32 %v816, %v858
    %v864 = vadd.f32 %v819, %v858
    %v865 = vadd.f32 %v822, %v858
    %v866 = vadd.f32 %v825, %v858
    %v867 = vadd.f32 %v828, %v858
    %v868 = vadd.f32 %v831, %v858
    %v869 = vadd.f32 %v834, %v858
    %v870 = vadd.f32 %v837, %v858
    %v871 = vadd.f32 %v840, %v858
    %v872 = vadd.f32 %v843, %v858
    %v873 = vadd.f32 %v846, %v858
    %v874 = vadd.f32 %v849, %v858
    %v891 = vlaneseq
    %v892 = vshrl.u32 %v891, 7
    %v893 = vsub.s32 0, %v892
    %v894 = vrot.slane %v859, %v893
    %v895 = vlaneseq
    %v896 = vshrl.u32 %v895, 7
    %v897 = vsub.s32 1, %v896
    %v898 = vrot.slane %v859, %v897
    %v899 = vlaneseq
    %v900 = vshrl.u32 %v899, 7
    %v901 = vsub.s32 2, %v900
    %v902 = vrot.slane %v859, %v901
    %v903 = vlaneseq
    %v904 = vshrl.u32 %v903, 7
    %v905 = vsub.s32 3, %v904
    %v906 = vrot.slane %v859, %v905
    %v907 = vlaneseq
    %v908 = vshrl.u32 %v907, 7
    %v909 = vsub.s32 4, %v908
    %v910 = vrot.slane %v859, %v909
    %v911 = vlaneseq
    %v912 = vshrl.u32 %v911, 7
    %v913 = vsub.s32 5, %v912
    %v914 = vrot.slane %v859, %v913
    %v915 = vlaneseq
    %v916 = vshrl.u32 %v915, 7
    %v917 = vsub.s32 6, %v916
    %v918 = vrot.slane %v859, %v917
    %v919 = vlaneseq
    %v920 = vshrl.u32 %v919, 7
    %v921 = vsub.s32 7, %v920
    %v922 = vrot.slane %v859, %v921
    %v923 = vlaneseq
    %v924 = vshrl.u32 %v923, 7
    %v925 = vsub.s32 0, %v924
    %v926 = vrot.slane %v860, %v925
    %v927 = vlaneseq
    %v928 = vshrl.u32 %v927, 7
    %v929 = vsub.s32 1, %v928
    %v930 = vrot.slane %v860, %v929
    %v931 = vlaneseq
    %v932 = vshrl.u32 %v931, 7
    %v933 = vsub.s32 2, %v932
    %v934 = vrot.slane %v860, %v933
    %v935 = vlaneseq
    %v936 = vshrl.u32 %v935, 7
    %v937 = vsub.s32 3, %v936
    %v938 = vrot.slane %v860, %v937
    %v939 = vlaneseq
    %v940 = vshrl.u32 %v939, 7
    %v941 = vsub.s32 4, %v940
    %v942 = vrot.slane %v860, %v941
    %v943 = vlaneseq
    %v944 = vshrl.u32 %v943, 7
    %v945 = vsub.s32 5, %v944
    %v946 = vrot.slane %v860, %v945
    %v947 = vlaneseq
    %v948 = vshrl.u32 %v947, 7
    %v949 = vsub.s32 6, %v948
    %v950 = vrot.slane %v860, %v949
    %v951 = vlaneseq
    %v952 = vshrl.u32 %v951, 7
    %v953 = vsub.s32 7, %v952
    %v954 = vrot.slane %v860, %v953
    %v955 = vlaneseq
    %v956 = vshrl.u32 %v955, 7
    %v957 = vsub.s32 0, %v956
    %v958 = vrot.slane %v861, %v957
    %v959 = vlaneseq
    %v960 = vshrl.u32 %v959, 7
    %v961 = vsub.s32 1, %v960
    %v962 = vrot.slane %v861, %v961
    %v963 = vlaneseq
    %v964 = vshrl.u32 %v963, 7
    %v965 = vsub.s32 2, %v964
    %v966 = vrot.slane %v861, %v965
    %v967 = vlaneseq
    %v968 = vshrl.u32 %v967, 7
    %v969 = vsub.s32 3, %v968
    %v970 = vrot.slane %v861, %v969
    %v971 = vlaneseq
    %v972 = vshrl.u32 %v971, 7
    %v973 = vsub.s32 4, %v972
    %v974 = vrot.slane %v861, %v973
    %v975 = vlaneseq
    %v976 = vshrl.u32 %v975, 7
    %v977 = vsub.s32 5, %v976
    %v978 = vrot.slane %v861, %v977
    %v979 = vlaneseq
    %v980 = vshrl.u32 %v979, 7
    %v981 = vsub.s32 6, %v980
    %v982 = vrot.slane %v861, %v981
    %v983 = vlaneseq
    %v984 = vshrl.u32 %v983, 7
    %v985 = vsub.s32 7, %v984
    %v986 = vrot.slane %v861, %v985
    %v987 = vlaneseq
    %v988 = vshrl.u32 %v987, 7
    %v989 = vsub.s32 0, %v988
    %v990 = vrot.slane %v862, %v989
    %v991 = vlaneseq
    %v992 = vshrl.u32 %v991, 7
    %v993 = vsub.s32 1, %v992
    %v994 = vrot.slane %v862, %v993
    %v995 = vlaneseq
    %v996 = vshrl.u32 %v995, 7
    %v997 = vsub.s32 2, %v996
    %v998 = vrot.slane %v862, %v997
    %v999 = vlaneseq
    %v1000 = vshrl.u32 %v999, 7
    %v1001 = vsub.s32 3, %v1000
    %v1002 = vrot.slane %v862, %v1001
    %v1003 = vlaneseq
    %v1004 = vshrl.u32 %v1003, 7
    %v1005 = vsub.s32 4, %v1004
    %v1006 = vrot.slane %v862, %v1005
    %v1007 = vlaneseq
    %v1008 = vshrl.u32 %v1007, 7
    %v1009 = vsub.s32 5, %v1008
    %v1010 = vrot.slane %v862, %v1009
    %v1011 = vlaneseq
    %v1012 = vshrl.u32 %v1011, 7
    %v1013 = vsub.s32 6, %v1012
    %v1014 = vrot.slane %v862, %v1013
    %v1015 = vlaneseq
    %v1016 = vshrl.u32 %v1015, 7
    %v1017 = vsub.s32 7, %v1016
    %v1018 = vrot.slane %v862, %v1017
    %v1019 = vlaneseq
    %v1020 = vshrl.u32 %v1019, 7
    %v1021 = vsub.s32 0, %v1020
    %v1022 = vrot.slane %v863, %v1021
    %v1023 = vlaneseq
    %v1024 = vshrl.u32 %v1023, 7
    %v1025 = vsub.s32 1, %v1024
    %v1026 = vrot.slane %v863, %v1025
    %v1027 = vlaneseq
    %v1028 = vshrl.u32 %v1027, 7
    %v1029 = vsub.s32 2, %v1028
    %v1030 = vrot.slane %v863, %v1029
    %v1031 = vlaneseq
    %v1032 = vshrl.u32 %v1031, 7
    %v1033 = vsub.s32 3, %v1032
    %v1034 = vrot.slane %v863, %v1033
    %v1035 = vlaneseq
    %v1036 = vshrl.u32 %v1035, 7
    %v1037 = vsub.s32 4, %v1036
    %v1038 = vrot.slane %v863, %v1037
    %v1039 = vlaneseq
    %v1040 = vshrl.u32 %v1039, 7
    %v1041 = vsub.s32 5, %v1040
    %v1042 = vrot.slane %v863, %v1041
    %v1043 = vlaneseq
    %v1044 = vshrl.u32 %v1043, 7
    %v1045 = vsub.s32 6, %v1044
    %v1046 = vrot.slane %v863, %v1045
    %v1047 = vlaneseq
    %v1048 = vshrl.u32 %v1047, 7
    %v1049 = vsub.s32 7, %v1048
    %v1050 = vrot.slane %v863, %v1049
    %v1051 = vlaneseq
    %v1052 = vshrl.u32 %v1051, 7
    %v1053 = vsub.s32 0, %v1052
    %v1054 = vrot.slane %v864, %v1053
    %v1055 = vlaneseq
    %v1056 = vshrl.u32 %v1055, 7
    %v1057 = vsub.s32 1, %v1056
    %v1058 = vrot.slane %v864, %v1057
    %v1059 = vlaneseq
    %v1060 = vshrl.u32 %v1059, 7
    %v1061 = vsub.s32 2, %v1060
    %v1062 = vrot.slane %v864, %v1061
    %v1063 = vlaneseq
    %v1064 = vshrl.u32 %v1063, 7
    %v1065 = vsub.s32 3, %v1064
    %v1066 = vrot.slane %v864, %v1065
    %v1067 = vlaneseq
    %v1068 = vshrl.u32 %v1067, 7
    %v1069 = vsub.s32 4, %v1068
    %v1070 = vrot.slane %v864, %v1069
    %v1071 = vlaneseq
    %v1072 = vshrl.u32 %v1071, 7
    %v1073 = vsub.s32 5, %v1072
    %v1074 = vrot.slane %v864, %v1073
    %v1075 = vlaneseq
    %v1076 = vshrl.u32 %v1075, 7
    %v1077 = vsub.s32 6, %v1076
    %v1078 = vrot.slane %v864, %v1077
    %v1079 = vlaneseq
    %v1080 = vshrl.u32 %v1079, 7
    %v1081 = vsub.s32 7, %v1080
    %v1082 = vrot.slane %v864, %v1081
    %v1083 = vlaneseq
    %v1084 = vshrl.u32 %v1083, 7
    %v1085 = vsub.s32 0, %v1084
    %v1086 = vrot.slane %v865, %v1085
    %v1087 = vlaneseq
    %v1088 = vshrl.u32 %v1087, 7
    %v1089 = vsub.s32 1, %v1088
    %v1090 = vrot.slane %v865, %v1089
    %v1091 = vlaneseq
    %v1092 = vshrl.u32 %v1091, 7
    %v1093 = vsub.s32 2, %v1092
    %v1094 = vrot.slane %v865, %v1093
    %v1095 = vlaneseq
    %v1096 = vshrl.u32 %v1095, 7
    %v1097 = vsub.s32 3, %v1096
    %v1098 = vrot.slane %v865, %v1097
    %v1099 = vlaneseq
    %v1100 = vshrl.u32 %v1099, 7
    %v1101 = vsub.s32 4, %v1100
    %v1102 = vrot.slane %v865, %v1101
    %v1103 = vlaneseq
    %v1104 = vshrl.u32 %v1103, 7
    %v1105 = vsub.s32 5, %v1104
    %v1106 = vrot.slane %v865, %v1105
    %v1107 = vlaneseq
    %v1108 = vshrl.u32 %v1107, 7
    %v1109 = vsub.s32 6, %v1108
    %v1110 = vrot.slane %v865, %v1109
    %v1111 = vlaneseq
    %v1112 = vshrl.u32 %v1111, 7
    %v1113 = vsub.s32 7, %v1112
    %v1114 = vrot.slane %v865, %v1113
    %v1115 = vlaneseq
    %v1116 = vshrl.u32 %v1115, 7
    %v1117 = vsub.s32 0, %v1116
    %v1118 = vrot.slane %v866, %v1117
    %v1119 = vlaneseq
    %v1120 = vshrl.u32 %v1119, 7
    %v1121 = vsub.s32 1, %v1120
    %v1122 = vrot.slane %v866, %v1121
    %v1123 = vlaneseq
    %v1124 = vshrl.u32 %v1123, 7
    %v1125 = vsub.s32 2, %v1124
    %v1126 = vrot.slane %v866, %v1125
    %v1127 = vlaneseq
    %v1128 = vshrl.u32 %v1127, 7
    %v1129 = vsub.s32 3, %v1128
    %v1130 = vrot.slane %v866, %v1129
    %v1131 = vlaneseq
    %v1132 = vshrl.u32 %v1131, 7
    %v1133 = vsub.s32 4, %v1132
    %v1134 = vrot.slane %v866, %v1133
    %v1135 = vlaneseq
    %v1136 = vshrl.u32 %v1135, 7
    %v1137 = vsub.s32 5, %v1136
    %v1138 = vrot.slane %v866, %v1137
    %v1139 = vlaneseq
    %v1140 = vshrl.u32 %v1139, 7
    %v1141 = vsub.s32 6, %v1140
    %v1142 = vrot.slane %v866, %v1141
    %v1143 = vlaneseq
    %v1144 = vshrl.u32 %v1143, 7
    %v1145 = vsub.s32 7, %v1144
    %v1146 = vrot.slane %v866, %v1145
    %v1147 = vlaneseq
    %v1148 = vshrl.u32 %v1147, 7
    %v1149 = vsub.s32 0, %v1148
    %v1150 = vrot.slane %v867, %v1149
    %v1151 = vlaneseq
    %v1152 = vshrl.u32 %v1151, 7
    %v1153 = vsub.s32 1, %v1152
    %v1154 = vrot.slane %v867, %v1153
    %v1155 = vlaneseq
    %v1156 = vshrl.u32 %v1155, 7
    %v1157 = vsub.s32 2, %v1156
    %v1158 = vrot.slane %v867, %v1157
    %v1159 = vlaneseq
    %v1160 = vshrl.u32 %v1159, 7
    %v1161 = vsub.s32 3, %v1160
    %v1162 = vrot.slane %v867, %v1161
    %v1163 = vlaneseq
    %v1164 = vshrl.u32 %v1163, 7
    %v1165 = vsub.s32 4, %v1164
    %v1166 = vrot.slane %v867, %v1165
    %v1167 = vlaneseq
    %v1168 = vshrl.u32 %v1167, 7
    %v1169 = vsub.s32 5, %v1168
    %v1170 = vrot.slane %v867, %v1169
    %v1171 = vlaneseq
    %v1172 = vshrl.u32 %v1171, 7
    %v1173 = vsub.s32 6, %v1172
    %v1174 = vrot.slane %v867, %v1173
    %v1175 = vlaneseq
    %v1176 = vshrl.u32 %v1175, 7
    %v1177 = vsub.s32 7, %v1176
    %v1178 = vrot.slane %v867, %v1177
    %v1179 = vlaneseq
    %v1180 = vshrl.u32 %v1179, 7
    %v1181 = vsub.s32 0, %v1180
    %v1182 = vrot.slane %v868, %v1181
    %v1183 = vlaneseq
    %v1184 = vshrl.u32 %v1183, 7
    %v1185 = vsub.s32 1, %v1184
    %v1186 = vrot.slane %v868, %v1185
    %v1187 = vlaneseq
    %v1188 = vshrl.u32 %v1187, 7
    %v1189 = vsub.s32 2, %v1188
    %v1190 = vrot.slane %v868, %v1189
    %v1191 = vlaneseq
    %v1192 = vshrl.u32 %v1191, 7
    %v1193 = vsub.s32 3, %v1192
    %v1194 = vrot.slane %v868, %v1193
    %v1195 = vlaneseq
    %v1196 = vshrl.u32 %v1195, 7
    %v1197 = vsub.s32 4, %v1196
    %v1198 = vrot.slane %v868, %v1197
    %v1199 = vlaneseq
    %v1200 = vshrl.u32 %v1199, 7
    %v1201 = vsub.s32 5, %v1200
    %v1202 = vrot.slane %v868, %v1201
    %v1203 = vlaneseq
    %v1204 = vshrl.u32 %v1203, 7
    %v1205 = vsub.s32 6, %v1204
    %v1206 = vrot.slane %v868, %v1205
    %v1207 = vlaneseq
    %v1208 = vshrl.u32 %v1207, 7
    %v1209 = vsub.s32 7, %v1208
    %v1210 = vrot.slane %v868, %v1209
    %v1211 = vlaneseq
    %v1212 = vshrl.u32 %v1211, 7
    %v1213 = vsub.s32 0, %v1212
    %v1214 = vrot.slane %v869, %v1213
    %v1215 = vlaneseq
    %v1216 = vshrl.u32 %v1215, 7
    %v1217 = vsub.s32 1, %v1216
    %v1218 = vrot.slane %v869, %v1217
    %v1219 = vlaneseq
    %v1220 = vshrl.u32 %v1219, 7
    %v1221 = vsub.s32 2, %v1220
    %v1222 = vrot.slane %v869, %v1221
    %v1223 = vlaneseq
    %v1224 = vshrl.u32 %v1223, 7
    %v1225 = vsub.s32 3, %v1224
    %v1226 = vrot.slane %v869, %v1225
    %v1227 = vlaneseq
    %v1228 = vshrl.u32 %v1227, 7
    %v1229 = vsub.s32 4, %v1228
    %v1230 = vrot.slane %v869, %v1229
    %v1231 = vlaneseq
    %v1232 = vshrl.u32 %v1231, 7
    %v1233 = vsub.s32 5, %v1232
    %v1234 = vrot.slane %v869, %v1233
    %v1235 = vlaneseq
    %v1236 = vshrl.u32 %v1235, 7
    %v1237 = vsub.s32 6, %v1236
    %v1238 = vrot.slane %v869, %v1237
    %v1239 = vlaneseq
    %v1240 = vshrl.u32 %v1239, 7
    %v1241 = vsub.s32 7, %v1240
    %v1242 = vrot.slane %v869, %v1241
    %v1243 = vlaneseq
    %v1244 = vshrl.u32 %v1243, 7
    %v1245 = vsub.s32 0, %v1244
    %v1246 = vrot.slane %v870, %v1245
    %v1247 = vlaneseq
    %v1248 = vshrl.u32 %v1247, 7
    %v1249 = vsub.s32 1, %v1248
    %v1250 = vrot.slane %v870, %v1249
    %v1251 = vlaneseq
    %v1252 = vshrl.u32 %v1251, 7
    %v1253 = vsub.s32 2, %v1252
    %v1254 = vrot.slane %v870, %v1253
    %v1255 = vlaneseq
    %v1256 = vshrl.u32 %v1255, 7
    %v1257 = vsub.s32 3, %v1256
    %v1258 = vrot.slane %v870, %v1257
    %v1259 = vlaneseq
    %v1260 = vshrl.u32 %v1259, 7
    %v1261 = vsub.s32 4, %v1260
    %v1262 = vrot.slane %v870, %v1261
    %v1263 = vlaneseq
    %v1264 = vshrl.u32 %v1263, 7
    %v1265 = vsub.s32 5, %v1264
    %v1266 = vrot.slane %v870, %v1265
    %v1267 = vlaneseq
    %v1268 = vshrl.u32 %v1267, 7
    %v1269 = vsub.s32 6, %v1268
    %v1270 = vrot.slane %v870, %v1269
    %v1271 = vlaneseq
    %v1272 = vshrl.u32 %v1271, 7
    %v1273 = vsub.s32 7, %v1272
    %v1274 = vrot.slane %v870, %v1273
    %v1275 = vlaneseq
    %v1276 = vshrl.u32 %v1275, 7
    %v1277 = vsub.s32 0, %v1276
    %v1278 = vrot.slane %v871, %v1277
    %v1279 = vlaneseq
    %v1280 = vshrl.u32 %v1279, 7
    %v1281 = vsub.s32 1, %v1280
    %v1282 = vrot.slane %v871, %v1281
    %v1283 = vlaneseq
    %v1284 = vshrl.u32 %v1283, 7
    %v1285 = vsub.s32 2, %v1284
    %v1286 = vrot.slane %v871, %v1285
    %v1287 = vlaneseq
    %v1288 = vshrl.u32 %v1287, 7
    %v1289 = vsub.s32 3, %v1288
    %v1290 = vrot.slane %v871, %v1289
    %v1291 = vlaneseq
    %v1292 = vshrl.u32 %v1291, 7
    %v1293 = vsub.s32 4, %v1292
    %v1294 = vrot.slane %v871, %v1293
    %v1295 = vlaneseq
    %v1296 = vshrl.u32 %v1295, 7
    %v1297 = vsub.s32 5, %v1296
    %v1298 = vrot.slane %v871, %v1297
    %v1299 = vlaneseq
    %v1300 = vshrl.u32 %v1299, 7
    %v1301 = vsub.s32 6, %v1300
    %v1302 = vrot.slane %v871, %v1301
    %v1303 = vlaneseq
    %v1304 = vshrl.u32 %v1303, 7
    %v1305 = vsub.s32 7, %v1304
    %v1306 = vrot.slane %v871, %v1305
    %v1307 = vlaneseq
    %v1308 = vshrl.u32 %v1307, 7
    %v1309 = vsub.s32 0, %v1308
    %v1310 = vrot.slane %v872, %v1309
    %v1311 = vlaneseq
    %v1312 = vshrl.u32 %v1311, 7
    %v1313 = vsub.s32 1, %v1312
    %v1314 = vrot.slane %v872, %v1313
    %v1315 = vlaneseq
    %v1316 = vshrl.u32 %v1315, 7
    %v1317 = vsub.s32 2, %v1316
    %v1318 = vrot.slane %v872, %v1317
    %v1319 = vlaneseq
    %v1320 = vshrl.u32 %v1319, 7
    %v1321 = vsub.s32 3, %v1320
    %v1322 = vrot.slane %v872, %v1321
    %v1323 = vlaneseq
    %v1324 = vshrl.u32 %v1323, 7
    %v1325 = vsub.s32 4, %v1324
    %v1326 = vrot.slane %v872, %v1325
    %v1327 = vlaneseq
    %v1328 = vshrl.u32 %v1327, 7
    %v1329 = vsub.s32 5, %v1328
    %v1330 = vrot.slane %v872, %v1329
    %v1331 = vlaneseq
    %v1332 = vshrl.u32 %v1331, 7
    %v1333 = vsub.s32 6, %v1332
    %v1334 = vrot.slane %v872, %v1333
    %v1335 = vlaneseq
    %v1336 = vshrl.u32 %v1335, 7
    %v1337 = vsub.s32 7, %v1336
    %v1338 = vrot.slane %v872, %v1337
    %v1339 = vlaneseq
    %v1340 = vshrl.u32 %v1339, 7
    %v1341 = vsub.s32 0, %v1340
    %v1342 = vrot.slane %v873, %v1341
    %v1343 = vlaneseq
    %v1344 = vshrl.u32 %v1343, 7
    %v1345 = vsub.s32 1, %v1344
    %v1346 = vrot.slane %v873, %v1345
    %v1347 = vlaneseq
    %v1348 = vshrl.u32 %v1347, 7
    %v1349 = vsub.s32 2, %v1348
    %v1350 = vrot.slane %v873, %v1349
    %v1351 = vlaneseq
    %v1352 = vshrl.u32 %v1351, 7
    %v1353 = vsub.s32 3, %v1352
    %v1354 = vrot.slane %v873, %v1353
    %v1355 = vlaneseq
    %v1356 = vshrl.u32 %v1355, 7
    %v1357 = vsub.s32 4, %v1356
    %v1358 = vrot.slane %v873, %v1357
    %v1359 = vlaneseq
    %v1360 = vshrl.u32 %v1359, 7
    %v1361 = vsub.s32 5, %v1360
    %v1362 = vrot.slane %v873, %v1361
    %v1363 = vlaneseq
    %v1364 = vshrl.u32 %v1363, 7
    %v1365 = vsub.s32 6, %v1364
    %v1366 = vrot.slane %v873, %v1365
    %v1367 = vlaneseq
    %v1368 = vshrl.u32 %v1367, 7
    %v1369 = vsub.s32 7, %v1368
    %v1370 = vrot.slane %v873, %v1369
    %v1371 = vlaneseq
    %v1372 = vshrl.u32 %v1371, 7
    %v1373 = vsub.s32 0, %v1372
    %v1374 = vrot.slane %v874, %v1373
    %v1375 = vlaneseq
    %v1376 = vshrl.u32 %v1375, 7
    %v1377 = vsub.s32 1, %v1376
    %v1378 = vrot.slane %v874, %v1377
    %v1379 = vlaneseq
    %v1380 = vshrl.u32 %v1379, 7
    %v1381 = vsub.s32 2, %v1380
    %v1382 = vrot.slane %v874, %v1381
    %v1383 = vlaneseq
    %v1384 = vshrl.u32 %v1383, 7
    %v1385 = vsub.s32 3, %v1384
    %v1386 = vrot.slane %v874, %v1385
    %v1387 = vlaneseq
    %v1388 = vshrl.u32 %v1387, 7
    %v1389 = vsub.s32 4, %v1388
    %v1390 = vrot.slane %v874, %v1389
    %v1391 = vlaneseq
    %v1392 = vshrl.u32 %v1391, 7
    %v1393 = vsub.s32 5, %v1392
    %v1394 = vrot.slane %v874, %v1393
    %v1395 = vlaneseq
    %v1396 = vshrl.u32 %v1395, 7
    %v1397 = vsub.s32 6, %v1396
    %v1398 = vrot.slane %v874, %v1397
    %v1399 = vlaneseq
    %v1400 = vshrl.u32 %v1399, 7
    %v1401 = vsub.s32 7, %v1400
    %v1402 = vrot.slane %v874, %v1401
    %v1403 = vcombine.low %v894, %v898
    %v1404 = vcombine.low %v902, %v906
    %v1405 = vcombine.low %v910, %v914
    %v1406 = vcombine.low %v918, %v922
    %v1408 = vunpack.c.l.s4 1966171168
    %v1409 = vunpack.c.0.s8 %v1408
    %v1410 = vlaneseq
    %v1411 = vshrl.u32 %v1410, 7
    %v1412 = vsub.s32 %v1409, %v1411
    %v1413 = vrot.slane %v1403, %v1412
    %v1415 = vunpack.c.l.s4 1966171168
    %v1416 = vunpack.c.0.s8 %v1415
    %v1417 = vlaneseq
    %v1418 = vshrl.u32 %v1417, 7
    %v1419 = vsub.s32 %v1416, %v1418
    %v1420 = vrot.slane %v1404, %v1419
    %v1422 = vunpack.c.l.s4 1966171168
    %v1423 = vunpack.c.0.s8 %v1422
    %v1424 = vlaneseq
    %v1425 = vshrl.u32 %v1424, 7
    %v1426 = vsub.s32 %v1423, %v1425
    %v1427 = vrot.slane %v1405, %v1426
    %v1429 = vunpack.c.l.s4 1966171168
    %v1430 = vunpack.c.0.s8 %v1429
    %v1431 = vlaneseq
    %v1432 = vshrl.u32 %v1431, 7
    %v1433 = vsub.s32 %v1430, %v1432
    %v1434 = vrot.slane %v1406, %v1433
    %v1435 = vcombine.low %v1413, %v1420
    %v1436 = vcombine.low %v1427, %v1434
    %v1438 = vunpack.c.l.s4 1966171168
    %v1439 = vunpack.c.0.s8 %v1438
    %v1440 = vlaneseq
    %v1441 = vshrl.u32 %v1440, 7
    %v1442 = vsub.s32 %v1439, %v1441
    %v1443 = vrot.slane %v1435, %v1442
    %v1445 = vunpack.c.l.s4 1966171168
    %v1446 = vunpack.c.0.s8 %v1445
    %v1447 = vlaneseq
    %v1448 = vshrl.u32 %v1447, 7
    %v1449 = vsub.s32 %v1446, %v1448
    %v1450 = vrot.slane %v1436, %v1449
    %v1451 = vcombine.low %v1443, %v1450
    %v1452 = vcombine.low %v926, %v930
    %v1453 = vcombine.low %v934, %v938
    %v1454 = vcombine.low %v942, %v946
    %v1455 = vcombine.low %v950, %v954
    %v1457 = vunpack.c.l.s4 1966171168
    %v1458 = vunpack.c.0.s8 %v1457
    %v1459 = vlaneseq
    %v1460 = vshrl.u32 %v1459, 7
    %v1461 = vsub.s32 %v1458, %v1460
    %v1462 = vrot.slane %v1452, %v1461
    %v1464 = vunpack.c.l.s4 1966171168
    %v1465 = vunpack.c.0.s8 %v1464
    %v1466 = vlaneseq
    %v1467 = vshrl.u32 %v1466, 7
    %v1468 = vsub.s32 %v1465, %v1467
    %v1469 = vrot.slane %v1453, %v1468
    %v1471 = vunpack.c.l.s4 1966171168
    %v1472 = vunpack.c.0.s8 %v1471
    %v1473 = vlaneseq
    %v1474 = vshrl.u32 %v1473, 7
    %v1475 = vsub.s32 %v1472, %v1474
    %v1476 = vrot.slane %v1454, %v1475
    %v1478 = vunpack.c.l.s4 1966171168
    %v1479 = vunpack.c.0.s8 %v1478
    %v1480 = vlaneseq
    %v1481 = vshrl.u32 %v1480, 7
    %v1482 = vsub.s32 %v1479, %v1481
    %v1483 = vrot.slane %v1455, %v1482
    %v1484 = vcombine.low %v1462, %v1469
    %v1485 = vcombine.low %v1476, %v1483
    %v1487 = vunpack.c.l.s4 1966171168
    %v1488 = vunpack.c.0.s8 %v1487
    %v1489 = vlaneseq
    %v1490 = vshrl.u32 %v1489, 7
    %v1491 = vsub.s32 %v1488, %v1490
    %v1492 = vrot.slane %v1484, %v1491
    %v1494 = vunpack.c.l.s4 1966171168
    %v1495 = vunpack.c.0.s8 %v1494
    %v1496 = vlaneseq
    %v1497 = vshrl.u32 %v1496, 7
    %v1498 = vsub.s32 %v1495, %v1497
    %v1499 = vrot.slane %v1485, %v1498
    %v1500 = vcombine.low %v1492, %v1499
    %v1501 = vcombine.low %v958, %v962
    %v1502 = vcombine.low %v966, %v970
    %v1503 = vcombine.low %v974, %v978
    %v1504 = vcombine.low %v982, %v986
    %v1506 = vunpack.c.l.s4 1966171168
    %v1507 = vunpack.c.0.s8 %v1506
    %v1508 = vlaneseq
    %v1509 = vshrl.u32 %v1508, 7
    %v1510 = vsub.s32 %v1507, %v1509
    %v1511 = vrot.slane %v1501, %v1510
    %v1513 = vunpack.c.l.s4 1966171168
    %v1514 = vunpack.c.0.s8 %v1513
    %v1515 = vlaneseq
    %v1516 = vshrl.u32 %v1515, 7
    %v1517 = vsub.s32 %v1514, %v1516
    %v1518 = vrot.slane %v1502, %v1517
    %v1520 = vunpack.c.l.s4 1966171168
    %v1521 = vunpack.c.0.s8 %v1520
    %v1522 = vlaneseq
    %v1523 = vshrl.u32 %v1522, 7
    %v1524 = vsub.s32 %v1521, %v1523
    %v1525 = vrot.slane %v1503, %v1524
    %v1527 = vunpack.c.l.s4 1966171168
    %v1528 = vunpack.c.0.s8 %v1527
    %v1529 = vlaneseq
    %v1530 = vshrl.u32 %v1529, 7
    %v1531 = vsub.s32 %v1528, %v1530
    %v1532 = vrot.slane %v1504, %v1531
    %v1533 = vcombine.low %v1511, %v1518
    %v1534 = vcombine.low %v1525, %v1532
    %v1536 = vunpack.c.l.s4 1966171168
    %v1537 = vunpack.c.0.s8 %v1536
    %v1538 = vlaneseq
    %v1539 = vshrl.u32 %v1538, 7
    %v1540 = vsub.s32 %v1537, %v1539
    %v1541 = vrot.slane %v1533, %v1540
    %v1543 = vunpack.c.l.s4 1966171168
    %v1544 = vunpack.c.0.s8 %v1543
    %v1545 = vlaneseq
    %v1546 = vshrl.u32 %v1545, 7
    %v1547 = vsub.s32 %v1544, %v1546
    %v1548 = vrot.slane %v1534, %v1547
    %v1549 = vcombine.low %v1541, %v1548
    %v1550 = vcombine.low %v990, %v994
    %v1551 = vcombine.low %v998, %v1002
    %v1552 = vcombine.low %v1006, %v1010
    %v1553 = vcombine.low %v1014, %v1018
    %v1555 = vunpack.c.l.s4 1966171168
    %v1556 = vunpack.c.0.s8 %v1555
    %v1557 = vlaneseq
    %v1558 = vshrl.u32 %v1557, 7
    %v1559 = vsub.s32 %v1556, %v1558
    %v1560 = vrot.slane %v1550, %v1559
    %v1562 = vunpack.c.l.s4 1966171168
    %v1563 = vunpack.c.0.s8 %v1562
    %v1564 = vlaneseq
    %v1565 = vshrl.u32 %v1564, 7
    %v1566 = vsub.s32 %v1563, %v1565
    %v1567 = vrot.slane %v1551, %v1566
    %v1569 = vunpack.c.l.s4 1966171168
    %v1570 = vunpack.c.0.s8 %v1569
    %v1571 = vlaneseq
    %v1572 = vshrl.u32 %v1571, 7
    %v1573 = vsub.s32 %v1570, %v1572
    %v1574 = vrot.slane %v1552, %v1573
    %v1576 = vunpack.c.l.s4 1966171168
    %v1577 = vunpack.c.0.s8 %v1576
    %v1578 = vlaneseq
    %v1579 = vshrl.u32 %v1578, 7
    %v1580 = vsub.s32 %v1577, %v1579
    %v1581 = vrot.slane %v1553, %v1580
    %v1582 = vcombine.low %v1560, %v1567
    %v1583 = vcombine.low %v1574, %v1581
    %v1585 = vunpack.c.l.s4 1966171168
    %v1586 = vunpack.c.0.s8 %v1585
    %v1587 = vlaneseq
    %v1588 = vshrl.u32 %v1587, 7
    %v1589 = vsub.s32 %v1586, %v1588
    %v1590 = vrot.slane %v1582, %v1589
    %v1592 = vunpack.c.l.s4 1966171168
    %v1593 = vunpack.c.0.s8 %v1592
    %v1594 = vlaneseq
    %v1595 = vshrl.u32 %v1594, 7
    %v1596 = vsub.s32 %v1593, %v1595
    %v1597 = vrot.slane %v1583, %v1596
    %v1598 = vcombine.low %v1590, %v1597
    %v1599 = vcombine.low %v1022, %v1026
    %v1600 = vcombine.low %v1030, %v1034
    %v1601 = vcombine.low %v1038, %v1042
    %v1602 = vcombine.low %v1046, %v1050
    %v1604 = vunpack.c.l.s4 1966171168
    %v1605 = vunpack.c.0.s8 %v1604
    %v1606 = vlaneseq
    %v1607 = vshrl.u32 %v1606, 7
    %v1608 = vsub.s32 %v1605, %v1607
    %v1609 = vrot.slane %v1599, %v1608
    %v1611 = vunpack.c.l.s4 1966171168
    %v1612 = vunpack.c.0.s8 %v1611
    %v1613 = vlaneseq
    %v1614 = vshrl.u32 %v1613, 7
    %v1615 = vsub.s32 %v1612, %v1614
    %v1616 = vrot.slane %v1600, %v1615
    %v1618 = vunpack.c.l.s4 1966171168
    %v1619 = vunpack.c.0.s8 %v1618
    %v1620 = vlaneseq
    %v1621 = vshrl.u32 %v1620, 7
    %v1622 = vsub.s32 %v1619, %v1621
    %v1623 = vrot.slane %v1601, %v1622
    %v1625 = vunpack.c.l.s4 1966171168
    %v1626 = vunpack.c.0.s8 %v1625
    %v1627 = vlaneseq
    %v1628 = vshrl.u32 %v1627, 7
    %v1629 = vsub.s32 %v1626, %v1628
    %v1630 = vrot.slane %v1602, %v1629
    %v1631 = vcombine.low %v1609, %v1616
    %v1632 = vcombine.low %v1623, %v1630
    %v1634 = vunpack.c.l.s4 1966171168
    %v1635 = vunpack.c.0.s8 %v1634
    %v1636 = vlaneseq
    %v1637 = vshrl.u32 %v1636, 7
    %v1638 = vsub.s32 %v1635, %v1637
    %v1639 = vrot.slane %v1631, %v1638
    %v1641 = vunpack.c.l.s4 1966171168
    %v1642 = vunpack.c.0.s8 %v1641
    %v1643 = vlaneseq
    %v1644 = vshrl.u32 %v1643, 7
    %v1645 = vsub.s32 %v1642, %v1644
    %v1646 = vrot.slane %v1632, %v1645
    %v1647 = vcombine.low %v1639, %v1646
    %v1648 = vcombine.low %v1054, %v1058
    %v1649 = vcombine.low %v1062, %v1066
    %v1650 = vcombine.low %v1070, %v1074
    %v1651 = vcombine.low %v1078, %v1082
    %v1653 = vunpack.c.l.s4 1966171168
    %v1654 = vunpack.c.0.s8 %v1653
    %v1655 = vlaneseq
    %v1656 = vshrl.u32 %v1655, 7
    %v1657 = vsub.s32 %v1654, %v1656
    %v1658 = vrot.slane %v1648, %v1657
    %v1660 = vunpack.c.l.s4 1966171168
    %v1661 = vunpack.c.0.s8 %v1660
    %v1662 = vlaneseq
    %v1663 = vshrl.u32 %v1662, 7
    %v1664 = vsub.s32 %v1661, %v1663
    %v1665 = vrot.slane %v1649, %v1664
    %v1667 = vunpack.c.l.s4 1966171168
    %v1668 = vunpack.c.0.s8 %v1667
    %v1669 = vlaneseq
    %v1670 = vshrl.u32 %v1669, 7
    %v1671 = vsub.s32 %v1668, %v1670
    %v1672 = vrot.slane %v1650, %v1671
    %v1674 = vunpack.c.l.s4 1966171168
    %v1675 = vunpack.c.0.s8 %v1674
    %v1676 = vlaneseq
    %v1677 = vshrl.u32 %v1676, 7
    %v1678 = vsub.s32 %v1675, %v1677
    %v1679 = vrot.slane %v1651, %v1678
    %v1680 = vcombine.low %v1658, %v1665
    %v1681 = vcombine.low %v1672, %v1679
    %v1683 = vunpack.c.l.s4 1966171168
    %v1684 = vunpack.c.0.s8 %v1683
    %v1685 = vlaneseq
    %v1686 = vshrl.u32 %v1685, 7
    %v1687 = vsub.s32 %v1684, %v1686
    %v1688 = vrot.slane %v1680, %v1687
    %v1690 = vunpack.c.l.s4 1966171168
    %v1691 = vunpack.c.0.s8 %v1690
    %v1692 = vlaneseq
    %v1693 = vshrl.u32 %v1692, 7
    %v1694 = vsub.s32 %v1691, %v1693
    %v1695 = vrot.slane %v1681, %v1694
    %v1696 = vcombine.low %v1688, %v1695
    %v1697 = vcombine.low %v1086, %v1090
    %v1698 = vcombine.low %v1094, %v1098
    %v1699 = vcombine.low %v1102, %v1106
    %v1700 = vcombine.low %v1110, %v1114
    %v1702 = vunpack.c.l.s4 1966171168
    %v1703 = vunpack.c.0.s8 %v1702
    %v1704 = vlaneseq
    %v1705 = vshrl.u32 %v1704, 7
    %v1706 = vsub.s32 %v1703, %v1705
    %v1707 = vrot.slane %v1697, %v1706
    %v1709 = vunpack.c.l.s4 1966171168
    %v1710 = vunpack.c.0.s8 %v1709
    %v1711 = vlaneseq
    %v1712 = vshrl.u32 %v1711, 7
    %v1713 = vsub.s32 %v1710, %v1712
    %v1714 = vrot.slane %v1698, %v1713
    %v1716 = vunpack.c.l.s4 1966171168
    %v1717 = vunpack.c.0.s8 %v1716
    %v1718 = vlaneseq
    %v1719 = vshrl.u32 %v1718, 7
    %v1720 = vsub.s32 %v1717, %v1719
    %v1721 = vrot.slane %v1699, %v1720
    %v1723 = vunpack.c.l.s4 1966171168
    %v1724 = vunpack.c.0.s8 %v1723
    %v1725 = vlaneseq
    %v1726 = vshrl.u32 %v1725, 7
    %v1727 = vsub.s32 %v1724, %v1726
    %v1728 = vrot.slane %v1700, %v1727
    %v1729 = vcombine.low %v1707, %v1714
    %v1730 = vcombine.low %v1721, %v1728
    %v1732 = vunpack.c.l.s4 1966171168
    %v1733 = vunpack.c.0.s8 %v1732
    %v1734 = vlaneseq
    %v1735 = vshrl.u32 %v1734, 7
    %v1736 = vsub.s32 %v1733, %v1735
    %v1737 = vrot.slane %v1729, %v1736
    %v1739 = vunpack.c.l.s4 1966171168
    %v1740 = vunpack.c.0.s8 %v1739
    %v1741 = vlaneseq
    %v1742 = vshrl.u32 %v1741, 7
    %v1743 = vsub.s32 %v1740, %v1742
    %v1744 = vrot.slane %v1730, %v1743
    %v1745 = vcombine.low %v1737, %v1744
    %v1746 = vcombine.low %v1118, %v1122
    %v1747 = vcombine.low %v1126, %v1130
    %v1748 = vcombine.low %v1134, %v1138
    %v1749 = vcombine.low %v1142, %v1146
    %v1751 = vunpack.c.l.s4 1966171168
    %v1752 = vunpack.c.0.s8 %v1751
    %v1753 = vlaneseq
    %v1754 = vshrl.u32 %v1753, 7
    %v1755 = vsub.s32 %v1752, %v1754
    %v1756 = vrot.slane %v1746, %v1755
    %v1758 = vunpack.c.l.s4 1966171168
    %v1759 = vunpack.c.0.s8 %v1758
    %v1760 = vlaneseq
    %v1761 = vshrl.u32 %v1760, 7
    %v1762 = vsub.s32 %v1759, %v1761
    %v1763 = vrot.slane %v1747, %v1762
    %v1765 = vunpack.c.l.s4 1966171168
    %v1766 = vunpack.c.0.s8 %v1765
    %v1767 = vlaneseq
    %v1768 = vshrl.u32 %v1767, 7
    %v1769 = vsub.s32 %v1766, %v1768
    %v1770 = vrot.slane %v1748, %v1769
    %v1772 = vunpack.c.l.s4 1966171168
    %v1773 = vunpack.c.0.s8 %v1772
    %v1774 = vlaneseq
    %v1775 = vshrl.u32 %v1774, 7
    %v1776 = vsub.s32 %v1773, %v1775
    %v1777 = vrot.slane %v1749, %v1776
    %v1778 = vcombine.low %v1756, %v1763
    %v1779 = vcombine.low %v1770, %v1777
    %v1781 = vunpack.c.l.s4 1966171168
    %v1782 = vunpack.c.0.s8 %v1781
    %v1783 = vlaneseq
    %v1784 = vshrl.u32 %v1783, 7
    %v1785 = vsub.s32 %v1782, %v1784
    %v1786 = vrot.slane %v1778, %v1785
    %v1788 = vunpack.c.l.s4 1966171168
    %v1789 = vunpack.c.0.s8 %v1788
    %v1790 = vlaneseq
    %v1791 = vshrl.u32 %v1790, 7
    %v1792 = vsub.s32 %v1789, %v1791
    %v1793 = vrot.slane %v1779, %v1792
    %v1794 = vcombine.low %v1786, %v1793
    %v1795 = vcombine.low %v1150, %v1154
    %v1796 = vcombine.low %v1158, %v1162
    %v1797 = vcombine.low %v1166, %v1170
    %v1798 = vcombine.low %v1174, %v1178
    %v1800 = vunpack.c.l.s4 1966171168
    %v1801 = vunpack.c.0.s8 %v1800
    %v1802 = vlaneseq
    %v1803 = vshrl.u32 %v1802, 7
    %v1804 = vsub.s32 %v1801, %v1803
    %v1805 = vrot.slane %v1795, %v1804
    %v1807 = vunpack.c.l.s4 1966171168
    %v1808 = vunpack.c.0.s8 %v1807
    %v1809 = vlaneseq
    %v1810 = vshrl.u32 %v1809, 7
    %v1811 = vsub.s32 %v1808, %v1810
    %v1812 = vrot.slane %v1796, %v1811
    %v1814 = vunpack.c.l.s4 1966171168
    %v1815 = vunpack.c.0.s8 %v1814
    %v1816 = vlaneseq
    %v1817 = vshrl.u32 %v1816, 7
    %v1818 = vsub.s32 %v1815, %v1817
    %v1819 = vrot.slane %v1797, %v1818
    %v1821 = vunpack.c.l.s4 1966171168
    %v1822 = vunpack.c.0.s8 %v1821
    %v1823 = vlaneseq
    %v1824 = vshrl.u32 %v1823, 7
    %v1825 = vsub.s32 %v1822, %v1824
    %v1826 = vrot.slane %v1798, %v1825
    %v1827 = vcombine.low %v1805, %v1812
    %v1828 = vcombine.low %v1819, %v1826
    %v1830 = vunpack.c.l.s4 1966171168
    %v1831 = vunpack.c.0.s8 %v1830
    %v1832 = vlaneseq
    %v1833 = vshrl.u32 %v1832, 7
    %v1834 = vsub.s32 %v1831, %v1833
    %v1835 = vrot.slane %v1827, %v1834
    %v1837 = vunpack.c.l.s4 1966171168
    %v1838 = vunpack.c.0.s8 %v1837
    %v1839 = vlaneseq
    %v1840 = vshrl.u32 %v1839, 7
    %v1841 = vsub.s32 %v1838, %v1840
    %v1842 = vrot.slane %v1828, %v1841
    %v1843 = vcombine.low %v1835, %v1842
    %v1844 = vcombine.low %v1182, %v1186
    %v1845 = vcombine.low %v1190, %v1194
    %v1846 = vcombine.low %v1198, %v1202
    %v1847 = vcombine.low %v1206, %v1210
    %v1849 = vunpack.c.l.s4 1966171168
    %v1850 = vunpack.c.0.s8 %v1849
    %v1851 = vlaneseq
    %v1852 = vshrl.u32 %v1851, 7
    %v1853 = vsub.s32 %v1850, %v1852
    %v1854 = vrot.slane %v1844, %v1853
    %v1856 = vunpack.c.l.s4 1966171168
    %v1857 = vunpack.c.0.s8 %v1856
    %v1858 = vlaneseq
    %v1859 = vshrl.u32 %v1858, 7
    %v1860 = vsub.s32 %v1857, %v1859
    %v1861 = vrot.slane %v1845, %v1860
    %v1863 = vunpack.c.l.s4 1966171168
    %v1864 = vunpack.c.0.s8 %v1863
    %v1865 = vlaneseq
    %v1866 = vshrl.u32 %v1865, 7
    %v1867 = vsub.s32 %v1864, %v1866
    %v1868 = vrot.slane %v1846, %v1867
    %v1870 = vunpack.c.l.s4 1966171168
    %v1871 = vunpack.c.0.s8 %v1870
    %v1872 = vlaneseq
    %v1873 = vshrl.u32 %v1872, 7
    %v1874 = vsub.s32 %v1871, %v1873
    %v1875 = vrot.slane %v1847, %v1874
    %v1876 = vcombine.low %v1854, %v1861
    %v1877 = vcombine.low %v1868, %v1875
    %v1879 = vunpack.c.l.s4 1966171168
    %v1880 = vunpack.c.0.s8 %v1879
    %v1881 = vlaneseq
    %v1882 = vshrl.u32 %v1881, 7
    %v1883 = vsub.s32 %v1880, %v1882
    %v1884 = vrot.slane %v1876, %v1883
    %v1886 = vunpack.c.l.s4 1966171168
    %v1887 = vunpack.c.0.s8 %v1886
    %v1888 = vlaneseq
    %v1889 = vshrl.u32 %v1888, 7
    %v1890 = vsub.s32 %v1887, %v1889
    %v1891 = vrot.slane %v1877, %v1890
    %v1892 = vcombine.low %v1884, %v1891
    %v1893 = vcombine.low %v1214, %v1218
    %v1894 = vcombine.low %v1222, %v1226
    %v1895 = vcombine.low %v1230, %v1234
    %v1896 = vcombine.low %v1238, %v1242
    %v1898 = vunpack.c.l.s4 1966171168
    %v1899 = vunpack.c.0.s8 %v1898
    %v1900 = vlaneseq
    %v1901 = vshrl.u32 %v1900, 7
    %v1902 = vsub.s32 %v1899, %v1901
    %v1903 = vrot.slane %v1893, %v1902
    %v1905 = vunpack.c.l.s4 1966171168
    %v1906 = vunpack.c.0.s8 %v1905
    %v1907 = vlaneseq
    %v1908 = vshrl.u32 %v1907, 7
    %v1909 = vsub.s32 %v1906, %v1908
    %v1910 = vrot.slane %v1894, %v1909
    %v1912 = vunpack.c.l.s4 1966171168
    %v1913 = vunpack.c.0.s8 %v1912
    %v1914 = vlaneseq
    %v1915 = vshrl.u32 %v1914, 7
    %v1916 = vsub.s32 %v1913, %v1915
    %v1917 = vrot.slane %v1895, %v1916
    %v1919 = vunpack.c.l.s4 1966171168
    %v1920 = vunpack.c.0.s8 %v1919
    %v1921 = vlaneseq
    %v1922 = vshrl.u32 %v1921, 7
    %v1923 = vsub.s32 %v1920, %v1922
    %v1924 = vrot.slane %v1896, %v1923
    %v1925 = vcombine.low %v1903, %v1910
    %v1926 = vcombine.low %v1917, %v1924
    %v1928 = vunpack.c.l.s4 1966171168
    %v1929 = vunpack.c.0.s8 %v1928
    %v1930 = vlaneseq
    %v1931 = vshrl.u32 %v1930, 7
    %v1932 = vsub.s32 %v1929, %v1931
    %v1933 = vrot.slane %v1925, %v1932
    %v1935 = vunpack.c.l.s4 1966171168
    %v1936 = vunpack.c.0.s8 %v1935
    %v1937 = vlaneseq
    %v1938 = vshrl.u32 %v1937, 7
    %v1939 = vsub.s32 %v1936, %v1938
    %v1940 = vrot.slane %v1926, %v1939
    %v1941 = vcombine.low %v1933, %v1940
    %v1942 = vcombine.low %v1246, %v1250
    %v1943 = vcombine.low %v1254, %v1258
    %v1944 = vcombine.low %v1262, %v1266
    %v1945 = vcombine.low %v1270, %v1274
    %v1947 = vunpack.c.l.s4 1966171168
    %v1948 = vunpack.c.0.s8 %v1947
    %v1949 = vlaneseq
    %v1950 = vshrl.u32 %v1949, 7
    %v1951 = vsub.s32 %v1948, %v1950
    %v1952 = vrot.slane %v1942, %v1951
    %v1954 = vunpack.c.l.s4 1966171168
    %v1955 = vunpack.c.0.s8 %v1954
    %v1956 = vlaneseq
    %v1957 = vshrl.u32 %v1956, 7
    %v1958 = vsub.s32 %v1955, %v1957
    %v1959 = vrot.slane %v1943, %v1958
    %v1961 = vunpack.c.l.s4 1966171168
    %v1962 = vunpack.c.0.s8 %v1961
    %v1963 = vlaneseq
    %v1964 = vshrl.u32 %v1963, 7
    %v1965 = vsub.s32 %v1962, %v1964
    %v1966 = vrot.slane %v1944, %v1965
    %v1968 = vunpack.c.l.s4 1966171168
    %v1969 = vunpack.c.0.s8 %v1968
    %v1970 = vlaneseq
    %v1971 = vshrl.u32 %v1970, 7
    %v1972 = vsub.s32 %v1969, %v1971
    %v1973 = vrot.slane %v1945, %v1972
    %v1974 = vcombine.low %v1952, %v1959
    %v1975 = vcombine.low %v1966, %v1973
    %v1977 = vunpack.c.l.s4 1966171168
    %v1978 = vunpack.c.0.s8 %v1977
    %v1979 = vlaneseq
    %v1980 = vshrl.u32 %v1979, 7
    %v1981 = vsub.s32 %v1978, %v1980
    %v1982 = vrot.slane %v1974, %v1981
    %v1984 = vunpack.c.l.s4 1966171168
    %v1985 = vunpack.c.0.s8 %v1984
    %v1986 = vlaneseq
    %v1987 = vshrl.u32 %v1986, 7
    %v1988 = vsub.s32 %v1985, %v1987
    %v1989 = vrot.slane %v1975, %v1988
    %v1990 = vcombine.low %v1982, %v1989
    %v1991 = vcombine.low %v1278, %v1282
    %v1992 = vcombine.low %v1286, %v1290
    %v1993 = vcombine.low %v1294, %v1298
    %v1994 = vcombine.low %v1302, %v1306
    %v1996 = vunpack.c.l.s4 1966171168
    %v1997 = vunpack.c.0.s8 %v1996
    %v1998 = vlaneseq
    %v1999 = vshrl.u32 %v1998, 7
    %v2000 = vsub.s32 %v1997, %v1999
    %v2001 = vrot.slane %v1991, %v2000
    %v2003 = vunpack.c.l.s4 1966171168
    %v2004 = vunpack.c.0.s8 %v2003
    %v2005 = vlaneseq
    %v2006 = vshrl.u32 %v2005, 7
    %v2007 = vsub.s32 %v2004, %v2006
    %v2008 = vrot.slane %v1992, %v2007
    %v2010 = vunpack.c.l.s4 1966171168
    %v2011 = vunpack.c.0.s8 %v2010
    %v2012 = vlaneseq
    %v2013 = vshrl.u32 %v2012, 7
    %v2014 = vsub.s32 %v2011, %v2013
    %v2015 = vrot.slane %v1993, %v2014
    %v2017 = vunpack.c.l.s4 1966171168
    %v2018 = vunpack.c.0.s8 %v2017
    %v2019 = vlaneseq
    %v2020 = vshrl.u32 %v2019, 7
    %v2021 = vsub.s32 %v2018, %v2020
    %v2022 = vrot.slane %v1994, %v2021
    %v2023 = vcombine.low %v2001, %v2008
    %v2024 = vcombine.low %v2015, %v2022
    %v2026 = vunpack.c.l.s4 1966171168
    %v2027 = vunpack.c.0.s8 %v2026
    %v2028 = vlaneseq
    %v2029 = vshrl.u32 %v2028, 7
    %v2030 = vsub.s32 %v2027, %v2029
    %v2031 = vrot.slane %v2023, %v2030
    %v2033 = vunpack.c.l.s4 1966171168
    %v2034 = vunpack.c.0.s8 %v2033
    %v2035 = vlaneseq
    %v2036 = vshrl.u32 %v2035, 7
    %v2037 = vsub.s32 %v2034, %v2036
    %v2038 = vrot.slane %v2024, %v2037
    %v2039 = vcombine.low %v2031, %v2038
    %v2040 = vcombine.low %v1310, %v1314
    %v2041 = vcombine.low %v1318, %v1322
    %v2042 = vcombine.low %v1326, %v1330
    %v2043 = vcombine.low %v1334, %v1338
    %v2045 = vunpack.c.l.s4 1966171168
    %v2046 = vunpack.c.0.s8 %v2045
    %v2047 = vlaneseq
    %v2048 = vshrl.u32 %v2047, 7
    %v2049 = vsub.s32 %v2046, %v2048
    %v2050 = vrot.slane %v2040, %v2049
    %v2052 = vunpack.c.l.s4 1966171168
    %v2053 = vunpack.c.0.s8 %v2052
    %v2054 = vlaneseq
    %v2055 = vshrl.u32 %v2054, 7
    %v2056 = vsub.s32 %v2053, %v2055
    %v2057 = vrot.slane %v2041, %v2056
    %v2059 = vunpack.c.l.s4 1966171168
    %v2060 = vunpack.c.0.s8 %v2059
    %v2061 = vlaneseq
    %v2062 = vshrl.u32 %v2061, 7
    %v2063 = vsub.s32 %v2060, %v2062
    %v2064 = vrot.slane %v2042, %v2063
    %v2066 = vunpack.c.l.s4 1966171168
    %v2067 = vunpack.c.0.s8 %v2066
    %v2068 = vlaneseq
    %v2069 = vshrl.u32 %v2068, 7
    %v2070 = vsub.s32 %v2067, %v2069
    %v2071 = vrot.slane %v2043, %v2070
    %v2072 = vcombine.low %v2050, %v2057
    %v2073 = vcombine.low %v2064, %v2071
    %v2075 = vunpack.c.l.s4 1966171168
    %v2076 = vunpack.c.0.s8 %v2075
    %v2077 = vlaneseq
    %v2078 = vshrl.u32 %v2077, 7
    %v2079 = vsub.s32 %v2076, %v2078
    %v2080 = vrot.slane %v2072, %v2079
    %v2082 = vunpack.c.l.s4 1966171168
    %v2083 = vunpack.c.0.s8 %v2082
    %v2084 = vlaneseq
    %v2085 = vshrl.u32 %v2084, 7
    %v2086 = vsub.s32 %v2083, %v2085
    %v2087 = vrot.slane %v2073, %v2086
    %v2088 = vcombine.low %v2080, %v2087
    %v2089 = vcombine.low %v1342, %v1346
    %v2090 = vcombine.low %v1350, %v1354
    %v2091 = vcombine.low %v1358, %v1362
    %v2092 = vcombine.low %v1366, %v1370
    %v2094 = vunpack.c.l.s4 1966171168
    %v2095 = vunpack.c.0.s8 %v2094
    %v2096 = vlaneseq
    %v2097 = vshrl.u32 %v2096, 7
    %v2098 = vsub.s32 %v2095, %v2097
    %v2099 = vrot.slane %v2089, %v2098
    %v2101 = vunpack.c.l.s4 1966171168
    %v2102 = vunpack.c.0.s8 %v2101
    %v2103 = vlaneseq
    %v2104 = vshrl.u32 %v2103, 7
    %v2105 = vsub.s32 %v2102, %v2104
    %v2106 = vrot.slane %v2090, %v2105
    %v2108 = vunpack.c.l.s4 1966171168
    %v2109 = vunpack.c.0.s8 %v2108
    %v2110 = vlaneseq
    %v2111 = vshrl.u32 %v2110, 7
    %v2112 = vsub.s32 %v2109, %v2111
    %v2113 = vrot.slane %v2091, %v2112
    %v2115 = vunpack.c.l.s4 1966171168
    %v2116 = vunpack.c.0.s8 %v2115
    %v2117 = vlaneseq
    %v2118 = vshrl.u32 %v2117, 7
    %v2119 = vsub.s32 %v2116, %v2118
    %v2120 = vrot.slane %v2092, %v2119
    %v2121 = vcombine.low %v2099, %v2106
    %v2122 = vcombine.low %v2113, %v2120
    %v2124 = vunpack.c.l.s4 1966171168
    %v2125 = vunpack.c.0.s8 %v2124
    %v2126 = vlaneseq
    %v2127 = vshrl.u32 %v2126, 7
    %v2128 = vsub.s32 %v2125, %v2127
    %v2129 = vrot.slane %v2121, %v2128
    %v2131 = vunpack.c.l.s4 1966171168
    %v2132 = vunpack.c.0.s8 %v2131
    %v2133 = vlaneseq
    %v2134 = vshrl.u32 %v2133, 7
    %v2135 = vsub.s32 %v2132, %v2134
    %v2136 = vrot.slane %v2122, %v2135
    %v2137 = vcombine.low %v2129, %v2136
    %v2138 = vcombine.low %v1374, %v1378
    %v2139 = vcombine.low %v1382, %v1386
    %v2140 = vcombine.low %v1390, %v1394
    %v2141 = vcombine.low %v1398, %v1402
    %v2143 = vunpack.c.l.s4 1966171168
    %v2144 = vunpack.c.0.s8 %v2143
    %v2145 = vlaneseq
    %v2146 = vshrl.u32 %v2145, 7
    %v2147 = vsub.s32 %v2144, %v2146
    %v2148 = vrot.slane %v2138, %v2147
    %v2150 = vunpack.c.l.s4 1966171168
    %v2151 = vunpack.c.0.s8 %v2150
    %v2152 = vlaneseq
    %v2153 = vshrl.u32 %v2152, 7
    %v2154 = vsub.s32 %v2151, %v2153
    %v2155 = vrot.slane %v2139, %v2154
    %v2157 = vunpack.c.l.s4 1966171168
    %v2158 = vunpack.c.0.s8 %v2157
    %v2159 = vlaneseq
    %v2160 = vshrl.u32 %v2159, 7
    %v2161 = vsub.s32 %v2158, %v2160
    %v2162 = vrot.slane %v2140, %v2161
    %v2164 = vunpack.c.l.s4 1966171168
    %v2165 = vunpack.c.0.s8 %v2164
    %v2166 = vlaneseq
    %v2167 = vshrl.u32 %v2166, 7
    %v2168 = vsub.s32 %v2165, %v2167
    %v2169 = vrot.slane %v2141, %v2168
    %v2170 = vcombine.low %v2148, %v2155
    %v2171 = vcombine.low %v2162, %v2169
    %v2173 = vunpack.c.l.s4 1966171168
    %v2174 = vunpack.c.0.s8 %v2173
    %v2175 = vlaneseq
    %v2176 = vshrl.u32 %v2175, 7
    %v2177 = vsub.s32 %v2174, %v2176
    %v2178 = vrot.slane %v2170, %v2177
    %v2180 = vunpack.c.l.s4 1966171168
    %v2181 = vunpack.c.0.s8 %v2180
    %v2182 = vlaneseq
    %v2183 = vshrl.u32 %v2182, 7
    %v2184 = vsub.s32 %v2181, %v2183
    %v2185 = vrot.slane %v2171, %v2184
    %v2186 = vcombine.low %v2178, %v2185
    %2187 = vset.pattern.permute.xlu0 0
    %2188 = vperm.xlu0 %2187, %v1451
    %v2189 = vpop.permute.xlu0 %2188
    %2190 = vset.pattern.permute.xlu0 0
    %2191 = vperm.xlu0 %2190, %v1500
    %v2192 = vpop.permute.xlu0 %2191
    %2193 = vset.pattern.permute.xlu0 0
    %2194 = vperm.xlu0 %2193, %v1549
    %v2195 = vpop.permute.xlu0 %2194
    %2196 = vset.pattern.permute.xlu0 0
    %2197 = vperm.xlu0 %2196, %v1598
    %v2198 = vpop.permute.xlu0 %2197
    %2199 = vset.pattern.permute.xlu0 0
    %2200 = vperm.xlu0 %2199, %v1647
    %v2201 = vpop.permute.xlu0 %2200
    %2202 = vset.pattern.permute.xlu0 0
    %2203 = vperm.xlu0 %2202, %v1696
    %v2204 = vpop.permute.xlu0 %2203
    %2205 = vset.pattern.permute.xlu0 0
    %2206 = vperm.xlu0 %2205, %v1745
    %v2207 = vpop.permute.xlu0 %2206
    %2208 = vset.pattern.permute.xlu0 0
    %2209 = vperm.xlu0 %2208, %v1794
    %v2210 = vpop.permute.xlu0 %2209
    %2211 = vset.pattern.permute.xlu0 0
    %2212 = vperm.xlu0 %2211, %v1843
    %v2213 = vpop.permute.xlu0 %2212
    %2214 = vset.pattern.permute.xlu0 0
    %2215 = vperm.xlu0 %2214, %v1892
    %v2216 = vpop.permute.xlu0 %2215
    %2217 = vset.pattern.permute.xlu0 0
    %2218 = vperm.xlu0 %2217, %v1941
    %v2219 = vpop.permute.xlu0 %2218
    %2220 = vset.pattern.permute.xlu0 0
    %2221 = vperm.xlu0 %2220, %v1990
    %v2222 = vpop.permute.xlu0 %2221
    %2223 = vset.pattern.permute.xlu0 0
    %2224 = vperm.xlu0 %2223, %v2039
    %v2225 = vpop.permute.xlu0 %2224
    %2226 = vset.pattern.permute.xlu0 0
    %2227 = vperm.xlu0 %2226, %v2088
    %v2228 = vpop.permute.xlu0 %2227
    %2229 = vset.pattern.permute.xlu0 0
    %2230 = vperm.xlu0 %2229, %v2137
    %v2231 = vpop.permute.xlu0 %2230
    %2232 = vset.pattern.permute.xlu0 0
    %2233 = vperm.xlu0 %2232, %v2186
    %v2234 = vpop.permute.xlu0 %2233
    %v2235 = vlaneseq
    %v2236 = vand.u32 %v2235, 127
    %v2237 = vlaneseq
    %v2238 = vshrl.u32 %v2237, 7
    %v2239 = vsub.s32 %v2236, %v2238
    %v2240 = vrot.slane %v2189, %v2239
    %v2241 = vadd.s32 %v2236, 4294967288
    %v2242 = vlaneseq
    %v2243 = vshrl.u32 %v2242, 7
    %v2244 = vsub.s32 %v2241, %v2243
    %v2245 = vrot.slane %v2192, %v2244
    %vm2246 = vcmask 130112
    %v2247 = vsel %vm2246, %v2245, %v2240
    %v2248 = vadd.s32 %v2236, 4294967280
    %v2249 = vlaneseq
    %v2250 = vshrl.u32 %v2249, 7
    %v2251 = vsub.s32 %v2248, %v2250
    %v2252 = vrot.slane %v2195, %v2251
    %vm2253 = vcmask 195712
    %v2254 = vsel %vm2253, %v2252, %v2247
    %v2255 = vadd.s32 %v2236, 4294967272
    %v2256 = vlaneseq
    %v2257 = vshrl.u32 %v2256, 7
    %v2258 = vsub.s32 %v2255, %v2257
    %v2259 = vrot.slane %v2198, %v2258
    %vm2260 = vcmask 261312
    %v2261 = vsel %vm2260, %v2259, %v2254
    %v2262 = vadd.s32 %v2236, 4294967264
    %v2263 = vlaneseq
    %v2264 = vshrl.u32 %v2263, 7
    %v2265 = vsub.s32 %v2262, %v2264
    %v2266 = vrot.slane %v2201, %v2265
    %vm2267 = vcmask 326912
    %v2268 = vsel %vm2267, %v2266, %v2261
    %v2269 = vadd.s32 %v2236, 4294967256
    %v2270 = vlaneseq
    %v2271 = vshrl.u32 %v2270, 7
    %v2272 = vsub.s32 %v2269, %v2271
    %v2273 = vrot.slane %v2204, %v2272
    %vm2274 = vcmask 392512
    %v2275 = vsel %vm2274, %v2273, %v2268
    %v2276 = vadd.s32 %v2236, 4294967248
    %v2277 = vlaneseq
    %v2278 = vshrl.u32 %v2277, 7
    %v2279 = vsub.s32 %v2276, %v2278
    %v2280 = vrot.slane %v2207, %v2279
    %vm2281 = vcmask 458112
    %v2282 = vsel %vm2281, %v2280, %v2275
    %v2283 = vadd.s32 %v2236, 4294967240
    %v2284 = vlaneseq
    %v2285 = vshrl.u32 %v2284, 7
    %v2286 = vsub.s32 %v2283, %v2285
    %v2287 = vrot.slane %v2210, %v2286
    %vm2288 = vcmask 523712
    %v2289 = vsel %vm2288, %v2287, %v2282
    %v2290 = vadd.s32 %v2236, 4294967232
    %v2291 = vlaneseq
    %v2292 = vshrl.u32 %v2291, 7
    %v2293 = vsub.s32 %v2290, %v2292
    %v2294 = vrot.slane %v2213, %v2293
    %vm2295 = vcmask 589312
    %v2296 = vsel %vm2295, %v2294, %v2289
    %v2297 = vadd.s32 %v2236, 4294967224
    %v2298 = vlaneseq
    %v2299 = vshrl.u32 %v2298, 7
    %v2300 = vsub.s32 %v2297, %v2299
    %v2301 = vrot.slane %v2216, %v2300
    %vm2302 = vcmask 654912
    %v2303 = vsel %vm2302, %v2301, %v2296
    %v2304 = vadd.s32 %v2236, 4294967216
    %v2305 = vlaneseq
    %v2306 = vshrl.u32 %v2305, 7
    %v2307 = vsub.s32 %v2304, %v2306
    %v2308 = vrot.slane %v2219, %v2307
    %vm2309 = vcmask 720512
    %v2310 = vsel %vm2309, %v2308, %v2303
    %v2311 = vadd.s32 %v2236, 4294967208
    %v2312 = vlaneseq
    %v2313 = vshrl.u32 %v2312, 7
    %v2314 = vsub.s32 %v2311, %v2313
    %v2315 = vrot.slane %v2222, %v2314
    %vm2316 = vcmask 786112
    %v2317 = vsel %vm2316, %v2315, %v2310
    %v2318 = vadd.s32 %v2236, 4294967200
    %v2319 = vlaneseq
    %v2320 = vshrl.u32 %v2319, 7
    %v2321 = vsub.s32 %v2318, %v2320
    %v2322 = vrot.slane %v2225, %v2321
    %vm2323 = vcmask 851712
    %v2324 = vsel %vm2323, %v2322, %v2317
    %v2325 = vadd.s32 %v2236, 4294967192
    %v2326 = vlaneseq
    %v2327 = vshrl.u32 %v2326, 7
    %v2328 = vsub.s32 %v2325, %v2327
    %v2329 = vrot.slane %v2228, %v2328
    %vm2330 = vcmask 917312
    %v2331 = vsel %vm2330, %v2329, %v2324
    %v2332 = vadd.s32 %v2236, 4294967184
    %v2333 = vlaneseq
    %v2334 = vshrl.u32 %v2333, 7
    %v2335 = vsub.s32 %v2332, %v2334
    %v2336 = vrot.slane %v2231, %v2335
    %vm2337 = vcmask 982912
    %v2338 = vsel %vm2337, %v2336, %v2331
    %v2339 = vadd.s32 %v2236, 4294967176
    %v2340 = vlaneseq
    %v2341 = vshrl.u32 %v2340, 7
    %v2342 = vsub.s32 %v2339, %v2341
    %v2343 = vrot.slane %v2234, %v2342
    %vm2344 = vcmask 1048512
    %v2345 = vsel %vm2344, %v2343, %v2338
    %v2347 = vunpack.c.l.s4 1966171168
    %v2348 = vunpack.c.0.s8 %v2347
    %v2349 = vlaneseq
    %v2350 = vshrl.u32 %v2349, 7
    %v2351 = vsub.s32 %v2348, %v2350
    %v2352 = vrot.slane %v2345, %v2351
    %v2354 = vunpack.c.l.s4 1966171168
    %v2355 = vunpack.c.0.s8 %v2354
    %v2356 = vlaneseq
    %v2357 = vshrl.u32 %v2356, 7
    %v2358 = vsub.s32 %v2355, %v2357
    %v2359 = vrot.slane %v2352, %v2358
    %v2361 = vlaneseq
    %vm2362 = vcmp.ge.s32.totalorder %v2361, 0
    %vm2363 = vcmp.lt.s32.totalorder %v2361, 128
    %vm2364 = vmand %vm2362, %vm2363
    %2365 = vst.msk [vmem:[#allocation3] sm:$0x1] %vm2364, %v2359
    %v2366 = vld [vmem:[%s0 + $0x40] sm:$0xf]
    %v2367 = vld [vmem:[%s0 + $0x44] sm:$0xf]
    %v2368 = vld [vmem:[%s0 + $0x48] sm:$0xf]
    %v2369 = vld [vmem:[%s0 + $0x4c] sm:$0xf]
    %v2370 = vld [vmem:[%s0 + $0x50] sm:$0xf]
    %v2371 = vld [vmem:[%s0 + $0x54] sm:$0xf]
    %v2372 = vld [vmem:[%s0 + $0x58] sm:$0xf]
    %v2373 = vld [vmem:[%s0 + $0x5c] sm:$0xf]
    %v2374 = vld [vmem:[%s0 + $0x60] sm:$0xf]
    %v2375 = vld [vmem:[%s0 + $0x64] sm:$0xf]
    %v2376 = vld [vmem:[%s0 + $0x68] sm:$0xf]
    %v2377 = vld [vmem:[%s0 + $0x6c] sm:$0xf]
    %v2378 = vld [vmem:[%s0 + $0x70] sm:$0xf]
    %v2379 = vld [vmem:[%s0 + $0x74] sm:$0xf]
    %v2380 = vld [vmem:[%s0 + $0x78] sm:$0xf]
    %v2381 = vld [vmem:[%s0 + $0x7c] sm:$0xf]
    %v2398 = vunpack.c.l.b16 %v2366
    %v2399 = vunpack.c.l.b16 %v2367
    %v2400 = vunpack.c.l.b16 %v2368
    %v2401 = vunpack.c.l.b16 %v2369
    %v2402 = vunpack.c.l.b16 %v2370
    %v2403 = vunpack.c.l.b16 %v2371
    %v2404 = vunpack.c.l.b16 %v2372
    %v2405 = vunpack.c.l.b16 %v2373
    %v2406 = vunpack.c.l.b16 %v2374
    %v2407 = vunpack.c.l.b16 %v2375
    %v2408 = vunpack.c.l.b16 %v2376
    %v2409 = vunpack.c.l.b16 %v2377
    %v2410 = vunpack.c.l.b16 %v2378
    %v2411 = vunpack.c.l.b16 %v2379
    %v2412 = vunpack.c.l.b16 %v2380
    %v2413 = vunpack.c.l.b16 %v2381
    %v2414 = vpack.c.b16 %v2399, %v2398
    %v2415 = vpack.c.b16 %v2401, %v2400
    %v2416 = vpack.c.b16 %v2403, %v2402
    %v2417 = vpack.c.b16 %v2405, %v2404
    %v2418 = vpack.c.b16 %v2407, %v2406
    %v2419 = vpack.c.b16 %v2409, %v2408
    %v2420 = vpack.c.b16 %v2411, %v2410
    %v2421 = vpack.c.b16 %v2413, %v2412
    %v2423 = vsel %vm181, %v2414, 0
    %v2426 = vsel %vm181, %v2415, 0
    %v2429 = vsel %vm181, %v2416, 0
    %v2432 = vsel %vm181, %v2417, 0
    %v2435 = vsel %vm181, %v2418, 0
    %v2438 = vsel %vm181, %v2419, 0
    %v2441 = vsel %vm181, %v2420, 0
    %v2444 = vsel %vm181, %v2421, 0
    %2446 = vmatprep.subr.bf16.mxu0 %v174
    %2447 = vmatpush1.bf16.msra.mxu0 %v173
    %2448 = vmatprep.subr.bf16.mxu0 %v176
    %2449 = vmatpush1.bf16.msra.mxu0 %v175
    %2450 = vmatprep.subr.bf16.mxu0 0
    %2451 = vmatpush1.bf16.msra.mxu0 0
    %2452 = vmatprep.subr.bf16.mxu0 0
    %2453 = vmatpush1.bf16.msra.mxu0 0
    %2454 = vmatprep.subr.bf16.mxu0 0
    %2455 = vmatpush1.bf16.msra.mxu0 0
    %2456 = vmatprep.subr.bf16.mxu0 0
    %2457 = vmatpush1.bf16.msra.mxu0 0
    %2458 = vmatprep.subr.bf16.mxu0 0
    %2459 = vmatpush1.bf16.msra.mxu0 0
    %2460 = vmatprep.subr.bf16.mxu0 0
    %2461 = vmatpush1.bf16.msra.mxu0 0
    %2462 = vmatprep.subr.bf16.mxu0 0
    %2463 = vmatpush1.bf16.msra.mxu0 0
    %2464 = vmatprep.subr.bf16.mxu0 0
    %2465 = vmatpush1.bf16.msra.mxu0 0
    %2466 = vmatprep.subr.bf16.mxu0 0
    %2467 = vmatpush1.bf16.msra.mxu0 0
    %2468 = vmatprep.subr.bf16.mxu0 0
    %2469 = vmatpush1.bf16.msra.mxu0 0
    %2470 = vmatprep.subr.bf16.mxu0 0
    %2471 = vmatpush1.bf16.msra.mxu0 0
    %2472 = vmatprep.subr.bf16.mxu0 0
    %2473 = vmatpush1.bf16.msra.mxu0 0
    %2474 = vmatprep.subr.bf16.mxu0 0
    %2475 = vmatpush1.bf16.msra.mxu0 0
    %2476 = vmatprep.subr.bf16.mxu0 0
    %2477 = vmatpush1.bf16.msra.mxu0 0
    %2478 = vmatprep.mubr.bf16.mxu0 0
    %2479 = vmatmul.mubr.bf16.gmra.mrb[0].mxu0 %v2423
    %v2480 = vpop.f32.mrb[0].mxu0
    %v2481 = vadd.f32 %v114, %v2480
    %v2482 = vpop.f32.mrb[0].mxu0
    %v2483 = vadd.f32 %v118, %v2482
    %v2484 = vpop.f32.mrb[0].mxu0
    %v2485 = vadd.f32 %v114, %v2484
    %v2486 = vpop.f32.mrb[0].mxu0
    %v2487 = vadd.f32 %v118, %v2486
    %2488 = vmatprep.mubr.bf16.mxu0 0
    %2489 = vmatmul.mubr.bf16.gmra.mrb[0].mxu0 %v2426
    %v2490 = vpop.f32.mrb[0].mxu0
    %v2491 = vadd.f32 %v114, %v2490
    %v2492 = vpop.f32.mrb[0].mxu0
    %v2493 = vadd.f32 %v118, %v2492
    %v2494 = vpop.f32.mrb[0].mxu0
    %v2495 = vadd.f32 %v114, %v2494
    %v2496 = vpop.f32.mrb[0].mxu0
    %v2497 = vadd.f32 %v118, %v2496
    %2498 = vmatprep.mubr.bf16.mxu0 0
    %2499 = vmatmul.mubr.bf16.gmra.mrb[0].mxu0 %v2429
    %v2500 = vpop.f32.mrb[0].mxu0
    %v2501 = vadd.f32 %v114, %v2500
    %v2502 = vpop.f32.mrb[0].mxu0
    %v2503 = vadd.f32 %v118, %v2502
    %v2504 = vpop.f32.mrb[0].mxu0
    %v2505 = vadd.f32 %v114, %v2504
    %v2506 = vpop.f32.mrb[0].mxu0
    %v2507 = vadd.f32 %v118, %v2506
    %2508 = vmatprep.mubr.bf16.mxu0 0
    %2509 = vmatmul.mubr.bf16.gmra.mrb[0].mxu0 %v2432
    %v2510 = vpop.f32.mrb[0].mxu0
    %v2511 = vadd.f32 %v114, %v2510
    %v2512 = vpop.f32.mrb[0].mxu0
    %v2513 = vadd.f32 %v118, %v2512
    %v2514 = vpop.f32.mrb[0].mxu0
    %v2515 = vadd.f32 %v114, %v2514
    %v2516 = vpop.f32.mrb[0].mxu0
    %v2517 = vadd.f32 %v118, %v2516
    %2518 = vmatprep.mubr.bf16.mxu0 0
    %2519 = vmatmul.mubr.bf16.gmra.mrb[0].mxu0 %v2435
    %v2520 = vpop.f32.mrb[0].mxu0
    %v2521 = vadd.f32 %v114, %v2520
    %v2522 = vpop.f32.mrb[0].mxu0
    %v2523 = vadd.f32 %v118, %v2522
    %v2524 = vpop.f32.mrb[0].mxu0
    %v2525 = vadd.f32 %v114, %v2524
    %v2526 = vpop.f32.mrb[0].mxu0
    %v2527 = vadd.f32 %v118, %v2526
    %2528 = vmatprep.mubr.bf16.mxu0 0
    %2529 = vmatmul.mubr.bf16.gmra.mrb[0].mxu0 %v2438
    %v2530 = vpop.f32.mrb[0].mxu0
    %v2531 = vadd.f32 %v114, %v2530
    %v2532 = vpop.f32.mrb[0].mxu0
    %v2533 = vadd.f32 %v118, %v2532
    %v2534 = vpop.f32.mrb[0].mxu0
    %v2535 = vadd.f32 %v114, %v2534
    %v2536 = vpop.f32.mrb[0].mxu0
    %v2537 = vadd.f32 %v118, %v2536
    %2538 = vmatprep.mubr.bf16.mxu0 0
    %2539 = vmatmul.mubr.bf16.gmra.mrb[0].mxu0 %v2441
    %v2540 = vpop.f32.mrb[0].mxu0
    %v2541 = vadd.f32 %v114, %v2540
    %v2542 = vpop.f32.mrb[0].mxu0
    %v2543 = vadd.f32 %v118, %v2542
    %v2544 = vpop.f32.mrb[0].mxu0
    %v2545 = vadd.f32 %v114, %v2544
    %v2546 = vpop.f32.mrb[0].mxu0
    %v2547 = vadd.f32 %v118, %v2546
    %2548 = vmatprep.mubr.bf16.mxu0 0
    %2549 = vmatmul.mubr.bf16.gmra.mrb[0].mxu0 %v2444
    %v2550 = vpop.f32.mrb[0].mxu0
    %v2551 = vadd.f32 %v114, %v2550
    %v2552 = vpop.f32.mrb[0].mxu0
    %v2553 = vadd.f32 %v118, %v2552
    %v2554 = vpop.f32.mrb[0].mxu0
    %v2555 = vadd.f32 %v114, %v2554
    %v2556 = vpop.f32.mrb[0].mxu0
    %v2557 = vadd.f32 %v118, %v2556
    %2558 = vdwg.mxu0
    %v2559 = vmax.f32 %v2481, 0.0
    %v2560 = vmax.f32 %v2483, 0.0
    %v2561 = vmax.f32 %v2485, 0.0
    %v2562 = vmax.f32 %v2487, 0.0
    %v2563 = vmax.f32 %v2491, 0.0
    %v2564 = vmax.f32 %v2493, 0.0
    %v2565 = vmax.f32 %v2495, 0.0
    %v2566 = vmax.f32 %v2497, 0.0
    %v2567 = vmax.f32 %v2501, 0.0
    %v2568 = vmax.f32 %v2503, 0.0
    %v2569 = vmax.f32 %v2505, 0.0
    %v2570 = vmax.f32 %v2507, 0.0
    %v2571 = vmax.f32 %v2511, 0.0
    %v2572 = vmax.f32 %v2513, 0.0
    %v2573 = vmax.f32 %v2515, 0.0
    %v2574 = vmax.f32 %v2517, 0.0
    %v2575 = vmax.f32 %v2521, 0.0
    %v2576 = vmax.f32 %v2523, 0.0
    %v2577 = vmax.f32 %v2525, 0.0
    %v2578 = vmax.f32 %v2527, 0.0
    %v2579 = vmax.f32 %v2531, 0.0
    %v2580 = vmax.f32 %v2533, 0.0
    %v2581 = vmax.f32 %v2535, 0.0
    %v2582 = vmax.f32 %v2537, 0.0
    %v2583 = vmax.f32 %v2541, 0.0
    %v2584 = vmax.f32 %v2543, 0.0
    %v2585 = vmax.f32 %v2545, 0.0
    %v2586 = vmax.f32 %v2547, 0.0
    %v2587 = vmax.f32 %v2551, 0.0
    %v2588 = vmax.f32 %v2553, 0.0
    %v2589 = vmax.f32 %v2555, 0.0
    %v2590 = vmax.f32 %v2557, 0.0
    %v2591 = vpack.c.bf16 %v2561, %v2559
    %v2592 = vpack.c.bf16 %v2562, %v2560
    %v2593 = vpack.c.bf16 %v2565, %v2563
    %v2594 = vpack.c.bf16 %v2566, %v2564
    %v2595 = vpack.c.bf16 %v2569, %v2567
    %v2596 = vpack.c.bf16 %v2570, %v2568
    %v2597 = vpack.c.bf16 %v2573, %v2571
    %v2598 = vpack.c.bf16 %v2574, %v2572
    %v2599 = vpack.c.bf16 %v2577, %v2575
    %v2600 = vpack.c.bf16 %v2578, %v2576
    %v2601 = vpack.c.bf16 %v2581, %v2579
    %v2602 = vpack.c.bf16 %v2582, %v2580
    %v2603 = vpack.c.bf16 %v2585, %v2583
    %v2604 = vpack.c.bf16 %v2586, %v2584
    %v2605 = vpack.c.bf16 %v2589, %v2587
    %v2606 = vpack.c.bf16 %v2590, %v2588
    %2607 = vmatprep.subr.bf16.mxu0 0
    %2608 = vmatpush1.bf16.msra.mxu0 %v437
    %2609 = vmatprep.subr.bf16.mxu0 0
    %2610 = vmatpush1.bf16.msra.mxu0 %v438
    %2611 = vmatprep.subr.bf16.mxu0 0
    %2612 = vmatpush1.bf16.msra.mxu0 %v439
    %2613 = vmatprep.subr.bf16.mxu0 0
    %2614 = vmatpush1.bf16.msra.mxu0 %v440
    %2615 = vmatprep.subr.bf16.mxu0 0
    %2616 = vmatpush1.bf16.msra.mxu0 %v441
    %2617 = vmatprep.subr.bf16.mxu0 0
    %2618 = vmatpush1.bf16.msra.mxu0 %v442
    %2619 = vmatprep.subr.bf16.mxu0 0
    %2620 = vmatpush1.bf16.msra.mxu0 %v443
    %2621 = vmatprep.subr.bf16.mxu0 0
    %2622 = vmatpush1.bf16.msra.mxu0 %v444
    %2623 = vmatprep.subr.bf16.mxu0 0
    %2624 = vmatpush1.bf16.msra.mxu0 %v445
    %2625 = vmatprep.subr.bf16.mxu0 0
    %2626 = vmatpush1.bf16.msra.mxu0 %v446
    %2627 = vmatprep.subr.bf16.mxu0 0
    %2628 = vmatpush1.bf16.msra.mxu0 %v447
    %2629 = vmatprep.subr.bf16.mxu0 0
    %2630 = vmatpush1.bf16.msra.mxu0 %v448
    %2631 = vmatprep.subr.bf16.mxu0 0
    %2632 = vmatpush1.bf16.msra.mxu0 %v449
    %2633 = vmatprep.subr.bf16.mxu0 0
    %2634 = vmatpush1.bf16.msra.mxu0 %v450
    %2635 = vmatprep.subr.bf16.mxu0 0
    %2636 = vmatpush1.bf16.msra.mxu0 %v451
    %2637 = vmatprep.subr.bf16.mxu0 0
    %2638 = vmatpush1.bf16.msra.mxu0 %v452
    %2639 = vmatprep.mubr.bf16.mxu0 %v2592
    %2640 = vmatmul.mubr.bf16.gmra.mrb[0].mxu0 %v2591
    %v2641 = vpop.f32.mrb[0].mxu0
    %v2642 = vadd.f32 %v371, %v2641
    %v2643 = vpop.f32.mrb[0].mxu0
    %v2644 = vpop.f32.mrb[0].mxu0
    %v2645 = vadd.f32 %v371, %v2644
    %v2646 = vpop.f32.mrb[0].mxu0
    %2647 = vmatprep.mubr.bf16.mxu0 %v2594
    %2648 = vmatmul.mubr.bf16.gmra.mrb[0].mxu0 %v2593
    %v2649 = vpop.f32.mrb[0].mxu0
    %v2650 = vadd.f32 %v371, %v2649
    %v2651 = vpop.f32.mrb[0].mxu0
    %v2652 = vpop.f32.mrb[0].mxu0
    %v2653 = vadd.f32 %v371, %v2652
    %v2654 = vpop.f32.mrb[0].mxu0
    %2655 = vmatprep.mubr.bf16.mxu0 %v2596
    %2656 = vmatmul.mubr.bf16.gmra.mrb[0].mxu0 %v2595
    %v2657 = vpop.f32.mrb[0].mxu0
    %v2658 = vadd.f32 %v371, %v2657
    %v2659 = vpop.f32.mrb[0].mxu0
    %v2660 = vpop.f32.mrb[0].mxu0
    %v2661 = vadd.f32 %v371, %v2660
    %v2662 = vpop.f32.mrb[0].mxu0
    %2663 = vmatprep.mubr.bf16.mxu0 %v2598
    %2664 = vmatmul.mubr.bf16.gmra.mrb[0].mxu0 %v2597
    %v2665 = vpop.f32.mrb[0].mxu0
    %v2666 = vadd.f32 %v371, %v2665
    %v2667 = vpop.f32.mrb[0].mxu0
    %v2668 = vpop.f32.mrb[0].mxu0
    %v2669 = vadd.f32 %v371, %v2668
    %v2670 = vpop.f32.mrb[0].mxu0
    %2671 = vmatprep.mubr.bf16.mxu0 %v2600
    %2672 = vmatmul.mubr.bf16.gmra.mrb[0].mxu0 %v2599
    %v2673 = vpop.f32.mrb[0].mxu0
    %v2674 = vadd.f32 %v371, %v2673
    %v2675 = vpop.f32.mrb[0].mxu0
    %v2676 = vpop.f32.mrb[0].mxu0
    %v2677 = vadd.f32 %v371, %v2676
    %v2678 = vpop.f32.mrb[0].mxu0
    %2679 = vmatprep.mubr.bf16.mxu0 %v2602
    %2680 = vmatmul.mubr.bf16.gmra.mrb[0].mxu0 %v2601
    %v2681 = vpop.f32.mrb[0].mxu0
    %v2682 = vadd.f32 %v371, %v2681
    %v2683 = vpop.f32.mrb[0].mxu0
    %v2684 = vpop.f32.mrb[0].mxu0
    %v2685 = vadd.f32 %v371, %v2684
    %v2686 = vpop.f32.mrb[0].mxu0
    %2687 = vmatprep.mubr.bf16.mxu0 %v2604
    %2688 = vmatmul.mubr.bf16.gmra.mrb[0].mxu0 %v2603
    %v2689 = vpop.f32.mrb[0].mxu0
    %v2690 = vadd.f32 %v371, %v2689
    %v2691 = vpop.f32.mrb[0].mxu0
    %v2692 = vpop.f32.mrb[0].mxu0
    %v2693 = vadd.f32 %v371, %v2692
    %v2694 = vpop.f32.mrb[0].mxu0
    %2695 = vmatprep.mubr.bf16.mxu0 %v2606
    %2696 = vmatmul.mubr.bf16.gmra.mrb[0].mxu0 %v2605
    %v2697 = vpop.f32.mrb[0].mxu0
    %v2698 = vadd.f32 %v371, %v2697
    %v2699 = vpop.f32.mrb[0].mxu0
    %v2700 = vpop.f32.mrb[0].mxu0
    %v2701 = vadd.f32 %v371, %v2700
    %v2702 = vpop.f32.mrb[0].mxu0
    %2703 = vdwg.mxu0
    %v2704 = vmax.f32 %v2642, 0.0
    %v2705 = vmax.f32 %v2645, 0.0
    %v2706 = vmax.f32 %v2650, 0.0
    %v2707 = vmax.f32 %v2653, 0.0
    %v2708 = vmax.f32 %v2658, 0.0
    %v2709 = vmax.f32 %v2661, 0.0
    %v2710 = vmax.f32 %v2666, 0.0
    %v2711 = vmax.f32 %v2669, 0.0
    %v2712 = vmax.f32 %v2674, 0.0
    %v2713 = vmax.f32 %v2677, 0.0
    %v2714 = vmax.f32 %v2682, 0.0
    %v2715 = vmax.f32 %v2685, 0.0
    %v2716 = vmax.f32 %v2690, 0.0
    %v2717 = vmax.f32 %v2693, 0.0
    %v2718 = vmax.f32 %v2698, 0.0
    %v2719 = vmax.f32 %v2701, 0.0
    %v2720 = vpack.c.bf16 %v2705, %v2704
    %v2721 = vpack.c.bf16 %v2707, %v2706
    %v2722 = vpack.c.bf16 %v2709, %v2708
    %v2723 = vpack.c.bf16 %v2711, %v2710
    %v2724 = vpack.c.bf16 %v2713, %v2712
    %v2725 = vpack.c.bf16 %v2715, %v2714
    %v2726 = vpack.c.bf16 %v2717, %v2716
    %v2727 = vpack.c.bf16 %v2719, %v2718
    %2728 = vmatprep.subr.bf16.mxu0 0
    %2729 = vmatpush1.bf16.msra.mxu0 %v628
    %2730 = vmatprep.subr.bf16.mxu0 0
    %2731 = vmatpush1.bf16.msra.mxu0 %v629
    %2732 = vmatprep.subr.bf16.mxu0 0
    %2733 = vmatpush1.bf16.msra.mxu0 %v630
    %2734 = vmatprep.subr.bf16.mxu0 0
    %2735 = vmatpush1.bf16.msra.mxu0 %v631
    %2736 = vmatprep.subr.bf16.mxu0 0
    %2737 = vmatpush1.bf16.msra.mxu0 %v632
    %2738 = vmatprep.subr.bf16.mxu0 0
    %2739 = vmatpush1.bf16.msra.mxu0 %v633
    %2740 = vmatprep.subr.bf16.mxu0 0
    %2741 = vmatpush1.bf16.msra.mxu0 %v634
    %2742 = vmatprep.subr.bf16.mxu0 0
    %2743 = vmatpush1.bf16.msra.mxu0 %v635
    %2744 = vmatprep.subr.bf16.mxu0 0
    %2745 = vmatpush1.bf16.msra.mxu0 0
    %2746 = vmatprep.subr.bf16.mxu0 0
    %2747 = vmatpush1.bf16.msra.mxu0 0
    %2748 = vmatprep.subr.bf16.mxu0 0
    %2749 = vmatpush1.bf16.msra.mxu0 0
    %2750 = vmatprep.subr.bf16.mxu0 0
    %2751 = vmatpush1.bf16.msra.mxu0 0
    %2752 = vmatprep.subr.bf16.mxu0 0
    %2753 = vmatpush1.bf16.msra.mxu0 0
    %2754 = vmatprep.subr.bf16.mxu0 0
    %2755 = vmatpush1.bf16.msra.mxu0 0
    %2756 = vmatprep.subr.bf16.mxu0 0
    %2757 = vmatpush1.bf16.msra.mxu0 0
    %2758 = vmatprep.subr.bf16.mxu0 0
    %2759 = vmatpush1.bf16.msra.mxu0 0
    %2760 = vmatprep.mubr.bf16.mxu0 0
    %2761 = vmatmul.mubr.bf16.gmra.mrb[0].mxu0 %v2720
    %v2762 = vpop.f32.mrb[0].mxu0
    %v2763 = vadd.f32 %v594, %v2762
    %v2764 = vpop.f32.mrb[0].mxu0
    %v2765 = vpop.f32.mrb[0].mxu0
    %v2766 = vadd.f32 %v594, %v2765
    %v2767 = vpop.f32.mrb[0].mxu0
    %2768 = vmatprep.mubr.bf16.mxu0 0
    %2769 = vmatmul.mubr.bf16.gmra.mrb[0].mxu0 %v2721
    %v2770 = vpop.f32.mrb[0].mxu0
    %v2771 = vadd.f32 %v594, %v2770
    %v2772 = vpop.f32.mrb[0].mxu0
    %v2773 = vpop.f32.mrb[0].mxu0
    %v2774 = vadd.f32 %v594, %v2773
    %v2775 = vpop.f32.mrb[0].mxu0
    %2776 = vmatprep.mubr.bf16.mxu0 0
    %2777 = vmatmul.mubr.bf16.gmra.mrb[0].mxu0 %v2722
    %v2778 = vpop.f32.mrb[0].mxu0
    %v2779 = vadd.f32 %v594, %v2778
    %v2780 = vpop.f32.mrb[0].mxu0
    %v2781 = vpop.f32.mrb[0].mxu0
    %v2782 = vadd.f32 %v594, %v2781
    %v2783 = vpop.f32.mrb[0].mxu0
    %2784 = vmatprep.mubr.bf16.mxu0 0
    %2785 = vmatmul.mubr.bf16.gmra.mrb[0].mxu0 %v2723
    %v2786 = vpop.f32.mrb[0].mxu0
    %v2787 = vadd.f32 %v594, %v2786
    %v2788 = vpop.f32.mrb[0].mxu0
    %v2789 = vpop.f32.mrb[0].mxu0
    %v2790 = vadd.f32 %v594, %v2789
    %v2791 = vpop.f32.mrb[0].mxu0
    %2792 = vmatprep.mubr.bf16.mxu0 0
    %2793 = vmatmul.mubr.bf16.gmra.mrb[0].mxu0 %v2724
    %v2794 = vpop.f32.mrb[0].mxu0
    %v2795 = vadd.f32 %v594, %v2794
    %v2796 = vpop.f32.mrb[0].mxu0
    %v2797 = vpop.f32.mrb[0].mxu0
    %v2798 = vadd.f32 %v594, %v2797
    %v2799 = vpop.f32.mrb[0].mxu0
    %2800 = vmatprep.mubr.bf16.mxu0 0
    %2801 = vmatmul.mubr.bf16.gmra.mrb[0].mxu0 %v2725
    %v2802 = vpop.f32.mrb[0].mxu0
    %v2803 = vadd.f32 %v594, %v2802
    %v2804 = vpop.f32.mrb[0].mxu0
    %v2805 = vpop.f32.mrb[0].mxu0
    %v2806 = vadd.f32 %v594, %v2805
    %v2807 = vpop.f32.mrb[0].mxu0
    %2808 = vmatprep.mubr.bf16.mxu0 0
    %2809 = vmatmul.mubr.bf16.gmra.mrb[0].mxu0 %v2726
    %v2810 = vpop.f32.mrb[0].mxu0
    %v2811 = vadd.f32 %v594, %v2810
    %v2812 = vpop.f32.mrb[0].mxu0
    %v2813 = vpop.f32.mrb[0].mxu0
    %v2814 = vadd.f32 %v594, %v2813
    %v2815 = vpop.f32.mrb[0].mxu0
    %2816 = vmatprep.mubr.bf16.mxu0 0
    %2817 = vmatmul.mubr.bf16.gmra.mrb[0].mxu0 %v2727
    %v2818 = vpop.f32.mrb[0].mxu0
    %v2819 = vadd.f32 %v594, %v2818
    %v2820 = vpop.f32.mrb[0].mxu0
    %v2821 = vpop.f32.mrb[0].mxu0
    %v2822 = vadd.f32 %v594, %v2821
    %v2823 = vpop.f32.mrb[0].mxu0
    %2824 = vdwg.mxu0
    %v2825 = vmax.f32 %v2763, 0.0
    %v2826 = vmax.f32 %v2766, 0.0
    %v2827 = vmax.f32 %v2771, 0.0
    %v2828 = vmax.f32 %v2774, 0.0
    %v2829 = vmax.f32 %v2779, 0.0
    %v2830 = vmax.f32 %v2782, 0.0
    %v2831 = vmax.f32 %v2787, 0.0
    %v2832 = vmax.f32 %v2790, 0.0
    %v2833 = vmax.f32 %v2795, 0.0
    %v2834 = vmax.f32 %v2798, 0.0
    %v2835 = vmax.f32 %v2803, 0.0
    %v2836 = vmax.f32 %v2806, 0.0
    %v2837 = vmax.f32 %v2811, 0.0
    %v2838 = vmax.f32 %v2814, 0.0
    %v2839 = vmax.f32 %v2819, 0.0
    %v2840 = vmax.f32 %v2822, 0.0
    %v2841 = vpack.c.bf16 %v2826, %v2825
    %v2842 = vpack.c.bf16 %v2828, %v2827
    %v2843 = vpack.c.bf16 %v2830, %v2829
    %v2844 = vpack.c.bf16 %v2832, %v2831
    %v2845 = vpack.c.bf16 %v2834, %v2833
    %v2846 = vpack.c.bf16 %v2836, %v2835
    %v2847 = vpack.c.bf16 %v2838, %v2837
    %v2848 = vpack.c.bf16 %v2840, %v2839
    %v2849 = vunpack.c.l.bf16 %v2841
    %v2850 = vunpack.c.h.bf16 %v2841
    %v2851 = vunpack.c.l.bf16 %v2842
    %v2852 = vunpack.c.h.bf16 %v2842
    %v2853 = vunpack.c.l.bf16 %v2843
    %v2854 = vunpack.c.h.bf16 %v2843
    %v2855 = vunpack.c.l.bf16 %v2844
    %v2856 = vunpack.c.h.bf16 %v2844
    %v2857 = vunpack.c.l.bf16 %v2845
    %v2858 = vunpack.c.h.bf16 %v2845
    %v2859 = vunpack.c.l.bf16 %v2846
    %v2860 = vunpack.c.h.bf16 %v2846
    %v2861 = vunpack.c.l.bf16 %v2847
    %v2862 = vunpack.c.h.bf16 %v2847
    %v2863 = vunpack.c.l.bf16 %v2848
    %v2864 = vunpack.c.h.bf16 %v2848
    %v2865 = vmul.f32 %v2849, %v784
    %v2866 = vmul.f32 %v2850, %v784
    %v2867 = vmul.f32 %v2851, %v784
    %v2868 = vmul.f32 %v2852, %v784
    %v2869 = vmul.f32 %v2853, %v784
    %v2870 = vmul.f32 %v2854, %v784
    %v2871 = vmul.f32 %v2855, %v784
    %v2872 = vmul.f32 %v2856, %v784
    %v2873 = vmul.f32 %v2857, %v784
    %v2874 = vmul.f32 %v2858, %v784
    %v2875 = vmul.f32 %v2859, %v784
    %v2876 = vmul.f32 %v2860, %v784
    %v2877 = vmul.f32 %v2861, %v784
    %v2878 = vmul.f32 %v2862, %v784
    %v2879 = vmul.f32 %v2863, %v784
    %v2880 = vmul.f32 %v2864, %v784
    %v2881 = vsel %vm801, %v2865, 0.0
    %2882 = vadd.xlane.f32.xlu0 %v2881
    %v2883 = vpop.xlane.xlu0 %2882
    %v2884 = vsel %vm801, %v2866, 0.0
    %2885 = vadd.xlane.f32.xlu0 %v2884
    %v2886 = vpop.xlane.xlu0 %2885
    %v2887 = vsel %vm801, %v2867, 0.0
    %2888 = vadd.xlane.f32.xlu0 %v2887
    %v2889 = vpop.xlane.xlu0 %2888
    %v2890 = vsel %vm801, %v2868, 0.0
    %2891 = vadd.xlane.f32.xlu0 %v2890
    %v2892 = vpop.xlane.xlu0 %2891
    %v2893 = vsel %vm801, %v2869, 0.0
    %2894 = vadd.xlane.f32.xlu0 %v2893
    %v2895 = vpop.xlane.xlu0 %2894
    %v2896 = vsel %vm801, %v2870, 0.0
    %2897 = vadd.xlane.f32.xlu0 %v2896
    %v2898 = vpop.xlane.xlu0 %2897
    %v2899 = vsel %vm801, %v2871, 0.0
    %2900 = vadd.xlane.f32.xlu0 %v2899
    %v2901 = vpop.xlane.xlu0 %2900
    %v2902 = vsel %vm801, %v2872, 0.0
    %2903 = vadd.xlane.f32.xlu0 %v2902
    %v2904 = vpop.xlane.xlu0 %2903
    %v2905 = vsel %vm801, %v2873, 0.0
    %2906 = vadd.xlane.f32.xlu0 %v2905
    %v2907 = vpop.xlane.xlu0 %2906
    %v2908 = vsel %vm801, %v2874, 0.0
    %2909 = vadd.xlane.f32.xlu0 %v2908
    %v2910 = vpop.xlane.xlu0 %2909
    %v2911 = vsel %vm801, %v2875, 0.0
    %2912 = vadd.xlane.f32.xlu0 %v2911
    %v2913 = vpop.xlane.xlu0 %2912
    %v2914 = vsel %vm801, %v2876, 0.0
    %2915 = vadd.xlane.f32.xlu0 %v2914
    %v2916 = vpop.xlane.xlu0 %2915
    %v2917 = vsel %vm801, %v2877, 0.0
    %2918 = vadd.xlane.f32.xlu0 %v2917
    %v2919 = vpop.xlane.xlu0 %2918
    %v2920 = vsel %vm801, %v2878, 0.0
    %2921 = vadd.xlane.f32.xlu0 %v2920
    %v2922 = vpop.xlane.xlu0 %2921
    %v2923 = vsel %vm801, %v2879, 0.0
    %2924 = vadd.xlane.f32.xlu0 %v2923
    %v2925 = vpop.xlane.xlu0 %2924
    %v2926 = vsel %vm801, %v2880, 0.0
    %2927 = vadd.xlane.f32.xlu0 %v2926
    %v2928 = vpop.xlane.xlu0 %2927
    %v2929 = vadd.f32 %v2883, %v858
    %v2930 = vadd.f32 %v2886, %v858
    %v2931 = vadd.f32 %v2889, %v858
    %v2932 = vadd.f32 %v2892, %v858
    %v2933 = vadd.f32 %v2895, %v858
    %v2934 = vadd.f32 %v2898, %v858
    %v2935 = vadd.f32 %v2901, %v858
    %v2936 = vadd.f32 %v2904, %v858
    %v2937 = vadd.f32 %v2907, %v858
    %v2938 = vadd.f32 %v2910, %v858
    %v2939 = vadd.f32 %v2913, %v858
    %v2940 = vadd.f32 %v2916, %v858
    %v2941 = vadd.f32 %v2919, %v858
    %v2942 = vadd.f32 %v2922, %v858
    %v2943 = vadd.f32 %v2925, %v858
    %v2944 = vadd.f32 %v2928, %v858
    %v2961 = vlaneseq
    %v2962 = vshrl.u32 %v2961, 7
    %v2963 = vsub.s32 0, %v2962
    %v2964 = vrot.slane %v2929, %v2963
    %v2965 = vlaneseq
    %v2966 = vshrl.u32 %v2965, 7
    %v2967 = vsub.s32 1, %v2966
    %v2968 = vrot.slane %v2929, %v2967
    %v2969 = vlaneseq
    %v2970 = vshrl.u32 %v2969, 7
    %v2971 = vsub.s32 2, %v2970
    %v2972 = vrot.slane %v2929, %v2971
    %v2973 = vlaneseq
    %v2974 = vshrl.u32 %v2973, 7
    %v2975 = vsub.s32 3, %v2974
    %v2976 = vrot.slane %v2929, %v2975
    %v2977 = vlaneseq
    %v2978 = vshrl.u32 %v2977, 7
    %v2979 = vsub.s32 4, %v2978
    %v2980 = vrot.slane %v2929, %v2979
    %v2981 = vlaneseq
    %v2982 = vshrl.u32 %v2981, 7
    %v2983 = vsub.s32 5, %v2982
    %v2984 = vrot.slane %v2929, %v2983
    %v2985 = vlaneseq
    %v2986 = vshrl.u32 %v2985, 7
    %v2987 = vsub.s32 6, %v2986
    %v2988 = vrot.slane %v2929, %v2987
    %v2989 = vlaneseq
    %v2990 = vshrl.u32 %v2989, 7
    %v2991 = vsub.s32 7, %v2990
    %v2992 = vrot.slane %v2929, %v2991
    %v2993 = vlaneseq
    %v2994 = vshrl.u32 %v2993, 7
    %v2995 = vsub.s32 0, %v2994
    %v2996 = vrot.slane %v2930, %v2995
    %v2997 = vlaneseq
    %v2998 = vshrl.u32 %v2997, 7
    %v2999 = vsub.s32 1, %v2998
    %v3000 = vrot.slane %v2930, %v2999
    %v3001 = vlaneseq
    %v3002 = vshrl.u32 %v3001, 7
    %v3003 = vsub.s32 2, %v3002
    %v3004 = vrot.slane %v2930, %v3003
    %v3005 = vlaneseq
    %v3006 = vshrl.u32 %v3005, 7
    %v3007 = vsub.s32 3, %v3006
    %v3008 = vrot.slane %v2930, %v3007
    %v3009 = vlaneseq
    %v3010 = vshrl.u32 %v3009, 7
    %v3011 = vsub.s32 4, %v3010
    %v3012 = vrot.slane %v2930, %v3011
    %v3013 = vlaneseq
    %v3014 = vshrl.u32 %v3013, 7
    %v3015 = vsub.s32 5, %v3014
    %v3016 = vrot.slane %v2930, %v3015
    %v3017 = vlaneseq
    %v3018 = vshrl.u32 %v3017, 7
    %v3019 = vsub.s32 6, %v3018
    %v3020 = vrot.slane %v2930, %v3019
    %v3021 = vlaneseq
    %v3022 = vshrl.u32 %v3021, 7
    %v3023 = vsub.s32 7, %v3022
    %v3024 = vrot.slane %v2930, %v3023
    %v3025 = vlaneseq
    %v3026 = vshrl.u32 %v3025, 7
    %v3027 = vsub.s32 0, %v3026
    %v3028 = vrot.slane %v2931, %v3027
    %v3029 = vlaneseq
    %v3030 = vshrl.u32 %v3029, 7
    %v3031 = vsub.s32 1, %v3030
    %v3032 = vrot.slane %v2931, %v3031
    %v3033 = vlaneseq
    %v3034 = vshrl.u32 %v3033, 7
    %v3035 = vsub.s32 2, %v3034
    %v3036 = vrot.slane %v2931, %v3035
    %v3037 = vlaneseq
    %v3038 = vshrl.u32 %v3037, 7
    %v3039 = vsub.s32 3, %v3038
    %v3040 = vrot.slane %v2931, %v3039
    %v3041 = vlaneseq
    %v3042 = vshrl.u32 %v3041, 7
    %v3043 = vsub.s32 4, %v3042
    %v3044 = vrot.slane %v2931, %v3043
    %v3045 = vlaneseq
    %v3046 = vshrl.u32 %v3045, 7
    %v3047 = vsub.s32 5, %v3046
    %v3048 = vrot.slane %v2931, %v3047
    %v3049 = vlaneseq
    %v3050 = vshrl.u32 %v3049, 7
    %v3051 = vsub.s32 6, %v3050
    %v3052 = vrot.slane %v2931, %v3051
    %v3053 = vlaneseq
    %v3054 = vshrl.u32 %v3053, 7
    %v3055 = vsub.s32 7, %v3054
    %v3056 = vrot.slane %v2931, %v3055
    %v3057 = vlaneseq
    %v3058 = vshrl.u32 %v3057, 7
    %v3059 = vsub.s32 0, %v3058
    %v3060 = vrot.slane %v2932, %v3059
    %v3061 = vlaneseq
    %v3062 = vshrl.u32 %v3061, 7
    %v3063 = vsub.s32 1, %v3062
    %v3064 = vrot.slane %v2932, %v3063
    %v3065 = vlaneseq
    %v3066 = vshrl.u32 %v3065, 7
    %v3067 = vsub.s32 2, %v3066
    %v3068 = vrot.slane %v2932, %v3067
    %v3069 = vlaneseq
    %v3070 = vshrl.u32 %v3069, 7
    %v3071 = vsub.s32 3, %v3070
    %v3072 = vrot.slane %v2932, %v3071
    %v3073 = vlaneseq
    %v3074 = vshrl.u32 %v3073, 7
    %v3075 = vsub.s32 4, %v3074
    %v3076 = vrot.slane %v2932, %v3075
    %v3077 = vlaneseq
    %v3078 = vshrl.u32 %v3077, 7
    %v3079 = vsub.s32 5, %v3078
    %v3080 = vrot.slane %v2932, %v3079
    %v3081 = vlaneseq
    %v3082 = vshrl.u32 %v3081, 7
    %v3083 = vsub.s32 6, %v3082
    %v3084 = vrot.slane %v2932, %v3083
    %v3085 = vlaneseq
    %v3086 = vshrl.u32 %v3085, 7
    %v3087 = vsub.s32 7, %v3086
    %v3088 = vrot.slane %v2932, %v3087
    %v3089 = vlaneseq
    %v3090 = vshrl.u32 %v3089, 7
    %v3091 = vsub.s32 0, %v3090
    %v3092 = vrot.slane %v2933, %v3091
    %v3093 = vlaneseq
    %v3094 = vshrl.u32 %v3093, 7
    %v3095 = vsub.s32 1, %v3094
    %v3096 = vrot.slane %v2933, %v3095
    %v3097 = vlaneseq
    %v3098 = vshrl.u32 %v3097, 7
    %v3099 = vsub.s32 2, %v3098
    %v3100 = vrot.slane %v2933, %v3099
    %v3101 = vlaneseq
    %v3102 = vshrl.u32 %v3101, 7
    %v3103 = vsub.s32 3, %v3102
    %v3104 = vrot.slane %v2933, %v3103
    %v3105 = vlaneseq
    %v3106 = vshrl.u32 %v3105, 7
    %v3107 = vsub.s32 4, %v3106
    %v3108 = vrot.slane %v2933, %v3107
    %v3109 = vlaneseq
    %v3110 = vshrl.u32 %v3109, 7
    %v3111 = vsub.s32 5, %v3110
    %v3112 = vrot.slane %v2933, %v3111
    %v3113 = vlaneseq
    %v3114 = vshrl.u32 %v3113, 7
    %v3115 = vsub.s32 6, %v3114
    %v3116 = vrot.slane %v2933, %v3115
    %v3117 = vlaneseq
    %v3118 = vshrl.u32 %v3117, 7
    %v3119 = vsub.s32 7, %v3118
    %v3120 = vrot.slane %v2933, %v3119
    %v3121 = vlaneseq
    %v3122 = vshrl.u32 %v3121, 7
    %v3123 = vsub.s32 0, %v3122
    %v3124 = vrot.slane %v2934, %v3123
    %v3125 = vlaneseq
    %v3126 = vshrl.u32 %v3125, 7
    %v3127 = vsub.s32 1, %v3126
    %v3128 = vrot.slane %v2934, %v3127
    %v3129 = vlaneseq
    %v3130 = vshrl.u32 %v3129, 7
    %v3131 = vsub.s32 2, %v3130
    %v3132 = vrot.slane %v2934, %v3131
    %v3133 = vlaneseq
    %v3134 = vshrl.u32 %v3133, 7
    %v3135 = vsub.s32 3, %v3134
    %v3136 = vrot.slane %v2934, %v3135
    %v3137 = vlaneseq
    %v3138 = vshrl.u32 %v3137, 7
    %v3139 = vsub.s32 4, %v3138
    %v3140 = vrot.slane %v2934, %v3139
    %v3141 = vlaneseq
    %v3142 = vshrl.u32 %v3141, 7
    %v3143 = vsub.s32 5, %v3142
    %v3144 = vrot.slane %v2934, %v3143
    %v3145 = vlaneseq
    %v3146 = vshrl.u32 %v3145, 7
    %v3147 = vsub.s32 6, %v3146
    %v3148 = vrot.slane %v2934, %v3147
    %v3149 = vlaneseq
    %v3150 = vshrl.u32 %v3149, 7
    %v3151 = vsub.s32 7, %v3150
    %v3152 = vrot.slane %v2934, %v3151
    %v3153 = vlaneseq
    %v3154 = vshrl.u32 %v3153, 7
    %v3155 = vsub.s32 0, %v3154
    %v3156 = vrot.slane %v2935, %v3155
    %v3157 = vlaneseq
    %v3158 = vshrl.u32 %v3157, 7
    %v3159 = vsub.s32 1, %v3158
    %v3160 = vrot.slane %v2935, %v3159
    %v3161 = vlaneseq
    %v3162 = vshrl.u32 %v3161, 7
    %v3163 = vsub.s32 2, %v3162
    %v3164 = vrot.slane %v2935, %v3163
    %v3165 = vlaneseq
    %v3166 = vshrl.u32 %v3165, 7
    %v3167 = vsub.s32 3, %v3166
    %v3168 = vrot.slane %v2935, %v3167
    %v3169 = vlaneseq
    %v3170 = vshrl.u32 %v3169, 7
    %v3171 = vsub.s32 4, %v3170
    %v3172 = vrot.slane %v2935, %v3171
    %v3173 = vlaneseq
    %v3174 = vshrl.u32 %v3173, 7
    %v3175 = vsub.s32 5, %v3174
    %v3176 = vrot.slane %v2935, %v3175
    %v3177 = vlaneseq
    %v3178 = vshrl.u32 %v3177, 7
    %v3179 = vsub.s32 6, %v3178
    %v3180 = vrot.slane %v2935, %v3179
    %v3181 = vlaneseq
    %v3182 = vshrl.u32 %v3181, 7
    %v3183 = vsub.s32 7, %v3182
    %v3184 = vrot.slane %v2935, %v3183
    %v3185 = vlaneseq
    %v3186 = vshrl.u32 %v3185, 7
    %v3187 = vsub.s32 0, %v3186
    %v3188 = vrot.slane %v2936, %v3187
    %v3189 = vlaneseq
    %v3190 = vshrl.u32 %v3189, 7
    %v3191 = vsub.s32 1, %v3190
    %v3192 = vrot.slane %v2936, %v3191
    %v3193 = vlaneseq
    %v3194 = vshrl.u32 %v3193, 7
    %v3195 = vsub.s32 2, %v3194
    %v3196 = vrot.slane %v2936, %v3195
    %v3197 = vlaneseq
    %v3198 = vshrl.u32 %v3197, 7
    %v3199 = vsub.s32 3, %v3198
    %v3200 = vrot.slane %v2936, %v3199
    %v3201 = vlaneseq
    %v3202 = vshrl.u32 %v3201, 7
    %v3203 = vsub.s32 4, %v3202
    %v3204 = vrot.slane %v2936, %v3203
    %v3205 = vlaneseq
    %v3206 = vshrl.u32 %v3205, 7
    %v3207 = vsub.s32 5, %v3206
    %v3208 = vrot.slane %v2936, %v3207
    %v3209 = vlaneseq
    %v3210 = vshrl.u32 %v3209, 7
    %v3211 = vsub.s32 6, %v3210
    %v3212 = vrot.slane %v2936, %v3211
    %v3213 = vlaneseq
    %v3214 = vshrl.u32 %v3213, 7
    %v3215 = vsub.s32 7, %v3214
    %v3216 = vrot.slane %v2936, %v3215
    %v3217 = vlaneseq
    %v3218 = vshrl.u32 %v3217, 7
    %v3219 = vsub.s32 0, %v3218
    %v3220 = vrot.slane %v2937, %v3219
    %v3221 = vlaneseq
    %v3222 = vshrl.u32 %v3221, 7
    %v3223 = vsub.s32 1, %v3222
    %v3224 = vrot.slane %v2937, %v3223
    %v3225 = vlaneseq
    %v3226 = vshrl.u32 %v3225, 7
    %v3227 = vsub.s32 2, %v3226
    %v3228 = vrot.slane %v2937, %v3227
    %v3229 = vlaneseq
    %v3230 = vshrl.u32 %v3229, 7
    %v3231 = vsub.s32 3, %v3230
    %v3232 = vrot.slane %v2937, %v3231
    %v3233 = vlaneseq
    %v3234 = vshrl.u32 %v3233, 7
    %v3235 = vsub.s32 4, %v3234
    %v3236 = vrot.slane %v2937, %v3235
    %v3237 = vlaneseq
    %v3238 = vshrl.u32 %v3237, 7
    %v3239 = vsub.s32 5, %v3238
    %v3240 = vrot.slane %v2937, %v3239
    %v3241 = vlaneseq
    %v3242 = vshrl.u32 %v3241, 7
    %v3243 = vsub.s32 6, %v3242
    %v3244 = vrot.slane %v2937, %v3243
    %v3245 = vlaneseq
    %v3246 = vshrl.u32 %v3245, 7
    %v3247 = vsub.s32 7, %v3246
    %v3248 = vrot.slane %v2937, %v3247
    %v3249 = vlaneseq
    %v3250 = vshrl.u32 %v3249, 7
    %v3251 = vsub.s32 0, %v3250
    %v3252 = vrot.slane %v2938, %v3251
    %v3253 = vlaneseq
    %v3254 = vshrl.u32 %v3253, 7
    %v3255 = vsub.s32 1, %v3254
    %v3256 = vrot.slane %v2938, %v3255
    %v3257 = vlaneseq
    %v3258 = vshrl.u32 %v3257, 7
    %v3259 = vsub.s32 2, %v3258
    %v3260 = vrot.slane %v2938, %v3259
    %v3261 = vlaneseq
    %v3262 = vshrl.u32 %v3261, 7
    %v3263 = vsub.s32 3, %v3262
    %v3264 = vrot.slane %v2938, %v3263
    %v3265 = vlaneseq
    %v3266 = vshrl.u32 %v3265, 7
    %v3267 = vsub.s32 4, %v3266
    %v3268 = vrot.slane %v2938, %v3267
    %v3269 = vlaneseq
    %v3270 = vshrl.u32 %v3269, 7
    %v3271 = vsub.s32 5, %v3270
    %v3272 = vrot.slane %v2938, %v3271
    %v3273 = vlaneseq
    %v3274 = vshrl.u32 %v3273, 7
    %v3275 = vsub.s32 6, %v3274
    %v3276 = vrot.slane %v2938, %v3275
    %v3277 = vlaneseq
    %v3278 = vshrl.u32 %v3277, 7
    %v3279 = vsub.s32 7, %v3278
    %v3280 = vrot.slane %v2938, %v3279
    %v3281 = vlaneseq
    %v3282 = vshrl.u32 %v3281, 7
    %v3283 = vsub.s32 0, %v3282
    %v3284 = vrot.slane %v2939, %v3283
    %v3285 = vlaneseq
    %v3286 = vshrl.u32 %v3285, 7
    %v3287 = vsub.s32 1, %v3286
    %v3288 = vrot.slane %v2939, %v3287
    %v3289 = vlaneseq
    %v3290 = vshrl.u32 %v3289, 7
    %v3291 = vsub.s32 2, %v3290
    %v3292 = vrot.slane %v2939, %v3291
    %v3293 = vlaneseq
    %v3294 = vshrl.u32 %v3293, 7
    %v3295 = vsub.s32 3, %v3294
    %v3296 = vrot.slane %v2939, %v3295
    %v3297 = vlaneseq
    %v3298 = vshrl.u32 %v3297, 7
    %v3299 = vsub.s32 4, %v3298
    %v3300 = vrot.slane %v2939, %v3299
    %v3301 = vlaneseq
    %v3302 = vshrl.u32 %v3301, 7
    %v3303 = vsub.s32 5, %v3302
    %v3304 = vrot.slane %v2939, %v3303
    %v3305 = vlaneseq
    %v3306 = vshrl.u32 %v3305, 7
    %v3307 = vsub.s32 6, %v3306
    %v3308 = vrot.slane %v2939, %v3307
    %v3309 = vlaneseq
    %v3310 = vshrl.u32 %v3309, 7
    %v3311 = vsub.s32 7, %v3310
    %v3312 = vrot.slane %v2939, %v3311
    %v3313 = vlaneseq
    %v3314 = vshrl.u32 %v3313, 7
    %v3315 = vsub.s32 0, %v3314
    %v3316 = vrot.slane %v2940, %v3315
    %v3317 = vlaneseq
    %v3318 = vshrl.u32 %v3317, 7
    %v3319 = vsub.s32 1, %v3318
    %v3320 = vrot.slane %v2940, %v3319
    %v3321 = vlaneseq
    %v3322 = vshrl.u32 %v3321, 7
    %v3323 = vsub.s32 2, %v3322
    %v3324 = vrot.slane %v2940, %v3323
    %v3325 = vlaneseq
    %v3326 = vshrl.u32 %v3325, 7
    %v3327 = vsub.s32 3, %v3326
    %v3328 = vrot.slane %v2940, %v3327
    %v3329 = vlaneseq
    %v3330 = vshrl.u32 %v3329, 7
    %v3331 = vsub.s32 4, %v3330
    %v3332 = vrot.slane %v2940, %v3331
    %v3333 = vlaneseq
    %v3334 = vshrl.u32 %v3333, 7
    %v3335 = vsub.s32 5, %v3334
    %v3336 = vrot.slane %v2940, %v3335
    %v3337 = vlaneseq
    %v3338 = vshrl.u32 %v3337, 7
    %v3339 = vsub.s32 6, %v3338
    %v3340 = vrot.slane %v2940, %v3339
    %v3341 = vlaneseq
    %v3342 = vshrl.u32 %v3341, 7
    %v3343 = vsub.s32 7, %v3342
    %v3344 = vrot.slane %v2940, %v3343
    %v3345 = vlaneseq
    %v3346 = vshrl.u32 %v3345, 7
    %v3347 = vsub.s32 0, %v3346
    %v3348 = vrot.slane %v2941, %v3347
    %v3349 = vlaneseq
    %v3350 = vshrl.u32 %v3349, 7
    %v3351 = vsub.s32 1, %v3350
    %v3352 = vrot.slane %v2941, %v3351
    %v3353 = vlaneseq
    %v3354 = vshrl.u32 %v3353, 7
    %v3355 = vsub.s32 2, %v3354
    %v3356 = vrot.slane %v2941, %v3355
    %v3357 = vlaneseq
    %v3358 = vshrl.u32 %v3357, 7
    %v3359 = vsub.s32 3, %v3358
    %v3360 = vrot.slane %v2941, %v3359
    %v3361 = vlaneseq
    %v3362 = vshrl.u32 %v3361, 7
    %v3363 = vsub.s32 4, %v3362
    %v3364 = vrot.slane %v2941, %v3363
    %v3365 = vlaneseq
    %v3366 = vshrl.u32 %v3365, 7
    %v3367 = vsub.s32 5, %v3366
    %v3368 = vrot.slane %v2941, %v3367
    %v3369 = vlaneseq
    %v3370 = vshrl.u32 %v3369, 7
    %v3371 = vsub.s32 6, %v3370
    %v3372 = vrot.slane %v2941, %v3371
    %v3373 = vlaneseq
    %v3374 = vshrl.u32 %v3373, 7
    %v3375 = vsub.s32 7, %v3374
    %v3376 = vrot.slane %v2941, %v3375
    %v3377 = vlaneseq
    %v3378 = vshrl.u32 %v3377, 7
    %v3379 = vsub.s32 0, %v3378
    %v3380 = vrot.slane %v2942, %v3379
    %v3381 = vlaneseq
    %v3382 = vshrl.u32 %v3381, 7
    %v3383 = vsub.s32 1, %v3382
    %v3384 = vrot.slane %v2942, %v3383
    %v3385 = vlaneseq
    %v3386 = vshrl.u32 %v3385, 7
    %v3387 = vsub.s32 2, %v3386
    %v3388 = vrot.slane %v2942, %v3387
    %v3389 = vlaneseq
    %v3390 = vshrl.u32 %v3389, 7
    %v3391 = vsub.s32 3, %v3390
    %v3392 = vrot.slane %v2942, %v3391
    %v3393 = vlaneseq
    %v3394 = vshrl.u32 %v3393, 7
    %v3395 = vsub.s32 4, %v3394
    %v3396 = vrot.slane %v2942, %v3395
    %v3397 = vlaneseq
    %v3398 = vshrl.u32 %v3397, 7
    %v3399 = vsub.s32 5, %v3398
    %v3400 = vrot.slane %v2942, %v3399
    %v3401 = vlaneseq
    %v3402 = vshrl.u32 %v3401, 7
    %v3403 = vsub.s32 6, %v3402
    %v3404 = vrot.slane %v2942, %v3403
    %v3405 = vlaneseq
    %v3406 = vshrl.u32 %v3405, 7
    %v3407 = vsub.s32 7, %v3406
    %v3408 = vrot.slane %v2942, %v3407
    %v3409 = vlaneseq
    %v3410 = vshrl.u32 %v3409, 7
    %v3411 = vsub.s32 0, %v3410
    %v3412 = vrot.slane %v2943, %v3411
    %v3413 = vlaneseq
    %v3414 = vshrl.u32 %v3413, 7
    %v3415 = vsub.s32 1, %v3414
    %v3416 = vrot.slane %v2943, %v3415
    %v3417 = vlaneseq
    %v3418 = vshrl.u32 %v3417, 7
    %v3419 = vsub.s32 2, %v3418
    %v3420 = vrot.slane %v2943, %v3419
    %v3421 = vlaneseq
    %v3422 = vshrl.u32 %v3421, 7
    %v3423 = vsub.s32 3, %v3422
    %v3424 = vrot.slane %v2943, %v3423
    %v3425 = vlaneseq
    %v3426 = vshrl.u32 %v3425, 7
    %v3427 = vsub.s32 4, %v3426
    %v3428 = vrot.slane %v2943, %v3427
    %v3429 = vlaneseq
    %v3430 = vshrl.u32 %v3429, 7
    %v3431 = vsub.s32 5, %v3430
    %v3432 = vrot.slane %v2943, %v3431
    %v3433 = vlaneseq
    %v3434 = vshrl.u32 %v3433, 7
    %v3435 = vsub.s32 6, %v3434
    %v3436 = vrot.slane %v2943, %v3435
    %v3437 = vlaneseq
    %v3438 = vshrl.u32 %v3437, 7
    %v3439 = vsub.s32 7, %v3438
    %v3440 = vrot.slane %v2943, %v3439
    %v3441 = vlaneseq
    %v3442 = vshrl.u32 %v3441, 7
    %v3443 = vsub.s32 0, %v3442
    %v3444 = vrot.slane %v2944, %v3443
    %v3445 = vlaneseq
    %v3446 = vshrl.u32 %v3445, 7
    %v3447 = vsub.s32 1, %v3446
    %v3448 = vrot.slane %v2944, %v3447
    %v3449 = vlaneseq
    %v3450 = vshrl.u32 %v3449, 7
    %v3451 = vsub.s32 2, %v3450
    %v3452 = vrot.slane %v2944, %v3451
    %v3453 = vlaneseq
    %v3454 = vshrl.u32 %v3453, 7
    %v3455 = vsub.s32 3, %v3454
    %v3456 = vrot.slane %v2944, %v3455
    %v3457 = vlaneseq
    %v3458 = vshrl.u32 %v3457, 7
    %v3459 = vsub.s32 4, %v3458
    %v3460 = vrot.slane %v2944, %v3459
    %v3461 = vlaneseq
    %v3462 = vshrl.u32 %v3461, 7
    %v3463 = vsub.s32 5, %v3462
    %v3464 = vrot.slane %v2944, %v3463
    %v3465 = vlaneseq
    %v3466 = vshrl.u32 %v3465, 7
    %v3467 = vsub.s32 6, %v3466
    %v3468 = vrot.slane %v2944, %v3467
    %v3469 = vlaneseq
    %v3470 = vshrl.u32 %v3469, 7
    %v3471 = vsub.s32 7, %v3470
    %v3472 = vrot.slane %v2944, %v3471
    %v3473 = vcombine.low %v2964, %v2968
    %v3474 = vcombine.low %v2972, %v2976
    %v3475 = vcombine.low %v2980, %v2984
    %v3476 = vcombine.low %v2988, %v2992
    %v3478 = vunpack.c.l.s4 1966171168
    %v3479 = vunpack.c.0.s8 %v3478
    %v3480 = vlaneseq
    %v3481 = vshrl.u32 %v3480, 7
    %v3482 = vsub.s32 %v3479, %v3481
    %v3483 = vrot.slane %v3473, %v3482
    %v3485 = vunpack.c.l.s4 1966171168
    %v3486 = vunpack.c.0.s8 %v3485
    %v3487 = vlaneseq
    %v3488 = vshrl.u32 %v3487, 7
    %v3489 = vsub.s32 %v3486, %v3488
    %v3490 = vrot.slane %v3474, %v3489
    %v3492 = vunpack.c.l.s4 1966171168
    %v3493 = vunpack.c.0.s8 %v3492
    %v3494 = vlaneseq
    %v3495 = vshrl.u32 %v3494, 7
    %v3496 = vsub.s32 %v3493, %v3495
    %v3497 = vrot.slane %v3475, %v3496
    %v3499 = vunpack.c.l.s4 1966171168
    %v3500 = vunpack.c.0.s8 %v3499
    %v3501 = vlaneseq
    %v3502 = vshrl.u32 %v3501, 7
    %v3503 = vsub.s32 %v3500, %v3502
    %v3504 = vrot.slane %v3476, %v3503
    %v3505 = vcombine.low %v3483, %v3490
    %v3506 = vcombine.low %v3497, %v3504
    %v3508 = vunpack.c.l.s4 1966171168
    %v3509 = vunpack.c.0.s8 %v3508
    %v3510 = vlaneseq
    %v3511 = vshrl.u32 %v3510, 7
    %v3512 = vsub.s32 %v3509, %v3511
    %v3513 = vrot.slane %v3505, %v3512
    %v3515 = vunpack.c.l.s4 1966171168
    %v3516 = vunpack.c.0.s8 %v3515
    %v3517 = vlaneseq
    %v3518 = vshrl.u32 %v3517, 7
    %v3519 = vsub.s32 %v3516, %v3518
    %v3520 = vrot.slane %v3506, %v3519
    %v3521 = vcombine.low %v3513, %v3520
    %v3522 = vcombine.low %v2996, %v3000
    %v3523 = vcombine.low %v3004, %v3008
    %v3524 = vcombine.low %v3012, %v3016
    %v3525 = vcombine.low %v3020, %v3024
    %v3527 = vunpack.c.l.s4 1966171168
    %v3528 = vunpack.c.0.s8 %v3527
    %v3529 = vlaneseq
    %v3530 = vshrl.u32 %v3529, 7
    %v3531 = vsub.s32 %v3528, %v3530
    %v3532 = vrot.slane %v3522, %v3531
    %v3534 = vunpack.c.l.s4 1966171168
    %v3535 = vunpack.c.0.s8 %v3534
    %v3536 = vlaneseq
    %v3537 = vshrl.u32 %v3536, 7
    %v3538 = vsub.s32 %v3535, %v3537
    %v3539 = vrot.slane %v3523, %v3538
    %v3541 = vunpack.c.l.s4 1966171168
    %v3542 = vunpack.c.0.s8 %v3541
    %v3543 = vlaneseq
    %v3544 = vshrl.u32 %v3543, 7
    %v3545 = vsub.s32 %v3542, %v3544
    %v3546 = vrot.slane %v3524, %v3545
    %v3548 = vunpack.c.l.s4 1966171168
    %v3549 = vunpack.c.0.s8 %v3548
    %v3550 = vlaneseq
    %v3551 = vshrl.u32 %v3550, 7
    %v3552 = vsub.s32 %v3549, %v3551
    %v3553 = vrot.slane %v3525, %v3552
    %v3554 = vcombine.low %v3532, %v3539
    %v3555 = vcombine.low %v3546, %v3553
    %v3557 = vunpack.c.l.s4 1966171168
    %v3558 = vunpack.c.0.s8 %v3557
    %v3559 = vlaneseq
    %v3560 = vshrl.u32 %v3559, 7
    %v3561 = vsub.s32 %v3558, %v3560
    %v3562 = vrot.slane %v3554, %v3561
    %v3564 = vunpack.c.l.s4 1966171168
    %v3565 = vunpack.c.0.s8 %v3564
    %v3566 = vlaneseq
    %v3567 = vshrl.u32 %v3566, 7
    %v3568 = vsub.s32 %v3565, %v3567
    %v3569 = vrot.slane %v3555, %v3568
    %v3570 = vcombine.low %v3562, %v3569
    %v3571 = vcombine.low %v3028, %v3032
    %v3572 = vcombine.low %v3036, %v3040
    %v3573 = vcombine.low %v3044, %v3048
    %v3574 = vcombine.low %v3052, %v3056
    %v3576 = vunpack.c.l.s4 1966171168
    %v3577 = vunpack.c.0.s8 %v3576
    %v3578 = vlaneseq
    %v3579 = vshrl.u32 %v3578, 7
    %v3580 = vsub.s32 %v3577, %v3579
    %v3581 = vrot.slane %v3571, %v3580
    %v3583 = vunpack.c.l.s4 1966171168
    %v3584 = vunpack.c.0.s8 %v3583
    %v3585 = vlaneseq
    %v3586 = vshrl.u32 %v3585, 7
    %v3587 = vsub.s32 %v3584, %v3586
    %v3588 = vrot.slane %v3572, %v3587
    %v3590 = vunpack.c.l.s4 1966171168
    %v3591 = vunpack.c.0.s8 %v3590
    %v3592 = vlaneseq
    %v3593 = vshrl.u32 %v3592, 7
    %v3594 = vsub.s32 %v3591, %v3593
    %v3595 = vrot.slane %v3573, %v3594
    %v3597 = vunpack.c.l.s4 1966171168
    %v3598 = vunpack.c.0.s8 %v3597
    %v3599 = vlaneseq
    %v3600 = vshrl.u32 %v3599, 7
    %v3601 = vsub.s32 %v3598, %v3600
    %v3602 = vrot.slane %v3574, %v3601
    %v3603 = vcombine.low %v3581, %v3588
    %v3604 = vcombine.low %v3595, %v3602
    %v3606 = vunpack.c.l.s4 1966171168
    %v3607 = vunpack.c.0.s8 %v3606
    %v3608 = vlaneseq
    %v3609 = vshrl.u32 %v3608, 7
    %v3610 = vsub.s32 %v3607, %v3609
    %v3611 = vrot.slane %v3603, %v3610
    %v3613 = vunpack.c.l.s4 1966171168
    %v3614 = vunpack.c.0.s8 %v3613
    %v3615 = vlaneseq
    %v3616 = vshrl.u32 %v3615, 7
    %v3617 = vsub.s32 %v3614, %v3616
    %v3618 = vrot.slane %v3604, %v3617
    %v3619 = vcombine.low %v3611, %v3618
    %v3620 = vcombine.low %v3060, %v3064
    %v3621 = vcombine.low %v3068, %v3072
    %v3622 = vcombine.low %v3076, %v3080
    %v3623 = vcombine.low %v3084, %v3088
    %v3625 = vunpack.c.l.s4 1966171168
    %v3626 = vunpack.c.0.s8 %v3625
    %v3627 = vlaneseq
    %v3628 = vshrl.u32 %v3627, 7
    %v3629 = vsub.s32 %v3626, %v3628
    %v3630 = vrot.slane %v3620, %v3629
    %v3632 = vunpack.c.l.s4 1966171168
    %v3633 = vunpack.c.0.s8 %v3632
    %v3634 = vlaneseq
    %v3635 = vshrl.u32 %v3634, 7
    %v3636 = vsub.s32 %v3633, %v3635
    %v3637 = vrot.slane %v3621, %v3636
    %v3639 = vunpack.c.l.s4 1966171168
    %v3640 = vunpack.c.0.s8 %v3639
    %v3641 = vlaneseq
    %v3642 = vshrl.u32 %v3641, 7
    %v3643 = vsub.s32 %v3640, %v3642
    %v3644 = vrot.slane %v3622, %v3643
    %v3646 = vunpack.c.l.s4 1966171168
    %v3647 = vunpack.c.0.s8 %v3646
    %v3648 = vlaneseq
    %v3649 = vshrl.u32 %v3648, 7
    %v3650 = vsub.s32 %v3647, %v3649
    %v3651 = vrot.slane %v3623, %v3650
    %v3652 = vcombine.low %v3630, %v3637
    %v3653 = vcombine.low %v3644, %v3651
    %v3655 = vunpack.c.l.s4 1966171168
    %v3656 = vunpack.c.0.s8 %v3655
    %v3657 = vlaneseq
    %v3658 = vshrl.u32 %v3657, 7
    %v3659 = vsub.s32 %v3656, %v3658
    %v3660 = vrot.slane %v3652, %v3659
    %v3662 = vunpack.c.l.s4 1966171168
    %v3663 = vunpack.c.0.s8 %v3662
    %v3664 = vlaneseq
    %v3665 = vshrl.u32 %v3664, 7
    %v3666 = vsub.s32 %v3663, %v3665
    %v3667 = vrot.slane %v3653, %v3666
    %v3668 = vcombine.low %v3660, %v3667
    %v3669 = vcombine.low %v3092, %v3096
    %v3670 = vcombine.low %v3100, %v3104
    %v3671 = vcombine.low %v3108, %v3112
    %v3672 = vcombine.low %v3116, %v3120
    %v3674 = vunpack.c.l.s4 1966171168
    %v3675 = vunpack.c.0.s8 %v3674
    %v3676 = vlaneseq
    %v3677 = vshrl.u32 %v3676, 7
    %v3678 = vsub.s32 %v3675, %v3677
    %v3679 = vrot.slane %v3669, %v3678
    %v3681 = vunpack.c.l.s4 1966171168
    %v3682 = vunpack.c.0.s8 %v3681
    %v3683 = vlaneseq
    %v3684 = vshrl.u32 %v3683, 7
    %v3685 = vsub.s32 %v3682, %v3684
    %v3686 = vrot.slane %v3670, %v3685
    %v3688 = vunpack.c.l.s4 1966171168
    %v3689 = vunpack.c.0.s8 %v3688
    %v3690 = vlaneseq
    %v3691 = vshrl.u32 %v3690, 7
    %v3692 = vsub.s32 %v3689, %v3691
    %v3693 = vrot.slane %v3671, %v3692
    %v3695 = vunpack.c.l.s4 1966171168
    %v3696 = vunpack.c.0.s8 %v3695
    %v3697 = vlaneseq
    %v3698 = vshrl.u32 %v3697, 7
    %v3699 = vsub.s32 %v3696, %v3698
    %v3700 = vrot.slane %v3672, %v3699
    %v3701 = vcombine.low %v3679, %v3686
    %v3702 = vcombine.low %v3693, %v3700
    %v3704 = vunpack.c.l.s4 1966171168
    %v3705 = vunpack.c.0.s8 %v3704
    %v3706 = vlaneseq
    %v3707 = vshrl.u32 %v3706, 7
    %v3708 = vsub.s32 %v3705, %v3707
    %v3709 = vrot.slane %v3701, %v3708
    %v3711 = vunpack.c.l.s4 1966171168
    %v3712 = vunpack.c.0.s8 %v3711
    %v3713 = vlaneseq
    %v3714 = vshrl.u32 %v3713, 7
    %v3715 = vsub.s32 %v3712, %v3714
    %v3716 = vrot.slane %v3702, %v3715
    %v3717 = vcombine.low %v3709, %v3716
    %v3718 = vcombine.low %v3124, %v3128
    %v3719 = vcombine.low %v3132, %v3136
    %v3720 = vcombine.low %v3140, %v3144
    %v3721 = vcombine.low %v3148, %v3152
    %v3723 = vunpack.c.l.s4 1966171168
    %v3724 = vunpack.c.0.s8 %v3723
    %v3725 = vlaneseq
    %v3726 = vshrl.u32 %v3725, 7
    %v3727 = vsub.s32 %v3724, %v3726
    %v3728 = vrot.slane %v3718, %v3727
    %v3730 = vunpack.c.l.s4 1966171168
    %v3731 = vunpack.c.0.s8 %v3730
    %v3732 = vlaneseq
    %v3733 = vshrl.u32 %v3732, 7
    %v3734 = vsub.s32 %v3731, %v3733
    %v3735 = vrot.slane %v3719, %v3734
    %v3737 = vunpack.c.l.s4 1966171168
    %v3738 = vunpack.c.0.s8 %v3737
    %v3739 = vlaneseq
    %v3740 = vshrl.u32 %v3739, 7
    %v3741 = vsub.s32 %v3738, %v3740
    %v3742 = vrot.slane %v3720, %v3741
    %v3744 = vunpack.c.l.s4 1966171168
    %v3745 = vunpack.c.0.s8 %v3744
    %v3746 = vlaneseq
    %v3747 = vshrl.u32 %v3746, 7
    %v3748 = vsub.s32 %v3745, %v3747
    %v3749 = vrot.slane %v3721, %v3748
    %v3750 = vcombine.low %v3728, %v3735
    %v3751 = vcombine.low %v3742, %v3749
    %v3753 = vunpack.c.l.s4 1966171168
    %v3754 = vunpack.c.0.s8 %v3753
    %v3755 = vlaneseq
    %v3756 = vshrl.u32 %v3755, 7
    %v3757 = vsub.s32 %v3754, %v3756
    %v3758 = vrot.slane %v3750, %v3757
    %v3760 = vunpack.c.l.s4 1966171168
    %v3761 = vunpack.c.0.s8 %v3760
    %v3762 = vlaneseq
    %v3763 = vshrl.u32 %v3762, 7
    %v3764 = vsub.s32 %v3761, %v3763
    %v3765 = vrot.slane %v3751, %v3764
    %v3766 = vcombine.low %v3758, %v3765
    %v3767 = vcombine.low %v3156, %v3160
    %v3768 = vcombine.low %v3164, %v3168
    %v3769 = vcombine.low %v3172, %v3176
    %v3770 = vcombine.low %v3180, %v3184
    %v3772 = vunpack.c.l.s4 1966171168
    %v3773 = vunpack.c.0.s8 %v3772
    %v3774 = vlaneseq
    %v3775 = vshrl.u32 %v3774, 7
    %v3776 = vsub.s32 %v3773, %v3775
    %v3777 = vrot.slane %v3767, %v3776
    %v3779 = vunpack.c.l.s4 1966171168
    %v3780 = vunpack.c.0.s8 %v3779
    %v3781 = vlaneseq
    %v3782 = vshrl.u32 %v3781, 7
    %v3783 = vsub.s32 %v3780, %v3782
    %v3784 = vrot.slane %v3768, %v3783
    %v3786 = vunpack.c.l.s4 1966171168
    %v3787 = vunpack.c.0.s8 %v3786
    %v3788 = vlaneseq
    %v3789 = vshrl.u32 %v3788, 7
    %v3790 = vsub.s32 %v3787, %v3789
    %v3791 = vrot.slane %v3769, %v3790
    %v3793 = vunpack.c.l.s4 1966171168
    %v3794 = vunpack.c.0.s8 %v3793
    %v3795 = vlaneseq
    %v3796 = vshrl.u32 %v3795, 7
    %v3797 = vsub.s32 %v3794, %v3796
    %v3798 = vrot.slane %v3770, %v3797
    %v3799 = vcombine.low %v3777, %v3784
    %v3800 = vcombine.low %v3791, %v3798
    %v3802 = vunpack.c.l.s4 1966171168
    %v3803 = vunpack.c.0.s8 %v3802
    %v3804 = vlaneseq
    %v3805 = vshrl.u32 %v3804, 7
    %v3806 = vsub.s32 %v3803, %v3805
    %v3807 = vrot.slane %v3799, %v3806
    %v3809 = vunpack.c.l.s4 1966171168
    %v3810 = vunpack.c.0.s8 %v3809
    %v3811 = vlaneseq
    %v3812 = vshrl.u32 %v3811, 7
    %v3813 = vsub.s32 %v3810, %v3812
    %v3814 = vrot.slane %v3800, %v3813
    %v3815 = vcombine.low %v3807, %v3814
    %v3816 = vcombine.low %v3188, %v3192
    %v3817 = vcombine.low %v3196, %v3200
    %v3818 = vcombine.low %v3204, %v3208
    %v3819 = vcombine.low %v3212, %v3216
    %v3821 = vunpack.c.l.s4 1966171168
    %v3822 = vunpack.c.0.s8 %v3821
    %v3823 = vlaneseq
    %v3824 = vshrl.u32 %v3823, 7
    %v3825 = vsub.s32 %v3822, %v3824
    %v3826 = vrot.slane %v3816, %v3825
    %v3828 = vunpack.c.l.s4 1966171168
    %v3829 = vunpack.c.0.s8 %v3828
    %v3830 = vlaneseq
    %v3831 = vshrl.u32 %v3830, 7
    %v3832 = vsub.s32 %v3829, %v3831
    %v3833 = vrot.slane %v3817, %v3832
    %v3835 = vunpack.c.l.s4 1966171168
    %v3836 = vunpack.c.0.s8 %v3835
    %v3837 = vlaneseq
    %v3838 = vshrl.u32 %v3837, 7
    %v3839 = vsub.s32 %v3836, %v3838
    %v3840 = vrot.slane %v3818, %v3839
    %v3842 = vunpack.c.l.s4 1966171168
    %v3843 = vunpack.c.0.s8 %v3842
    %v3844 = vlaneseq
    %v3845 = vshrl.u32 %v3844, 7
    %v3846 = vsub.s32 %v3843, %v3845
    %v3847 = vrot.slane %v3819, %v3846
    %v3848 = vcombine.low %v3826, %v3833
    %v3849 = vcombine.low %v3840, %v3847
    %v3851 = vunpack.c.l.s4 1966171168
    %v3852 = vunpack.c.0.s8 %v3851
    %v3853 = vlaneseq
    %v3854 = vshrl.u32 %v3853, 7
    %v3855 = vsub.s32 %v3852, %v3854
    %v3856 = vrot.slane %v3848, %v3855
    %v3858 = vunpack.c.l.s4 1966171168
    %v3859 = vunpack.c.0.s8 %v3858
    %v3860 = vlaneseq
    %v3861 = vshrl.u32 %v3860, 7
    %v3862 = vsub.s32 %v3859, %v3861
    %v3863 = vrot.slane %v3849, %v3862
    %v3864 = vcombine.low %v3856, %v3863
    %v3865 = vcombine.low %v3220, %v3224
    %v3866 = vcombine.low %v3228, %v3232
    %v3867 = vcombine.low %v3236, %v3240
    %v3868 = vcombine.low %v3244, %v3248
    %v3870 = vunpack.c.l.s4 1966171168
    %v3871 = vunpack.c.0.s8 %v3870
    %v3872 = vlaneseq
    %v3873 = vshrl.u32 %v3872, 7
    %v3874 = vsub.s32 %v3871, %v3873
    %v3875 = vrot.slane %v3865, %v3874
    %v3877 = vunpack.c.l.s4 1966171168
    %v3878 = vunpack.c.0.s8 %v3877
    %v3879 = vlaneseq
    %v3880 = vshrl.u32 %v3879, 7
    %v3881 = vsub.s32 %v3878, %v3880
    %v3882 = vrot.slane %v3866, %v3881
    %v3884 = vunpack.c.l.s4 1966171168
    %v3885 = vunpack.c.0.s8 %v3884
    %v3886 = vlaneseq
    %v3887 = vshrl.u32 %v3886, 7
    %v3888 = vsub.s32 %v3885, %v3887
    %v3889 = vrot.slane %v3867, %v3888
    %v3891 = vunpack.c.l.s4 1966171168
    %v3892 = vunpack.c.0.s8 %v3891
    %v3893 = vlaneseq
    %v3894 = vshrl.u32 %v3893, 7
    %v3895 = vsub.s32 %v3892, %v3894
    %v3896 = vrot.slane %v3868, %v3895
    %v3897 = vcombine.low %v3875, %v3882
    %v3898 = vcombine.low %v3889, %v3896
    %v3900 = vunpack.c.l.s4 1966171168
    %v3901 = vunpack.c.0.s8 %v3900
    %v3902 = vlaneseq
    %v3903 = vshrl.u32 %v3902, 7
    %v3904 = vsub.s32 %v3901, %v3903
    %v3905 = vrot.slane %v3897, %v3904
    %v3907 = vunpack.c.l.s4 1966171168
    %v3908 = vunpack.c.0.s8 %v3907
    %v3909 = vlaneseq
    %v3910 = vshrl.u32 %v3909, 7
    %v3911 = vsub.s32 %v3908, %v3910
    %v3912 = vrot.slane %v3898, %v3911
    %v3913 = vcombine.low %v3905, %v3912
    %v3914 = vcombine.low %v3252, %v3256
    %v3915 = vcombine.low %v3260, %v3264
    %v3916 = vcombine.low %v3268, %v3272
    %v3917 = vcombine.low %v3276, %v3280
    %v3919 = vunpack.c.l.s4 1966171168
    %v3920 = vunpack.c.0.s8 %v3919
    %v3921 = vlaneseq
    %v3922 = vshrl.u32 %v3921, 7
    %v3923 = vsub.s32 %v3920, %v3922
    %v3924 = vrot.slane %v3914, %v3923
    %v3926 = vunpack.c.l.s4 1966171168
    %v3927 = vunpack.c.0.s8 %v3926
    %v3928 = vlaneseq
    %v3929 = vshrl.u32 %v3928, 7
    %v3930 = vsub.s32 %v3927, %v3929
    %v3931 = vrot.slane %v3915, %v3930
    %v3933 = vunpack.c.l.s4 1966171168
    %v3934 = vunpack.c.0.s8 %v3933
    %v3935 = vlaneseq
    %v3936 = vshrl.u32 %v3935, 7
    %v3937 = vsub.s32 %v3934, %v3936
    %v3938 = vrot.slane %v3916, %v3937
    %v3940 = vunpack.c.l.s4 1966171168
    %v3941 = vunpack.c.0.s8 %v3940
    %v3942 = vlaneseq
    %v3943 = vshrl.u32 %v3942, 7
    %v3944 = vsub.s32 %v3941, %v3943
    %v3945 = vrot.slane %v3917, %v3944
    %v3946 = vcombine.low %v3924, %v3931
    %v3947 = vcombine.low %v3938, %v3945
    %v3949 = vunpack.c.l.s4 1966171168
    %v3950 = vunpack.c.0.s8 %v3949
    %v3951 = vlaneseq
    %v3952 = vshrl.u32 %v3951, 7
    %v3953 = vsub.s32 %v3950, %v3952
    %v3954 = vrot.slane %v3946, %v3953
    %v3956 = vunpack.c.l.s4 1966171168
    %v3957 = vunpack.c.0.s8 %v3956
    %v3958 = vlaneseq
    %v3959 = vshrl.u32 %v3958, 7
    %v3960 = vsub.s32 %v3957, %v3959
    %v3961 = vrot.slane %v3947, %v3960
    %v3962 = vcombine.low %v3954, %v3961
    %v3963 = vcombine.low %v3284, %v3288
    %v3964 = vcombine.low %v3292, %v3296
    %v3965 = vcombine.low %v3300, %v3304
    %v3966 = vcombine.low %v3308, %v3312
    %v3968 = vunpack.c.l.s4 1966171168
    %v3969 = vunpack.c.0.s8 %v3968
    %v3970 = vlaneseq
    %v3971 = vshrl.u32 %v3970, 7
    %v3972 = vsub.s32 %v3969, %v3971
    %v3973 = vrot.slane %v3963, %v3972
    %v3975 = vunpack.c.l.s4 1966171168
    %v3976 = vunpack.c.0.s8 %v3975
    %v3977 = vlaneseq
    %v3978 = vshrl.u32 %v3977, 7
    %v3979 = vsub.s32 %v3976, %v3978
    %v3980 = vrot.slane %v3964, %v3979
    %v3982 = vunpack.c.l.s4 1966171168
    %v3983 = vunpack.c.0.s8 %v3982
    %v3984 = vlaneseq
    %v3985 = vshrl.u32 %v3984, 7
    %v3986 = vsub.s32 %v3983, %v3985
    %v3987 = vrot.slane %v3965, %v3986
    %v3989 = vunpack.c.l.s4 1966171168
    %v3990 = vunpack.c.0.s8 %v3989
    %v3991 = vlaneseq
    %v3992 = vshrl.u32 %v3991, 7
    %v3993 = vsub.s32 %v3990, %v3992
    %v3994 = vrot.slane %v3966, %v3993
    %v3995 = vcombine.low %v3973, %v3980
    %v3996 = vcombine.low %v3987, %v3994
    %v3998 = vunpack.c.l.s4 1966171168
    %v3999 = vunpack.c.0.s8 %v3998
    %v4000 = vlaneseq
    %v4001 = vshrl.u32 %v4000, 7
    %v4002 = vsub.s32 %v3999, %v4001
    %v4003 = vrot.slane %v3995, %v4002
    %v4005 = vunpack.c.l.s4 1966171168
    %v4006 = vunpack.c.0.s8 %v4005
    %v4007 = vlaneseq
    %v4008 = vshrl.u32 %v4007, 7
    %v4009 = vsub.s32 %v4006, %v4008
    %v4010 = vrot.slane %v3996, %v4009
    %v4011 = vcombine.low %v4003, %v4010
    %v4012 = vcombine.low %v3316, %v3320
    %v4013 = vcombine.low %v3324, %v3328
    %v4014 = vcombine.low %v3332, %v3336
    %v4015 = vcombine.low %v3340, %v3344
    %v4017 = vunpack.c.l.s4 1966171168
    %v4018 = vunpack.c.0.s8 %v4017
    %v4019 = vlaneseq
    %v4020 = vshrl.u32 %v4019, 7
    %v4021 = vsub.s32 %v4018, %v4020
    %v4022 = vrot.slane %v4012, %v4021
    %v4024 = vunpack.c.l.s4 1966171168
    %v4025 = vunpack.c.0.s8 %v4024
    %v4026 = vlaneseq
    %v4027 = vshrl.u32 %v4026, 7
    %v4028 = vsub.s32 %v4025, %v4027
    %v4029 = vrot.slane %v4013, %v4028
    %v4031 = vunpack.c.l.s4 1966171168
    %v4032 = vunpack.c.0.s8 %v4031
    %v4033 = vlaneseq
    %v4034 = vshrl.u32 %v4033, 7
    %v4035 = vsub.s32 %v4032, %v4034
    %v4036 = vrot.slane %v4014, %v4035
    %v4038 = vunpack.c.l.s4 1966171168
    %v4039 = vunpack.c.0.s8 %v4038
    %v4040 = vlaneseq
    %v4041 = vshrl.u32 %v4040, 7
    %v4042 = vsub.s32 %v4039, %v4041
    %v4043 = vrot.slane %v4015, %v4042
    %v4044 = vcombine.low %v4022, %v4029
    %v4045 = vcombine.low %v4036, %v4043
    %v4047 = vunpack.c.l.s4 1966171168
    %v4048 = vunpack.c.0.s8 %v4047
    %v4049 = vlaneseq
    %v4050 = vshrl.u32 %v4049, 7
    %v4051 = vsub.s32 %v4048, %v4050
    %v4052 = vrot.slane %v4044, %v4051
    %v4054 = vunpack.c.l.s4 1966171168
    %v4055 = vunpack.c.0.s8 %v4054
    %v4056 = vlaneseq
    %v4057 = vshrl.u32 %v4056, 7
    %v4058 = vsub.s32 %v4055, %v4057
    %v4059 = vrot.slane %v4045, %v4058
    %v4060 = vcombine.low %v4052, %v4059
    %v4061 = vcombine.low %v3348, %v3352
    %v4062 = vcombine.low %v3356, %v3360
    %v4063 = vcombine.low %v3364, %v3368
    %v4064 = vcombine.low %v3372, %v3376
    %v4066 = vunpack.c.l.s4 1966171168
    %v4067 = vunpack.c.0.s8 %v4066
    %v4068 = vlaneseq
    %v4069 = vshrl.u32 %v4068, 7
    %v4070 = vsub.s32 %v4067, %v4069
    %v4071 = vrot.slane %v4061, %v4070
    %v4073 = vunpack.c.l.s4 1966171168
    %v4074 = vunpack.c.0.s8 %v4073
    %v4075 = vlaneseq
    %v4076 = vshrl.u32 %v4075, 7
    %v4077 = vsub.s32 %v4074, %v4076
    %v4078 = vrot.slane %v4062, %v4077
    %v4080 = vunpack.c.l.s4 1966171168
    %v4081 = vunpack.c.0.s8 %v4080
    %v4082 = vlaneseq
    %v4083 = vshrl.u32 %v4082, 7
    %v4084 = vsub.s32 %v4081, %v4083
    %v4085 = vrot.slane %v4063, %v4084
    %v4087 = vunpack.c.l.s4 1966171168
    %v4088 = vunpack.c.0.s8 %v4087
    %v4089 = vlaneseq
    %v4090 = vshrl.u32 %v4089, 7
    %v4091 = vsub.s32 %v4088, %v4090
    %v4092 = vrot.slane %v4064, %v4091
    %v4093 = vcombine.low %v4071, %v4078
    %v4094 = vcombine.low %v4085, %v4092
    %v4096 = vunpack.c.l.s4 1966171168
    %v4097 = vunpack.c.0.s8 %v4096
    %v4098 = vlaneseq
    %v4099 = vshrl.u32 %v4098, 7
    %v4100 = vsub.s32 %v4097, %v4099
    %v4101 = vrot.slane %v4093, %v4100
    %v4103 = vunpack.c.l.s4 1966171168
    %v4104 = vunpack.c.0.s8 %v4103
    %v4105 = vlaneseq
    %v4106 = vshrl.u32 %v4105, 7
    %v4107 = vsub.s32 %v4104, %v4106
    %v4108 = vrot.slane %v4094, %v4107
    %v4109 = vcombine.low %v4101, %v4108
    %v4110 = vcombine.low %v3380, %v3384
    %v4111 = vcombine.low %v3388, %v3392
    %v4112 = vcombine.low %v3396, %v3400
    %v4113 = vcombine.low %v3404, %v3408
    %v4115 = vunpack.c.l.s4 1966171168
    %v4116 = vunpack.c.0.s8 %v4115
    %v4117 = vlaneseq
    %v4118 = vshrl.u32 %v4117, 7
    %v4119 = vsub.s32 %v4116, %v4118
    %v4120 = vrot.slane %v4110, %v4119
    %v4122 = vunpack.c.l.s4 1966171168
    %v4123 = vunpack.c.0.s8 %v4122
    %v4124 = vlaneseq
    %v4125 = vshrl.u32 %v4124, 7
    %v4126 = vsub.s32 %v4123, %v4125
    %v4127 = vrot.slane %v4111, %v4126
    %v4129 = vunpack.c.l.s4 1966171168
    %v4130 = vunpack.c.0.s8 %v4129
    %v4131 = vlaneseq
    %v4132 = vshrl.u32 %v4131, 7
    %v4133 = vsub.s32 %v4130, %v4132
    %v4134 = vrot.slane %v4112, %v4133
    %v4136 = vunpack.c.l.s4 1966171168
    %v4137 = vunpack.c.0.s8 %v4136
    %v4138 = vlaneseq
    %v4139 = vshrl.u32 %v4138, 7
    %v4140 = vsub.s32 %v4137, %v4139
    %v4141 = vrot.slane %v4113, %v4140
    %v4142 = vcombine.low %v4120, %v4127
    %v4143 = vcombine.low %v4134, %v4141
    %v4145 = vunpack.c.l.s4 1966171168
    %v4146 = vunpack.c.0.s8 %v4145
    %v4147 = vlaneseq
    %v4148 = vshrl.u32 %v4147, 7
    %v4149 = vsub.s32 %v4146, %v4148
    %v4150 = vrot.slane %v4142, %v4149
    %v4152 = vunpack.c.l.s4 1966171168
    %v4153 = vunpack.c.0.s8 %v4152
    %v4154 = vlaneseq
    %v4155 = vshrl.u32 %v4154, 7
    %v4156 = vsub.s32 %v4153, %v4155
    %v4157 = vrot.slane %v4143, %v4156
    %v4158 = vcombine.low %v4150, %v4157
    %v4159 = vcombine.low %v3412, %v3416
    %v4160 = vcombine.low %v3420, %v3424
    %v4161 = vcombine.low %v3428, %v3432
    %v4162 = vcombine.low %v3436, %v3440
    %v4164 = vunpack.c.l.s4 1966171168
    %v4165 = vunpack.c.0.s8 %v4164
    %v4166 = vlaneseq
    %v4167 = vshrl.u32 %v4166, 7
    %v4168 = vsub.s32 %v4165, %v4167
    %v4169 = vrot.slane %v4159, %v4168
    %v4171 = vunpack.c.l.s4 1966171168
    %v4172 = vunpack.c.0.s8 %v4171
    %v4173 = vlaneseq
    %v4174 = vshrl.u32 %v4173, 7
    %v4175 = vsub.s32 %v4172, %v4174
    %v4176 = vrot.slane %v4160, %v4175
    %v4178 = vunpack.c.l.s4 1966171168
    %v4179 = vunpack.c.0.s8 %v4178
    %v4180 = vlaneseq
    %v4181 = vshrl.u32 %v4180, 7
    %v4182 = vsub.s32 %v4179, %v4181
    %v4183 = vrot.slane %v4161, %v4182
    %v4185 = vunpack.c.l.s4 1966171168
    %v4186 = vunpack.c.0.s8 %v4185
    %v4187 = vlaneseq
    %v4188 = vshrl.u32 %v4187, 7
    %v4189 = vsub.s32 %v4186, %v4188
    %v4190 = vrot.slane %v4162, %v4189
    %v4191 = vcombine.low %v4169, %v4176
    %v4192 = vcombine.low %v4183, %v4190
    %v4194 = vunpack.c.l.s4 1966171168
    %v4195 = vunpack.c.0.s8 %v4194
    %v4196 = vlaneseq
    %v4197 = vshrl.u32 %v4196, 7
    %v4198 = vsub.s32 %v4195, %v4197
    %v4199 = vrot.slane %v4191, %v4198
    %v4201 = vunpack.c.l.s4 1966171168
    %v4202 = vunpack.c.0.s8 %v4201
    %v4203 = vlaneseq
    %v4204 = vshrl.u32 %v4203, 7
    %v4205 = vsub.s32 %v4202, %v4204
    %v4206 = vrot.slane %v4192, %v4205
    %v4207 = vcombine.low %v4199, %v4206
    %v4208 = vcombine.low %v3444, %v3448
    %v4209 = vcombine.low %v3452, %v3456
    %v4210 = vcombine.low %v3460, %v3464
    %v4211 = vcombine.low %v3468, %v3472
    %v4213 = vunpack.c.l.s4 1966171168
    %v4214 = vunpack.c.0.s8 %v4213
    %v4215 = vlaneseq
    %v4216 = vshrl.u32 %v4215, 7
    %v4217 = vsub.s32 %v4214, %v4216
    %v4218 = vrot.slane %v4208, %v4217
    %v4220 = vunpack.c.l.s4 1966171168
    %v4221 = vunpack.c.0.s8 %v4220
    %v4222 = vlaneseq
    %v4223 = vshrl.u32 %v4222, 7
    %v4224 = vsub.s32 %v4221, %v4223
    %v4225 = vrot.slane %v4209, %v4224
    %v4227 = vunpack.c.l.s4 1966171168
    %v4228 = vunpack.c.0.s8 %v4227
    %v4229 = vlaneseq
    %v4230 = vshrl.u32 %v4229, 7
    %v4231 = vsub.s32 %v4228, %v4230
    %v4232 = vrot.slane %v4210, %v4231
    %v4234 = vunpack.c.l.s4 1966171168
    %v4235 = vunpack.c.0.s8 %v4234
    %v4236 = vlaneseq
    %v4237 = vshrl.u32 %v4236, 7
    %v4238 = vsub.s32 %v4235, %v4237
    %v4239 = vrot.slane %v4211, %v4238
    %v4240 = vcombine.low %v4218, %v4225
    %v4241 = vcombine.low %v4232, %v4239
    %v4243 = vunpack.c.l.s4 1966171168
    %v4244 = vunpack.c.0.s8 %v4243
    %v4245 = vlaneseq
    %v4246 = vshrl.u32 %v4245, 7
    %v4247 = vsub.s32 %v4244, %v4246
    %v4248 = vrot.slane %v4240, %v4247
    %v4250 = vunpack.c.l.s4 1966171168
    %v4251 = vunpack.c.0.s8 %v4250
    %v4252 = vlaneseq
    %v4253 = vshrl.u32 %v4252, 7
    %v4254 = vsub.s32 %v4251, %v4253
    %v4255 = vrot.slane %v4241, %v4254
    %v4256 = vcombine.low %v4248, %v4255
    %4257 = vset.pattern.permute.xlu0 0
    %4258 = vperm.xlu0 %4257, %v3521
    %v4259 = vpop.permute.xlu0 %4258
    %4260 = vset.pattern.permute.xlu0 0
    %4261 = vperm.xlu0 %4260, %v3570
    %v4262 = vpop.permute.xlu0 %4261
    %4263 = vset.pattern.permute.xlu0 0
    %4264 = vperm.xlu0 %4263, %v3619
    %v4265 = vpop.permute.xlu0 %4264
    %4266 = vset.pattern.permute.xlu0 0
    %4267 = vperm.xlu0 %4266, %v3668
    %v4268 = vpop.permute.xlu0 %4267
    %4269 = vset.pattern.permute.xlu0 0
    %4270 = vperm.xlu0 %4269, %v3717
    %v4271 = vpop.permute.xlu0 %4270
    %4272 = vset.pattern.permute.xlu0 0
    %4273 = vperm.xlu0 %4272, %v3766
    %v4274 = vpop.permute.xlu0 %4273
    %4275 = vset.pattern.permute.xlu0 0
    %4276 = vperm.xlu0 %4275, %v3815
    %v4277 = vpop.permute.xlu0 %4276
    %4278 = vset.pattern.permute.xlu0 0
    %4279 = vperm.xlu0 %4278, %v3864
    %v4280 = vpop.permute.xlu0 %4279
    %4281 = vset.pattern.permute.xlu0 0
    %4282 = vperm.xlu0 %4281, %v3913
    %v4283 = vpop.permute.xlu0 %4282
    %4284 = vset.pattern.permute.xlu0 0
    %4285 = vperm.xlu0 %4284, %v3962
    %v4286 = vpop.permute.xlu0 %4285
    %4287 = vset.pattern.permute.xlu0 0
    %4288 = vperm.xlu0 %4287, %v4011
    %v4289 = vpop.permute.xlu0 %4288
    %4290 = vset.pattern.permute.xlu0 0
    %4291 = vperm.xlu0 %4290, %v4060
    %v4292 = vpop.permute.xlu0 %4291
    %4293 = vset.pattern.permute.xlu0 0
    %4294 = vperm.xlu0 %4293, %v4109
    %v4295 = vpop.permute.xlu0 %4294
    %4296 = vset.pattern.permute.xlu0 0
    %4297 = vperm.xlu0 %4296, %v4158
    %v4298 = vpop.permute.xlu0 %4297
    %4299 = vset.pattern.permute.xlu0 0
    %4300 = vperm.xlu0 %4299, %v4207
    %v4301 = vpop.permute.xlu0 %4300
    %4302 = vset.pattern.permute.xlu0 0
    %4303 = vperm.xlu0 %4302, %v4256
    %v4304 = vpop.permute.xlu0 %4303
    %v4305 = vlaneseq
    %v4306 = vshrl.u32 %v4305, 7
    %v4307 = vsub.s32 %v2236, %v4306
    %v4308 = vrot.slane %v4259, %v4307
    %v4309 = vlaneseq
    %v4310 = vshrl.u32 %v4309, 7
    %v4311 = vsub.s32 %v2241, %v4310
    %v4312 = vrot.slane %v4262, %v4311
    %v4313 = vsel %vm2246, %v4312, %v4308
    %v4314 = vlaneseq
    %v4315 = vshrl.u32 %v4314, 7
    %v4316 = vsub.s32 %v2248, %v4315
    %v4317 = vrot.slane %v4265, %v4316
    %v4318 = vsel %vm2253, %v4317, %v4313
    %v4319 = vlaneseq
    %v4320 = vshrl.u32 %v4319, 7
    %v4321 = vsub.s32 %v2255, %v4320
    %v4322 = vrot.slane %v4268, %v4321
    %v4323 = vsel %vm2260, %v4322, %v4318
    %v4324 = vlaneseq
    %v4325 = vshrl.u32 %v4324, 7
    %v4326 = vsub.s32 %v2262, %v4325
    %v4327 = vrot.slane %v4271, %v4326
    %v4328 = vsel %vm2267, %v4327, %v4323
    %v4329 = vlaneseq
    %v4330 = vshrl.u32 %v4329, 7
    %v4331 = vsub.s32 %v2269, %v4330
    %v4332 = vrot.slane %v4274, %v4331
    %v4333 = vsel %vm2274, %v4332, %v4328
    %v4334 = vlaneseq
    %v4335 = vshrl.u32 %v4334, 7
    %v4336 = vsub.s32 %v2276, %v4335
    %v4337 = vrot.slane %v4277, %v4336
    %v4338 = vsel %vm2281, %v4337, %v4333
    %v4339 = vlaneseq
    %v4340 = vshrl.u32 %v4339, 7
    %v4341 = vsub.s32 %v2283, %v4340
    %v4342 = vrot.slane %v4280, %v4341
    %v4343 = vsel %vm2288, %v4342, %v4338
    %v4344 = vlaneseq
    %v4345 = vshrl.u32 %v4344, 7
    %v4346 = vsub.s32 %v2290, %v4345
    %v4347 = vrot.slane %v4283, %v4346
    %v4348 = vsel %vm2295, %v4347, %v4343
    %v4349 = vlaneseq
    %v4350 = vshrl.u32 %v4349, 7
    %v4351 = vsub.s32 %v2297, %v4350
    %v4352 = vrot.slane %v4286, %v4351
    %v4353 = vsel %vm2302, %v4352, %v4348
    %v4354 = vlaneseq
    %v4355 = vshrl.u32 %v4354, 7
    %v4356 = vsub.s32 %v2304, %v4355
    %v4357 = vrot.slane %v4289, %v4356
    %v4358 = vsel %vm2309, %v4357, %v4353
    %v4359 = vlaneseq
    %v4360 = vshrl.u32 %v4359, 7
    %v4361 = vsub.s32 %v2311, %v4360
    %v4362 = vrot.slane %v4292, %v4361
    %v4363 = vsel %vm2316, %v4362, %v4358
    %v4364 = vlaneseq
    %v4365 = vshrl.u32 %v4364, 7
    %v4366 = vsub.s32 %v2318, %v4365
    %v4367 = vrot.slane %v4295, %v4366
    %v4368 = vsel %vm2323, %v4367, %v4363
    %v4369 = vlaneseq
    %v4370 = vshrl.u32 %v4369, 7
    %v4371 = vsub.s32 %v2325, %v4370
    %v4372 = vrot.slane %v4298, %v4371
    %v4373 = vsel %vm2330, %v4372, %v4368
    %v4374 = vlaneseq
    %v4375 = vshrl.u32 %v4374, 7
    %v4376 = vsub.s32 %v2332, %v4375
    %v4377 = vrot.slane %v4301, %v4376
    %v4378 = vsel %vm2337, %v4377, %v4373
    %v4379 = vlaneseq
    %v4380 = vshrl.u32 %v4379, 7
    %v4381 = vsub.s32 %v2339, %v4380
    %v4382 = vrot.slane %v4304, %v4381
    %v4383 = vsel %vm2344, %v4382, %v4378
    %v4385 = vunpack.c.l.s4 1966171168
    %v4386 = vunpack.c.0.s8 %v4385
    %v4387 = vlaneseq
    %v4388 = vshrl.u32 %v4387, 7
    %v4389 = vsub.s32 %v4386, %v4388
    %v4390 = vrot.slane %v4383, %v4389
    %v4392 = vunpack.c.l.s4 1966171168
    %v4393 = vunpack.c.0.s8 %v4392
    %v4394 = vlaneseq
    %v4395 = vshrl.u32 %v4394, 7
    %v4396 = vsub.s32 %v4393, %v4395
    %v4397 = vrot.slane %v4390, %v4396
    %4399 = vst.msk [vmem:[#allocation3 + $0x1] sm:$0x1] %vm2364, %v4397
    // Predicated region
    $region38: #{tpu_custom_call.1} parent=1 // pred_check
      _
    $region39: #{tpu_custom_call.1} parent=1 // pred_check_branch
      %4401 = sbr.rel (0) target = $region41
    $region40: #{tpu_custom_call.1} parent=1 // pred_region
      %s4403 = ssub.s32 32, 32
      %4404 = vsyncadd [#allocation4], %s4403
      %s4406 = sshll.u32 [#allocation3], 4
      %s4407 = int_to_ptr.vmem [resolvable:$true] %s4406
      %4409 = dma.vmem_to_hbm [thread:$0]  %s4407, 32, %s9, [#allocation4]
    $region41: #{tpu_custom_call.1} parent=1 // pred_fallthru
      _
    // Predicated region
    $region42: #{tpu_custom_call.1} parent=1 // pred_check
      _
    $region43: #{tpu_custom_call.1} parent=1 // pred_check_branch
      %4411 = sbr.rel (0) target = $region45
    $region44: #{tpu_custom_call.1} parent=1 // pred_region
      %4412 = dma.done [#allocation4], 32
    $region45: #{tpu_custom_call.1} parent=1 // pred_fallthru
      _
    %4413 = vsyncpa [#allocation4], 1

</llo_original>
